<compile_context>
chip_gen: v7x
topology: tpu7x:2x2x1
jax: 0.10.0
libtpu: 0.0.40
codegen_flags: <defaults>
</compile_context>

<pallas_src>
import functools
import math

import jax
import jax.numpy as jnp
from jax.experimental import pallas as pl
from jax.experimental.pallas import tpu as pltpu


FC_IN = 5184          # 64 * 9 * 9 (hard-coded flatten in the torch module)
FC_TK = 2688          # K tile (21 * 128); two tiles cover the zero-padded K
FC_KP = 2 * FC_TK     # 5376
ATOMS_P = 256         # atoms (200) lane-padded to a multiple of 128


# ---------------------------------------------------------------------------
# Generic M-tiled linear kernel (conv-as-matmul path): bf16 operands, f32 acc
# ---------------------------------------------------------------------------

def _linear_bias_act_kernel(x_ref, w_ref, b_ref, o_ref, *, relu):
    y = jnp.dot(x_ref[...], w_ref[...], preferred_element_type=jnp.float32)
    y = y + b_ref[...]                        # (1, N) f32 broadcast over rows
    if relu:
        y = jnp.maximum(y, 0.0)
    o_ref[...] = y.astype(o_ref.dtype)


def pallas_linear(x, w, b, *, relu=False, tm=128, out_dtype=jnp.float32):
    """x:(M,K) bf16, w:(K,N) bf16 with N % 128 == 0, b:(1,N) f32."""
    M, K = x.shape
    _, N = w.shape
    Mp = pl.cdiv(M, tm) * tm
    if Mp != M:
        x = jnp.pad(x, ((0, Mp - M), (0, 0)))
    out = pl.pallas_call(
        functools.partial(_linear_bias_act_kernel, relu=relu),
        out_shape=jax.ShapeDtypeStruct((Mp, N), out_dtype),
        grid=(Mp // tm,),
        in_specs=[
            pl.BlockSpec((tm, K), lambda i: (i, 0)),
            pl.BlockSpec((K, N), lambda i: (0, 0)),
            pl.BlockSpec((1, N), lambda i: (0, 0)),
        ],
        out_specs=pl.BlockSpec((tm, N), lambda i: (i, 0)),
        compiler_params=pltpu.CompilerParams(
            dimension_semantics=("parallel",)),
    )(x, w, b)
    return out[:M] if Mp != M else out


# ---------------------------------------------------------------------------
# im2col (plain-JAX glue): cheap strided-reshape construction
# ---------------------------------------------------------------------------

def _im2col(x, kh, kw, stride):
    """x:(B,H,W,C) -> (B*OH*OW, kh*kw*C), feature order (kh, kw, c)."""
    B, H, W, C = x.shape
    OH = (H - kh) // stride + 1
    OW = (W - kw) // stride + 1
    rows = []
    for i in range(kh):
        xr = x[:, i:i + stride * (OH - 1) + 1:stride, :, :]      # (B, OH, W, C)
        if stride == 1:
            row = jnp.stack([xr[:, :, j:j + OW, :] for j in range(kw)], axis=3)
        elif kw % stride == 0:
            groups = []
            for g in range(kw // stride):
                seg = xr[:, :, g * stride:g * stride + stride * OW, :]
                groups.append(seg.reshape(B, OH, OW, stride, C))
            row = jnp.concatenate(groups, axis=3)                # (B,OH,OW,kw,C)
        else:  # generic fallback (unused for this model)
            row = jnp.stack(
                [xr[:, :, j:j + stride * (OW - 1) + 1:stride, :] for j in range(kw)],
                axis=3)
        rows.append(row)
    patches = jnp.stack(rows, axis=3)                            # (B,OH,OW,kh,kw,C)
    return patches.reshape(B * OH * OW, kh * kw * C), OH, OW


def conv2d_relu(x, wmat, bias, *, kh, kw, cout, stride, pad, tm):
    """x:(B,H,W,Cin) bf16; wmat:(kh*kw*Cin, 128-padded cout) bf16; bias:(1,Np) f32."""
    if pad:
        x = jnp.pad(x, ((0, 0), (pad, pad), (pad, pad), (0, 0)))
    B = x.shape[0]
    patches, OH, OW = _im2col(x, kh, kw, stride)
    y = pallas_linear(patches, wmat, bias, relu=True, tm=tm, out_dtype=jnp.bfloat16)
    return y[:, :cout].reshape(B, OH, OW, cout)


# ---------------------------------------------------------------------------
# Fused FC head: fc_h (int8 weights, K-tiled) + fc_z_v + fc_z_a + dueling
# ---------------------------------------------------------------------------

def _fc_head_kernel(x_ref, wq_ref, scale_ref, bh_ref, wzv_ref, bzv_ref,
                    wza_ref, bza_ref, q_ref, acc_ref, *,
                    action_space, atoms, atoms_p, softmax):
    k = pl.program_id(0)

    @pl.when(k == 0)
    def _():
        acc_ref[...] = jnp.zeros_like(acc_ref)

    # int8 weight tile -> bf16 (per-column scale applied once in the epilogue);
    # bf16 x bf16 MXU matmul with f32 accumulation.
    acc_ref[...] += jnp.dot(x_ref[...], wq_ref[...].astype(jnp.bfloat16),
                            preferred_element_type=jnp.float32)

    @pl.when(k == pl.num_programs(0) - 1)
    def _():
        h = jnp.maximum(acc_ref[...] * scale_ref[...] + bh_ref[...], 0.0)
        nh = h.shape[1] // 2                               # 512 (lane-aligned)
        h_v = h[:, :nh].astype(jnp.bfloat16)
        h_a = h[:, nh:].astype(jnp.bfloat16)

        v = jnp.dot(h_v, wzv_ref[...],
                    preferred_element_type=jnp.float32) + bzv_ref[...]   # (Bp, 256)
        a = jnp.dot(h_a, wza_ref[...],
                    preferred_element_type=jnp.float32) + bza_ref[...]   # (Bp, A*256)

        # Dueling combine with static, 128-lane-aligned per-action chunks.
        a_chunks = [a[:, i * atoms_p:(i + 1) * atoms_p] for i in range(action_space)]
        a_mean = a_chunks[0]
        for i in range(1, action_space):
            a_mean = a_mean + a_chunks[i]
        a_mean = a_mean * (1.0 / float(action_space))

        q_chunks = []
        for i in range(action_space):
            q_i = v + a_chunks[i] - a_mean
            if softmax:
                col = jax.lax.broadcasted_iota(jnp.int32, q_i.shape, 1)
                q_i = jnp.where(col < atoms, q_i, -1e30)   # mask lane padding
                m = jnp.max(q_i, axis=1, keepdims=True)
                e = jnp.exp(q_i - m)
                q_i = e * pl.reciprocal(jnp.sum(e, axis=1, keepdims=True),
                                        approx=True)
            q_chunks.append(q_i)
        q_ref[...] = jnp.concatenate(q_chunks, axis=1).astype(q_ref.dtype)


def fc_head_fused(x_pad, prep, *, action_space, atoms, softmax):
    """x_pad:(Bp, FC_KP) bf16 -> (Bp, action_space*ATOMS_P) f32."""
    Bp, Kp = x_pad.shape
    assert Kp % FC_TK == 0
    nk = Kp // FC_TK
    hidden = prep["w_zv"].shape[0]
    n2 = 2 * hidden
    na = action_space * ATOMS_P
    kernel = functools.partial(_fc_head_kernel, action_space=action_space,
                               atoms=atoms, atoms_p=ATOMS_P, softmax=softmax)
    return pl.pallas_call(
        kernel,
        out_shape=jax.ShapeDtypeStruct((Bp, na), jnp.float32),
        grid=(nk,),
        in_specs=[
            pl.BlockSpec((Bp, FC_TK), lambda k: (0, k)),         # x (bf16)
            pl.BlockSpec((FC_TK, n2), lambda k: (k, 0)),         # w_h (int8, streamed)
            pl.BlockSpec((1, n2), lambda k: (0, 0)),             # per-column scale
            pl.BlockSpec((1, n2), lambda k: (0, 0)),             # b_h
            pl.BlockSpec((hidden, ATOMS_P), lambda k: (0, 0)),   # w_zv (bf16, resident)
            pl.BlockSpec((1, ATOMS_P), lambda k: (0, 0)),        # b_zv
            pl.BlockSpec((hidden, na), lambda k: (0, 0)),        # w_za (bf16, resident)
            pl.BlockSpec((1, na), lambda k: (0, 0)),             # b_za
        ],
        out_specs=pl.BlockSpec((Bp, na), lambda k: (0, 0)),
        scratch_shapes=[pltpu.VMEM((Bp, n2), jnp.float32)],
        compiler_params=pltpu.CompilerParams(
            dimension_semantics=("arbitrary",)),
    )(x_pad, prep["w_h_q"], prep["w_h_scale"], prep["b_h"],
      prep["w_zv"], prep["b_zv"], prep["w_za"], prep["b_za"])


# ---------------------------------------------------------------------------
# Deterministic parameter construction (synthetic, matches module shapes)
# ---------------------------------------------------------------------------

def _conv_params(key, kh, kw, cin, cout):
    k1, k2 = jax.random.split(key)
    bound = 1.0 / math.sqrt(cin * kh * kw)
    w = jax.random.uniform(k1, (kh, kw, cin, cout), minval=-bound, maxval=bound)
    b = jax.random.uniform(k2, (cout,), minval=-bound, maxval=bound)
    return w.astype(jnp.float32), b.astype(jnp.float32)


def _scale_noise(key, size):
    x = jax.random.normal(key, (size,))
    return jnp.sign(x) * jnp.sqrt(jnp.abs(x))


def _noisy_linear_params(key, in_f, out_f, std_init):
    """Effective (training-mode) weights: mu + sigma * epsilon (factorized)."""
    k1, k2, k3, k4 = jax.random.split(key, 4)
    mu_range = 1.0 / math.sqrt(in_f)
    w_mu = jax.random.uniform(k1, (in_f, out_f), minval=-mu_range, maxval=mu_range)
    w_sigma = jnp.full((in_f, out_f), std_init / math.sqrt(in_f))
    b_mu = jax.random.uniform(k2, (out_f,), minval=-mu_range, maxval=mu_range)
    b_sigma = jnp.full((out_f,), std_init / math.sqrt(out_f))
    eps_in = _scale_noise(k3, in_f)
    eps_out = _scale_noise(k4, out_f)
    w = w_mu + w_sigma * jnp.outer(eps_in, eps_out)   # (in, out) == ger(out,in).T
    b = b_mu + b_sigma * eps_out
    return w.astype(jnp.float32), b.astype(jnp.float32)


def make_dqn_params(key, *, action_space, history=4, hidden_size=512,
                    noisy_std=0.1, atoms=200):
    keys = jax.random.split(key, 7)
    p = {}
    p["conv1_w"], p["conv1_b"] = _conv_params(keys[0], 8, 8, history, 32)
    p["conv2_w"], p["conv2_b"] = _conv_params(keys[1], 4, 4, 32, 64)
    p["conv3_w"], p["conv3_b"] = _conv_params(keys[2], 3, 3, 64, 64)
    p["fc_h_v_w"], p["fc_h_v_b"] = _noisy_linear_params(keys[3], FC_IN, hidden_size, noisy_std)
    p["fc_h_a_w"], p["fc_h_a_b"] = _noisy_linear_params(keys[4], FC_IN, hidden_size, noisy_std)
    p["fc_z_v_w"], p["fc_z_v_b"] = _noisy_linear_params(keys[5], hidden_size, atoms, noisy_std)
    p["fc_z_a_w"], p["fc_z_a_b"] = _noisy_linear_params(
        keys[6], hidden_size, action_space * atoms, noisy_std)
    return p


def prepare_inference_params(p, *, atoms=200):
    """One-time (offline) weight prep: conv weights -> bf16 matmul form,
    fc_h_v|fc_h_a fused + NHWC-row-permuted + int8 per-column quantized,
    head weights atoms-padded 200 -> 256 and cast to bf16."""
    ip = {}

    # Conv weights -> (K, 128) bf16 matmul form, bias -> (1, 128) f32.
    for name in ("conv1", "conv2", "conv3"):
        w = p[name + "_w"]
        b = p[name + "_b"]
        kh, kw, cin, cout = w.shape
        np_ = ((cout + 127) // 128) * 128
        ip[name + "_wmat"] = jnp.pad(
            w.reshape(kh * kw * cin, cout), ((0, 0), (0, np_ - cout))
        ).astype(jnp.bfloat16)
        ip[name + "_bias"] = jnp.pad(b, (0, np_ - cout)).reshape(1, np_).astype(jnp.float32)

    hidden = p["fc_z_v_w"].shape[0]

    # Fuse fc_h_v | fc_h_a; permute rows so x can be flattened straight from
    # NHWC (torch flattens NCHW); quantize int8 per output column; pad K.
    c3, h3, w3 = 64, 9, 9
    perm = (jnp.arange(h3)[:, None, None] * w3
            + jnp.arange(w3)[None, :, None]
            + jnp.arange(c3)[None, None, :] * (h3 * w3)).reshape(-1)
    w_h = jnp.concatenate([p["fc_h_v_w"], p["fc_h_a_w"]], axis=1)   # (5184, 2*hidden)
    w_h = w_h[perm, :]                                              # rows in NHWC order
    amax = jnp.max(jnp.abs(w_h), axis=0, keepdims=True)
    scale = jnp.maximum(amax, 1e-12) / 127.0
    w_q = jnp.clip(jnp.round(w_h / scale), -127, 127).astype(jnp.int8)
    ip["w_h_q"] = jnp.pad(w_q, ((0, FC_KP - FC_IN), (0, 0)))        # (5376, 2*hidden) int8
    ip["w_h_scale"] = scale.astype(jnp.float32)                     # (1, 2*hidden)
    ip["b_h"] = jnp.concatenate([p["fc_h_v_b"], p["fc_h_a_b"]])[None, :].astype(jnp.float32)

    # Head weights with atoms padded 200 -> 256 (lane-dense chunks & output).
    pad_a = ATOMS_P - atoms
    ip["w_zv"] = jnp.pad(p["fc_z_v_w"], ((0, 0), (0, pad_a))).astype(jnp.bfloat16)
    ip["b_zv"] = jnp.pad(p["fc_z_v_b"], (0, pad_a))[None, :].astype(jnp.float32)
    action_space = p["fc_z_a_w"].shape[1] // atoms
    w_za = p["fc_z_a_w"].reshape(hidden, action_space, atoms)
    ip["w_za"] = jnp.pad(w_za, ((0, 0), (0, 0), (0, pad_a))).reshape(
        hidden, action_space * ATOMS_P).astype(jnp.bfloat16)
    b_za = p["fc_z_a_b"].reshape(action_space, atoms)
    ip["b_za"] = jnp.pad(b_za, ((0, 0), (0, pad_a))).reshape(
        1, action_space * ATOMS_P).astype(jnp.float32)
    return ip


# ---------------------------------------------------------------------------
# Full forward pass
# ---------------------------------------------------------------------------

def dqn_forward(prep, x_nchw, *, action_space, atoms=200, quantile=True):
    # Input is NCHW (PyTorch convention); convert once to NHWC / bf16.
    x = jnp.transpose(x_nchw, (0, 2, 3, 1)).astype(jnp.bfloat16)

    x = conv2d_relu(x, prep["conv1_wmat"], prep["conv1_bias"],
                    kh=8, kw=8, cout=32, stride=4, pad=1, tm=576)
    x = conv2d_relu(x, prep["conv2_wmat"], prep["conv2_bias"],
                    kh=4, kw=4, cout=64, stride=2, pad=0, tm=256)
    x = conv2d_relu(x, prep["conv3_wmat"], prep["conv3_bias"],
                    kh=3, kw=3, cout=64, stride=1, pad=0, tm=256)

    B = x.shape[0]
    # Flatten straight from NHWC; the torch NCHW-flatten permutation is folded
    # into w_h's rows at prep time, so no runtime transpose is needed.
    x_flat = x.reshape(B, -1)                                      # (B, 5184) bf16
    Bp = max(8, ((B + 7) // 8) * 8)
    x_pad = jnp.pad(x_flat, ((0, Bp - B), (0, FC_KP - FC_IN))).astype(jnp.bfloat16)

    q2d = fc_head_fused(x_pad, prep, action_space=action_space,
                        atoms=atoms, softmax=not quantile)          # (Bp, A*256)
    q = q2d[:B].reshape(B, action_space, ATOMS_P)[:, :, :atoms]
    return q


# ---------------------------------------------------------------------------
# Main
# ---------------------------------------------------------------------------

if __name__ == "__main__":
    ACTION_SPACE = 4
    HISTORY = 4
    ATOMS = 200          # quantile=True in the reference module
    BATCH = 2
    # Spatial size 100x100 is forced by the module's hard-coded flatten to 5184
    # (100 -> conv1(pad=1) -> 24 -> conv2 -> 11 -> conv3 -> 9; 64*9*9 = 5184).
    H = W = 100

    root = jax.random.PRNGKey(0)
    k_params, k_x = jax.random.split(root)

    params = make_dqn_params(k_params, action_space=ACTION_SPACE,
                             history=HISTORY, hidden_size=512,
                             noisy_std=0.1, atoms=ATOMS)
    prep = prepare_inference_params(params, atoms=ATOMS)

    x = jax.random.normal(k_x, (BATCH, HISTORY, H, W), dtype=jnp.float32)

    fwd = jax.jit(functools.partial(dqn_forward, action_space=ACTION_SPACE,
                                    atoms=ATOMS, quantile=True))
    q = fwd(prep, x)
    q = jax.block_until_ready(q)

    assert q.shape == (BATCH, ACTION_SPACE, ATOMS), q.shape
    assert q.dtype == jnp.float32
    assert bool(jnp.all(jnp.isfinite(q)))
    print("KERNEL_OK")
</pallas_src>

<mosaic_0001>
module attributes {stable_mosaic.version = 11 : i64} {
  func.func @_linear_bias_act_kernel(%arg0: i32, %arg1: memref<576x256xbf16, #tpu.memory_space<vmem>>, %arg2: memref<256x128xbf16, #tpu.memory_space<vmem>>, %arg3: memref<1x128xf32, #tpu.memory_space<vmem>>, %arg4: memref<576x128xbf16, #tpu.memory_space<vmem>>) attributes {dimension_semantics = [#tpu.dimension_semantics<parallel>], iteration_bounds = array<i64: 2>, scalar_prefetch = 0 : i64, scratch_operands = 0 : i64, tpu.core_type = #tpu.core_type<tc>, window_params = [{transform_indices = @transform_0, window_bounds = array<i64: 576, 256>}, {pipeline_mode = #tpu.pipeline_mode<synchronous>, transform_indices = @transform_1, window_bounds = array<i64: 256, 128>}, {pipeline_mode = #tpu.pipeline_mode<synchronous>, transform_indices = @transform_2, window_bounds = array<i64: 1, 128>}, {transform_indices = @transform_3, window_bounds = array<i64: 576, 128>}]} {
    %c0 = arith.constant 0 : index
    %c0_0 = arith.constant 0 : index
    %0 = vector.load %arg1[%c0, %c0_0] : memref<576x256xbf16, #tpu.memory_space<vmem>>, vector<576x256xbf16>
    %c0_1 = arith.constant 0 : index
    %c0_2 = arith.constant 0 : index
    %1 = vector.load %arg2[%c0_1, %c0_2] : memref<256x128xbf16, #tpu.memory_space<vmem>>, vector<256x128xbf16>
    %cst = arith.constant dense<0.000000e+00> : vector<576x128xf32>
    %2 = tpu.matmul %0, %1, %cst {dimension_numbers = #tpu.dot_dimension_numbers<[1], [0], [0], [1], [0, 0, 1, 1], [], []>} : vector<576x256xbf16>, vector<256x128xbf16>, vector<576x128xf32> -> vector<576x128xf32>
    %c0_3 = arith.constant 0 : index
    %c0_4 = arith.constant 0 : index
    %3 = vector.load %arg3[%c0_3, %c0_4] : memref<1x128xf32, #tpu.memory_space<vmem>>, vector<1x128xf32>
    %4 = vector.broadcast %3 : vector<1x128xf32> to vector<576x128xf32>
    %5 = arith.addf %2, %4 : vector<576x128xf32>
    %cst_5 = arith.constant 0.000000e+00 : f32
    %6 = vector.broadcast %cst_5 : f32 to vector<576x128xf32>
    %7 = arith.maximumf %5, %6 : vector<576x128xf32>
    %8 = arith.truncf %7 : vector<576x128xf32> to vector<576x128xbf16>
    %c0_6 = arith.constant 0 : index
    %c0_7 = arith.constant 0 : index
    %9 = vector.load %arg4[%c0_6, %c0_7] : memref<576x128xbf16, #tpu.memory_space<vmem>>, vector<576x128xbf16>
    tpu.vector_store %arg4[%c0_6, %c0_7], %8 {strides = array<i32>} : memref<576x128xbf16, #tpu.memory_space<vmem>>, vector<576x128xbf16>,
    return
  }
  func.func @transform_0(%arg0: i32) -> (i32, i32) {
    %c0_i32 = arith.constant 0 : i32
    %c0_i32_0 = arith.constant 0 : i32
    return %arg0, %c0_i32 : i32, i32
  }
  func.func @transform_1(%arg0: i32) -> (i32, i32) {
    %c0_i32 = arith.constant 0 : i32
    %c0_i32_0 = arith.constant 0 : i32
    %c0_i32_1 = arith.constant 0 : i32
    return %c0_i32, %c0_i32_0 : i32, i32
  }
  func.func @transform_2(%arg0: i32) -> (i32, i32) {
    %c0_i32 = arith.constant 0 : i32
    %c0_i32_0 = arith.constant 0 : i32
    %c0_i32_1 = arith.constant 0 : i32
    return %c0_i32, %c0_i32_0 : i32, i32
  }
  func.func @transform_3(%arg0: i32) -> (i32, i32) {
    %c0_i32 = arith.constant 0 : i32
    %c0_i32_0 = arith.constant 0 : i32
    return %arg0, %c0_i32 : i32, i32
  }
}

module attributes {stable_mosaic.version = 11 : i64} {
  func.func @_linear_bias_act_kernel(%arg0: i32, %arg1: memref<256x512xbf16, #tpu.memory_space<vmem>>, %arg2: memref<512x128xbf16, #tpu.memory_space<vmem>>, %arg3: memref<1x128xf32, #tpu.memory_space<vmem>>, %arg4: memref<256x128xbf16, #tpu.memory_space<vmem>>) attributes {dimension_semantics = [#tpu.dimension_semantics<parallel>], iteration_bounds = array<i64: 1>, scalar_prefetch = 0 : i64, scratch_operands = 0 : i64, tpu.core_type = #tpu.core_type<tc>, window_params = [{transform_indices = @transform_0, window_bounds = array<i64: 256, 512>}, {pipeline_mode = #tpu.pipeline_mode<synchronous>, transform_indices = @transform_1, window_bounds = array<i64: 512, 128>}, {pipeline_mode = #tpu.pipeline_mode<synchronous>, transform_indices = @transform_2, window_bounds = array<i64: 1, 128>}, {transform_indices = @transform_3, window_bounds = array<i64: 256, 128>}]} {
    %c0 = arith.constant 0 : index
    %c0_0 = arith.constant 0 : index
    %0 = vector.load %arg1[%c0, %c0_0] : memref<256x512xbf16, #tpu.memory_space<vmem>>, vector<256x512xbf16>
    %c0_1 = arith.constant 0 : index
    %c0_2 = arith.constant 0 : index
    %1 = vector.load %arg2[%c0_1, %c0_2] : memref<512x128xbf16, #tpu.memory_space<vmem>>, vector<512x128xbf16>
    %cst = arith.constant dense<0.000000e+00> : vector<256x128xf32>
    %2 = tpu.matmul %0, %1, %cst {dimension_numbers = #tpu.dot_dimension_numbers<[1], [0], [0], [1], [0, 0, 1, 1], [], []>} : vector<256x512xbf16>, vector<512x128xbf16>, vector<256x128xf32> -> vector<256x128xf32>
    %c0_3 = arith.constant 0 : index
    %c0_4 = arith.constant 0 : index
    %3 = vector.load %arg3[%c0_3, %c0_4] : memref<1x128xf32, #tpu.memory_space<vmem>>, vector<1x128xf32>
    %4 = vector.broadcast %3 : vector<1x128xf32> to vector<256x128xf32>
    %5 = arith.addf %2, %4 : vector<256x128xf32>
    %cst_5 = arith.constant 0.000000e+00 : f32
    %6 = vector.broadcast %cst_5 : f32 to vector<256x128xf32>
    %7 = arith.maximumf %5, %6 : vector<256x128xf32>
    %8 = arith.truncf %7 : vector<256x128xf32> to vector<256x128xbf16>
    %c0_6 = arith.constant 0 : index
    %c0_7 = arith.constant 0 : index
    %9 = vector.load %arg4[%c0_6, %c0_7] : memref<256x128xbf16, #tpu.memory_space<vmem>>, vector<256x128xbf16>
    tpu.vector_store %arg4[%c0_6, %c0_7], %8 {strides = array<i32>} : memref<256x128xbf16, #tpu.memory_space<vmem>>, vector<256x128xbf16>,
    return
  }
  func.func @transform_0(%arg0: i32) -> (i32, i32) {
    %c0_i32 = arith.constant 0 : i32
    %c0_i32_0 = arith.constant 0 : i32
    return %arg0, %c0_i32 : i32, i32
  }
  func.func @transform_1(%arg0: i32) -> (i32, i32) {
    %c0_i32 = arith.constant 0 : i32
    %c0_i32_0 = arith.constant 0 : i32
    %c0_i32_1 = arith.constant 0 : i32
    return %c0_i32, %c0_i32_0 : i32, i32
  }
  func.func @transform_2(%arg0: i32) -> (i32, i32) {
    %c0_i32 = arith.constant 0 : i32
    %c0_i32_0 = arith.constant 0 : i32
    %c0_i32_1 = arith.constant 0 : i32
    return %c0_i32, %c0_i32_0 : i32, i32
  }
  func.func @transform_3(%arg0: i32) -> (i32, i32) {
    %c0_i32 = arith.constant 0 : i32
    %c0_i32_0 = arith.constant 0 : i32
    return %arg0, %c0_i32 : i32, i32
  }
}

module attributes {stable_mosaic.version = 11 : i64} {
  func.func @_linear_bias_act_kernel(%arg0: i32, %arg1: memref<256x576xbf16, #tpu.memory_space<vmem>>, %arg2: memref<576x128xbf16, #tpu.memory_space<vmem>>, %arg3: memref<1x128xf32, #tpu.memory_space<vmem>>, %arg4: memref<256x128xbf16, #tpu.memory_space<vmem>>) attributes {dimension_semantics = [#tpu.dimension_semantics<parallel>], iteration_bounds = array<i64: 1>, scalar_prefetch = 0 : i64, scratch_operands = 0 : i64, tpu.core_type = #tpu.core_type<tc>, window_params = [{transform_indices = @transform_0, window_bounds = array<i64: 256, 576>}, {pipeline_mode = #tpu.pipeline_mode<synchronous>, transform_indices = @transform_1, window_bounds = array<i64: 576, 128>}, {pipeline_mode = #tpu.pipeline_mode<synchronous>, transform_indices = @transform_2, window_bounds = array<i64: 1, 128>}, {transform_indices = @transform_3, window_bounds = array<i64: 256, 128>}]} {
    %c0 = arith.constant 0 : index
    %c0_0 = arith.constant 0 : index
    %0 = vector.load %arg1[%c0, %c0_0] : memref<256x576xbf16, #tpu.memory_space<vmem>>, vector<256x576xbf16>
    %c0_1 = arith.constant 0 : index
    %c0_2 = arith.constant 0 : index
    %1 = vector.load %arg2[%c0_1, %c0_2] : memref<576x128xbf16, #tpu.memory_space<vmem>>, vector<576x128xbf16>
    %cst = arith.constant dense<0.000000e+00> : vector<256x128xf32>
    %2 = tpu.matmul %0, %1, %cst {dimension_numbers = #tpu.dot_dimension_numbers<[1], [0], [0], [1], [0, 0, 1, 1], [], []>} : vector<256x576xbf16>, vector<576x128xbf16>, vector<256x128xf32> -> vector<256x128xf32>
    %c0_3 = arith.constant 0 : index
    %c0_4 = arith.constant 0 : index
    %3 = vector.load %arg3[%c0_3, %c0_4] : memref<1x128xf32, #tpu.memory_space<vmem>>, vector<1x128xf32>
    %4 = vector.broadcast %3 : vector<1x128xf32> to vector<256x128xf32>
    %5 = arith.addf %2, %4 : vector<256x128xf32>
    %cst_5 = arith.constant 0.000000e+00 : f32
    %6 = vector.broadcast %cst_5 : f32 to vector<256x128xf32>
    %7 = arith.maximumf %5, %6 : vector<256x128xf32>
    %8 = arith.truncf %7 : vector<256x128xf32> to vector<256x128xbf16>
    %c0_6 = arith.constant 0 : index
    %c0_7 = arith.constant 0 : index
    %9 = vector.load %arg4[%c0_6, %c0_7] : memref<256x128xbf16, #tpu.memory_space<vmem>>, vector<256x128xbf16>
    tpu.vector_store %arg4[%c0_6, %c0_7], %8 {strides = array<i32>} : memref<256x128xbf16, #tpu.memory_space<vmem>>, vector<256x128xbf16>,
    return
  }
  func.func @transform_0(%arg0: i32) -> (i32, i32) {
    %c0_i32 = arith.constant 0 : i32
    %c0_i32_0 = arith.constant 0 : i32
    return %arg0, %c0_i32 : i32, i32
  }
  func.func @transform_1(%arg0: i32) -> (i32, i32) {
    %c0_i32 = arith.constant 0 : i32
    %c0_i32_0 = arith.constant 0 : i32
    %c0_i32_1 = arith.constant 0 : i32
    return %c0_i32, %c0_i32_0 : i32, i32
  }
  func.func @transform_2(%arg0: i32) -> (i32, i32) {
    %c0_i32 = arith.constant 0 : i32
    %c0_i32_0 = arith.constant 0 : i32
    %c0_i32_1 = arith.constant 0 : i32
    return %c0_i32, %c0_i32_0 : i32, i32
  }
  func.func @transform_3(%arg0: i32) -> (i32, i32) {
    %c0_i32 = arith.constant 0 : i32
    %c0_i32_0 = arith.constant 0 : i32
    return %arg0, %c0_i32 : i32, i32
  }
}

module attributes {stable_mosaic.version = 11 : i64} {
  func.func @_fc_head_kernel(%arg0: i32, %arg1: memref<8x2688xbf16, #tpu.memory_space<vmem>>, %arg2: memref<2688x1024xi8, #tpu.memory_space<vmem>>, %arg3: memref<1x1024xf32, #tpu.memory_space<vmem>>, %arg4: memref<1x1024xf32, #tpu.memory_space<vmem>>, %arg5: memref<512x256xbf16, #tpu.memory_space<vmem>>, %arg6: memref<1x256xf32, #tpu.memory_space<vmem>>, %arg7: memref<512x1024xbf16, #tpu.memory_space<vmem>>, %arg8: memref<1x1024xf32, #tpu.memory_space<vmem>>, %arg9: memref<8x1024xf32, #tpu.memory_space<vmem>>, %arg10: memref<8x1024xf32, #tpu.memory_space<vmem>>) attributes {dimension_semantics = [#tpu.dimension_semantics<arbitrary>], iteration_bounds = array<i64: 2>, scalar_prefetch = 0 : i64, scratch_operands = 1 : i64, tpu.core_type = #tpu.core_type<tc>, window_params = [{transform_indices = @transform_0, window_bounds = array<i64: 8, 2688>}, {transform_indices = @transform_1, window_bounds = array<i64: 2688, 1024>}, {pipeline_mode = #tpu.pipeline_mode<synchronous>, transform_indices = @transform_2, window_bounds = array<i64: 1, 1024>}, {pipeline_mode = #tpu.pipeline_mode<synchronous>, transform_indices = @transform_3, window_bounds = array<i64: 1, 1024>}, {pipeline_mode = #tpu.pipeline_mode<synchronous>, transform_indices = @transform_4, window_bounds = array<i64: 512, 256>}, {pipeline_mode = #tpu.pipeline_mode<synchronous>, transform_indices = @transform_5, window_bounds = array<i64: 1, 256>}, {pipeline_mode = #tpu.pipeline_mode<synchronous>, transform_indices = @transform_6, window_bounds = array<i64: 512, 1024>}, {pipeline_mode = #tpu.pipeline_mode<synchronous>, transform_indices = @transform_7, window_bounds = array<i64: 1, 1024>}, {pipeline_mode = #tpu.pipeline_mode<synchronous>, transform_indices = @transform_8, window_bounds = array<i64: 8, 1024>}]} {
    %c0_i32 = arith.constant 0 : i32
    %0 = arith.cmpi eq, %arg0, %c0_i32 : i32
    %1 = arith.extui %0 : i1 to i32
    %c0_i32_0 = arith.constant 0 : i32
    %2 = arith.cmpi ne, %1, %c0_i32_0 : i32
    scf.if %2 {
      %cst_9 = arith.constant 0.000000e+00 : f32
      %13 = vector.broadcast %cst_9 : f32 to vector<8x1024xf32>
      %c0_10 = arith.constant 0 : index
      %c0_11 = arith.constant 0 : index
      %14 = vector.load %arg10[%c0_10, %c0_11] : memref<8x1024xf32, #tpu.memory_space<vmem>>, vector<8x1024xf32>
      tpu.vector_store %arg10[%c0_10, %c0_11], %13 {strides = array<i32>} : memref<8x1024xf32, #tpu.memory_space<vmem>>, vector<8x1024xf32>,
    } else {
    }
    %c0 = arith.constant 0 : index
    %c0_1 = arith.constant 0 : index
    %3 = vector.load %arg10[%c0, %c0_1] : memref<8x1024xf32, #tpu.memory_space<vmem>>, vector<8x1024xf32>
    %c0_2 = arith.constant 0 : index
    %c0_3 = arith.constant 0 : index
    %4 = vector.load %arg1[%c0_2, %c0_3] : memref<8x2688xbf16, #tpu.memory_space<vmem>>, vector<8x2688xbf16>
    %c0_4 = arith.constant 0 : index
    %c0_5 = arith.constant 0 : index
    %5 = vector.load %arg2[%c0_4, %c0_5] : memref<2688x1024xi8, #tpu.memory_space<vmem>>, vector<2688x1024xi8>
    %6 = arith.sitofp %5 : vector<2688x1024xi8> to vector<2688x1024xbf16>
    %cst = arith.constant dense<0.000000e+00> : vector<8x1024xf32>
    %7 = tpu.matmul %4, %6, %cst {dimension_numbers = #tpu.dot_dimension_numbers<[1], [0], [0], [1], [0, 0, 1, 1], [], []>} : vector<8x2688xbf16>, vector<2688x1024xbf16>, vector<8x1024xf32> -> vector<8x1024xf32>
    %8 = arith.addf %3, %7 : vector<8x1024xf32>
    %c0_6 = arith.constant 0 : index
    %c0_7 = arith.constant 0 : index
    %9 = vector.load %arg10[%c0_6, %c0_7] : memref<8x1024xf32, #tpu.memory_space<vmem>>, vector<8x1024xf32>
    tpu.vector_store %arg10[%c0_6, %c0_7], %8 {strides = array<i32>} : memref<8x1024xf32, #tpu.memory_space<vmem>>, vector<8x1024xf32>,
    %c1_i32 = arith.constant 1 : i32
    %10 = arith.cmpi eq, %arg0, %c1_i32 : i32
    %11 = arith.extui %10 : i1 to i32
    %c0_i32_8 = arith.constant 0 : i32
    %12 = arith.cmpi ne, %11, %c0_i32_8 : i32
    scf.if %12 {
      %c0_9 = arith.constant 0 : index
      %c0_10 = arith.constant 0 : index
      %13 = vector.load %arg10[%c0_9, %c0_10] : memref<8x1024xf32, #tpu.memory_space<vmem>>, vector<8x1024xf32>
      %c0_11 = arith.constant 0 : index
      %c0_12 = arith.constant 0 : index
      %14 = vector.load %arg3[%c0_11, %c0_12] : memref<1x1024xf32, #tpu.memory_space<vmem>>, vector<1x1024xf32>
      %15 = vector.broadcast %14 : vector<1x1024xf32> to vector<8x1024xf32>
      %16 = arith.mulf %13, %15 : vector<8x1024xf32>
      %c0_13 = arith.constant 0 : index
      %c0_14 = arith.constant 0 : index
      %17 = vector.load %arg4[%c0_13, %c0_14] : memref<1x1024xf32, #tpu.memory_space<vmem>>, vector<1x1024xf32>
      %18 = vector.broadcast %17 : vector<1x1024xf32> to vector<8x1024xf32>
      %19 = arith.addf %16, %18 : vector<8x1024xf32>
      %cst_15 = arith.constant 0.000000e+00 : f32
      %20 = vector.broadcast %cst_15 : f32 to vector<8x1024xf32>
      %21 = arith.maximumf %19, %20 : vector<8x1024xf32>
      %22 = vector.extract_strided_slice %21 {offsets = [0, 0], sizes = [8, 512], strides = [1, 1]} : vector<8x1024xf32> to vector<8x512xf32>
      %23 = arith.truncf %22 : vector<8x512xf32> to vector<8x512xbf16>
      %24 = vector.extract_strided_slice %21 {offsets = [0, 512], sizes = [8, 512], strides = [1, 1]} : vector<8x1024xf32> to vector<8x512xf32>
      %25 = arith.truncf %24 : vector<8x512xf32> to vector<8x512xbf16>
      %c0_16 = arith.constant 0 : index
      %c0_17 = arith.constant 0 : index
      %26 = vector.load %arg5[%c0_16, %c0_17] : memref<512x256xbf16, #tpu.memory_space<vmem>>, vector<512x256xbf16>
      %cst_18 = arith.constant dense<0.000000e+00> : vector<8x256xf32>
      %27 = tpu.matmul %23, %26, %cst_18 {dimension_numbers = #tpu.dot_dimension_numbers<[1], [0], [0], [1], [0, 0, 1, 1], [], []>} : vector<8x512xbf16>, vector<512x256xbf16>, vector<8x256xf32> -> vector<8x256xf32>
      %c0_19 = arith.constant 0 : index
      %c0_20 = arith.constant 0 : index
      %28 = vector.load %arg6[%c0_19, %c0_20] : memref<1x256xf32, #tpu.memory_space<vmem>>, vector<1x256xf32>
      %29 = vector.broadcast %28 : vector<1x256xf32> to vector<8x256xf32>
      %30 = arith.addf %27, %29 : vector<8x256xf32>
      %c0_21 = arith.constant 0 : index
      %c0_22 = arith.constant 0 : index
      %31 = vector.load %arg7[%c0_21, %c0_22] : memref<512x1024xbf16, #tpu.memory_space<vmem>>, vector<512x1024xbf16>
      %cst_23 = arith.constant dense<0.000000e+00> : vector<8x1024xf32>
      %32 = tpu.matmul %25, %31, %cst_23 {dimension_numbers = #tpu.dot_dimension_numbers<[1], [0], [0], [1], [0, 0, 1, 1], [], []>} : vector<8x512xbf16>, vector<512x1024xbf16>, vector<8x1024xf32> -> vector<8x1024xf32>
      %c0_24 = arith.constant 0 : index
      %c0_25 = arith.constant 0 : index
      %33 = vector.load %arg8[%c0_24, %c0_25] : memref<1x1024xf32, #tpu.memory_space<vmem>>, vector<1x1024xf32>
      %34 = vector.broadcast %33 : vector<1x1024xf32> to vector<8x1024xf32>
      %35 = arith.addf %32, %34 : vector<8x1024xf32>
      %36 = vector.extract_strided_slice %35 {offsets = [0, 0], sizes = [8, 256], strides = [1, 1]} : vector<8x1024xf32> to vector<8x256xf32>
      %37 = vector.extract_strided_slice %35 {offsets = [0, 256], sizes = [8, 256], strides = [1, 1]} : vector<8x1024xf32> to vector<8x256xf32>
      %38 = vector.extract_strided_slice %35 {offsets = [0, 512], sizes = [8, 256], strides = [1, 1]} : vector<8x1024xf32> to vector<8x256xf32>
      %39 = vector.extract_strided_slice %35 {offsets = [0, 768], sizes = [8, 256], strides = [1, 1]} : vector<8x1024xf32> to vector<8x256xf32>
      %40 = arith.addf %36, %37 : vector<8x256xf32>
      %41 = arith.addf %40, %38 : vector<8x256xf32>
      %42 = arith.addf %41, %39 : vector<8x256xf32>
      %cst_26 = arith.constant 2.500000e-01 : f32
      %43 = vector.broadcast %cst_26 : f32 to vector<8x256xf32>
      %44 = arith.mulf %42, %43 : vector<8x256xf32>
      %45 = arith.addf %30, %36 : vector<8x256xf32>
      %46 = arith.subf %45, %44 : vector<8x256xf32>
      %47 = arith.addf %30, %37 : vector<8x256xf32>
      %48 = arith.subf %47, %44 : vector<8x256xf32>
      %49 = arith.addf %30, %38 : vector<8x256xf32>
      %50 = arith.subf %49, %44 : vector<8x256xf32>
      %51 = arith.addf %30, %39 : vector<8x256xf32>
      %52 = arith.subf %51, %44 : vector<8x256xf32>
      %53 = tpu.concatenate %46, %48, %50, %52 in 1 : vector<8x256xf32>, vector<8x256xf32>, vector<8x256xf32>, vector<8x256xf32> -> vector<8x1024xf32>
      %c0_27 = arith.constant 0 : index
      %c0_28 = arith.constant 0 : index
      %54 = vector.load %arg9[%c0_27, %c0_28] : memref<8x1024xf32, #tpu.memory_space<vmem>>, vector<8x1024xf32>
      tpu.vector_store %arg9[%c0_27, %c0_28], %53 {strides = array<i32>} : memref<8x1024xf32, #tpu.memory_space<vmem>>, vector<8x1024xf32>,
    } else {
    }
    return
  }
  func.func @transform_0(%arg0: i32) -> (i32, i32) {
    %c0_i32 = arith.constant 0 : i32
    %c0_i32_0 = arith.constant 0 : i32
    return %c0_i32, %arg0 : i32, i32
  }
  func.func @transform_1(%arg0: i32) -> (i32, i32) {
    %c0_i32 = arith.constant 0 : i32
    %c0_i32_0 = arith.constant 0 : i32
    return %arg0, %c0_i32 : i32, i32
  }
  func.func @transform_2(%arg0: i32) -> (i32, i32) {
    %c0_i32 = arith.constant 0 : i32
    %c0_i32_0 = arith.constant 0 : i32
    %c0_i32_1 = arith.constant 0 : i32
    return %c0_i32, %c0_i32_0 : i32, i32
  }
  func.func @transform_3(%arg0: i32) -> (i32, i32) {
    %c0_i32 = arith.constant 0 : i32
    %c0_i32_0 = arith.constant 0 : i32
    %c0_i32_1 = arith.constant 0 : i32
    return %c0_i32, %c0_i32_0 : i32, i32
  }
  func.func @transform_4(%arg0: i32) -> (i32, i32) {
    %c0_i32 = arith.constant 0 : i32
    %c0_i32_0 = arith.constant 0 : i32
    %c0_i32_1 = arith.constant 0 : i32
    return %c0_i32, %c0_i32_0 : i32, i32
  }
  func.func @transform_5(%arg0: i32) -> (i32, i32) {
    %c0_i32 = arith.constant 0 : i32
    %c0_i32_0 = arith.constant 0 : i32
    %c0_i32_1 = arith.constant 0 : i32
    return %c0_i32, %c0_i32_0 : i32, i32
  }
  func.func @transform_6(%arg0: i32) -> (i32, i32) {
    %c0_i32 = arith.constant 0 : i32
    %c0_i32_0 = arith.constant 0 : i32
    %c0_i32_1 = arith.constant 0 : i32
    return %c0_i32, %c0_i32_0 : i32, i32
  }
  func.func @transform_7(%arg0: i32) -> (i32, i32) {
    %c0_i32 = arith.constant 0 : i32
    %c0_i32_0 = arith.constant 0 : i32
    %c0_i32_1 = arith.constant 0 : i32
    return %c0_i32, %c0_i32_0 : i32, i32
  }
  func.func @transform_8(%arg0: i32) -> (i32, i32) {
    %c0_i32 = arith.constant 0 : i32
    %c0_i32_0 = arith.constant 0 : i32
    %c0_i32_1 = arith.constant 0 : i32
    return %c0_i32, %c0_i32_0 : i32, i32
  }
}

</mosaic_0001>

<llo_original>
// kernel: dqn_forward.4
$region0: #{dqn_forward.4}
  #allocation0 [shape = 'u32[]', space=smem, size = 0x4, offset = 0x4, fixed_abs, tag = 'smem constant byte address 0x4 - core index']
  #allocation1 [shape = 'u32[144,128]{1,0:T(1,128)}', space=vmem, size = 0x12000, scoped, tag = 'internal scratch']
  %s0 = inlined_call_operand.vmem [shape: bf16[1152,256], index: 0, kind: input, shape index: {}]
  %s1 = inlined_call_operand.vmem [shape: bf16[256,128], index: 1, kind: input, shape index: {}]
  %s2 = inlined_call_operand.vmem [shape: f32[1,128], index: 2, kind: input, shape index: {}]
  %s3 = inlined_call_operand.vmem [shape: bf16[1152,128], index: 3, kind: output, shape index: {}]
  %s4 = sld [smem:[#allocation0]]
  $region45: #{dqn_forward.4} parent=0
    _
  %s6 = ssub.s32 1, %s4
  %s7 = scalar_select 0, %s6, %s4
  loop: start=0, step=1, limit=4
  $region2: #{dqn_forward.4} parent=0 // loop_pre_header
    _
  $region3: #{dqn_forward.4} parent=0 // loop_header
    %s9 = sphi 0, %s13
    %p10 = scmp.ge.s32.totalorder %s9, 4
    %s19 = sphi 0, %s21
    %s22 = sphi 0, %s19
    %s23 = sphi 0, %s22
    %s39 = sphi 0, %s23
    %s43 = sphi 0, %s43
    %s45 = sphi 0, %s43
    %s46 = sphi 0, %s45
    %s60 = sphi 0, %s46
    %s64 = sphi 0, %s64
    %s66 = sphi 0, %s64
    %s67 = sphi 0, %s66
    %s81 = sphi 0, %s67
    %s87 = sphi 0, %s89
    %s90 = sphi 0, %s87
    %s91 = sphi 0, %s90
    %s107 = sphi 0, %s91
  $region4: #{dqn_forward.4} parent=0 // loop_header_branch
    %12 = sbr.rel (%p10) target = $region8
  $region5: #{dqn_forward.4} parent=0 // loop_body
    %s14 = ssub.s32 %s9, 1
    %s15 = ssub.s32 %s9, 2
    %s16 = sadd.s32 %s9, 1
    %s17 = ssub.s32 %s9, %s16
    %p18 = scmp.eq.s32.totalorder %s17, 0
    %s20 = sadd.s32 %s19, 1
    %s21 = scalar_select %p18, %s19, %s20
    %p24 = pneg %p18
    %p25 = scmp.eq.s32.totalorder %s9, 1
    %p26 = por %p24, %p25
    %p27 = scmp.ne.s32.totalorder %s19, %s22
    %p28 = scmp.eq.s32.totalorder %s9, 0
    %p29 = por %p27, %p28
    %p30 = scmp.ne.s32.totalorder %s19, %s22
    %p31 = scmp.eq.s32.totalorder %s14, 1
    %p32 = por %p30, %p31
    %p33 = scmp.ne.s32.totalorder %s22, %s23
    %p34 = scmp.eq.s32.totalorder %s14, 0
    %p35 = por %p33, %p34
    %p36 = scmp.ne.s32.totalorder %s22, %s23
    %p37 = scmp.eq.s32.totalorder %s15, 1
    %p38 = por %p36, %p37
    %p40 = scmp.ne.s32.totalorder %s23, %s39
    %p41 = scmp.eq.s32.totalorder %s15, 0
    %p42 = por %p40, %p41
    %s44 = sadd.s32 %s43, 1
    %p47 = scmp.eq.s32.totalorder %s9, 1
    %p48 = scmp.ne.s32.totalorder %s43, %s45
    %p49 = scmp.eq.s32.totalorder %s9, 0
    %p50 = por %p48, %p49
    %p51 = scmp.ne.s32.totalorder %s43, %s45
    %p52 = scmp.eq.s32.totalorder %s14, 1
    %p53 = por %p51, %p52
    %p54 = scmp.ne.s32.totalorder %s45, %s46
    %p55 = scmp.eq.s32.totalorder %s14, 0
    %p56 = por %p54, %p55
    %p57 = scmp.ne.s32.totalorder %s45, %s46
    %p58 = scmp.eq.s32.totalorder %s15, 1
    %p59 = por %p57, %p58
    %p61 = scmp.ne.s32.totalorder %s46, %s60
    %p62 = scmp.eq.s32.totalorder %s15, 0
    %p63 = por %p61, %p62
    %s65 = sadd.s32 %s64, 1
    %p68 = scmp.eq.s32.totalorder %s9, 1
    %p69 = scmp.ne.s32.totalorder %s64, %s66
    %p70 = scmp.eq.s32.totalorder %s9, 0
    %p71 = por %p69, %p70
    %p72 = scmp.ne.s32.totalorder %s64, %s66
    %p73 = scmp.eq.s32.totalorder %s14, 1
    %p74 = por %p72, %p73
    %p75 = scmp.ne.s32.totalorder %s66, %s67
    %p76 = scmp.eq.s32.totalorder %s14, 0
    %p77 = por %p75, %p76
    %p78 = scmp.ne.s32.totalorder %s66, %s67
    %p79 = scmp.eq.s32.totalorder %s15, 1
    %p80 = por %p78, %p79
    %p82 = scmp.ne.s32.totalorder %s67, %s81
    %p83 = scmp.eq.s32.totalorder %s15, 0
    %p84 = por %p82, %p83
    %s85 = ssub.s32 %s9, %s16
    %p86 = scmp.eq.s32.totalorder %s85, 0
    %s88 = sadd.s32 %s87, 1
    %s89 = scalar_select %p86, %s87, %s88
    %p92 = pneg %p86
    %p93 = scmp.eq.s32.totalorder %s9, 1
    %p94 = por %p92, %p93
    %p95 = scmp.ne.s32.totalorder %s87, %s90
    %p96 = scmp.eq.s32.totalorder %s9, 0
    %p97 = por %p95, %p96
    %p98 = scmp.ne.s32.totalorder %s87, %s90
    %p99 = scmp.eq.s32.totalorder %s14, 1
    %p100 = por %p98, %p99
    %p101 = scmp.ne.s32.totalorder %s90, %s91
    %p102 = scmp.eq.s32.totalorder %s14, 0
    %p103 = por %p101, %p102
    %p104 = scmp.ne.s32.totalorder %s90, %s91
    %p105 = scmp.eq.s32.totalorder %s15, 1
    %p106 = por %p104, %p105
    %p108 = scmp.ne.s32.totalorder %s91, %s107
    %p109 = scmp.eq.s32.totalorder %s15, 0
    %p110 = por %p108, %p109
    %p111 = scmp.le.s32.totalorder 1, %s9
    %p112 = scmp.lt.s32.totalorder %s9, 3
    %p113 = pnand %p111, %p112
    %p114 = pneg %p113
    // Predicated region
    $region9: #{dqn_forward.4} parent=5 // pred_check
      _
    $region10: #{dqn_forward.4} parent=5 // pred_check_branch
      %116 = sbr.rel (%p113) target = $region12
    $region11: #{dqn_forward.4} parent=5 // pred_region
      %s117 = ssub.s32 %s9, 1
      // Predicated region
      $region13: #{dqn_forward.4} parent=11 // pred_check
        %p118 = pneg %p56
      $region14: #{dqn_forward.4} parent=11 // pred_check_branch
        %120 = sbr.rel (%p118) target = $region16
      $region15: #{dqn_forward.4} parent=11 // pred_region
        _
      $region16: #{dqn_forward.4} parent=11 // pred_fallthru
        _
      // Predicated region
      $region17: #{dqn_forward.4} parent=11 // pred_check
        %p121 = pneg %p77
      $region18: #{dqn_forward.4} parent=11 // pred_check_branch
        %123 = sbr.rel (%p121) target = $region20
      $region19: #{dqn_forward.4} parent=11 // pred_region
        _
      $region20: #{dqn_forward.4} parent=11 // pred_fallthru
        _
    $region12: #{dqn_forward.4} parent=5 // pred_fallthru
      _
    %p124 = scmp.lt.s32.totalorder %s9, 2
    // Predicated region
    $region21: #{dqn_forward.4} parent=5 // pred_check
      %p125 = pneg %p124
    $region22: #{dqn_forward.4} parent=5 // pred_check_branch
      %127 = sbr.rel (%p125) target = $region24
    $region23: #{dqn_forward.4} parent=5 // pred_region
      // Predicated region
      $region25: #{dqn_forward.4} parent=23 // pred_check
        %p128 = pneg %p29
      $region26: #{dqn_forward.4} parent=23 // pred_check_branch
        %130 = sbr.rel (%p128) target = $region28
      $region27: #{dqn_forward.4} parent=23 // pred_region
        %s131 = smul.u32 72, %s9
        %p132 = scmp.lt.s32.totalorder %s131, 143
        %s133 = scalar_select %p132, %s131, 143
        %s134 = smul.addr %s133, 2
        %s135 = smul.addr %s134, 4
        %s136 = scalar_lea.vmem %s0, %s135
        %s137 = smul.u32 72, %s9
      $region28: #{dqn_forward.4} parent=23 // pred_fallthru
        _
    $region24: #{dqn_forward.4} parent=5 // pred_fallthru
      _
    %p138 = scmp.le.s32.totalorder 1, %s9
    %p139 = scmp.lt.s32.totalorder %s9, 3
    %p140 = pnand %p138, %p139
    %p141 = pneg %p140
    // Predicated region
    $region29: #{dqn_forward.4} parent=5 // pred_check
      _
    $region30: #{dqn_forward.4} parent=5 // pred_check_branch
      %143 = sbr.rel (%p140) target = $region32
    $region31: #{dqn_forward.4} parent=5 // pred_region
      %s144 = ssub.s32 %s9, 1
      %s145 = smul.u32 72, %s14
      %p146 = scmp.lt.s32.totalorder %s145, 143
      %s147 = scalar_select %p146, %s145, 143
      %s148 = smul.addr %s147, 2
      %s149 = smul.addr %s148, 4
      %s150 = scalar_lea.vmem %s0, %s149
      %p151 = pneg %p35
      %p152 = pneg %p32
      %p153 = pneg %p56
      %p154 = pneg %p53
      %p155 = pneg %p77
      %p156 = pneg %p74
      %p157 = pneg %p103
      %p158 = pneg %p100
      %s159 = smul.u32 72, %s14
      %p160 = scmp.lt.s32.totalorder %s159, 143
      %s161 = scalar_select %p160, %s159, 143
      %s162 = smul.addr %s161, 4
      %s163 = scalar_lea.vmem %s3, %s162
      %s164 = smul.u32 72, %s14
      %p165 = scmp.lt.s32.totalorder %s164, 143
      %s166 = scalar_select %p165, %s164, 143
      %s167 = smul.addr %s166, 2
      %s168 = smul.addr %s167, 4
      %s169 = scalar_lea.vmem %s0, %s168
      %s170 = smul.u32 72, %s14
      %s171 = smul.u32 72, %s14
      %p172 = scmp.lt.s32.totalorder %s171, 143
      %s173 = scalar_select %p172, %s171, 143
      %s174 = smul.addr %s173, 4
      %s175 = scalar_lea.vmem %s3, %s174
      %s176 = smul.u32 72, %s14
      %v178 = vld [vmem:[%s169] sm:$0xff]
      %v179 = vld [vmem:[%s169 + $0x8] sm:$0xff]
      %v180 = vld [vmem:[%s169 + $0x10] sm:$0xff]
      %v181 = vld [vmem:[%s169 + $0x18] sm:$0xff]
      %v182 = vld [vmem:[%s169 + $0x20] sm:$0xff]
      %v183 = vld [vmem:[%s169 + $0x28] sm:$0xff]
      %v184 = vld [vmem:[%s169 + $0x30] sm:$0xff]
      %v185 = vld [vmem:[%s169 + $0x38] sm:$0xff]
      %v186 = vld [vmem:[%s169 + $0x40] sm:$0xff]
      %v187 = vld [vmem:[%s169 + $0x48] sm:$0xff]
      %v188 = vld [vmem:[%s169 + $0x50] sm:$0xff]
      %v189 = vld [vmem:[%s169 + $0x58] sm:$0xff]
      %v190 = vld [vmem:[%s169 + $0x60] sm:$0xff]
      %v191 = vld [vmem:[%s169 + $0x68] sm:$0xff]
      %v192 = vld [vmem:[%s169 + $0x70] sm:$0xff]
      %v193 = vld [vmem:[%s169 + $0x78] sm:$0xff]
      %v194 = vld [vmem:[%s169 + $0x80] sm:$0xff]
      %v195 = vld [vmem:[%s169 + $0x88] sm:$0xff]
      %v196 = vld [vmem:[%s169 + $0x90] sm:$0xff]
      %v197 = vld [vmem:[%s169 + $0x98] sm:$0xff]
      %v198 = vld [vmem:[%s169 + $0xa0] sm:$0xff]
      %v199 = vld [vmem:[%s169 + $0xa8] sm:$0xff]
      %v200 = vld [vmem:[%s169 + $0xb0] sm:$0xff]
      %v201 = vld [vmem:[%s169 + $0xb8] sm:$0xff]
      %v202 = vld [vmem:[%s169 + $0xc0] sm:$0xff]
      %v203 = vld [vmem:[%s169 + $0xc8] sm:$0xff]
      %v204 = vld [vmem:[%s169 + $0xd0] sm:$0xff]
      %v205 = vld [vmem:[%s169 + $0xd8] sm:$0xff]
      %v206 = vld [vmem:[%s169 + $0xe0] sm:$0xff]
      %v207 = vld [vmem:[%s169 + $0xe8] sm:$0xff]
      %v208 = vld [vmem:[%s169 + $0xf0] sm:$0xff]
      %v209 = vld [vmem:[%s169 + $0xf8] sm:$0xff]
      %v210 = vld [vmem:[%s169 + $0x100] sm:$0xff]
      %v211 = vld [vmem:[%s169 + $0x108] sm:$0xff]
      %v212 = vld [vmem:[%s169 + $0x110] sm:$0xff]
      %v213 = vld [vmem:[%s169 + $0x118] sm:$0xff]
      %v214 = vld [vmem:[%s169 + $0x120] sm:$0xff]
      %v215 = vld [vmem:[%s169 + $0x128] sm:$0xff]
      %v216 = vld [vmem:[%s169 + $0x130] sm:$0xff]
      %v217 = vld [vmem:[%s169 + $0x138] sm:$0xff]
      %v218 = vld [vmem:[%s169 + $0x140] sm:$0xff]
      %v219 = vld [vmem:[%s169 + $0x148] sm:$0xff]
      %v220 = vld [vmem:[%s169 + $0x150] sm:$0xff]
      %v221 = vld [vmem:[%s169 + $0x158] sm:$0xff]
      %v222 = vld [vmem:[%s169 + $0x160] sm:$0xff]
      %v223 = vld [vmem:[%s169 + $0x168] sm:$0xff]
      %v224 = vld [vmem:[%s169 + $0x170] sm:$0xff]
      %v225 = vld [vmem:[%s169 + $0x178] sm:$0xff]
      %v226 = vld [vmem:[%s169 + $0x180] sm:$0xff]
      %v227 = vld [vmem:[%s169 + $0x188] sm:$0xff]
      %v228 = vld [vmem:[%s169 + $0x190] sm:$0xff]
      %v229 = vld [vmem:[%s169 + $0x198] sm:$0xff]
      %v230 = vld [vmem:[%s169 + $0x1a0] sm:$0xff]
      %v231 = vld [vmem:[%s169 + $0x1a8] sm:$0xff]
      %v232 = vld [vmem:[%s169 + $0x1b0] sm:$0xff]
      %v233 = vld [vmem:[%s169 + $0x1b8] sm:$0xff]
      %v234 = vld [vmem:[%s169 + $0x1c0] sm:$0xff]
      %v235 = vld [vmem:[%s169 + $0x1c8] sm:$0xff]
      %v236 = vld [vmem:[%s169 + $0x1d0] sm:$0xff]
      %v237 = vld [vmem:[%s169 + $0x1d8] sm:$0xff]
      %v238 = vld [vmem:[%s169 + $0x1e0] sm:$0xff]
      %v239 = vld [vmem:[%s169 + $0x1e8] sm:$0xff]
      %v240 = vld [vmem:[%s169 + $0x1f0] sm:$0xff]
      %v241 = vld [vmem:[%s169 + $0x1f8] sm:$0xff]
      %v242 = vld [vmem:[%s169 + $0x200] sm:$0xff]
      %v243 = vld [vmem:[%s169 + $0x208] sm:$0xff]
      %v244 = vld [vmem:[%s169 + $0x210] sm:$0xff]
      %v245 = vld [vmem:[%s169 + $0x218] sm:$0xff]
      %v246 = vld [vmem:[%s169 + $0x220] sm:$0xff]
      %v247 = vld [vmem:[%s169 + $0x228] sm:$0xff]
      %v248 = vld [vmem:[%s169 + $0x230] sm:$0xff]
      %v249 = vld [vmem:[%s169 + $0x238] sm:$0xff]
      %v250 = vld [vmem:[%s1] sm:$0xf]
      %v251 = vld [vmem:[%s1 + $0x4] sm:$0xf]
      %v252 = vld [vmem:[%s1 + $0x8] sm:$0xf]
      %v253 = vld [vmem:[%s1 + $0xc] sm:$0xf]
      %v254 = vld [vmem:[%s1 + $0x10] sm:$0xf]
      %v255 = vld [vmem:[%s1 + $0x14] sm:$0xf]
      %v256 = vld [vmem:[%s1 + $0x18] sm:$0xf]
      %v257 = vld [vmem:[%s1 + $0x1c] sm:$0xf]
      %v258 = vld [vmem:[%s1 + $0x20] sm:$0xf]
      %v259 = vld [vmem:[%s1 + $0x24] sm:$0xf]
      %v260 = vld [vmem:[%s1 + $0x28] sm:$0xf]
      %v261 = vld [vmem:[%s1 + $0x2c] sm:$0xf]
      %v262 = vld [vmem:[%s1 + $0x30] sm:$0xf]
      %v263 = vld [vmem:[%s1 + $0x34] sm:$0xf]
      %v264 = vld [vmem:[%s1 + $0x38] sm:$0xf]
      %v265 = vld [vmem:[%s1 + $0x3c] sm:$0xf]
      %v266 = vld [vmem:[%s1 + $0x40] sm:$0xf]
      %v267 = vld [vmem:[%s1 + $0x44] sm:$0xf]
      %v268 = vld [vmem:[%s1 + $0x48] sm:$0xf]
      %v269 = vld [vmem:[%s1 + $0x4c] sm:$0xf]
      %v270 = vld [vmem:[%s1 + $0x50] sm:$0xf]
      %v271 = vld [vmem:[%s1 + $0x54] sm:$0xf]
      %v272 = vld [vmem:[%s1 + $0x58] sm:$0xf]
      %v273 = vld [vmem:[%s1 + $0x5c] sm:$0xf]
      %v274 = vld [vmem:[%s1 + $0x60] sm:$0xf]
      %v275 = vld [vmem:[%s1 + $0x64] sm:$0xf]
      %v276 = vld [vmem:[%s1 + $0x68] sm:$0xf]
      %v277 = vld [vmem:[%s1 + $0x6c] sm:$0xf]
      %v278 = vld [vmem:[%s1 + $0x70] sm:$0xf]
      %v279 = vld [vmem:[%s1 + $0x74] sm:$0xf]
      %v280 = vld [vmem:[%s1 + $0x78] sm:$0xf]
      %v281 = vld [vmem:[%s1 + $0x7c] sm:$0xf]
      %v282 = vld [vmem:[%s2] sm:$0x1]
      %v284 = vlaneseq
      %v285 = vshrl.u32 %v284, 7
      %v286 = vsub.s32 0, %v285
      %v287 = vrot.slane %v282, %v286
      %v361 = vunpack.c.l.b16 %v178
      %v362 = vunpack.c.h.b16 %v178
      %v363 = vunpack.c.l.b16 %v179
      %v364 = vunpack.c.h.b16 %v179
      %v365 = vunpack.c.l.b16 %v180
      %v366 = vunpack.c.h.b16 %v180
      %v367 = vunpack.c.l.b16 %v181
      %v368 = vunpack.c.h.b16 %v181
      %v369 = vunpack.c.l.b16 %v182
      %v370 = vunpack.c.h.b16 %v182
      %v371 = vunpack.c.l.b16 %v183
      %v372 = vunpack.c.h.b16 %v183
      %v373 = vunpack.c.l.b16 %v184
      %v374 = vunpack.c.h.b16 %v184
      %v375 = vunpack.c.l.b16 %v185
      %v376 = vunpack.c.h.b16 %v185
      %v377 = vunpack.c.l.b16 %v186
      %v378 = vunpack.c.h.b16 %v186
      %v379 = vunpack.c.l.b16 %v187
      %v380 = vunpack.c.h.b16 %v187
      %v381 = vunpack.c.l.b16 %v188
      %v382 = vunpack.c.h.b16 %v188
      %v383 = vunpack.c.l.b16 %v189
      %v384 = vunpack.c.h.b16 %v189
      %v385 = vunpack.c.l.b16 %v190
      %v386 = vunpack.c.h.b16 %v190
      %v387 = vunpack.c.l.b16 %v191
      %v388 = vunpack.c.h.b16 %v191
      %v389 = vunpack.c.l.b16 %v192
      %v390 = vunpack.c.h.b16 %v192
      %v391 = vunpack.c.l.b16 %v193
      %v392 = vunpack.c.h.b16 %v193
      %v393 = vunpack.c.l.b16 %v194
      %v394 = vunpack.c.h.b16 %v194
      %v395 = vunpack.c.l.b16 %v195
      %v396 = vunpack.c.h.b16 %v195
      %v397 = vunpack.c.l.b16 %v196
      %v398 = vunpack.c.h.b16 %v196
      %v399 = vunpack.c.l.b16 %v197
      %v400 = vunpack.c.h.b16 %v197
      %v401 = vunpack.c.l.b16 %v198
      %v402 = vunpack.c.h.b16 %v198
      %v403 = vunpack.c.l.b16 %v199
      %v404 = vunpack.c.h.b16 %v199
      %v405 = vunpack.c.l.b16 %v200
      %v406 = vunpack.c.h.b16 %v200
      %v407 = vunpack.c.l.b16 %v201
      %v408 = vunpack.c.h.b16 %v201
      %v409 = vunpack.c.l.b16 %v202
      %v410 = vunpack.c.h.b16 %v202
      %v411 = vunpack.c.l.b16 %v203
      %v412 = vunpack.c.h.b16 %v203
      %v413 = vunpack.c.l.b16 %v204
      %v414 = vunpack.c.h.b16 %v204
      %v415 = vunpack.c.l.b16 %v205
      %v416 = vunpack.c.h.b16 %v205
      %v417 = vunpack.c.l.b16 %v206
      %v418 = vunpack.c.h.b16 %v206
      %v419 = vunpack.c.l.b16 %v207
      %v420 = vunpack.c.h.b16 %v207
      %v421 = vunpack.c.l.b16 %v208
      %v422 = vunpack.c.h.b16 %v208
      %v423 = vunpack.c.l.b16 %v209
      %v424 = vunpack.c.h.b16 %v209
      %v425 = vunpack.c.l.b16 %v210
      %v426 = vunpack.c.h.b16 %v210
      %v427 = vunpack.c.l.b16 %v211
      %v428 = vunpack.c.h.b16 %v211
      %v429 = vunpack.c.l.b16 %v212
      %v430 = vunpack.c.h.b16 %v212
      %v431 = vunpack.c.l.b16 %v213
      %v432 = vunpack.c.h.b16 %v213
      %v433 = vunpack.c.l.b16 %v214
      %v434 = vunpack.c.h.b16 %v214
      %v435 = vunpack.c.l.b16 %v215
      %v436 = vunpack.c.h.b16 %v215
      %v437 = vunpack.c.l.b16 %v216
      %v438 = vunpack.c.h.b16 %v216
      %v439 = vunpack.c.l.b16 %v217
      %v440 = vunpack.c.h.b16 %v217
      %v441 = vunpack.c.l.b16 %v218
      %v442 = vunpack.c.h.b16 %v218
      %v443 = vunpack.c.l.b16 %v219
      %v444 = vunpack.c.h.b16 %v219
      %v445 = vunpack.c.l.b16 %v220
      %v446 = vunpack.c.h.b16 %v220
      %v447 = vunpack.c.l.b16 %v221
      %v448 = vunpack.c.h.b16 %v221
      %v449 = vunpack.c.l.b16 %v222
      %v450 = vunpack.c.h.b16 %v222
      %v451 = vunpack.c.l.b16 %v223
      %v452 = vunpack.c.h.b16 %v223
      %v453 = vunpack.c.l.b16 %v224
      %v454 = vunpack.c.h.b16 %v224
      %v455 = vunpack.c.l.b16 %v225
      %v456 = vunpack.c.h.b16 %v225
      %v457 = vunpack.c.l.b16 %v226
      %v458 = vunpack.c.h.b16 %v226
      %v459 = vunpack.c.l.b16 %v227
      %v460 = vunpack.c.h.b16 %v227
      %v461 = vunpack.c.l.b16 %v228
      %v462 = vunpack.c.h.b16 %v228
      %v463 = vunpack.c.l.b16 %v229
      %v464 = vunpack.c.h.b16 %v229
      %v465 = vunpack.c.l.b16 %v230
      %v466 = vunpack.c.h.b16 %v230
      %v467 = vunpack.c.l.b16 %v231
      %v468 = vunpack.c.h.b16 %v231
      %v469 = vunpack.c.l.b16 %v232
      %v470 = vunpack.c.h.b16 %v232
      %v471 = vunpack.c.l.b16 %v233
      %v472 = vunpack.c.h.b16 %v233
      %v473 = vunpack.c.l.b16 %v234
      %v474 = vunpack.c.h.b16 %v234
      %v475 = vunpack.c.l.b16 %v235
      %v476 = vunpack.c.h.b16 %v235
      %v477 = vunpack.c.l.b16 %v236
      %v478 = vunpack.c.h.b16 %v236
      %v479 = vunpack.c.l.b16 %v237
      %v480 = vunpack.c.h.b16 %v237
      %v481 = vunpack.c.l.b16 %v238
      %v482 = vunpack.c.h.b16 %v238
      %v483 = vunpack.c.l.b16 %v239
      %v484 = vunpack.c.h.b16 %v239
      %v485 = vunpack.c.l.b16 %v240
      %v486 = vunpack.c.h.b16 %v240
      %v487 = vunpack.c.l.b16 %v241
      %v488 = vunpack.c.h.b16 %v241
      %v489 = vunpack.c.l.b16 %v242
      %v490 = vunpack.c.h.b16 %v242
      %v491 = vunpack.c.l.b16 %v243
      %v492 = vunpack.c.h.b16 %v243
      %v493 = vunpack.c.l.b16 %v244
      %v494 = vunpack.c.h.b16 %v244
      %v495 = vunpack.c.l.b16 %v245
      %v496 = vunpack.c.h.b16 %v245
      %v497 = vunpack.c.l.b16 %v246
      %v498 = vunpack.c.h.b16 %v246
      %v499 = vunpack.c.l.b16 %v247
      %v500 = vunpack.c.h.b16 %v247
      %v501 = vunpack.c.l.b16 %v248
      %v502 = vunpack.c.h.b16 %v248
      %v503 = vunpack.c.l.b16 %v249
      %v504 = vunpack.c.h.b16 %v249
      %v505 = vpack.c.b16 %v363, %v361
      %v506 = vpack.c.b16 %v364, %v362
      %v507 = vpack.c.b16 %v367, %v365
      %v508 = vpack.c.b16 %v368, %v366
      %v509 = vpack.c.b16 %v371, %v369
      %v510 = vpack.c.b16 %v372, %v370
      %v511 = vpack.c.b16 %v375, %v373
      %v512 = vpack.c.b16 %v376, %v374
      %v513 = vpack.c.b16 %v379, %v377
      %v514 = vpack.c.b16 %v380, %v378
      %v515 = vpack.c.b16 %v383, %v381
      %v516 = vpack.c.b16 %v384, %v382
      %v517 = vpack.c.b16 %v387, %v385
      %v518 = vpack.c.b16 %v388, %v386
      %v519 = vpack.c.b16 %v391, %v389
      %v520 = vpack.c.b16 %v392, %v390
      %v521 = vpack.c.b16 %v395, %v393
      %v522 = vpack.c.b16 %v396, %v394
      %v523 = vpack.c.b16 %v399, %v397
      %v524 = vpack.c.b16 %v400, %v398
      %v525 = vpack.c.b16 %v403, %v401
      %v526 = vpack.c.b16 %v404, %v402
      %v527 = vpack.c.b16 %v407, %v405
      %v528 = vpack.c.b16 %v408, %v406
      %v529 = vpack.c.b16 %v411, %v409
      %v530 = vpack.c.b16 %v412, %v410
      %v531 = vpack.c.b16 %v415, %v413
      %v532 = vpack.c.b16 %v416, %v414
      %v533 = vpack.c.b16 %v419, %v417
      %v534 = vpack.c.b16 %v420, %v418
      %v535 = vpack.c.b16 %v423, %v421
      %v536 = vpack.c.b16 %v424, %v422
      %v537 = vpack.c.b16 %v427, %v425
      %v538 = vpack.c.b16 %v428, %v426
      %v539 = vpack.c.b16 %v431, %v429
      %v540 = vpack.c.b16 %v432, %v430
      %v541 = vpack.c.b16 %v435, %v433
      %v542 = vpack.c.b16 %v436, %v434
      %v543 = vpack.c.b16 %v439, %v437
      %v544 = vpack.c.b16 %v440, %v438
      %v545 = vpack.c.b16 %v443, %v441
      %v546 = vpack.c.b16 %v444, %v442
      %v547 = vpack.c.b16 %v447, %v445
      %v548 = vpack.c.b16 %v448, %v446
      %v549 = vpack.c.b16 %v451, %v449
      %v550 = vpack.c.b16 %v452, %v450
      %v551 = vpack.c.b16 %v455, %v453
      %v552 = vpack.c.b16 %v456, %v454
      %v553 = vpack.c.b16 %v459, %v457
      %v554 = vpack.c.b16 %v460, %v458
      %v555 = vpack.c.b16 %v463, %v461
      %v556 = vpack.c.b16 %v464, %v462
      %v557 = vpack.c.b16 %v467, %v465
      %v558 = vpack.c.b16 %v468, %v466
      %v559 = vpack.c.b16 %v471, %v469
      %v560 = vpack.c.b16 %v472, %v470
      %v561 = vpack.c.b16 %v475, %v473
      %v562 = vpack.c.b16 %v476, %v474
      %v563 = vpack.c.b16 %v479, %v477
      %v564 = vpack.c.b16 %v480, %v478
      %v565 = vpack.c.b16 %v483, %v481
      %v566 = vpack.c.b16 %v484, %v482
      %v567 = vpack.c.b16 %v487, %v485
      %v568 = vpack.c.b16 %v488, %v486
      %v569 = vpack.c.b16 %v491, %v489
      %v570 = vpack.c.b16 %v492, %v490
      %v571 = vpack.c.b16 %v495, %v493
      %v572 = vpack.c.b16 %v496, %v494
      %v573 = vpack.c.b16 %v499, %v497
      %v574 = vpack.c.b16 %v500, %v498
      %v575 = vpack.c.b16 %v503, %v501
      %v576 = vpack.c.b16 %v504, %v502
      %v681 = vunpack.c.l.b16 %v250
      %v682 = vunpack.c.l.b16 %v251
      %v683 = vunpack.c.l.b16 %v252
      %v684 = vunpack.c.l.b16 %v253
      %v685 = vunpack.c.l.b16 %v254
      %v686 = vunpack.c.l.b16 %v255
      %v687 = vunpack.c.l.b16 %v256
      %v688 = vunpack.c.l.b16 %v257
      %v689 = vunpack.c.l.b16 %v258
      %v690 = vunpack.c.l.b16 %v259
      %v691 = vunpack.c.l.b16 %v260
      %v692 = vunpack.c.l.b16 %v261
      %v693 = vunpack.c.l.b16 %v262
      %v694 = vunpack.c.l.b16 %v263
      %v695 = vunpack.c.l.b16 %v264
      %v696 = vunpack.c.l.b16 %v265
      %v697 = vunpack.c.l.b16 %v266
      %v698 = vunpack.c.l.b16 %v267
      %v699 = vunpack.c.l.b16 %v268
      %v700 = vunpack.c.l.b16 %v269
      %v701 = vunpack.c.l.b16 %v270
      %v702 = vunpack.c.l.b16 %v271
      %v703 = vunpack.c.l.b16 %v272
      %v704 = vunpack.c.l.b16 %v273
      %v705 = vunpack.c.l.b16 %v274
      %v706 = vunpack.c.l.b16 %v275
      %v707 = vunpack.c.l.b16 %v276
      %v708 = vunpack.c.l.b16 %v277
      %v709 = vunpack.c.l.b16 %v278
      %v710 = vunpack.c.l.b16 %v279
      %v711 = vunpack.c.l.b16 %v280
      %v712 = vunpack.c.l.b16 %v281
      %v713 = vpack.c.b16 %v682, %v681
      %v714 = vpack.c.b16 %v684, %v683
      %v715 = vpack.c.b16 %v686, %v685
      %v716 = vpack.c.b16 %v688, %v687
      %v717 = vpack.c.b16 %v690, %v689
      %v718 = vpack.c.b16 %v692, %v691
      %v719 = vpack.c.b16 %v694, %v693
      %v720 = vpack.c.b16 %v696, %v695
      %v721 = vpack.c.b16 %v698, %v697
      %v722 = vpack.c.b16 %v700, %v699
      %v723 = vpack.c.b16 %v702, %v701
      %v724 = vpack.c.b16 %v704, %v703
      %v725 = vpack.c.b16 %v706, %v705
      %v726 = vpack.c.b16 %v708, %v707
      %v727 = vpack.c.b16 %v710, %v709
      %v728 = vpack.c.b16 %v712, %v711
      %745 = vmatprep.subr.bf16.mxu0 0
      %746 = vmatpush1.bf16.msra.mxu0 %v713
      %747 = vmatprep.subr.bf16.mxu0 0
      %748 = vmatpush1.bf16.msra.mxu0 %v714
      %749 = vmatprep.subr.bf16.mxu0 0
      %750 = vmatpush1.bf16.msra.mxu0 %v715
      %751 = vmatprep.subr.bf16.mxu0 0
      %752 = vmatpush1.bf16.msra.mxu0 %v716
      %753 = vmatprep.subr.bf16.mxu0 0
      %754 = vmatpush1.bf16.msra.mxu0 %v717
      %755 = vmatprep.subr.bf16.mxu0 0
      %756 = vmatpush1.bf16.msra.mxu0 %v718
      %757 = vmatprep.subr.bf16.mxu0 0
      %758 = vmatpush1.bf16.msra.mxu0 %v719
      %759 = vmatprep.subr.bf16.mxu0 0
      %760 = vmatpush1.bf16.msra.mxu0 %v720
      %761 = vmatprep.subr.bf16.mxu0 0
      %762 = vmatpush1.bf16.msra.mxu0 %v721
      %763 = vmatprep.subr.bf16.mxu0 0
      %764 = vmatpush1.bf16.msra.mxu0 %v722
      %765 = vmatprep.subr.bf16.mxu0 0
      %766 = vmatpush1.bf16.msra.mxu0 %v723
      %767 = vmatprep.subr.bf16.mxu0 0
      %768 = vmatpush1.bf16.msra.mxu0 %v724
      %769 = vmatprep.subr.bf16.mxu0 0
      %770 = vmatpush1.bf16.msra.mxu0 %v725
      %771 = vmatprep.subr.bf16.mxu0 0
      %772 = vmatpush1.bf16.msra.mxu0 %v726
      %773 = vmatprep.subr.bf16.mxu0 0
      %774 = vmatpush1.bf16.msra.mxu0 %v727
      %775 = vmatprep.subr.bf16.mxu0 0
      %776 = vmatpush1.bf16.msra.mxu0 %v728
      %777 = vmatprep.mubr.bf16.mxu0 %v506
      %778 = vmatmul.mubr.bf16.gmra.mrb[0].mxu0 %v505
      %v779 = vpop.f32.mrb[0].mxu0
      %v780 = vadd.f32 %v287, %v779
      %v781 = vpop.f32.mrb[0].mxu0
      %v782 = vpop.f32.mrb[0].mxu0
      %v783 = vadd.f32 %v287, %v782
      %v784 = vpop.f32.mrb[0].mxu0
      %785 = vmatprep.mubr.bf16.mxu0 %v508
      %786 = vmatmul.mubr.bf16.gmra.mrb[0].mxu0 %v507
      %v787 = vpop.f32.mrb[0].mxu0
      %v788 = vadd.f32 %v287, %v787
      %v789 = vpop.f32.mrb[0].mxu0
      %v790 = vpop.f32.mrb[0].mxu0
      %v791 = vadd.f32 %v287, %v790
      %v792 = vpop.f32.mrb[0].mxu0
      %793 = vmatprep.mubr.bf16.mxu0 %v510
      %794 = vmatmul.mubr.bf16.gmra.mrb[0].mxu0 %v509
      %v795 = vpop.f32.mrb[0].mxu0
      %v796 = vadd.f32 %v287, %v795
      %v797 = vpop.f32.mrb[0].mxu0
      %v798 = vpop.f32.mrb[0].mxu0
      %v799 = vadd.f32 %v287, %v798
      %v800 = vpop.f32.mrb[0].mxu0
      %801 = vmatprep.mubr.bf16.mxu0 %v512
      %802 = vmatmul.mubr.bf16.gmra.mrb[0].mxu0 %v511
      %v803 = vpop.f32.mrb[0].mxu0
      %v804 = vadd.f32 %v287, %v803
      %v805 = vpop.f32.mrb[0].mxu0
      %v806 = vpop.f32.mrb[0].mxu0
      %v807 = vadd.f32 %v287, %v806
      %v808 = vpop.f32.mrb[0].mxu0
      %809 = vmatprep.mubr.bf16.mxu0 %v514
      %810 = vmatmul.mubr.bf16.gmra.mrb[0].mxu0 %v513
      %v811 = vpop.f32.mrb[0].mxu0
      %v812 = vadd.f32 %v287, %v811
      %v813 = vpop.f32.mrb[0].mxu0
      %v814 = vpop.f32.mrb[0].mxu0
      %v815 = vadd.f32 %v287, %v814
      %v816 = vpop.f32.mrb[0].mxu0
      %817 = vmatprep.mubr.bf16.mxu0 %v516
      %818 = vmatmul.mubr.bf16.gmra.mrb[0].mxu0 %v515
      %v819 = vpop.f32.mrb[0].mxu0
      %v820 = vadd.f32 %v287, %v819
      %v821 = vpop.f32.mrb[0].mxu0
      %v822 = vpop.f32.mrb[0].mxu0
      %v823 = vadd.f32 %v287, %v822
      %v824 = vpop.f32.mrb[0].mxu0
      %825 = vmatprep.mubr.bf16.mxu0 %v518
      %826 = vmatmul.mubr.bf16.gmra.mrb[0].mxu0 %v517
      %v827 = vpop.f32.mrb[0].mxu0
      %v828 = vadd.f32 %v287, %v827
      %v829 = vpop.f32.mrb[0].mxu0
      %v830 = vpop.f32.mrb[0].mxu0
      %v831 = vadd.f32 %v287, %v830
      %v832 = vpop.f32.mrb[0].mxu0
      %833 = vmatprep.mubr.bf16.mxu0 %v520
      %834 = vmatmul.mubr.bf16.gmra.mrb[0].mxu0 %v519
      %v835 = vpop.f32.mrb[0].mxu0
      %v836 = vadd.f32 %v287, %v835
      %v837 = vpop.f32.mrb[0].mxu0
      %v838 = vpop.f32.mrb[0].mxu0
      %v839 = vadd.f32 %v287, %v838
      %v840 = vpop.f32.mrb[0].mxu0
      %841 = vmatprep.mubr.bf16.mxu0 %v522
      %842 = vmatmul.mubr.bf16.gmra.mrb[0].mxu0 %v521
      %v843 = vpop.f32.mrb[0].mxu0
      %v844 = vadd.f32 %v287, %v843
      %v845 = vpop.f32.mrb[0].mxu0
      %v846 = vpop.f32.mrb[0].mxu0
      %v847 = vadd.f32 %v287, %v846
      %v848 = vpop.f32.mrb[0].mxu0
      %849 = vmatprep.mubr.bf16.mxu0 %v524
      %850 = vmatmul.mubr.bf16.gmra.mrb[0].mxu0 %v523
      %v851 = vpop.f32.mrb[0].mxu0
      %v852 = vadd.f32 %v287, %v851
      %v853 = vpop.f32.mrb[0].mxu0
      %v854 = vpop.f32.mrb[0].mxu0
      %v855 = vadd.f32 %v287, %v854
      %v856 = vpop.f32.mrb[0].mxu0
      %857 = vmatprep.mubr.bf16.mxu0 %v526
      %858 = vmatmul.mubr.bf16.gmra.mrb[0].mxu0 %v525
      %v859 = vpop.f32.mrb[0].mxu0
      %v860 = vadd.f32 %v287, %v859
      %v861 = vpop.f32.mrb[0].mxu0
      %v862 = vpop.f32.mrb[0].mxu0
      %v863 = vadd.f32 %v287, %v862
      %v864 = vpop.f32.mrb[0].mxu0
      %865 = vmatprep.mubr.bf16.mxu0 %v528
      %866 = vmatmul.mubr.bf16.gmra.mrb[0].mxu0 %v527
      %v867 = vpop.f32.mrb[0].mxu0
      %v868 = vadd.f32 %v287, %v867
      %v869 = vpop.f32.mrb[0].mxu0
      %v870 = vpop.f32.mrb[0].mxu0
      %v871 = vadd.f32 %v287, %v870
      %v872 = vpop.f32.mrb[0].mxu0
      %873 = vmatprep.mubr.bf16.mxu0 %v530
      %874 = vmatmul.mubr.bf16.gmra.mrb[0].mxu0 %v529
      %v875 = vpop.f32.mrb[0].mxu0
      %v876 = vadd.f32 %v287, %v875
      %v877 = vpop.f32.mrb[0].mxu0
      %v878 = vpop.f32.mrb[0].mxu0
      %v879 = vadd.f32 %v287, %v878
      %v880 = vpop.f32.mrb[0].mxu0
      %881 = vmatprep.mubr.bf16.mxu0 %v532
      %882 = vmatmul.mubr.bf16.gmra.mrb[0].mxu0 %v531
      %v883 = vpop.f32.mrb[0].mxu0
      %v884 = vadd.f32 %v287, %v883
      %v885 = vpop.f32.mrb[0].mxu0
      %v886 = vpop.f32.mrb[0].mxu0
      %v887 = vadd.f32 %v287, %v886
      %v888 = vpop.f32.mrb[0].mxu0
      %889 = vmatprep.mubr.bf16.mxu0 %v534
      %890 = vmatmul.mubr.bf16.gmra.mrb[0].mxu0 %v533
      %v891 = vpop.f32.mrb[0].mxu0
      %v892 = vadd.f32 %v287, %v891
      %v893 = vpop.f32.mrb[0].mxu0
      %v894 = vpop.f32.mrb[0].mxu0
      %v895 = vadd.f32 %v287, %v894
      %v896 = vpop.f32.mrb[0].mxu0
      %897 = vmatprep.mubr.bf16.mxu0 %v536
      %898 = vmatmul.mubr.bf16.gmra.mrb[0].mxu0 %v535
      %v899 = vpop.f32.mrb[0].mxu0
      %v900 = vadd.f32 %v287, %v899
      %v901 = vpop.f32.mrb[0].mxu0
      %v902 = vpop.f32.mrb[0].mxu0
      %v903 = vadd.f32 %v287, %v902
      %v904 = vpop.f32.mrb[0].mxu0
      %905 = vmatprep.mubr.bf16.mxu0 %v538
      %906 = vmatmul.mubr.bf16.gmra.mrb[0].mxu0 %v537
      %v907 = vpop.f32.mrb[0].mxu0
      %v908 = vadd.f32 %v287, %v907
      %v909 = vpop.f32.mrb[0].mxu0
      %v910 = vpop.f32.mrb[0].mxu0
      %v911 = vadd.f32 %v287, %v910
      %v912 = vpop.f32.mrb[0].mxu0
      %913 = vmatprep.mubr.bf16.mxu0 %v540
      %914 = vmatmul.mubr.bf16.gmra.mrb[0].mxu0 %v539
      %v915 = vpop.f32.mrb[0].mxu0
      %v916 = vadd.f32 %v287, %v915
      %v917 = vpop.f32.mrb[0].mxu0
      %v918 = vpop.f32.mrb[0].mxu0
      %v919 = vadd.f32 %v287, %v918
      %v920 = vpop.f32.mrb[0].mxu0
      %921 = vmatprep.mubr.bf16.mxu0 %v542
      %922 = vmatmul.mubr.bf16.gmra.mrb[0].mxu0 %v541
      %v923 = vpop.f32.mrb[0].mxu0
      %v924 = vadd.f32 %v287, %v923
      %v925 = vpop.f32.mrb[0].mxu0
      %v926 = vpop.f32.mrb[0].mxu0
      %v927 = vadd.f32 %v287, %v926
      %v928 = vpop.f32.mrb[0].mxu0
      %929 = vmatprep.mubr.bf16.mxu0 %v544
      %930 = vmatmul.mubr.bf16.gmra.mrb[0].mxu0 %v543
      %v931 = vpop.f32.mrb[0].mxu0
      %v932 = vadd.f32 %v287, %v931
      %v933 = vpop.f32.mrb[0].mxu0
      %v934 = vpop.f32.mrb[0].mxu0
      %v935 = vadd.f32 %v287, %v934
      %v936 = vpop.f32.mrb[0].mxu0
      %937 = vmatprep.mubr.bf16.mxu0 %v546
      %938 = vmatmul.mubr.bf16.gmra.mrb[0].mxu0 %v545
      %v939 = vpop.f32.mrb[0].mxu0
      %v940 = vadd.f32 %v287, %v939
      %v941 = vpop.f32.mrb[0].mxu0
      %v942 = vpop.f32.mrb[0].mxu0
      %v943 = vadd.f32 %v287, %v942
      %v944 = vpop.f32.mrb[0].mxu0
      %945 = vmatprep.mubr.bf16.mxu0 %v548
      %946 = vmatmul.mubr.bf16.gmra.mrb[0].mxu0 %v547
      %v947 = vpop.f32.mrb[0].mxu0
      %v948 = vadd.f32 %v287, %v947
      %v949 = vpop.f32.mrb[0].mxu0
      %v950 = vpop.f32.mrb[0].mxu0
      %v951 = vadd.f32 %v287, %v950
      %v952 = vpop.f32.mrb[0].mxu0
      %953 = vmatprep.mubr.bf16.mxu0 %v550
      %954 = vmatmul.mubr.bf16.gmra.mrb[0].mxu0 %v549
      %v955 = vpop.f32.mrb[0].mxu0
      %v956 = vadd.f32 %v287, %v955
      %v957 = vpop.f32.mrb[0].mxu0
      %v958 = vpop.f32.mrb[0].mxu0
      %v959 = vadd.f32 %v287, %v958
      %v960 = vpop.f32.mrb[0].mxu0
      %961 = vmatprep.mubr.bf16.mxu0 %v552
      %962 = vmatmul.mubr.bf16.gmra.mrb[0].mxu0 %v551
      %v963 = vpop.f32.mrb[0].mxu0
      %v964 = vadd.f32 %v287, %v963
      %v965 = vpop.f32.mrb[0].mxu0
      %v966 = vpop.f32.mrb[0].mxu0
      %v967 = vadd.f32 %v287, %v966
      %v968 = vpop.f32.mrb[0].mxu0
      %969 = vmatprep.mubr.bf16.mxu0 %v554
      %970 = vmatmul.mubr.bf16.gmra.mrb[0].mxu0 %v553
      %v971 = vpop.f32.mrb[0].mxu0
      %v972 = vadd.f32 %v287, %v971
      %v973 = vpop.f32.mrb[0].mxu0
      %v974 = vpop.f32.mrb[0].mxu0
      %v975 = vadd.f32 %v287, %v974
      %v976 = vpop.f32.mrb[0].mxu0
      %977 = vmatprep.mubr.bf16.mxu0 %v556
      %978 = vmatmul.mubr.bf16.gmra.mrb[0].mxu0 %v555
      %v979 = vpop.f32.mrb[0].mxu0
      %v980 = vadd.f32 %v287, %v979
      %v981 = vpop.f32.mrb[0].mxu0
      %v982 = vpop.f32.mrb[0].mxu0
      %v983 = vadd.f32 %v287, %v982
      %v984 = vpop.f32.mrb[0].mxu0
      %985 = vmatprep.mubr.bf16.mxu0 %v558
      %986 = vmatmul.mubr.bf16.gmra.mrb[0].mxu0 %v557
      %v987 = vpop.f32.mrb[0].mxu0
      %v988 = vadd.f32 %v287, %v987
      %v989 = vpop.f32.mrb[0].mxu0
      %v990 = vpop.f32.mrb[0].mxu0
      %v991 = vadd.f32 %v287, %v990
      %v992 = vpop.f32.mrb[0].mxu0
      %993 = vmatprep.mubr.bf16.mxu0 %v560
      %994 = vmatmul.mubr.bf16.gmra.mrb[0].mxu0 %v559
      %v995 = vpop.f32.mrb[0].mxu0
      %v996 = vadd.f32 %v287, %v995
      %v997 = vpop.f32.mrb[0].mxu0
      %v998 = vpop.f32.mrb[0].mxu0
      %v999 = vadd.f32 %v287, %v998
      %v1000 = vpop.f32.mrb[0].mxu0
      %1001 = vmatprep.mubr.bf16.mxu0 %v562
      %1002 = vmatmul.mubr.bf16.gmra.mrb[0].mxu0 %v561
      %v1003 = vpop.f32.mrb[0].mxu0
      %v1004 = vadd.f32 %v287, %v1003
      %v1005 = vpop.f32.mrb[0].mxu0
      %v1006 = vpop.f32.mrb[0].mxu0
      %v1007 = vadd.f32 %v287, %v1006
      %v1008 = vpop.f32.mrb[0].mxu0
      %1009 = vmatprep.mubr.bf16.mxu0 %v564
      %1010 = vmatmul.mubr.bf16.gmra.mrb[0].mxu0 %v563
      %v1011 = vpop.f32.mrb[0].mxu0
      %v1012 = vadd.f32 %v287, %v1011
      %v1013 = vpop.f32.mrb[0].mxu0
      %v1014 = vpop.f32.mrb[0].mxu0
      %v1015 = vadd.f32 %v287, %v1014
      %v1016 = vpop.f32.mrb[0].mxu0
      %1017 = vmatprep.mubr.bf16.mxu0 %v566
      %1018 = vmatmul.mubr.bf16.gmra.mrb[0].mxu0 %v565
      %v1019 = vpop.f32.mrb[0].mxu0
      %v1020 = vadd.f32 %v287, %v1019
      %v1021 = vpop.f32.mrb[0].mxu0
      %v1022 = vpop.f32.mrb[0].mxu0
      %v1023 = vadd.f32 %v287, %v1022
      %v1024 = vpop.f32.mrb[0].mxu0
      %1025 = vmatprep.mubr.bf16.mxu0 %v568
      %1026 = vmatmul.mubr.bf16.gmra.mrb[0].mxu0 %v567
      %v1027 = vpop.f32.mrb[0].mxu0
      %v1028 = vadd.f32 %v287, %v1027
      %v1029 = vpop.f32.mrb[0].mxu0
      %v1030 = vpop.f32.mrb[0].mxu0
      %v1031 = vadd.f32 %v287, %v1030
      %v1032 = vpop.f32.mrb[0].mxu0
      %1033 = vmatprep.mubr.bf16.mxu0 %v570
      %1034 = vmatmul.mubr.bf16.gmra.mrb[0].mxu0 %v569
      %v1035 = vpop.f32.mrb[0].mxu0
      %v1036 = vadd.f32 %v287, %v1035
      %v1037 = vpop.f32.mrb[0].mxu0
      %v1038 = vpop.f32.mrb[0].mxu0
      %v1039 = vadd.f32 %v287, %v1038
      %v1040 = vpop.f32.mrb[0].mxu0
      %1041 = vmatprep.mubr.bf16.mxu0 %v572
      %1042 = vmatmul.mubr.bf16.gmra.mrb[0].mxu0 %v571
      %v1043 = vpop.f32.mrb[0].mxu0
      %v1044 = vadd.f32 %v287, %v1043
      %v1045 = vpop.f32.mrb[0].mxu0
      %v1046 = vpop.f32.mrb[0].mxu0
      %v1047 = vadd.f32 %v287, %v1046
      %v1048 = vpop.f32.mrb[0].mxu0
      %1049 = vmatprep.mubr.bf16.mxu0 %v574
      %1050 = vmatmul.mubr.bf16.gmra.mrb[0].mxu0 %v573
      %v1051 = vpop.f32.mrb[0].mxu0
      %v1052 = vadd.f32 %v287, %v1051
      %v1053 = vpop.f32.mrb[0].mxu0
      %v1054 = vpop.f32.mrb[0].mxu0
      %v1055 = vadd.f32 %v287, %v1054
      %v1056 = vpop.f32.mrb[0].mxu0
      %1057 = vmatprep.mubr.bf16.mxu0 %v576
      %1058 = vmatmul.mubr.bf16.gmra.mrb[0].mxu0 %v575
      %v1059 = vpop.f32.mrb[0].mxu0
      %v1060 = vadd.f32 %v287, %v1059
      %v1061 = vpop.f32.mrb[0].mxu0
      %v1062 = vpop.f32.mrb[0].mxu0
      %v1063 = vadd.f32 %v287, %v1062
      %v1064 = vpop.f32.mrb[0].mxu0
      %1065 = vdwg.mxu0
      %v1066 = vmax.f32 %v780, 0.0
      %v1067 = vmax.f32 %v783, 0.0
      %v1068 = vmax.f32 %v788, 0.0
      %v1069 = vmax.f32 %v791, 0.0
      %v1070 = vmax.f32 %v796, 0.0
      %v1071 = vmax.f32 %v799, 0.0
      %v1072 = vmax.f32 %v804, 0.0
      %v1073 = vmax.f32 %v807, 0.0
      %v1074 = vmax.f32 %v812, 0.0
      %v1075 = vmax.f32 %v815, 0.0
      %v1076 = vmax.f32 %v820, 0.0
      %v1077 = vmax.f32 %v823, 0.0
      %v1078 = vmax.f32 %v828, 0.0
      %v1079 = vmax.f32 %v831, 0.0
      %v1080 = vmax.f32 %v836, 0.0
      %v1081 = vmax.f32 %v839, 0.0
      %v1082 = vmax.f32 %v844, 0.0
      %v1083 = vmax.f32 %v847, 0.0
      %v1084 = vmax.f32 %v852, 0.0
      %v1085 = vmax.f32 %v855, 0.0
      %v1086 = vmax.f32 %v860, 0.0
      %v1087 = vmax.f32 %v863, 0.0
      %v1088 = vmax.f32 %v868, 0.0
      %v1089 = vmax.f32 %v871, 0.0
      %v1090 = vmax.f32 %v876, 0.0
      %v1091 = vmax.f32 %v879, 0.0
      %v1092 = vmax.f32 %v884, 0.0
      %v1093 = vmax.f32 %v887, 0.0
      %v1094 = vmax.f32 %v892, 0.0
      %v1095 = vmax.f32 %v895, 0.0
      %v1096 = vmax.f32 %v900, 0.0
      %v1097 = vmax.f32 %v903, 0.0
      %v1098 = vmax.f32 %v908, 0.0
      %v1099 = vmax.f32 %v911, 0.0
      %v1100 = vmax.f32 %v916, 0.0
      %v1101 = vmax.f32 %v919, 0.0
      %v1102 = vmax.f32 %v924, 0.0
      %v1103 = vmax.f32 %v927, 0.0
      %v1104 = vmax.f32 %v932, 0.0
      %v1105 = vmax.f32 %v935, 0.0
      %v1106 = vmax.f32 %v940, 0.0
      %v1107 = vmax.f32 %v943, 0.0
      %v1108 = vmax.f32 %v948, 0.0
      %v1109 = vmax.f32 %v951, 0.0
      %v1110 = vmax.f32 %v956, 0.0
      %v1111 = vmax.f32 %v959, 0.0
      %v1112 = vmax.f32 %v964, 0.0
      %v1113 = vmax.f32 %v967, 0.0
      %v1114 = vmax.f32 %v972, 0.0
      %v1115 = vmax.f32 %v975, 0.0
      %v1116 = vmax.f32 %v980, 0.0
      %v1117 = vmax.f32 %v983, 0.0
      %v1118 = vmax.f32 %v988, 0.0
      %v1119 = vmax.f32 %v991, 0.0
      %v1120 = vmax.f32 %v996, 0.0
      %v1121 = vmax.f32 %v999, 0.0
      %v1122 = vmax.f32 %v1004, 0.0
      %v1123 = vmax.f32 %v1007, 0.0
      %v1124 = vmax.f32 %v1012, 0.0
      %v1125 = vmax.f32 %v1015, 0.0
      %v1126 = vmax.f32 %v1020, 0.0
      %v1127 = vmax.f32 %v1023, 0.0
      %v1128 = vmax.f32 %v1028, 0.0
      %v1129 = vmax.f32 %v1031, 0.0
      %v1130 = vmax.f32 %v1036, 0.0
      %v1131 = vmax.f32 %v1039, 0.0
      %v1132 = vmax.f32 %v1044, 0.0
      %v1133 = vmax.f32 %v1047, 0.0
      %v1134 = vmax.f32 %v1052, 0.0
      %v1135 = vmax.f32 %v1055, 0.0
      %v1136 = vmax.f32 %v1060, 0.0
      %v1137 = vmax.f32 %v1063, 0.0
      %v1138 = vpack.c.bf16 %v1067, %v1066
      %v1139 = vpack.c.bf16 %v1069, %v1068
      %v1140 = vpack.c.bf16 %v1071, %v1070
      %v1141 = vpack.c.bf16 %v1073, %v1072
      %v1142 = vpack.c.bf16 %v1075, %v1074
      %v1143 = vpack.c.bf16 %v1077, %v1076
      %v1144 = vpack.c.bf16 %v1079, %v1078
      %v1145 = vpack.c.bf16 %v1081, %v1080
      %v1146 = vpack.c.bf16 %v1083, %v1082
      %v1147 = vpack.c.bf16 %v1085, %v1084
      %v1148 = vpack.c.bf16 %v1087, %v1086
      %v1149 = vpack.c.bf16 %v1089, %v1088
      %v1150 = vpack.c.bf16 %v1091, %v1090
      %v1151 = vpack.c.bf16 %v1093, %v1092
      %v1152 = vpack.c.bf16 %v1095, %v1094
      %v1153 = vpack.c.bf16 %v1097, %v1096
      %v1154 = vpack.c.bf16 %v1099, %v1098
      %v1155 = vpack.c.bf16 %v1101, %v1100
      %v1156 = vpack.c.bf16 %v1103, %v1102
      %v1157 = vpack.c.bf16 %v1105, %v1104
      %v1158 = vpack.c.bf16 %v1107, %v1106
      %v1159 = vpack.c.bf16 %v1109, %v1108
      %v1160 = vpack.c.bf16 %v1111, %v1110
      %v1161 = vpack.c.bf16 %v1113, %v1112
      %v1162 = vpack.c.bf16 %v1115, %v1114
      %v1163 = vpack.c.bf16 %v1117, %v1116
      %v1164 = vpack.c.bf16 %v1119, %v1118
      %v1165 = vpack.c.bf16 %v1121, %v1120
      %v1166 = vpack.c.bf16 %v1123, %v1122
      %v1167 = vpack.c.bf16 %v1125, %v1124
      %v1168 = vpack.c.bf16 %v1127, %v1126
      %v1169 = vpack.c.bf16 %v1129, %v1128
      %v1170 = vpack.c.bf16 %v1131, %v1130
      %v1171 = vpack.c.bf16 %v1133, %v1132
      %v1172 = vpack.c.bf16 %v1135, %v1134
      %v1173 = vpack.c.bf16 %v1137, %v1136
      %v1210 = vunpack.c.l.b16 %v1138
      %v1211 = vunpack.c.h.b16 %v1138
      %v1212 = vunpack.c.l.b16 %v1139
      %v1213 = vunpack.c.h.b16 %v1139
      %v1214 = vunpack.c.l.b16 %v1140
      %v1215 = vunpack.c.h.b16 %v1140
      %v1216 = vunpack.c.l.b16 %v1141
      %v1217 = vunpack.c.h.b16 %v1141
      %v1218 = vunpack.c.l.b16 %v1142
      %v1219 = vunpack.c.h.b16 %v1142
      %v1220 = vunpack.c.l.b16 %v1143
      %v1221 = vunpack.c.h.b16 %v1143
      %v1222 = vunpack.c.l.b16 %v1144
      %v1223 = vunpack.c.h.b16 %v1144
      %v1224 = vunpack.c.l.b16 %v1145
      %v1225 = vunpack.c.h.b16 %v1145
      %v1226 = vunpack.c.l.b16 %v1146
      %v1227 = vunpack.c.h.b16 %v1146
      %v1228 = vunpack.c.l.b16 %v1147
      %v1229 = vunpack.c.h.b16 %v1147
      %v1230 = vunpack.c.l.b16 %v1148
      %v1231 = vunpack.c.h.b16 %v1148
      %v1232 = vunpack.c.l.b16 %v1149
      %v1233 = vunpack.c.h.b16 %v1149
      %v1234 = vunpack.c.l.b16 %v1150
      %v1235 = vunpack.c.h.b16 %v1150
      %v1236 = vunpack.c.l.b16 %v1151
      %v1237 = vunpack.c.h.b16 %v1151
      %v1238 = vunpack.c.l.b16 %v1152
      %v1239 = vunpack.c.h.b16 %v1152
      %v1240 = vunpack.c.l.b16 %v1153
      %v1241 = vunpack.c.h.b16 %v1153
      %v1242 = vunpack.c.l.b16 %v1154
      %v1243 = vunpack.c.h.b16 %v1154
      %v1244 = vunpack.c.l.b16 %v1155
      %v1245 = vunpack.c.h.b16 %v1155
      %v1246 = vunpack.c.l.b16 %v1156
      %v1247 = vunpack.c.h.b16 %v1156
      %v1248 = vunpack.c.l.b16 %v1157
      %v1249 = vunpack.c.h.b16 %v1157
      %v1250 = vunpack.c.l.b16 %v1158
      %v1251 = vunpack.c.h.b16 %v1158
      %v1252 = vunpack.c.l.b16 %v1159
      %v1253 = vunpack.c.h.b16 %v1159
      %v1254 = vunpack.c.l.b16 %v1160
      %v1255 = vunpack.c.h.b16 %v1160
      %v1256 = vunpack.c.l.b16 %v1161
      %v1257 = vunpack.c.h.b16 %v1161
      %v1258 = vunpack.c.l.b16 %v1162
      %v1259 = vunpack.c.h.b16 %v1162
      %v1260 = vunpack.c.l.b16 %v1163
      %v1261 = vunpack.c.h.b16 %v1163
      %v1262 = vunpack.c.l.b16 %v1164
      %v1263 = vunpack.c.h.b16 %v1164
      %v1264 = vunpack.c.l.b16 %v1165
      %v1265 = vunpack.c.h.b16 %v1165
      %v1266 = vunpack.c.l.b16 %v1166
      %v1267 = vunpack.c.h.b16 %v1166
      %v1268 = vunpack.c.l.b16 %v1167
      %v1269 = vunpack.c.h.b16 %v1167
      %v1270 = vunpack.c.l.b16 %v1168
      %v1271 = vunpack.c.h.b16 %v1168
      %v1272 = vunpack.c.l.b16 %v1169
      %v1273 = vunpack.c.h.b16 %v1169
      %v1274 = vunpack.c.l.b16 %v1170
      %v1275 = vunpack.c.h.b16 %v1170
      %v1276 = vunpack.c.l.b16 %v1171
      %v1277 = vunpack.c.h.b16 %v1171
      %v1278 = vunpack.c.l.b16 %v1172
      %v1279 = vunpack.c.h.b16 %v1172
      %v1280 = vunpack.c.l.b16 %v1173
      %v1281 = vunpack.c.h.b16 %v1173
      %v1282 = vpack.c.b16 %v1210, %v1210
      %v1283 = vpack.c.b16 %v1211, %v1211
      %v1284 = vpack.c.b16 %v1212, %v1212
      %v1285 = vpack.c.b16 %v1213, %v1213
      %v1286 = vpack.c.b16 %v1214, %v1214
      %v1287 = vpack.c.b16 %v1215, %v1215
      %v1288 = vpack.c.b16 %v1216, %v1216
      %v1289 = vpack.c.b16 %v1217, %v1217
      %v1290 = vpack.c.b16 %v1218, %v1218
      %v1291 = vpack.c.b16 %v1219, %v1219
      %v1292 = vpack.c.b16 %v1220, %v1220
      %v1293 = vpack.c.b16 %v1221, %v1221
      %v1294 = vpack.c.b16 %v1222, %v1222
      %v1295 = vpack.c.b16 %v1223, %v1223
      %v1296 = vpack.c.b16 %v1224, %v1224
      %v1297 = vpack.c.b16 %v1225, %v1225
      %v1298 = vpack.c.b16 %v1226, %v1226
      %v1299 = vpack.c.b16 %v1227, %v1227
      %v1300 = vpack.c.b16 %v1228, %v1228
      %v1301 = vpack.c.b16 %v1229, %v1229
      %v1302 = vpack.c.b16 %v1230, %v1230
      %v1303 = vpack.c.b16 %v1231, %v1231
      %v1304 = vpack.c.b16 %v1232, %v1232
      %v1305 = vpack.c.b16 %v1233, %v1233
      %v1306 = vpack.c.b16 %v1234, %v1234
      %v1307 = vpack.c.b16 %v1235, %v1235
      %v1308 = vpack.c.b16 %v1236, %v1236
      %v1309 = vpack.c.b16 %v1237, %v1237
      %v1310 = vpack.c.b16 %v1238, %v1238
      %v1311 = vpack.c.b16 %v1239, %v1239
      %v1312 = vpack.c.b16 %v1240, %v1240
      %v1313 = vpack.c.b16 %v1241, %v1241
      %v1314 = vpack.c.b16 %v1242, %v1242
      %v1315 = vpack.c.b16 %v1243, %v1243
      %v1316 = vpack.c.b16 %v1244, %v1244
      %v1317 = vpack.c.b16 %v1245, %v1245
      %v1318 = vpack.c.b16 %v1246, %v1246
      %v1319 = vpack.c.b16 %v1247, %v1247
      %v1320 = vpack.c.b16 %v1248, %v1248
      %v1321 = vpack.c.b16 %v1249, %v1249
      %v1322 = vpack.c.b16 %v1250, %v1250
      %v1323 = vpack.c.b16 %v1251, %v1251
      %v1324 = vpack.c.b16 %v1252, %v1252
      %v1325 = vpack.c.b16 %v1253, %v1253
      %v1326 = vpack.c.b16 %v1254, %v1254
      %v1327 = vpack.c.b16 %v1255, %v1255
      %v1328 = vpack.c.b16 %v1256, %v1256
      %v1329 = vpack.c.b16 %v1257, %v1257
      %v1330 = vpack.c.b16 %v1258, %v1258
      %v1331 = vpack.c.b16 %v1259, %v1259
      %v1332 = vpack.c.b16 %v1260, %v1260
      %v1333 = vpack.c.b16 %v1261, %v1261
      %v1334 = vpack.c.b16 %v1262, %v1262
      %v1335 = vpack.c.b16 %v1263, %v1263
      %v1336 = vpack.c.b16 %v1264, %v1264
      %v1337 = vpack.c.b16 %v1265, %v1265
      %v1338 = vpack.c.b16 %v1266, %v1266
      %v1339 = vpack.c.b16 %v1267, %v1267
      %v1340 = vpack.c.b16 %v1268, %v1268
      %v1341 = vpack.c.b16 %v1269, %v1269
      %v1342 = vpack.c.b16 %v1270, %v1270
      %v1343 = vpack.c.b16 %v1271, %v1271
      %v1344 = vpack.c.b16 %v1272, %v1272
      %v1345 = vpack.c.b16 %v1273, %v1273
      %v1346 = vpack.c.b16 %v1274, %v1274
      %v1347 = vpack.c.b16 %v1275, %v1275
      %v1348 = vpack.c.b16 %v1276, %v1276
      %v1349 = vpack.c.b16 %v1277, %v1277
      %v1350 = vpack.c.b16 %v1278, %v1278
      %v1351 = vpack.c.b16 %v1279, %v1279
      %v1352 = vpack.c.b16 %v1280, %v1280
      %v1353 = vpack.c.b16 %v1281, %v1281
      %1426 = vst [vmem:[%s175] sm:$0xf] %v1282
      %1427 = vst [vmem:[%s175 + $0x4] sm:$0xf] %v1283
      %1428 = vst [vmem:[%s175 + $0x8] sm:$0xf] %v1284
      %1429 = vst [vmem:[%s175 + $0xc] sm:$0xf] %v1285
      %1430 = vst [vmem:[%s175 + $0x10] sm:$0xf] %v1286
      %1431 = vst [vmem:[%s175 + $0x14] sm:$0xf] %v1287
      %1432 = vst [vmem:[%s175 + $0x18] sm:$0xf] %v1288
      %1433 = vst [vmem:[%s175 + $0x1c] sm:$0xf] %v1289
      %1434 = vst [vmem:[%s175 + $0x20] sm:$0xf] %v1290
      %1435 = vst [vmem:[%s175 + $0x24] sm:$0xf] %v1291
      %1436 = vst [vmem:[%s175 + $0x28] sm:$0xf] %v1292
      %1437 = vst [vmem:[%s175 + $0x2c] sm:$0xf] %v1293
      %1438 = vst [vmem:[%s175 + $0x30] sm:$0xf] %v1294
      %1439 = vst [vmem:[%s175 + $0x34] sm:$0xf] %v1295
      %1440 = vst [vmem:[%s175 + $0x38] sm:$0xf] %v1296
      %1441 = vst [vmem:[%s175 + $0x3c] sm:$0xf] %v1297
      %1442 = vst [vmem:[%s175 + $0x40] sm:$0xf] %v1298
      %1443 = vst [vmem:[%s175 + $0x44] sm:$0xf] %v1299
      %1444 = vst [vmem:[%s175 + $0x48] sm:$0xf] %v1300
      %1445 = vst [vmem:[%s175 + $0x4c] sm:$0xf] %v1301
      %1446 = vst [vmem:[%s175 + $0x50] sm:$0xf] %v1302
      %1447 = vst [vmem:[%s175 + $0x54] sm:$0xf] %v1303
      %1448 = vst [vmem:[%s175 + $0x58] sm:$0xf] %v1304
      %1449 = vst [vmem:[%s175 + $0x5c] sm:$0xf] %v1305
      %1450 = vst [vmem:[%s175 + $0x60] sm:$0xf] %v1306
      %1451 = vst [vmem:[%s175 + $0x64] sm:$0xf] %v1307
      %1452 = vst [vmem:[%s175 + $0x68] sm:$0xf] %v1308
      %1453 = vst [vmem:[%s175 + $0x6c] sm:$0xf] %v1309
      %1454 = vst [vmem:[%s175 + $0x70] sm:$0xf] %v1310
      %1455 = vst [vmem:[%s175 + $0x74] sm:$0xf] %v1311
      %1456 = vst [vmem:[%s175 + $0x78] sm:$0xf] %v1312
      %1457 = vst [vmem:[%s175 + $0x7c] sm:$0xf] %v1313
      %1458 = vst [vmem:[%s175 + $0x80] sm:$0xf] %v1314
      %1459 = vst [vmem:[%s175 + $0x84] sm:$0xf] %v1315
      %1460 = vst [vmem:[%s175 + $0x88] sm:$0xf] %v1316
      %1461 = vst [vmem:[%s175 + $0x8c] sm:$0xf] %v1317
      %1462 = vst [vmem:[%s175 + $0x90] sm:$0xf] %v1318
      %1463 = vst [vmem:[%s175 + $0x94] sm:$0xf] %v1319
      %1464 = vst [vmem:[%s175 + $0x98] sm:$0xf] %v1320
      %1465 = vst [vmem:[%s175 + $0x9c] sm:$0xf] %v1321
      %1466 = vst [vmem:[%s175 + $0xa0] sm:$0xf] %v1322
      %1467 = vst [vmem:[%s175 + $0xa4] sm:$0xf] %v1323
      %1468 = vst [vmem:[%s175 + $0xa8] sm:$0xf] %v1324
      %1469 = vst [vmem:[%s175 + $0xac] sm:$0xf] %v1325
      %1470 = vst [vmem:[%s175 + $0xb0] sm:$0xf] %v1326
      %1471 = vst [vmem:[%s175 + $0xb4] sm:$0xf] %v1327
      %1472 = vst [vmem:[%s175 + $0xb8] sm:$0xf] %v1328
      %1473 = vst [vmem:[%s175 + $0xbc] sm:$0xf] %v1329
      %1474 = vst [vmem:[%s175 + $0xc0] sm:$0xf] %v1330
      %1475 = vst [vmem:[%s175 + $0xc4] sm:$0xf] %v1331
      %1476 = vst [vmem:[%s175 + $0xc8] sm:$0xf] %v1332
      %1477 = vst [vmem:[%s175 + $0xcc] sm:$0xf] %v1333
      %1478 = vst [vmem:[%s175 + $0xd0] sm:$0xf] %v1334
      %1479 = vst [vmem:[%s175 + $0xd4] sm:$0xf] %v1335
      %1480 = vst [vmem:[%s175 + $0xd8] sm:$0xf] %v1336
      %1481 = vst [vmem:[%s175 + $0xdc] sm:$0xf] %v1337
      %1482 = vst [vmem:[%s175 + $0xe0] sm:$0xf] %v1338
      %1483 = vst [vmem:[%s175 + $0xe4] sm:$0xf] %v1339
      %1484 = vst [vmem:[%s175 + $0xe8] sm:$0xf] %v1340
      %1485 = vst [vmem:[%s175 + $0xec] sm:$0xf] %v1341
      %1486 = vst [vmem:[%s175 + $0xf0] sm:$0xf] %v1342
      %1487 = vst [vmem:[%s175 + $0xf4] sm:$0xf] %v1343
      %1488 = vst [vmem:[%s175 + $0xf8] sm:$0xf] %v1344
      %1489 = vst [vmem:[%s175 + $0xfc] sm:$0xf] %v1345
      %1490 = vst [vmem:[%s175 + $0x100] sm:$0xf] %v1346
      %1491 = vst [vmem:[%s175 + $0x104] sm:$0xf] %v1347
      %1492 = vst [vmem:[%s175 + $0x108] sm:$0xf] %v1348
      %1493 = vst [vmem:[%s175 + $0x10c] sm:$0xf] %v1349
      %1494 = vst [vmem:[%s175 + $0x110] sm:$0xf] %v1350
      %1495 = vst [vmem:[%s175 + $0x114] sm:$0xf] %v1351
      %1496 = vst [vmem:[%s175 + $0x118] sm:$0xf] %v1352
      %1497 = vst [vmem:[%s175 + $0x11c] sm:$0xf] %v1353
      %s1498 = smul.u32 72, %s14
      %p1499 = scmp.lt.s32.totalorder %s1498, 143
      %s1500 = scalar_select %p1499, %s1498, 143
      %s1501 = smul.addr %s1500, 4
      %s1502 = scalar_lea.vmem %s3, %s1501
      // Predicated region
      $region33: #{dqn_forward.4} parent=31 // pred_check
        %p1503 = pneg %p100
      $region34: #{dqn_forward.4} parent=31 // pred_check_branch
        %1505 = sbr.rel (%p1503) target = $region36
      $region35: #{dqn_forward.4} parent=31 // pred_region
        %s1506 = smul.u32 72, %s14
      $region36: #{dqn_forward.4} parent=31 // pred_fallthru
        _
    $region32: #{dqn_forward.4} parent=5 // pred_fallthru
      _
    %p1507 = scmp.le.s32.totalorder 2, %s9
    // Predicated region
    $region37: #{dqn_forward.4} parent=5 // pred_check
      %p1508 = pneg %p1507
    $region38: #{dqn_forward.4} parent=5 // pred_check_branch
      %1510 = sbr.rel (%p1508) target = $region40
    $region39: #{dqn_forward.4} parent=5 // pred_region
      %s1511 = ssub.s32 %s9, 2
      // Predicated region
      $region41: #{dqn_forward.4} parent=39 // pred_check
        %p1512 = pneg %p106
      $region42: #{dqn_forward.4} parent=39 // pred_check_branch
        %1514 = sbr.rel (%p1512) target = $region44
      $region43: #{dqn_forward.4} parent=39 // pred_region
        %s1515 = smul.u32 72, %s15
        %p1516 = scmp.lt.s32.totalorder %s1515, 143
        %s1517 = scalar_select %p1516, %s1515, 143
        %s1518 = smul.addr %s1517, 4
        %s1519 = scalar_lea.vmem %s3, %s1518
      $region44: #{dqn_forward.4} parent=39 // pred_fallthru
        _
    $region40: #{dqn_forward.4} parent=5 // pred_fallthru
      _
  $region6: #{dqn_forward.4} parent=0 // loop_footer
    %s13 = sadd.s32 1, %s9
  $region7: #{dqn_forward.4} parent=0 // loop_footer_branch
    %8 = sbr.rel target = $region3
  $region8: #{dqn_forward.4} parent=0 // loop_exit
    _

// kernel: dqn_forward.5
$region0: #{dqn_forward.5}
  #allocation0 [shape = 'u32[]', space=smem, size = 0x4, offset = 0x4, fixed_abs, tag = 'smem constant byte address 0x4 - core index']
  #allocation1 [shape = 'u32[144,128]{1,0:T(1,128)}', space=vmem, size = 0x12000, scoped, tag = 'internal scratch']
  %s0 = inlined_call_operand.vmem [shape: bf16[256,512], index: 0, kind: input, shape index: {}]
  %s1 = inlined_call_operand.vmem [shape: bf16[512,128], index: 1, kind: input, shape index: {}]
  %s2 = inlined_call_operand.vmem [shape: f32[1,128], index: 2, kind: input, shape index: {}]
  %s3 = inlined_call_operand.vmem [shape: bf16[256,128], index: 3, kind: output, shape index: {}]
  %s4 = sld [smem:[#allocation0]]
  $region22: #{dqn_forward.5} parent=0
    _
  %s6 = ssub.s32 1, %s4
  %s7 = scalar_select 0, %s6, %s4
  // Predicated region
  $region2: #{dqn_forward.5} parent=0 // pred_check
    _
  $region3: #{dqn_forward.5} parent=0 // pred_check_branch
    %9 = sbr.rel (0) target = $region5
  $region4: #{dqn_forward.5} parent=0 // pred_region
    _
  $region5: #{dqn_forward.5} parent=0 // pred_fallthru
    _
  // Predicated region
  $region6: #{dqn_forward.5} parent=0 // pred_check
    _
  $region7: #{dqn_forward.5} parent=0 // pred_check_branch
    %11 = sbr.rel (0) target = $region9
  $region8: #{dqn_forward.5} parent=0 // pred_region
    _
  $region9: #{dqn_forward.5} parent=0 // pred_fallthru
    _
  // Predicated region
  $region10: #{dqn_forward.5} parent=0 // pred_check
    _
  $region11: #{dqn_forward.5} parent=0 // pred_check_branch
    %13 = sbr.rel (0) target = $region13
  $region12: #{dqn_forward.5} parent=0 // pred_region
    _
  $region13: #{dqn_forward.5} parent=0 // pred_fallthru
    _
  %v15 = vld [vmem:[%s0] sm:$0xff]
  %v16 = vld [vmem:[%s0 + $0x8] sm:$0xff]
  %v17 = vld [vmem:[%s0 + $0x10] sm:$0xff]
  %v18 = vld [vmem:[%s0 + $0x18] sm:$0xff]
  %v19 = vld [vmem:[%s0 + $0x20] sm:$0xff]
  %v20 = vld [vmem:[%s0 + $0x28] sm:$0xff]
  %v21 = vld [vmem:[%s0 + $0x30] sm:$0xff]
  %v22 = vld [vmem:[%s0 + $0x38] sm:$0xff]
  %v23 = vld [vmem:[%s0 + $0x40] sm:$0xff]
  %v24 = vld [vmem:[%s0 + $0x48] sm:$0xff]
  %v25 = vld [vmem:[%s0 + $0x50] sm:$0xff]
  %v26 = vld [vmem:[%s0 + $0x58] sm:$0xff]
  %v27 = vld [vmem:[%s0 + $0x60] sm:$0xff]
  %v28 = vld [vmem:[%s0 + $0x68] sm:$0xff]
  %v29 = vld [vmem:[%s0 + $0x70] sm:$0xff]
  %v30 = vld [vmem:[%s0 + $0x78] sm:$0xff]
  %v31 = vld [vmem:[%s0 + $0x80] sm:$0xff]
  %v32 = vld [vmem:[%s0 + $0x88] sm:$0xff]
  %v33 = vld [vmem:[%s0 + $0x90] sm:$0xff]
  %v34 = vld [vmem:[%s0 + $0x98] sm:$0xff]
  %v35 = vld [vmem:[%s0 + $0xa0] sm:$0xff]
  %v36 = vld [vmem:[%s0 + $0xa8] sm:$0xff]
  %v37 = vld [vmem:[%s0 + $0xb0] sm:$0xff]
  %v38 = vld [vmem:[%s0 + $0xb8] sm:$0xff]
  %v39 = vld [vmem:[%s0 + $0xc0] sm:$0xff]
  %v40 = vld [vmem:[%s0 + $0xc8] sm:$0xff]
  %v41 = vld [vmem:[%s0 + $0xd0] sm:$0xff]
  %v42 = vld [vmem:[%s0 + $0xd8] sm:$0xff]
  %v43 = vld [vmem:[%s0 + $0xe0] sm:$0xff]
  %v44 = vld [vmem:[%s0 + $0xe8] sm:$0xff]
  %v45 = vld [vmem:[%s0 + $0xf0] sm:$0xff]
  %v46 = vld [vmem:[%s0 + $0xf8] sm:$0xff]
  %v47 = vld [vmem:[%s0 + $0x100] sm:$0xff]
  %v48 = vld [vmem:[%s0 + $0x108] sm:$0xff]
  %v49 = vld [vmem:[%s0 + $0x110] sm:$0xff]
  %v50 = vld [vmem:[%s0 + $0x118] sm:$0xff]
  %v51 = vld [vmem:[%s0 + $0x120] sm:$0xff]
  %v52 = vld [vmem:[%s0 + $0x128] sm:$0xff]
  %v53 = vld [vmem:[%s0 + $0x130] sm:$0xff]
  %v54 = vld [vmem:[%s0 + $0x138] sm:$0xff]
  %v55 = vld [vmem:[%s0 + $0x140] sm:$0xff]
  %v56 = vld [vmem:[%s0 + $0x148] sm:$0xff]
  %v57 = vld [vmem:[%s0 + $0x150] sm:$0xff]
  %v58 = vld [vmem:[%s0 + $0x158] sm:$0xff]
  %v59 = vld [vmem:[%s0 + $0x160] sm:$0xff]
  %v60 = vld [vmem:[%s0 + $0x168] sm:$0xff]
  %v61 = vld [vmem:[%s0 + $0x170] sm:$0xff]
  %v62 = vld [vmem:[%s0 + $0x178] sm:$0xff]
  %v63 = vld [vmem:[%s0 + $0x180] sm:$0xff]
  %v64 = vld [vmem:[%s0 + $0x188] sm:$0xff]
  %v65 = vld [vmem:[%s0 + $0x190] sm:$0xff]
  %v66 = vld [vmem:[%s0 + $0x198] sm:$0xff]
  %v67 = vld [vmem:[%s0 + $0x1a0] sm:$0xff]
  %v68 = vld [vmem:[%s0 + $0x1a8] sm:$0xff]
  %v69 = vld [vmem:[%s0 + $0x1b0] sm:$0xff]
  %v70 = vld [vmem:[%s0 + $0x1b8] sm:$0xff]
  %v71 = vld [vmem:[%s0 + $0x1c0] sm:$0xff]
  %v72 = vld [vmem:[%s0 + $0x1c8] sm:$0xff]
  %v73 = vld [vmem:[%s0 + $0x1d0] sm:$0xff]
  %v74 = vld [vmem:[%s0 + $0x1d8] sm:$0xff]
  %v75 = vld [vmem:[%s0 + $0x1e0] sm:$0xff]
  %v76 = vld [vmem:[%s0 + $0x1e8] sm:$0xff]
  %v77 = vld [vmem:[%s0 + $0x1f0] sm:$0xff]
  %v78 = vld [vmem:[%s0 + $0x1f8] sm:$0xff]
  %v79 = vld [vmem:[%s1] sm:$0xf]
  %v80 = vld [vmem:[%s1 + $0x4] sm:$0xf]
  %v81 = vld [vmem:[%s1 + $0x8] sm:$0xf]
  %v82 = vld [vmem:[%s1 + $0xc] sm:$0xf]
  %v83 = vld [vmem:[%s1 + $0x10] sm:$0xf]
  %v84 = vld [vmem:[%s1 + $0x14] sm:$0xf]
  %v85 = vld [vmem:[%s1 + $0x18] sm:$0xf]
  %v86 = vld [vmem:[%s1 + $0x1c] sm:$0xf]
  %v87 = vld [vmem:[%s1 + $0x20] sm:$0xf]
  %v88 = vld [vmem:[%s1 + $0x24] sm:$0xf]
  %v89 = vld [vmem:[%s1 + $0x28] sm:$0xf]
  %v90 = vld [vmem:[%s1 + $0x2c] sm:$0xf]
  %v91 = vld [vmem:[%s1 + $0x30] sm:$0xf]
  %v92 = vld [vmem:[%s1 + $0x34] sm:$0xf]
  %v93 = vld [vmem:[%s1 + $0x38] sm:$0xf]
  %v94 = vld [vmem:[%s1 + $0x3c] sm:$0xf]
  %v95 = vld [vmem:[%s1 + $0x40] sm:$0xf]
  %v96 = vld [vmem:[%s1 + $0x44] sm:$0xf]
  %v97 = vld [vmem:[%s1 + $0x48] sm:$0xf]
  %v98 = vld [vmem:[%s1 + $0x4c] sm:$0xf]
  %v99 = vld [vmem:[%s1 + $0x50] sm:$0xf]
  %v100 = vld [vmem:[%s1 + $0x54] sm:$0xf]
  %v101 = vld [vmem:[%s1 + $0x58] sm:$0xf]
  %v102 = vld [vmem:[%s1 + $0x5c] sm:$0xf]
  %v103 = vld [vmem:[%s1 + $0x60] sm:$0xf]
  %v104 = vld [vmem:[%s1 + $0x64] sm:$0xf]
  %v105 = vld [vmem:[%s1 + $0x68] sm:$0xf]
  %v106 = vld [vmem:[%s1 + $0x6c] sm:$0xf]
  %v107 = vld [vmem:[%s1 + $0x70] sm:$0xf]
  %v108 = vld [vmem:[%s1 + $0x74] sm:$0xf]
  %v109 = vld [vmem:[%s1 + $0x78] sm:$0xf]
  %v110 = vld [vmem:[%s1 + $0x7c] sm:$0xf]
  %v111 = vld [vmem:[%s1 + $0x80] sm:$0xf]
  %v112 = vld [vmem:[%s1 + $0x84] sm:$0xf]
  %v113 = vld [vmem:[%s1 + $0x88] sm:$0xf]
  %v114 = vld [vmem:[%s1 + $0x8c] sm:$0xf]
  %v115 = vld [vmem:[%s1 + $0x90] sm:$0xf]
  %v116 = vld [vmem:[%s1 + $0x94] sm:$0xf]
  %v117 = vld [vmem:[%s1 + $0x98] sm:$0xf]
  %v118 = vld [vmem:[%s1 + $0x9c] sm:$0xf]
  %v119 = vld [vmem:[%s1 + $0xa0] sm:$0xf]
  %v120 = vld [vmem:[%s1 + $0xa4] sm:$0xf]
  %v121 = vld [vmem:[%s1 + $0xa8] sm:$0xf]
  %v122 = vld [vmem:[%s1 + $0xac] sm:$0xf]
  %v123 = vld [vmem:[%s1 + $0xb0] sm:$0xf]
  %v124 = vld [vmem:[%s1 + $0xb4] sm:$0xf]
  %v125 = vld [vmem:[%s1 + $0xb8] sm:$0xf]
  %v126 = vld [vmem:[%s1 + $0xbc] sm:$0xf]
  %v127 = vld [vmem:[%s1 + $0xc0] sm:$0xf]
  %v128 = vld [vmem:[%s1 + $0xc4] sm:$0xf]
  %v129 = vld [vmem:[%s1 + $0xc8] sm:$0xf]
  %v130 = vld [vmem:[%s1 + $0xcc] sm:$0xf]
  %v131 = vld [vmem:[%s1 + $0xd0] sm:$0xf]
  %v132 = vld [vmem:[%s1 + $0xd4] sm:$0xf]
  %v133 = vld [vmem:[%s1 + $0xd8] sm:$0xf]
  %v134 = vld [vmem:[%s1 + $0xdc] sm:$0xf]
  %v135 = vld [vmem:[%s1 + $0xe0] sm:$0xf]
  %v136 = vld [vmem:[%s1 + $0xe4] sm:$0xf]
  %v137 = vld [vmem:[%s1 + $0xe8] sm:$0xf]
  %v138 = vld [vmem:[%s1 + $0xec] sm:$0xf]
  %v139 = vld [vmem:[%s1 + $0xf0] sm:$0xf]
  %v140 = vld [vmem:[%s1 + $0xf4] sm:$0xf]
  %v141 = vld [vmem:[%s1 + $0xf8] sm:$0xf]
  %v142 = vld [vmem:[%s1 + $0xfc] sm:$0xf]
  %v143 = vld [vmem:[%s2] sm:$0x1]
  %v145 = vlaneseq
  %v146 = vshrl.u32 %v145, 7
  %v147 = vsub.s32 0, %v146
  %v148 = vrot.slane %v143, %v147
  %v214 = vunpack.c.l.b16 %v15
  %v215 = vunpack.c.h.b16 %v15
  %v216 = vunpack.c.l.b16 %v16
  %v217 = vunpack.c.h.b16 %v16
  %v218 = vunpack.c.l.b16 %v17
  %v219 = vunpack.c.h.b16 %v17
  %v220 = vunpack.c.l.b16 %v18
  %v221 = vunpack.c.h.b16 %v18
  %v222 = vunpack.c.l.b16 %v19
  %v223 = vunpack.c.h.b16 %v19
  %v224 = vunpack.c.l.b16 %v20
  %v225 = vunpack.c.h.b16 %v20
  %v226 = vunpack.c.l.b16 %v21
  %v227 = vunpack.c.h.b16 %v21
  %v228 = vunpack.c.l.b16 %v22
  %v229 = vunpack.c.h.b16 %v22
  %v230 = vunpack.c.l.b16 %v23
  %v231 = vunpack.c.h.b16 %v23
  %v232 = vunpack.c.l.b16 %v24
  %v233 = vunpack.c.h.b16 %v24
  %v234 = vunpack.c.l.b16 %v25
  %v235 = vunpack.c.h.b16 %v25
  %v236 = vunpack.c.l.b16 %v26
  %v237 = vunpack.c.h.b16 %v26
  %v238 = vunpack.c.l.b16 %v27
  %v239 = vunpack.c.h.b16 %v27
  %v240 = vunpack.c.l.b16 %v28
  %v241 = vunpack.c.h.b16 %v28
  %v242 = vunpack.c.l.b16 %v29
  %v243 = vunpack.c.h.b16 %v29
  %v244 = vunpack.c.l.b16 %v30
  %v245 = vunpack.c.h.b16 %v30
  %v246 = vunpack.c.l.b16 %v31
  %v247 = vunpack.c.h.b16 %v31
  %v248 = vunpack.c.l.b16 %v32
  %v249 = vunpack.c.h.b16 %v32
  %v250 = vunpack.c.l.b16 %v33
  %v251 = vunpack.c.h.b16 %v33
  %v252 = vunpack.c.l.b16 %v34
  %v253 = vunpack.c.h.b16 %v34
  %v254 = vunpack.c.l.b16 %v35
  %v255 = vunpack.c.h.b16 %v35
  %v256 = vunpack.c.l.b16 %v36
  %v257 = vunpack.c.h.b16 %v36
  %v258 = vunpack.c.l.b16 %v37
  %v259 = vunpack.c.h.b16 %v37
  %v260 = vunpack.c.l.b16 %v38
  %v261 = vunpack.c.h.b16 %v38
  %v262 = vunpack.c.l.b16 %v39
  %v263 = vunpack.c.h.b16 %v39
  %v264 = vunpack.c.l.b16 %v40
  %v265 = vunpack.c.h.b16 %v40
  %v266 = vunpack.c.l.b16 %v41
  %v267 = vunpack.c.h.b16 %v41
  %v268 = vunpack.c.l.b16 %v42
  %v269 = vunpack.c.h.b16 %v42
  %v270 = vunpack.c.l.b16 %v43
  %v271 = vunpack.c.h.b16 %v43
  %v272 = vunpack.c.l.b16 %v44
  %v273 = vunpack.c.h.b16 %v44
  %v274 = vunpack.c.l.b16 %v45
  %v275 = vunpack.c.h.b16 %v45
  %v276 = vunpack.c.l.b16 %v46
  %v277 = vunpack.c.h.b16 %v46
  %v278 = vunpack.c.l.b16 %v47
  %v279 = vunpack.c.h.b16 %v47
  %v280 = vunpack.c.l.b16 %v48
  %v281 = vunpack.c.h.b16 %v48
  %v282 = vunpack.c.l.b16 %v49
  %v283 = vunpack.c.h.b16 %v49
  %v284 = vunpack.c.l.b16 %v50
  %v285 = vunpack.c.h.b16 %v50
  %v286 = vunpack.c.l.b16 %v51
  %v287 = vunpack.c.h.b16 %v51
  %v288 = vunpack.c.l.b16 %v52
  %v289 = vunpack.c.h.b16 %v52
  %v290 = vunpack.c.l.b16 %v53
  %v291 = vunpack.c.h.b16 %v53
  %v292 = vunpack.c.l.b16 %v54
  %v293 = vunpack.c.h.b16 %v54
  %v294 = vunpack.c.l.b16 %v55
  %v295 = vunpack.c.h.b16 %v55
  %v296 = vunpack.c.l.b16 %v56
  %v297 = vunpack.c.h.b16 %v56
  %v298 = vunpack.c.l.b16 %v57
  %v299 = vunpack.c.h.b16 %v57
  %v300 = vunpack.c.l.b16 %v58
  %v301 = vunpack.c.h.b16 %v58
  %v302 = vunpack.c.l.b16 %v59
  %v303 = vunpack.c.h.b16 %v59
  %v304 = vunpack.c.l.b16 %v60
  %v305 = vunpack.c.h.b16 %v60
  %v306 = vunpack.c.l.b16 %v61
  %v307 = vunpack.c.h.b16 %v61
  %v308 = vunpack.c.l.b16 %v62
  %v309 = vunpack.c.h.b16 %v62
  %v310 = vunpack.c.l.b16 %v63
  %v311 = vunpack.c.h.b16 %v63
  %v312 = vunpack.c.l.b16 %v64
  %v313 = vunpack.c.h.b16 %v64
  %v314 = vunpack.c.l.b16 %v65
  %v315 = vunpack.c.h.b16 %v65
  %v316 = vunpack.c.l.b16 %v66
  %v317 = vunpack.c.h.b16 %v66
  %v318 = vunpack.c.l.b16 %v67
  %v319 = vunpack.c.h.b16 %v67
  %v320 = vunpack.c.l.b16 %v68
  %v321 = vunpack.c.h.b16 %v68
  %v322 = vunpack.c.l.b16 %v69
  %v323 = vunpack.c.h.b16 %v69
  %v324 = vunpack.c.l.b16 %v70
  %v325 = vunpack.c.h.b16 %v70
  %v326 = vunpack.c.l.b16 %v71
  %v327 = vunpack.c.h.b16 %v71
  %v328 = vunpack.c.l.b16 %v72
  %v329 = vunpack.c.h.b16 %v72
  %v330 = vunpack.c.l.b16 %v73
  %v331 = vunpack.c.h.b16 %v73
  %v332 = vunpack.c.l.b16 %v74
  %v333 = vunpack.c.h.b16 %v74
  %v334 = vunpack.c.l.b16 %v75
  %v335 = vunpack.c.h.b16 %v75
  %v336 = vunpack.c.l.b16 %v76
  %v337 = vunpack.c.h.b16 %v76
  %v338 = vunpack.c.l.b16 %v77
  %v339 = vunpack.c.h.b16 %v77
  %v340 = vunpack.c.l.b16 %v78
  %v341 = vunpack.c.h.b16 %v78
  %v342 = vpack.c.b16 %v218, %v214
  %v343 = vpack.c.b16 %v219, %v215
  %v344 = vpack.c.b16 %v220, %v216
  %v345 = vpack.c.b16 %v221, %v217
  %v346 = vpack.c.b16 %v226, %v222
  %v347 = vpack.c.b16 %v227, %v223
  %v348 = vpack.c.b16 %v228, %v224
  %v349 = vpack.c.b16 %v229, %v225
  %v350 = vpack.c.b16 %v234, %v230
  %v351 = vpack.c.b16 %v235, %v231
  %v352 = vpack.c.b16 %v236, %v232
  %v353 = vpack.c.b16 %v237, %v233
  %v354 = vpack.c.b16 %v242, %v238
  %v355 = vpack.c.b16 %v243, %v239
  %v356 = vpack.c.b16 %v244, %v240
  %v357 = vpack.c.b16 %v245, %v241
  %v358 = vpack.c.b16 %v250, %v246
  %v359 = vpack.c.b16 %v251, %v247
  %v360 = vpack.c.b16 %v252, %v248
  %v361 = vpack.c.b16 %v253, %v249
  %v362 = vpack.c.b16 %v258, %v254
  %v363 = vpack.c.b16 %v259, %v255
  %v364 = vpack.c.b16 %v260, %v256
  %v365 = vpack.c.b16 %v261, %v257
  %v366 = vpack.c.b16 %v266, %v262
  %v367 = vpack.c.b16 %v267, %v263
  %v368 = vpack.c.b16 %v268, %v264
  %v369 = vpack.c.b16 %v269, %v265
  %v370 = vpack.c.b16 %v274, %v270
  %v371 = vpack.c.b16 %v275, %v271
  %v372 = vpack.c.b16 %v276, %v272
  %v373 = vpack.c.b16 %v277, %v273
  %v374 = vpack.c.b16 %v282, %v278
  %v375 = vpack.c.b16 %v283, %v279
  %v376 = vpack.c.b16 %v284, %v280
  %v377 = vpack.c.b16 %v285, %v281
  %v378 = vpack.c.b16 %v290, %v286
  %v379 = vpack.c.b16 %v291, %v287
  %v380 = vpack.c.b16 %v292, %v288
  %v381 = vpack.c.b16 %v293, %v289
  %v382 = vpack.c.b16 %v298, %v294
  %v383 = vpack.c.b16 %v299, %v295
  %v384 = vpack.c.b16 %v300, %v296
  %v385 = vpack.c.b16 %v301, %v297
  %v386 = vpack.c.b16 %v306, %v302
  %v387 = vpack.c.b16 %v307, %v303
  %v388 = vpack.c.b16 %v308, %v304
  %v389 = vpack.c.b16 %v309, %v305
  %v390 = vpack.c.b16 %v314, %v310
  %v391 = vpack.c.b16 %v315, %v311
  %v392 = vpack.c.b16 %v316, %v312
  %v393 = vpack.c.b16 %v317, %v313
  %v394 = vpack.c.b16 %v322, %v318
  %v395 = vpack.c.b16 %v323, %v319
  %v396 = vpack.c.b16 %v324, %v320
  %v397 = vpack.c.b16 %v325, %v321
  %v398 = vpack.c.b16 %v330, %v326
  %v399 = vpack.c.b16 %v331, %v327
  %v400 = vpack.c.b16 %v332, %v328
  %v401 = vpack.c.b16 %v333, %v329
  %v402 = vpack.c.b16 %v338, %v334
  %v403 = vpack.c.b16 %v339, %v335
  %v404 = vpack.c.b16 %v340, %v336
  %v405 = vpack.c.b16 %v341, %v337
  %v534 = vunpack.c.l.b16 %v79
  %v535 = vunpack.c.l.b16 %v80
  %v536 = vunpack.c.l.b16 %v81
  %v537 = vunpack.c.l.b16 %v82
  %v538 = vunpack.c.l.b16 %v83
  %v539 = vunpack.c.l.b16 %v84
  %v540 = vunpack.c.l.b16 %v85
  %v541 = vunpack.c.l.b16 %v86
  %v542 = vunpack.c.l.b16 %v87
  %v543 = vunpack.c.l.b16 %v88
  %v544 = vunpack.c.l.b16 %v89
  %v545 = vunpack.c.l.b16 %v90
  %v546 = vunpack.c.l.b16 %v91
  %v547 = vunpack.c.l.b16 %v92
  %v548 = vunpack.c.l.b16 %v93
  %v549 = vunpack.c.l.b16 %v94
  %v550 = vunpack.c.l.b16 %v95
  %v551 = vunpack.c.l.b16 %v96
  %v552 = vunpack.c.l.b16 %v97
  %v553 = vunpack.c.l.b16 %v98
  %v554 = vunpack.c.l.b16 %v99
  %v555 = vunpack.c.l.b16 %v100
  %v556 = vunpack.c.l.b16 %v101
  %v557 = vunpack.c.l.b16 %v102
  %v558 = vunpack.c.l.b16 %v103
  %v559 = vunpack.c.l.b16 %v104
  %v560 = vunpack.c.l.b16 %v105
  %v561 = vunpack.c.l.b16 %v106
  %v562 = vunpack.c.l.b16 %v107
  %v563 = vunpack.c.l.b16 %v108
  %v564 = vunpack.c.l.b16 %v109
  %v565 = vunpack.c.l.b16 %v110
  %v566 = vunpack.c.l.b16 %v111
  %v567 = vunpack.c.l.b16 %v112
  %v568 = vunpack.c.l.b16 %v113
  %v569 = vunpack.c.l.b16 %v114
  %v570 = vunpack.c.l.b16 %v115
  %v571 = vunpack.c.l.b16 %v116
  %v572 = vunpack.c.l.b16 %v117
  %v573 = vunpack.c.l.b16 %v118
  %v574 = vunpack.c.l.b16 %v119
  %v575 = vunpack.c.l.b16 %v120
  %v576 = vunpack.c.l.b16 %v121
  %v577 = vunpack.c.l.b16 %v122
  %v578 = vunpack.c.l.b16 %v123
  %v579 = vunpack.c.l.b16 %v124
  %v580 = vunpack.c.l.b16 %v125
  %v581 = vunpack.c.l.b16 %v126
  %v582 = vunpack.c.l.b16 %v127
  %v583 = vunpack.c.l.b16 %v128
  %v584 = vunpack.c.l.b16 %v129
  %v585 = vunpack.c.l.b16 %v130
  %v586 = vunpack.c.l.b16 %v131
  %v587 = vunpack.c.l.b16 %v132
  %v588 = vunpack.c.l.b16 %v133
  %v589 = vunpack.c.l.b16 %v134
  %v590 = vunpack.c.l.b16 %v135
  %v591 = vunpack.c.l.b16 %v136
  %v592 = vunpack.c.l.b16 %v137
  %v593 = vunpack.c.l.b16 %v138
  %v594 = vunpack.c.l.b16 %v139
  %v595 = vunpack.c.l.b16 %v140
  %v596 = vunpack.c.l.b16 %v141
  %v597 = vunpack.c.l.b16 %v142
  %v598 = vpack.c.b16 %v535, %v534
  %v599 = vpack.c.b16 %v537, %v536
  %v600 = vpack.c.b16 %v539, %v538
  %v601 = vpack.c.b16 %v541, %v540
  %v602 = vpack.c.b16 %v543, %v542
  %v603 = vpack.c.b16 %v545, %v544
  %v604 = vpack.c.b16 %v547, %v546
  %v605 = vpack.c.b16 %v549, %v548
  %v606 = vpack.c.b16 %v551, %v550
  %v607 = vpack.c.b16 %v553, %v552
  %v608 = vpack.c.b16 %v555, %v554
  %v609 = vpack.c.b16 %v557, %v556
  %v610 = vpack.c.b16 %v559, %v558
  %v611 = vpack.c.b16 %v561, %v560
  %v612 = vpack.c.b16 %v563, %v562
  %v613 = vpack.c.b16 %v565, %v564
  %v614 = vpack.c.b16 %v567, %v566
  %v615 = vpack.c.b16 %v569, %v568
  %v616 = vpack.c.b16 %v571, %v570
  %v617 = vpack.c.b16 %v573, %v572
  %v618 = vpack.c.b16 %v575, %v574
  %v619 = vpack.c.b16 %v577, %v576
  %v620 = vpack.c.b16 %v579, %v578
  %v621 = vpack.c.b16 %v581, %v580
  %v622 = vpack.c.b16 %v583, %v582
  %v623 = vpack.c.b16 %v585, %v584
  %v624 = vpack.c.b16 %v587, %v586
  %v625 = vpack.c.b16 %v589, %v588
  %v626 = vpack.c.b16 %v591, %v590
  %v627 = vpack.c.b16 %v593, %v592
  %v628 = vpack.c.b16 %v595, %v594
  %v629 = vpack.c.b16 %v597, %v596
  %662 = vmatprep.subr.bf16.mxu0 0
  %663 = vmatpush1.bf16.msra.mxu0 %v598
  %664 = vmatprep.subr.bf16.mxu0 0
  %665 = vmatpush1.bf16.msra.mxu0 %v599
  %666 = vmatprep.subr.bf16.mxu0 0
  %667 = vmatpush1.bf16.msra.mxu0 %v600
  %668 = vmatprep.subr.bf16.mxu0 0
  %669 = vmatpush1.bf16.msra.mxu0 %v601
  %670 = vmatprep.subr.bf16.mxu0 0
  %671 = vmatpush1.bf16.msra.mxu0 %v602
  %672 = vmatprep.subr.bf16.mxu0 0
  %673 = vmatpush1.bf16.msra.mxu0 %v603
  %674 = vmatprep.subr.bf16.mxu0 0
  %675 = vmatpush1.bf16.msra.mxu0 %v604
  %676 = vmatprep.subr.bf16.mxu0 0
  %677 = vmatpush1.bf16.msra.mxu0 %v605
  %678 = vmatprep.subr.bf16.mxu0 0
  %679 = vmatpush1.bf16.msra.mxu0 %v606
  %680 = vmatprep.subr.bf16.mxu0 0
  %681 = vmatpush1.bf16.msra.mxu0 %v607
  %682 = vmatprep.subr.bf16.mxu0 0
  %683 = vmatpush1.bf16.msra.mxu0 %v608
  %684 = vmatprep.subr.bf16.mxu0 0
  %685 = vmatpush1.bf16.msra.mxu0 %v609
  %686 = vmatprep.subr.bf16.mxu0 0
  %687 = vmatpush1.bf16.msra.mxu0 %v610
  %688 = vmatprep.subr.bf16.mxu0 0
  %689 = vmatpush1.bf16.msra.mxu0 %v611
  %690 = vmatprep.subr.bf16.mxu0 0
  %691 = vmatpush1.bf16.msra.mxu0 %v612
  %692 = vmatprep.subr.bf16.mxu0 0
  %693 = vmatpush1.bf16.msra.mxu0 %v613
  %694 = vmatprep.mubr.bf16.mxu0 %v343
  %695 = vmatmul.mubr.bf16.gmra.mrb[0].mxu0 %v342
  %v696 = vpop.f32.mrb[0].mxu0
  %v697 = vadd.f32 %v148, %v696
  %v698 = vpop.f32.mrb[0].mxu0
  %v699 = vpop.f32.mrb[0].mxu0
  %v700 = vadd.f32 %v148, %v699
  %v701 = vpop.f32.mrb[0].mxu0
  %702 = vmatprep.mubr.bf16.mxu0 %v347
  %703 = vmatmul.mubr.bf16.gmra.mrb[0].mxu0 %v346
  %v704 = vpop.f32.mrb[0].mxu0
  %v705 = vadd.f32 %v148, %v704
  %v706 = vpop.f32.mrb[0].mxu0
  %v707 = vpop.f32.mrb[0].mxu0
  %v708 = vadd.f32 %v148, %v707
  %v709 = vpop.f32.mrb[0].mxu0
  %710 = vmatprep.mubr.bf16.mxu0 %v351
  %711 = vmatmul.mubr.bf16.gmra.mrb[0].mxu0 %v350
  %v712 = vpop.f32.mrb[0].mxu0
  %v713 = vadd.f32 %v148, %v712
  %v714 = vpop.f32.mrb[0].mxu0
  %v715 = vpop.f32.mrb[0].mxu0
  %v716 = vadd.f32 %v148, %v715
  %v717 = vpop.f32.mrb[0].mxu0
  %718 = vmatprep.mubr.bf16.mxu0 %v355
  %719 = vmatmul.mubr.bf16.gmra.mrb[0].mxu0 %v354
  %v720 = vpop.f32.mrb[0].mxu0
  %v721 = vadd.f32 %v148, %v720
  %v722 = vpop.f32.mrb[0].mxu0
  %v723 = vpop.f32.mrb[0].mxu0
  %v724 = vadd.f32 %v148, %v723
  %v725 = vpop.f32.mrb[0].mxu0
  %726 = vmatprep.mubr.bf16.mxu0 %v359
  %727 = vmatmul.mubr.bf16.gmra.mrb[0].mxu0 %v358
  %v728 = vpop.f32.mrb[0].mxu0
  %v729 = vadd.f32 %v148, %v728
  %v730 = vpop.f32.mrb[0].mxu0
  %v731 = vpop.f32.mrb[0].mxu0
  %v732 = vadd.f32 %v148, %v731
  %v733 = vpop.f32.mrb[0].mxu0
  %734 = vmatprep.mubr.bf16.mxu0 %v363
  %735 = vmatmul.mubr.bf16.gmra.mrb[0].mxu0 %v362
  %v736 = vpop.f32.mrb[0].mxu0
  %v737 = vadd.f32 %v148, %v736
  %v738 = vpop.f32.mrb[0].mxu0
  %v739 = vpop.f32.mrb[0].mxu0
  %v740 = vadd.f32 %v148, %v739
  %v741 = vpop.f32.mrb[0].mxu0
  %742 = vmatprep.mubr.bf16.mxu0 %v367
  %743 = vmatmul.mubr.bf16.gmra.mrb[0].mxu0 %v366
  %v744 = vpop.f32.mrb[0].mxu0
  %v745 = vadd.f32 %v148, %v744
  %v746 = vpop.f32.mrb[0].mxu0
  %v747 = vpop.f32.mrb[0].mxu0
  %v748 = vadd.f32 %v148, %v747
  %v749 = vpop.f32.mrb[0].mxu0
  %750 = vmatprep.mubr.bf16.mxu0 %v371
  %751 = vmatmul.mubr.bf16.gmra.mrb[0].mxu0 %v370
  %v752 = vpop.f32.mrb[0].mxu0
  %v753 = vadd.f32 %v148, %v752
  %v754 = vpop.f32.mrb[0].mxu0
  %v755 = vpop.f32.mrb[0].mxu0
  %v756 = vadd.f32 %v148, %v755
  %v757 = vpop.f32.mrb[0].mxu0
  %758 = vmatprep.mubr.bf16.mxu0 %v375
  %759 = vmatmul.mubr.bf16.gmra.mrb[0].mxu0 %v374
  %v760 = vpop.f32.mrb[0].mxu0
  %v761 = vadd.f32 %v148, %v760
  %v762 = vpop.f32.mrb[0].mxu0
  %v763 = vpop.f32.mrb[0].mxu0
  %v764 = vadd.f32 %v148, %v763
  %v765 = vpop.f32.mrb[0].mxu0
  %766 = vmatprep.mubr.bf16.mxu0 %v379
  %767 = vmatmul.mubr.bf16.gmra.mrb[0].mxu0 %v378
  %v768 = vpop.f32.mrb[0].mxu0
  %v769 = vadd.f32 %v148, %v768
  %v770 = vpop.f32.mrb[0].mxu0
  %v771 = vpop.f32.mrb[0].mxu0
  %v772 = vadd.f32 %v148, %v771
  %v773 = vpop.f32.mrb[0].mxu0
  %774 = vmatprep.mubr.bf16.mxu0 %v383
  %775 = vmatmul.mubr.bf16.gmra.mrb[0].mxu0 %v382
  %v776 = vpop.f32.mrb[0].mxu0
  %v777 = vadd.f32 %v148, %v776
  %v778 = vpop.f32.mrb[0].mxu0
  %v779 = vpop.f32.mrb[0].mxu0
  %v780 = vadd.f32 %v148, %v779
  %v781 = vpop.f32.mrb[0].mxu0
  %782 = vmatprep.mubr.bf16.mxu0 %v387
  %783 = vmatmul.mubr.bf16.gmra.mrb[0].mxu0 %v386
  %v784 = vpop.f32.mrb[0].mxu0
  %v785 = vadd.f32 %v148, %v784
  %v786 = vpop.f32.mrb[0].mxu0
  %v787 = vpop.f32.mrb[0].mxu0
  %v788 = vadd.f32 %v148, %v787
  %v789 = vpop.f32.mrb[0].mxu0
  %790 = vmatprep.mubr.bf16.mxu0 %v391
  %791 = vmatmul.mubr.bf16.gmra.mrb[0].mxu0 %v390
  %v792 = vpop.f32.mrb[0].mxu0
  %v793 = vadd.f32 %v148, %v792
  %v794 = vpop.f32.mrb[0].mxu0
  %v795 = vpop.f32.mrb[0].mxu0
  %v796 = vadd.f32 %v148, %v795
  %v797 = vpop.f32.mrb[0].mxu0
  %798 = vmatprep.mubr.bf16.mxu0 %v395
  %799 = vmatmul.mubr.bf16.gmra.mrb[0].mxu0 %v394
  %v800 = vpop.f32.mrb[0].mxu0
  %v801 = vadd.f32 %v148, %v800
  %v802 = vpop.f32.mrb[0].mxu0
  %v803 = vpop.f32.mrb[0].mxu0
  %v804 = vadd.f32 %v148, %v803
  %v805 = vpop.f32.mrb[0].mxu0
  %806 = vmatprep.mubr.bf16.mxu0 %v399
  %807 = vmatmul.mubr.bf16.gmra.mrb[0].mxu0 %v398
  %v808 = vpop.f32.mrb[0].mxu0
  %v809 = vadd.f32 %v148, %v808
  %v810 = vpop.f32.mrb[0].mxu0
  %v811 = vpop.f32.mrb[0].mxu0
  %v812 = vadd.f32 %v148, %v811
  %v813 = vpop.f32.mrb[0].mxu0
  %814 = vmatprep.mubr.bf16.mxu0 %v403
  %815 = vmatmul.mubr.bf16.gmra.mrb[0].mxu0 %v402
  %v816 = vpop.f32.mrb[0].mxu0
  %v817 = vadd.f32 %v148, %v816
  %v818 = vpop.f32.mrb[0].mxu0
  %v819 = vpop.f32.mrb[0].mxu0
  %v820 = vadd.f32 %v148, %v819
  %v821 = vpop.f32.mrb[0].mxu0
  %822 = vdwg.mxu0
  %823 = vmatprep.subr.bf16.mxu0 0
  %824 = vmatpush1.bf16.msra.mxu0 %v614
  %825 = vmatprep.subr.bf16.mxu0 0
  %826 = vmatpush1.bf16.msra.mxu0 %v615
  %827 = vmatprep.subr.bf16.mxu0 0
  %828 = vmatpush1.bf16.msra.mxu0 %v616
  %829 = vmatprep.subr.bf16.mxu0 0
  %830 = vmatpush1.bf16.msra.mxu0 %v617
  %831 = vmatprep.subr.bf16.mxu0 0
  %832 = vmatpush1.bf16.msra.mxu0 %v618
  %833 = vmatprep.subr.bf16.mxu0 0
  %834 = vmatpush1.bf16.msra.mxu0 %v619
  %835 = vmatprep.subr.bf16.mxu0 0
  %836 = vmatpush1.bf16.msra.mxu0 %v620
  %837 = vmatprep.subr.bf16.mxu0 0
  %838 = vmatpush1.bf16.msra.mxu0 %v621
  %839 = vmatprep.subr.bf16.mxu0 0
  %840 = vmatpush1.bf16.msra.mxu0 %v622
  %841 = vmatprep.subr.bf16.mxu0 0
  %842 = vmatpush1.bf16.msra.mxu0 %v623
  %843 = vmatprep.subr.bf16.mxu0 0
  %844 = vmatpush1.bf16.msra.mxu0 %v624
  %845 = vmatprep.subr.bf16.mxu0 0
  %846 = vmatpush1.bf16.msra.mxu0 %v625
  %847 = vmatprep.subr.bf16.mxu0 0
  %848 = vmatpush1.bf16.msra.mxu0 %v626
  %849 = vmatprep.subr.bf16.mxu0 0
  %850 = vmatpush1.bf16.msra.mxu0 %v627
  %851 = vmatprep.subr.bf16.mxu0 0
  %852 = vmatpush1.bf16.msra.mxu0 %v628
  %853 = vmatprep.subr.bf16.mxu0 0
  %854 = vmatpush1.bf16.msra.mxu0 %v629
  %855 = vmatprep.mubr.bf16.mxu0 %v345
  %856 = vmatmul.mubr.bf16.gmra.mrb[0].mxu0 %v344
  %v857 = vpop.f32.mrb[0].mxu0
  %v858 = vadd.f32 %v697, %v857
  %v859 = vpop.f32.mrb[0].mxu0
  %v860 = vpop.f32.mrb[0].mxu0
  %v861 = vadd.f32 %v700, %v860
  %v862 = vpop.f32.mrb[0].mxu0
  %863 = vmatprep.mubr.bf16.mxu0 %v349
  %864 = vmatmul.mubr.bf16.gmra.mrb[0].mxu0 %v348
  %v865 = vpop.f32.mrb[0].mxu0
  %v866 = vadd.f32 %v705, %v865
  %v867 = vpop.f32.mrb[0].mxu0
  %v868 = vpop.f32.mrb[0].mxu0
  %v869 = vadd.f32 %v708, %v868
  %v870 = vpop.f32.mrb[0].mxu0
  %871 = vmatprep.mubr.bf16.mxu0 %v353
  %872 = vmatmul.mubr.bf16.gmra.mrb[0].mxu0 %v352
  %v873 = vpop.f32.mrb[0].mxu0
  %v874 = vadd.f32 %v713, %v873
  %v875 = vpop.f32.mrb[0].mxu0
  %v876 = vpop.f32.mrb[0].mxu0
  %v877 = vadd.f32 %v716, %v876
  %v878 = vpop.f32.mrb[0].mxu0
  %879 = vmatprep.mubr.bf16.mxu0 %v357
  %880 = vmatmul.mubr.bf16.gmra.mrb[0].mxu0 %v356
  %v881 = vpop.f32.mrb[0].mxu0
  %v882 = vadd.f32 %v721, %v881
  %v883 = vpop.f32.mrb[0].mxu0
  %v884 = vpop.f32.mrb[0].mxu0
  %v885 = vadd.f32 %v724, %v884
  %v886 = vpop.f32.mrb[0].mxu0
  %887 = vmatprep.mubr.bf16.mxu0 %v361
  %888 = vmatmul.mubr.bf16.gmra.mrb[0].mxu0 %v360
  %v889 = vpop.f32.mrb[0].mxu0
  %v890 = vadd.f32 %v729, %v889
  %v891 = vpop.f32.mrb[0].mxu0
  %v892 = vpop.f32.mrb[0].mxu0
  %v893 = vadd.f32 %v732, %v892
  %v894 = vpop.f32.mrb[0].mxu0
  %895 = vmatprep.mubr.bf16.mxu0 %v365
  %896 = vmatmul.mubr.bf16.gmra.mrb[0].mxu0 %v364
  %v897 = vpop.f32.mrb[0].mxu0
  %v898 = vadd.f32 %v737, %v897
  %v899 = vpop.f32.mrb[0].mxu0
  %v900 = vpop.f32.mrb[0].mxu0
  %v901 = vadd.f32 %v740, %v900
  %v902 = vpop.f32.mrb[0].mxu0
  %903 = vmatprep.mubr.bf16.mxu0 %v369
  %904 = vmatmul.mubr.bf16.gmra.mrb[0].mxu0 %v368
  %v905 = vpop.f32.mrb[0].mxu0
  %v906 = vadd.f32 %v745, %v905
  %v907 = vpop.f32.mrb[0].mxu0
  %v908 = vpop.f32.mrb[0].mxu0
  %v909 = vadd.f32 %v748, %v908
  %v910 = vpop.f32.mrb[0].mxu0
  %911 = vmatprep.mubr.bf16.mxu0 %v373
  %912 = vmatmul.mubr.bf16.gmra.mrb[0].mxu0 %v372
  %v913 = vpop.f32.mrb[0].mxu0
  %v914 = vadd.f32 %v753, %v913
  %v915 = vpop.f32.mrb[0].mxu0
  %v916 = vpop.f32.mrb[0].mxu0
  %v917 = vadd.f32 %v756, %v916
  %v918 = vpop.f32.mrb[0].mxu0
  %919 = vmatprep.mubr.bf16.mxu0 %v377
  %920 = vmatmul.mubr.bf16.gmra.mrb[0].mxu0 %v376
  %v921 = vpop.f32.mrb[0].mxu0
  %v922 = vadd.f32 %v761, %v921
  %v923 = vpop.f32.mrb[0].mxu0
  %v924 = vpop.f32.mrb[0].mxu0
  %v925 = vadd.f32 %v764, %v924
  %v926 = vpop.f32.mrb[0].mxu0
  %927 = vmatprep.mubr.bf16.mxu0 %v381
  %928 = vmatmul.mubr.bf16.gmra.mrb[0].mxu0 %v380
  %v929 = vpop.f32.mrb[0].mxu0
  %v930 = vadd.f32 %v769, %v929
  %v931 = vpop.f32.mrb[0].mxu0
  %v932 = vpop.f32.mrb[0].mxu0
  %v933 = vadd.f32 %v772, %v932
  %v934 = vpop.f32.mrb[0].mxu0
  %935 = vmatprep.mubr.bf16.mxu0 %v385
  %936 = vmatmul.mubr.bf16.gmra.mrb[0].mxu0 %v384
  %v937 = vpop.f32.mrb[0].mxu0
  %v938 = vadd.f32 %v777, %v937
  %v939 = vpop.f32.mrb[0].mxu0
  %v940 = vpop.f32.mrb[0].mxu0
  %v941 = vadd.f32 %v780, %v940
  %v942 = vpop.f32.mrb[0].mxu0
  %943 = vmatprep.mubr.bf16.mxu0 %v389
  %944 = vmatmul.mubr.bf16.gmra.mrb[0].mxu0 %v388
  %v945 = vpop.f32.mrb[0].mxu0
  %v946 = vadd.f32 %v785, %v945
  %v947 = vpop.f32.mrb[0].mxu0
  %v948 = vpop.f32.mrb[0].mxu0
  %v949 = vadd.f32 %v788, %v948
  %v950 = vpop.f32.mrb[0].mxu0
  %951 = vmatprep.mubr.bf16.mxu0 %v393
  %952 = vmatmul.mubr.bf16.gmra.mrb[0].mxu0 %v392
  %v953 = vpop.f32.mrb[0].mxu0
  %v954 = vadd.f32 %v793, %v953
  %v955 = vpop.f32.mrb[0].mxu0
  %v956 = vpop.f32.mrb[0].mxu0
  %v957 = vadd.f32 %v796, %v956
  %v958 = vpop.f32.mrb[0].mxu0
  %959 = vmatprep.mubr.bf16.mxu0 %v397
  %960 = vmatmul.mubr.bf16.gmra.mrb[0].mxu0 %v396
  %v961 = vpop.f32.mrb[0].mxu0
  %v962 = vadd.f32 %v801, %v961
  %v963 = vpop.f32.mrb[0].mxu0
  %v964 = vpop.f32.mrb[0].mxu0
  %v965 = vadd.f32 %v804, %v964
  %v966 = vpop.f32.mrb[0].mxu0
  %967 = vmatprep.mubr.bf16.mxu0 %v401
  %968 = vmatmul.mubr.bf16.gmra.mrb[0].mxu0 %v400
  %v969 = vpop.f32.mrb[0].mxu0
  %v970 = vadd.f32 %v809, %v969
  %v971 = vpop.f32.mrb[0].mxu0
  %v972 = vpop.f32.mrb[0].mxu0
  %v973 = vadd.f32 %v812, %v972
  %v974 = vpop.f32.mrb[0].mxu0
  %975 = vmatprep.mubr.bf16.mxu0 %v405
  %976 = vmatmul.mubr.bf16.gmra.mrb[0].mxu0 %v404
  %v977 = vpop.f32.mrb[0].mxu0
  %v978 = vadd.f32 %v817, %v977
  %v979 = vpop.f32.mrb[0].mxu0
  %v980 = vpop.f32.mrb[0].mxu0
  %v981 = vadd.f32 %v820, %v980
  %v982 = vpop.f32.mrb[0].mxu0
  %983 = vdwg.mxu0
  %v984 = vmax.f32 %v858, 0.0
  %v985 = vmax.f32 %v861, 0.0
  %v986 = vmax.f32 %v866, 0.0
  %v987 = vmax.f32 %v869, 0.0
  %v988 = vmax.f32 %v874, 0.0
  %v989 = vmax.f32 %v877, 0.0
  %v990 = vmax.f32 %v882, 0.0
  %v991 = vmax.f32 %v885, 0.0
  %v992 = vmax.f32 %v890, 0.0
  %v993 = vmax.f32 %v893, 0.0
  %v994 = vmax.f32 %v898, 0.0
  %v995 = vmax.f32 %v901, 0.0
  %v996 = vmax.f32 %v906, 0.0
  %v997 = vmax.f32 %v909, 0.0
  %v998 = vmax.f32 %v914, 0.0
  %v999 = vmax.f32 %v917, 0.0
  %v1000 = vmax.f32 %v922, 0.0
  %v1001 = vmax.f32 %v925, 0.0
  %v1002 = vmax.f32 %v930, 0.0
  %v1003 = vmax.f32 %v933, 0.0
  %v1004 = vmax.f32 %v938, 0.0
  %v1005 = vmax.f32 %v941, 0.0
  %v1006 = vmax.f32 %v946, 0.0
  %v1007 = vmax.f32 %v949, 0.0
  %v1008 = vmax.f32 %v954, 0.0
  %v1009 = vmax.f32 %v957, 0.0
  %v1010 = vmax.f32 %v962, 0.0
  %v1011 = vmax.f32 %v965, 0.0
  %v1012 = vmax.f32 %v970, 0.0
  %v1013 = vmax.f32 %v973, 0.0
  %v1014 = vmax.f32 %v978, 0.0
  %v1015 = vmax.f32 %v981, 0.0
  %v1016 = vpack.c.bf16 %v985, %v984
  %v1017 = vpack.c.bf16 %v987, %v986
  %v1018 = vpack.c.bf16 %v989, %v988
  %v1019 = vpack.c.bf16 %v991, %v990
  %v1020 = vpack.c.bf16 %v993, %v992
  %v1021 = vpack.c.bf16 %v995, %v994
  %v1022 = vpack.c.bf16 %v997, %v996
  %v1023 = vpack.c.bf16 %v999, %v998
  %v1024 = vpack.c.bf16 %v1001, %v1000
  %v1025 = vpack.c.bf16 %v1003, %v1002
  %v1026 = vpack.c.bf16 %v1005, %v1004
  %v1027 = vpack.c.bf16 %v1007, %v1006
  %v1028 = vpack.c.bf16 %v1009, %v1008
  %v1029 = vpack.c.bf16 %v1011, %v1010
  %v1030 = vpack.c.bf16 %v1013, %v1012
  %v1031 = vpack.c.bf16 %v1015, %v1014
  %v1048 = vunpack.c.l.b16 %v1016
  %v1049 = vunpack.c.h.b16 %v1016
  %v1050 = vunpack.c.l.b16 %v1017
  %v1051 = vunpack.c.h.b16 %v1017
  %v1052 = vunpack.c.l.b16 %v1018
  %v1053 = vunpack.c.h.b16 %v1018
  %v1054 = vunpack.c.l.b16 %v1019
  %v1055 = vunpack.c.h.b16 %v1019
  %v1056 = vunpack.c.l.b16 %v1020
  %v1057 = vunpack.c.h.b16 %v1020
  %v1058 = vunpack.c.l.b16 %v1021
  %v1059 = vunpack.c.h.b16 %v1021
  %v1060 = vunpack.c.l.b16 %v1022
  %v1061 = vunpack.c.h.b16 %v1022
  %v1062 = vunpack.c.l.b16 %v1023
  %v1063 = vunpack.c.h.b16 %v1023
  %v1064 = vunpack.c.l.b16 %v1024
  %v1065 = vunpack.c.h.b16 %v1024
  %v1066 = vunpack.c.l.b16 %v1025
  %v1067 = vunpack.c.h.b16 %v1025
  %v1068 = vunpack.c.l.b16 %v1026
  %v1069 = vunpack.c.h.b16 %v1026
  %v1070 = vunpack.c.l.b16 %v1027
  %v1071 = vunpack.c.h.b16 %v1027
  %v1072 = vunpack.c.l.b16 %v1028
  %v1073 = vunpack.c.h.b16 %v1028
  %v1074 = vunpack.c.l.b16 %v1029
  %v1075 = vunpack.c.h.b16 %v1029
  %v1076 = vunpack.c.l.b16 %v1030
  %v1077 = vunpack.c.h.b16 %v1030
  %v1078 = vunpack.c.l.b16 %v1031
  %v1079 = vunpack.c.h.b16 %v1031
  %v1080 = vpack.c.b16 %v1048, %v1048
  %v1081 = vpack.c.b16 %v1049, %v1049
  %v1082 = vpack.c.b16 %v1050, %v1050
  %v1083 = vpack.c.b16 %v1051, %v1051
  %v1084 = vpack.c.b16 %v1052, %v1052
  %v1085 = vpack.c.b16 %v1053, %v1053
  %v1086 = vpack.c.b16 %v1054, %v1054
  %v1087 = vpack.c.b16 %v1055, %v1055
  %v1088 = vpack.c.b16 %v1056, %v1056
  %v1089 = vpack.c.b16 %v1057, %v1057
  %v1090 = vpack.c.b16 %v1058, %v1058
  %v1091 = vpack.c.b16 %v1059, %v1059
  %v1092 = vpack.c.b16 %v1060, %v1060
  %v1093 = vpack.c.b16 %v1061, %v1061
  %v1094 = vpack.c.b16 %v1062, %v1062
  %v1095 = vpack.c.b16 %v1063, %v1063
  %v1096 = vpack.c.b16 %v1064, %v1064
  %v1097 = vpack.c.b16 %v1065, %v1065
  %v1098 = vpack.c.b16 %v1066, %v1066
  %v1099 = vpack.c.b16 %v1067, %v1067
  %v1100 = vpack.c.b16 %v1068, %v1068
  %v1101 = vpack.c.b16 %v1069, %v1069
  %v1102 = vpack.c.b16 %v1070, %v1070
  %v1103 = vpack.c.b16 %v1071, %v1071
  %v1104 = vpack.c.b16 %v1072, %v1072
  %v1105 = vpack.c.b16 %v1073, %v1073
  %v1106 = vpack.c.b16 %v1074, %v1074
  %v1107 = vpack.c.b16 %v1075, %v1075
  %v1108 = vpack.c.b16 %v1076, %v1076
  %v1109 = vpack.c.b16 %v1077, %v1077
  %v1110 = vpack.c.b16 %v1078, %v1078
  %v1111 = vpack.c.b16 %v1079, %v1079
  %1144 = vst [vmem:[%s3] sm:$0xf] %v1080
  %1145 = vst [vmem:[%s3 + $0x4] sm:$0xf] %v1081
  %1146 = vst [vmem:[%s3 + $0x8] sm:$0xf] %v1082
  %1147 = vst [vmem:[%s3 + $0xc] sm:$0xf] %v1083
  %1148 = vst [vmem:[%s3 + $0x10] sm:$0xf] %v1084
  %1149 = vst [vmem:[%s3 + $0x14] sm:$0xf] %v1085
  %1150 = vst [vmem:[%s3 + $0x18] sm:$0xf] %v1086
  %1151 = vst [vmem:[%s3 + $0x1c] sm:$0xf] %v1087
  %1152 = vst [vmem:[%s3 + $0x20] sm:$0xf] %v1088
  %1153 = vst [vmem:[%s3 + $0x24] sm:$0xf] %v1089
  %1154 = vst [vmem:[%s3 + $0x28] sm:$0xf] %v1090
  %1155 = vst [vmem:[%s3 + $0x2c] sm:$0xf] %v1091
  %1156 = vst [vmem:[%s3 + $0x30] sm:$0xf] %v1092
  %1157 = vst [vmem:[%s3 + $0x34] sm:$0xf] %v1093
  %1158 = vst [vmem:[%s3 + $0x38] sm:$0xf] %v1094
  %1159 = vst [vmem:[%s3 + $0x3c] sm:$0xf] %v1095
  %1160 = vst [vmem:[%s3 + $0x40] sm:$0xf] %v1096
  %1161 = vst [vmem:[%s3 + $0x44] sm:$0xf] %v1097
  %1162 = vst [vmem:[%s3 + $0x48] sm:$0xf] %v1098
  %1163 = vst [vmem:[%s3 + $0x4c] sm:$0xf] %v1099
  %1164 = vst [vmem:[%s3 + $0x50] sm:$0xf] %v1100
  %1165 = vst [vmem:[%s3 + $0x54] sm:$0xf] %v1101
  %1166 = vst [vmem:[%s3 + $0x58] sm:$0xf] %v1102
  %1167 = vst [vmem:[%s3 + $0x5c] sm:$0xf] %v1103
  %1168 = vst [vmem:[%s3 + $0x60] sm:$0xf] %v1104
  %1169 = vst [vmem:[%s3 + $0x64] sm:$0xf] %v1105
  %1170 = vst [vmem:[%s3 + $0x68] sm:$0xf] %v1106
  %1171 = vst [vmem:[%s3 + $0x6c] sm:$0xf] %v1107
  %1172 = vst [vmem:[%s3 + $0x70] sm:$0xf] %v1108
  %1173 = vst [vmem:[%s3 + $0x74] sm:$0xf] %v1109
  %1174 = vst [vmem:[%s3 + $0x78] sm:$0xf] %v1110
  %1175 = vst [vmem:[%s3 + $0x7c] sm:$0xf] %v1111
  // Predicated region
  $region14: #{dqn_forward.5} parent=0 // pred_check
    _
  $region15: #{dqn_forward.5} parent=0 // pred_check_branch
    %1177 = sbr.rel (0) target = $region17
  $region16: #{dqn_forward.5} parent=0 // pred_region
    _
  $region17: #{dqn_forward.5} parent=0 // pred_fallthru
    _
  // Predicated region
  $region18: #{dqn_forward.5} parent=0 // pred_check
    _
  $region19: #{dqn_forward.5} parent=0 // pred_check_branch
    %1179 = sbr.rel (0) target = $region21
  $region20: #{dqn_forward.5} parent=0 // pred_region
    _
  $region21: #{dqn_forward.5} parent=0 // pred_fallthru
    _

// kernel: dqn_forward.6
$region0: #{dqn_forward.6}
  #allocation0 [shape = 'u32[]', space=smem, size = 0x4, offset = 0x4, fixed_abs, tag = 'smem constant byte address 0x4 - core index']
  #allocation1 [shape = 'u32[144,128]{1,0:T(1,128)}', space=vmem, size = 0x12000, scoped, tag = 'internal scratch']
  %s0 = inlined_call_operand.vmem [shape: bf16[256,576], index: 0, kind: input, shape index: {}]
  %s1 = inlined_call_operand.vmem [shape: bf16[576,128], index: 1, kind: input, shape index: {}]
  %s2 = inlined_call_operand.vmem [shape: f32[1,128], index: 2, kind: input, shape index: {}]
  %s3 = inlined_call_operand.vmem [shape: bf16[256,128], index: 3, kind: output, shape index: {}]
  %s4 = sld [smem:[#allocation0]]
  $region22: #{dqn_forward.6} parent=0
    _
  %s6 = ssub.s32 1, %s4
  %s7 = scalar_select 0, %s6, %s4
  // Predicated region
  $region2: #{dqn_forward.6} parent=0 // pred_check
    _
  $region3: #{dqn_forward.6} parent=0 // pred_check_branch
    %9 = sbr.rel (0) target = $region5
  $region4: #{dqn_forward.6} parent=0 // pred_region
    _
  $region5: #{dqn_forward.6} parent=0 // pred_fallthru
    _
  // Predicated region
  $region6: #{dqn_forward.6} parent=0 // pred_check
    _
  $region7: #{dqn_forward.6} parent=0 // pred_check_branch
    %11 = sbr.rel (0) target = $region9
  $region8: #{dqn_forward.6} parent=0 // pred_region
    _
  $region9: #{dqn_forward.6} parent=0 // pred_fallthru
    _
  // Predicated region
  $region10: #{dqn_forward.6} parent=0 // pred_check
    _
  $region11: #{dqn_forward.6} parent=0 // pred_check_branch
    %13 = sbr.rel (0) target = $region13
  $region12: #{dqn_forward.6} parent=0 // pred_region
    _
  $region13: #{dqn_forward.6} parent=0 // pred_fallthru
    _
  %v15 = vld [vmem:[%s0] sm:$0xff]
  %v16 = vld [vmem:[%s0 + $0x8] sm:$0xff]
  %v17 = vld [vmem:[%s0 + $0x10] sm:$0xf]
  %v18 = vld [vmem:[%s0 + $0x14] sm:$0xff]
  %v19 = vld [vmem:[%s0 + $0x1c] sm:$0xff]
  %v20 = vld [vmem:[%s0 + $0x24] sm:$0xf]
  %v21 = vld [vmem:[%s0 + $0x28] sm:$0xff]
  %v22 = vld [vmem:[%s0 + $0x30] sm:$0xff]
  %v23 = vld [vmem:[%s0 + $0x38] sm:$0xf]
  %v24 = vld [vmem:[%s0 + $0x3c] sm:$0xff]
  %v25 = vld [vmem:[%s0 + $0x44] sm:$0xff]
  %v26 = vld [vmem:[%s0 + $0x4c] sm:$0xf]
  %v27 = vld [vmem:[%s0 + $0x50] sm:$0xff]
  %v28 = vld [vmem:[%s0 + $0x58] sm:$0xff]
  %v29 = vld [vmem:[%s0 + $0x60] sm:$0xf]
  %v30 = vld [vmem:[%s0 + $0x64] sm:$0xff]
  %v31 = vld [vmem:[%s0 + $0x6c] sm:$0xff]
  %v32 = vld [vmem:[%s0 + $0x74] sm:$0xf]
  %v33 = vld [vmem:[%s0 + $0x78] sm:$0xff]
  %v34 = vld [vmem:[%s0 + $0x80] sm:$0xff]
  %v35 = vld [vmem:[%s0 + $0x88] sm:$0xf]
  %v36 = vld [vmem:[%s0 + $0x8c] sm:$0xff]
  %v37 = vld [vmem:[%s0 + $0x94] sm:$0xff]
  %v38 = vld [vmem:[%s0 + $0x9c] sm:$0xf]
  %v39 = vld [vmem:[%s0 + $0xa0] sm:$0xff]
  %v40 = vld [vmem:[%s0 + $0xa8] sm:$0xff]
  %v41 = vld [vmem:[%s0 + $0xb0] sm:$0xf]
  %v42 = vld [vmem:[%s0 + $0xb4] sm:$0xff]
  %v43 = vld [vmem:[%s0 + $0xbc] sm:$0xff]
  %v44 = vld [vmem:[%s0 + $0xc4] sm:$0xf]
  %v45 = vld [vmem:[%s0 + $0xc8] sm:$0xff]
  %v46 = vld [vmem:[%s0 + $0xd0] sm:$0xff]
  %v47 = vld [vmem:[%s0 + $0xd8] sm:$0xf]
  %v48 = vld [vmem:[%s0 + $0xdc] sm:$0xff]
  %v49 = vld [vmem:[%s0 + $0xe4] sm:$0xff]
  %v50 = vld [vmem:[%s0 + $0xec] sm:$0xf]
  %v51 = vld [vmem:[%s0 + $0xf0] sm:$0xff]
  %v52 = vld [vmem:[%s0 + $0xf8] sm:$0xff]
  %v53 = vld [vmem:[%s0 + $0x100] sm:$0xf]
  %v54 = vld [vmem:[%s0 + $0x104] sm:$0xff]
  %v55 = vld [vmem:[%s0 + $0x10c] sm:$0xff]
  %v56 = vld [vmem:[%s0 + $0x114] sm:$0xf]
  %v57 = vld [vmem:[%s0 + $0x118] sm:$0xff]
  %v58 = vld [vmem:[%s0 + $0x120] sm:$0xff]
  %v59 = vld [vmem:[%s0 + $0x128] sm:$0xf]
  %v60 = vld [vmem:[%s0 + $0x12c] sm:$0xff]
  %v61 = vld [vmem:[%s0 + $0x134] sm:$0xff]
  %v62 = vld [vmem:[%s0 + $0x13c] sm:$0xf]
  %v63 = vld [vmem:[%s0 + $0x140] sm:$0xff]
  %v64 = vld [vmem:[%s0 + $0x148] sm:$0xff]
  %v65 = vld [vmem:[%s0 + $0x150] sm:$0xf]
  %v66 = vld [vmem:[%s0 + $0x154] sm:$0xff]
  %v67 = vld [vmem:[%s0 + $0x15c] sm:$0xff]
  %v68 = vld [vmem:[%s0 + $0x164] sm:$0xf]
  %v69 = vld [vmem:[%s0 + $0x168] sm:$0xff]
  %v70 = vld [vmem:[%s0 + $0x170] sm:$0xff]
  %v71 = vld [vmem:[%s0 + $0x178] sm:$0xf]
  %v72 = vld [vmem:[%s0 + $0x17c] sm:$0xff]
  %v73 = vld [vmem:[%s0 + $0x184] sm:$0xff]
  %v74 = vld [vmem:[%s0 + $0x18c] sm:$0xf]
  %v75 = vld [vmem:[%s0 + $0x190] sm:$0xff]
  %v76 = vld [vmem:[%s0 + $0x198] sm:$0xff]
  %v77 = vld [vmem:[%s0 + $0x1a0] sm:$0xf]
  %v78 = vld [vmem:[%s0 + $0x1a4] sm:$0xff]
  %v79 = vld [vmem:[%s0 + $0x1ac] sm:$0xff]
  %v80 = vld [vmem:[%s0 + $0x1b4] sm:$0xf]
  %v81 = vld [vmem:[%s0 + $0x1b8] sm:$0xff]
  %v82 = vld [vmem:[%s0 + $0x1c0] sm:$0xff]
  %v83 = vld [vmem:[%s0 + $0x1c8] sm:$0xf]
  %v84 = vld [vmem:[%s0 + $0x1cc] sm:$0xff]
  %v85 = vld [vmem:[%s0 + $0x1d4] sm:$0xff]
  %v86 = vld [vmem:[%s0 + $0x1dc] sm:$0xf]
  %v87 = vld [vmem:[%s0 + $0x1e0] sm:$0xff]
  %v88 = vld [vmem:[%s0 + $0x1e8] sm:$0xff]
  %v89 = vld [vmem:[%s0 + $0x1f0] sm:$0xf]
  %v90 = vld [vmem:[%s0 + $0x1f4] sm:$0xff]
  %v91 = vld [vmem:[%s0 + $0x1fc] sm:$0xff]
  %v92 = vld [vmem:[%s0 + $0x204] sm:$0xf]
  %v93 = vld [vmem:[%s0 + $0x208] sm:$0xff]
  %v94 = vld [vmem:[%s0 + $0x210] sm:$0xff]
  %v95 = vld [vmem:[%s0 + $0x218] sm:$0xf]
  %v96 = vld [vmem:[%s0 + $0x21c] sm:$0xff]
  %v97 = vld [vmem:[%s0 + $0x224] sm:$0xff]
  %v98 = vld [vmem:[%s0 + $0x22c] sm:$0xf]
  %v99 = vld [vmem:[%s0 + $0x230] sm:$0xff]
  %v100 = vld [vmem:[%s0 + $0x238] sm:$0xff]
  %v101 = vld [vmem:[%s0 + $0x240] sm:$0xf]
  %v102 = vld [vmem:[%s0 + $0x244] sm:$0xff]
  %v103 = vld [vmem:[%s0 + $0x24c] sm:$0xff]
  %v104 = vld [vmem:[%s0 + $0x254] sm:$0xf]
  %v105 = vld [vmem:[%s0 + $0x258] sm:$0xff]
  %v106 = vld [vmem:[%s0 + $0x260] sm:$0xff]
  %v107 = vld [vmem:[%s0 + $0x268] sm:$0xf]
  %v108 = vld [vmem:[%s0 + $0x26c] sm:$0xff]
  %v109 = vld [vmem:[%s0 + $0x274] sm:$0xff]
  %v110 = vld [vmem:[%s0 + $0x27c] sm:$0xf]
  %v111 = vld [vmem:[%s1] sm:$0xf]
  %v112 = vld [vmem:[%s1 + $0x4] sm:$0xf]
  %v113 = vld [vmem:[%s1 + $0x8] sm:$0xf]
  %v114 = vld [vmem:[%s1 + $0xc] sm:$0xf]
  %v115 = vld [vmem:[%s1 + $0x10] sm:$0xf]
  %v116 = vld [vmem:[%s1 + $0x14] sm:$0xf]
  %v117 = vld [vmem:[%s1 + $0x18] sm:$0xf]
  %v118 = vld [vmem:[%s1 + $0x1c] sm:$0xf]
  %v119 = vld [vmem:[%s1 + $0x20] sm:$0xf]
  %v120 = vld [vmem:[%s1 + $0x24] sm:$0xf]
  %v121 = vld [vmem:[%s1 + $0x28] sm:$0xf]
  %v122 = vld [vmem:[%s1 + $0x2c] sm:$0xf]
  %v123 = vld [vmem:[%s1 + $0x30] sm:$0xf]
  %v124 = vld [vmem:[%s1 + $0x34] sm:$0xf]
  %v125 = vld [vmem:[%s1 + $0x38] sm:$0xf]
  %v126 = vld [vmem:[%s1 + $0x3c] sm:$0xf]
  %v127 = vld [vmem:[%s1 + $0x40] sm:$0xf]
  %v128 = vld [vmem:[%s1 + $0x44] sm:$0xf]
  %v129 = vld [vmem:[%s1 + $0x48] sm:$0xf]
  %v130 = vld [vmem:[%s1 + $0x4c] sm:$0xf]
  %v131 = vld [vmem:[%s1 + $0x50] sm:$0xf]
  %v132 = vld [vmem:[%s1 + $0x54] sm:$0xf]
  %v133 = vld [vmem:[%s1 + $0x58] sm:$0xf]
  %v134 = vld [vmem:[%s1 + $0x5c] sm:$0xf]
  %v135 = vld [vmem:[%s1 + $0x60] sm:$0xf]
  %v136 = vld [vmem:[%s1 + $0x64] sm:$0xf]
  %v137 = vld [vmem:[%s1 + $0x68] sm:$0xf]
  %v138 = vld [vmem:[%s1 + $0x6c] sm:$0xf]
  %v139 = vld [vmem:[%s1 + $0x70] sm:$0xf]
  %v140 = vld [vmem:[%s1 + $0x74] sm:$0xf]
  %v141 = vld [vmem:[%s1 + $0x78] sm:$0xf]
  %v142 = vld [vmem:[%s1 + $0x7c] sm:$0xf]
  %v143 = vld [vmem:[%s1 + $0x80] sm:$0xf]
  %v144 = vld [vmem:[%s1 + $0x84] sm:$0xf]
  %v145 = vld [vmem:[%s1 + $0x88] sm:$0xf]
  %v146 = vld [vmem:[%s1 + $0x8c] sm:$0xf]
  %v147 = vld [vmem:[%s1 + $0x90] sm:$0xf]
  %v148 = vld [vmem:[%s1 + $0x94] sm:$0xf]
  %v149 = vld [vmem:[%s1 + $0x98] sm:$0xf]
  %v150 = vld [vmem:[%s1 + $0x9c] sm:$0xf]
  %v151 = vld [vmem:[%s1 + $0xa0] sm:$0xf]
  %v152 = vld [vmem:[%s1 + $0xa4] sm:$0xf]
  %v153 = vld [vmem:[%s1 + $0xa8] sm:$0xf]
  %v154 = vld [vmem:[%s1 + $0xac] sm:$0xf]
  %v155 = vld [vmem:[%s1 + $0xb0] sm:$0xf]
  %v156 = vld [vmem:[%s1 + $0xb4] sm:$0xf]
  %v157 = vld [vmem:[%s1 + $0xb8] sm:$0xf]
  %v158 = vld [vmem:[%s1 + $0xbc] sm:$0xf]
  %v159 = vld [vmem:[%s1 + $0xc0] sm:$0xf]
  %v160 = vld [vmem:[%s1 + $0xc4] sm:$0xf]
  %v161 = vld [vmem:[%s1 + $0xc8] sm:$0xf]
  %v162 = vld [vmem:[%s1 + $0xcc] sm:$0xf]
  %v163 = vld [vmem:[%s1 + $0xd0] sm:$0xf]
  %v164 = vld [vmem:[%s1 + $0xd4] sm:$0xf]
  %v165 = vld [vmem:[%s1 + $0xd8] sm:$0xf]
  %v166 = vld [vmem:[%s1 + $0xdc] sm:$0xf]
  %v167 = vld [vmem:[%s1 + $0xe0] sm:$0xf]
  %v168 = vld [vmem:[%s1 + $0xe4] sm:$0xf]
  %v169 = vld [vmem:[%s1 + $0xe8] sm:$0xf]
  %v170 = vld [vmem:[%s1 + $0xec] sm:$0xf]
  %v171 = vld [vmem:[%s1 + $0xf0] sm:$0xf]
  %v172 = vld [vmem:[%s1 + $0xf4] sm:$0xf]
  %v173 = vld [vmem:[%s1 + $0xf8] sm:$0xf]
  %v174 = vld [vmem:[%s1 + $0xfc] sm:$0xf]
  %v175 = vld [vmem:[%s1 + $0x100] sm:$0xf]
  %v176 = vld [vmem:[%s1 + $0x104] sm:$0xf]
  %v177 = vld [vmem:[%s1 + $0x108] sm:$0xf]
  %v178 = vld [vmem:[%s1 + $0x10c] sm:$0xf]
  %v179 = vld [vmem:[%s1 + $0x110] sm:$0xf]
  %v180 = vld [vmem:[%s1 + $0x114] sm:$0xf]
  %v181 = vld [vmem:[%s1 + $0x118] sm:$0xf]
  %v182 = vld [vmem:[%s1 + $0x11c] sm:$0xf]
  %v183 = vld [vmem:[%s2] sm:$0x1]
  %v185 = vlaneseq
  %v186 = vshrl.u32 %v185, 7
  %v187 = vsub.s32 0, %v186
  %v188 = vrot.slane %v183, %v187
  %v286 = vunpack.c.l.b16 %v15
  %v287 = vunpack.c.h.b16 %v15
  %v288 = vunpack.c.l.b16 %v16
  %v289 = vunpack.c.h.b16 %v16
  %v290 = vunpack.c.l.b16 %v17
  %v291 = vunpack.c.l.b16 %v18
  %v292 = vunpack.c.h.b16 %v18
  %v293 = vunpack.c.l.b16 %v19
  %v294 = vunpack.c.h.b16 %v19
  %v295 = vunpack.c.l.b16 %v20
  %v296 = vunpack.c.l.b16 %v21
  %v297 = vunpack.c.h.b16 %v21
  %v298 = vunpack.c.l.b16 %v22
  %v299 = vunpack.c.h.b16 %v22
  %v300 = vunpack.c.l.b16 %v23
  %v301 = vunpack.c.l.b16 %v24
  %v302 = vunpack.c.h.b16 %v24
  %v303 = vunpack.c.l.b16 %v25
  %v304 = vunpack.c.h.b16 %v25
  %v305 = vunpack.c.l.b16 %v26
  %v306 = vunpack.c.l.b16 %v27
  %v307 = vunpack.c.h.b16 %v27
  %v308 = vunpack.c.l.b16 %v28
  %v309 = vunpack.c.h.b16 %v28
  %v310 = vunpack.c.l.b16 %v29
  %v311 = vunpack.c.l.b16 %v30
  %v312 = vunpack.c.h.b16 %v30
  %v313 = vunpack.c.l.b16 %v31
  %v314 = vunpack.c.h.b16 %v31
  %v315 = vunpack.c.l.b16 %v32
  %v316 = vunpack.c.l.b16 %v33
  %v317 = vunpack.c.h.b16 %v33
  %v318 = vunpack.c.l.b16 %v34
  %v319 = vunpack.c.h.b16 %v34
  %v320 = vunpack.c.l.b16 %v35
  %v321 = vunpack.c.l.b16 %v36
  %v322 = vunpack.c.h.b16 %v36
  %v323 = vunpack.c.l.b16 %v37
  %v324 = vunpack.c.h.b16 %v37
  %v325 = vunpack.c.l.b16 %v38
  %v326 = vunpack.c.l.b16 %v39
  %v327 = vunpack.c.h.b16 %v39
  %v328 = vunpack.c.l.b16 %v40
  %v329 = vunpack.c.h.b16 %v40
  %v330 = vunpack.c.l.b16 %v41
  %v331 = vunpack.c.l.b16 %v42
  %v332 = vunpack.c.h.b16 %v42
  %v333 = vunpack.c.l.b16 %v43
  %v334 = vunpack.c.h.b16 %v43
  %v335 = vunpack.c.l.b16 %v44
  %v336 = vunpack.c.l.b16 %v45
  %v337 = vunpack.c.h.b16 %v45
  %v338 = vunpack.c.l.b16 %v46
  %v339 = vunpack.c.h.b16 %v46
  %v340 = vunpack.c.l.b16 %v47
  %v341 = vunpack.c.l.b16 %v48
  %v342 = vunpack.c.h.b16 %v48
  %v343 = vunpack.c.l.b16 %v49
  %v344 = vunpack.c.h.b16 %v49
  %v345 = vunpack.c.l.b16 %v50
  %v346 = vunpack.c.l.b16 %v51
  %v347 = vunpack.c.h.b16 %v51
  %v348 = vunpack.c.l.b16 %v52
  %v349 = vunpack.c.h.b16 %v52
  %v350 = vunpack.c.l.b16 %v53
  %v351 = vunpack.c.l.b16 %v54
  %v352 = vunpack.c.h.b16 %v54
  %v353 = vunpack.c.l.b16 %v55
  %v354 = vunpack.c.h.b16 %v55
  %v355 = vunpack.c.l.b16 %v56
  %v356 = vunpack.c.l.b16 %v57
  %v357 = vunpack.c.h.b16 %v57
  %v358 = vunpack.c.l.b16 %v58
  %v359 = vunpack.c.h.b16 %v58
  %v360 = vunpack.c.l.b16 %v59
  %v361 = vunpack.c.l.b16 %v60
  %v362 = vunpack.c.h.b16 %v60
  %v363 = vunpack.c.l.b16 %v61
  %v364 = vunpack.c.h.b16 %v61
  %v365 = vunpack.c.l.b16 %v62
  %v366 = vunpack.c.l.b16 %v63
  %v367 = vunpack.c.h.b16 %v63
  %v368 = vunpack.c.l.b16 %v64
  %v369 = vunpack.c.h.b16 %v64
  %v370 = vunpack.c.l.b16 %v65
  %v371 = vunpack.c.l.b16 %v66
  %v372 = vunpack.c.h.b16 %v66
  %v373 = vunpack.c.l.b16 %v67
  %v374 = vunpack.c.h.b16 %v67
  %v375 = vunpack.c.l.b16 %v68
  %v376 = vunpack.c.l.b16 %v69
  %v377 = vunpack.c.h.b16 %v69
  %v378 = vunpack.c.l.b16 %v70
  %v379 = vunpack.c.h.b16 %v70
  %v380 = vunpack.c.l.b16 %v71
  %v381 = vunpack.c.l.b16 %v72
  %v382 = vunpack.c.h.b16 %v72
  %v383 = vunpack.c.l.b16 %v73
  %v384 = vunpack.c.h.b16 %v73
  %v385 = vunpack.c.l.b16 %v74
  %v386 = vunpack.c.l.b16 %v75
  %v387 = vunpack.c.h.b16 %v75
  %v388 = vunpack.c.l.b16 %v76
  %v389 = vunpack.c.h.b16 %v76
  %v390 = vunpack.c.l.b16 %v77
  %v391 = vunpack.c.l.b16 %v78
  %v392 = vunpack.c.h.b16 %v78
  %v393 = vunpack.c.l.b16 %v79
  %v394 = vunpack.c.h.b16 %v79
  %v395 = vunpack.c.l.b16 %v80
  %v396 = vunpack.c.l.b16 %v81
  %v397 = vunpack.c.h.b16 %v81
  %v398 = vunpack.c.l.b16 %v82
  %v399 = vunpack.c.h.b16 %v82
  %v400 = vunpack.c.l.b16 %v83
  %v401 = vunpack.c.l.b16 %v84
  %v402 = vunpack.c.h.b16 %v84
  %v403 = vunpack.c.l.b16 %v85
  %v404 = vunpack.c.h.b16 %v85
  %v405 = vunpack.c.l.b16 %v86
  %v406 = vunpack.c.l.b16 %v87
  %v407 = vunpack.c.h.b16 %v87
  %v408 = vunpack.c.l.b16 %v88
  %v409 = vunpack.c.h.b16 %v88
  %v410 = vunpack.c.l.b16 %v89
  %v411 = vunpack.c.l.b16 %v90
  %v412 = vunpack.c.h.b16 %v90
  %v413 = vunpack.c.l.b16 %v91
  %v414 = vunpack.c.h.b16 %v91
  %v415 = vunpack.c.l.b16 %v92
  %v416 = vunpack.c.l.b16 %v93
  %v417 = vunpack.c.h.b16 %v93
  %v418 = vunpack.c.l.b16 %v94
  %v419 = vunpack.c.h.b16 %v94
  %v420 = vunpack.c.l.b16 %v95
  %v421 = vunpack.c.l.b16 %v96
  %v422 = vunpack.c.h.b16 %v96
  %v423 = vunpack.c.l.b16 %v97
  %v424 = vunpack.c.h.b16 %v97
  %v425 = vunpack.c.l.b16 %v98
  %v426 = vunpack.c.l.b16 %v99
  %v427 = vunpack.c.h.b16 %v99
  %v428 = vunpack.c.l.b16 %v100
  %v429 = vunpack.c.h.b16 %v100
  %v430 = vunpack.c.l.b16 %v101
  %v431 = vunpack.c.l.b16 %v102
  %v432 = vunpack.c.h.b16 %v102
  %v433 = vunpack.c.l.b16 %v103
  %v434 = vunpack.c.h.b16 %v103
  %v435 = vunpack.c.l.b16 %v104
  %v436 = vunpack.c.l.b16 %v105
  %v437 = vunpack.c.h.b16 %v105
  %v438 = vunpack.c.l.b16 %v106
  %v439 = vunpack.c.h.b16 %v106
  %v440 = vunpack.c.l.b16 %v107
  %v441 = vunpack.c.l.b16 %v108
  %v442 = vunpack.c.h.b16 %v108
  %v443 = vunpack.c.l.b16 %v109
  %v444 = vunpack.c.h.b16 %v109
  %v445 = vunpack.c.l.b16 %v110
  %v446 = vpack.c.b16 %v291, %v286
  %v447 = vpack.c.b16 %v292, %v287
  %v448 = vpack.c.b16 %v293, %v288
  %v449 = vpack.c.b16 %v294, %v289
  %v450 = vpack.c.b16 %v295, %v290
  %v451 = vpack.c.b16 %v301, %v296
  %v452 = vpack.c.b16 %v302, %v297
  %v453 = vpack.c.b16 %v303, %v298
  %v454 = vpack.c.b16 %v304, %v299
  %v455 = vpack.c.b16 %v305, %v300
  %v456 = vpack.c.b16 %v311, %v306
  %v457 = vpack.c.b16 %v312, %v307
  %v458 = vpack.c.b16 %v313, %v308
  %v459 = vpack.c.b16 %v314, %v309
  %v460 = vpack.c.b16 %v315, %v310
  %v461 = vpack.c.b16 %v321, %v316
  %v462 = vpack.c.b16 %v322, %v317
  %v463 = vpack.c.b16 %v323, %v318
  %v464 = vpack.c.b16 %v324, %v319
  %v465 = vpack.c.b16 %v325, %v320
  %v466 = vpack.c.b16 %v331, %v326
  %v467 = vpack.c.b16 %v332, %v327
  %v468 = vpack.c.b16 %v333, %v328
  %v469 = vpack.c.b16 %v334, %v329
  %v470 = vpack.c.b16 %v335, %v330
  %v471 = vpack.c.b16 %v341, %v336
  %v472 = vpack.c.b16 %v342, %v337
  %v473 = vpack.c.b16 %v343, %v338
  %v474 = vpack.c.b16 %v344, %v339
  %v475 = vpack.c.b16 %v345, %v340
  %v476 = vpack.c.b16 %v351, %v346
  %v477 = vpack.c.b16 %v352, %v347
  %v478 = vpack.c.b16 %v353, %v348
  %v479 = vpack.c.b16 %v354, %v349
  %v480 = vpack.c.b16 %v355, %v350
  %v481 = vpack.c.b16 %v361, %v356
  %v482 = vpack.c.b16 %v362, %v357
  %v483 = vpack.c.b16 %v363, %v358
  %v484 = vpack.c.b16 %v364, %v359
  %v485 = vpack.c.b16 %v365, %v360
  %v486 = vpack.c.b16 %v371, %v366
  %v487 = vpack.c.b16 %v372, %v367
  %v488 = vpack.c.b16 %v373, %v368
  %v489 = vpack.c.b16 %v374, %v369
  %v490 = vpack.c.b16 %v375, %v370
  %v491 = vpack.c.b16 %v381, %v376
  %v492 = vpack.c.b16 %v382, %v377
  %v493 = vpack.c.b16 %v383, %v378
  %v494 = vpack.c.b16 %v384, %v379
  %v495 = vpack.c.b16 %v385, %v380
  %v496 = vpack.c.b16 %v391, %v386
  %v497 = vpack.c.b16 %v392, %v387
  %v498 = vpack.c.b16 %v393, %v388
  %v499 = vpack.c.b16 %v394, %v389
  %v500 = vpack.c.b16 %v395, %v390
  %v501 = vpack.c.b16 %v401, %v396
  %v502 = vpack.c.b16 %v402, %v397
  %v503 = vpack.c.b16 %v403, %v398
  %v504 = vpack.c.b16 %v404, %v399
  %v505 = vpack.c.b16 %v405, %v400
  %v506 = vpack.c.b16 %v411, %v406
  %v507 = vpack.c.b16 %v412, %v407
  %v508 = vpack.c.b16 %v413, %v408
  %v509 = vpack.c.b16 %v414, %v409
  %v510 = vpack.c.b16 %v415, %v410
  %v511 = vpack.c.b16 %v421, %v416
  %v512 = vpack.c.b16 %v422, %v417
  %v513 = vpack.c.b16 %v423, %v418
  %v514 = vpack.c.b16 %v424, %v419
  %v515 = vpack.c.b16 %v425, %v420
  %v516 = vpack.c.b16 %v431, %v426
  %v517 = vpack.c.b16 %v432, %v427
  %v518 = vpack.c.b16 %v433, %v428
  %v519 = vpack.c.b16 %v434, %v429
  %v520 = vpack.c.b16 %v435, %v430
  %v521 = vpack.c.b16 %v441, %v436
  %v522 = vpack.c.b16 %v442, %v437
  %v523 = vpack.c.b16 %v443, %v438
  %v524 = vpack.c.b16 %v444, %v439
  %v525 = vpack.c.b16 %v445, %v440
  %v662 = vunpack.c.l.b16 %v111
  %v663 = vunpack.c.l.b16 %v112
  %v664 = vunpack.c.l.b16 %v113
  %v665 = vunpack.c.l.b16 %v114
  %v666 = vunpack.c.l.b16 %v115
  %v667 = vunpack.c.l.b16 %v116
  %v668 = vunpack.c.l.b16 %v117
  %v669 = vunpack.c.l.b16 %v118
  %v670 = vunpack.c.l.b16 %v119
  %v671 = vunpack.c.l.b16 %v120
  %v672 = vunpack.c.l.b16 %v121
  %v673 = vunpack.c.l.b16 %v122
  %v674 = vunpack.c.l.b16 %v123
  %v675 = vunpack.c.l.b16 %v124
  %v676 = vunpack.c.l.b16 %v125
  %v677 = vunpack.c.l.b16 %v126
  %v678 = vunpack.c.l.b16 %v127
  %v679 = vunpack.c.l.b16 %v128
  %v680 = vunpack.c.l.b16 %v129
  %v681 = vunpack.c.l.b16 %v130
  %v682 = vunpack.c.l.b16 %v131
  %v683 = vunpack.c.l.b16 %v132
  %v684 = vunpack.c.l.b16 %v133
  %v685 = vunpack.c.l.b16 %v134
  %v686 = vunpack.c.l.b16 %v135
  %v687 = vunpack.c.l.b16 %v136
  %v688 = vunpack.c.l.b16 %v137
  %v689 = vunpack.c.l.b16 %v138
  %v690 = vunpack.c.l.b16 %v139
  %v691 = vunpack.c.l.b16 %v140
  %v692 = vunpack.c.l.b16 %v141
  %v693 = vunpack.c.l.b16 %v142
  %v694 = vunpack.c.l.b16 %v143
  %v695 = vunpack.c.l.b16 %v144
  %v696 = vunpack.c.l.b16 %v145
  %v697 = vunpack.c.l.b16 %v146
  %v698 = vunpack.c.l.b16 %v147
  %v699 = vunpack.c.l.b16 %v148
  %v700 = vunpack.c.l.b16 %v149
  %v701 = vunpack.c.l.b16 %v150
  %v702 = vunpack.c.l.b16 %v151
  %v703 = vunpack.c.l.b16 %v152
  %v704 = vunpack.c.l.b16 %v153
  %v705 = vunpack.c.l.b16 %v154
  %v706 = vunpack.c.l.b16 %v155
  %v707 = vunpack.c.l.b16 %v156
  %v708 = vunpack.c.l.b16 %v157
  %v709 = vunpack.c.l.b16 %v158
  %v710 = vunpack.c.l.b16 %v159
  %v711 = vunpack.c.l.b16 %v160
  %v712 = vunpack.c.l.b16 %v161
  %v713 = vunpack.c.l.b16 %v162
  %v714 = vunpack.c.l.b16 %v163
  %v715 = vunpack.c.l.b16 %v164
  %v716 = vunpack.c.l.b16 %v165
  %v717 = vunpack.c.l.b16 %v166
  %v718 = vunpack.c.l.b16 %v167
  %v719 = vunpack.c.l.b16 %v168
  %v720 = vunpack.c.l.b16 %v169
  %v721 = vunpack.c.l.b16 %v170
  %v722 = vunpack.c.l.b16 %v171
  %v723 = vunpack.c.l.b16 %v172
  %v724 = vunpack.c.l.b16 %v173
  %v725 = vunpack.c.l.b16 %v174
  %v726 = vunpack.c.l.b16 %v175
  %v727 = vunpack.c.l.b16 %v176
  %v728 = vunpack.c.l.b16 %v177
  %v729 = vunpack.c.l.b16 %v178
  %v730 = vunpack.c.l.b16 %v179
  %v731 = vunpack.c.l.b16 %v180
  %v732 = vunpack.c.l.b16 %v181
  %v733 = vunpack.c.l.b16 %v182
  %v734 = vpack.c.b16 %v663, %v662
  %v735 = vpack.c.b16 %v665, %v664
  %v736 = vpack.c.b16 %v667, %v666
  %v737 = vpack.c.b16 %v669, %v668
  %v738 = vpack.c.b16 %v671, %v670
  %v739 = vpack.c.b16 %v673, %v672
  %v740 = vpack.c.b16 %v675, %v674
  %v741 = vpack.c.b16 %v677, %v676
  %v742 = vpack.c.b16 %v679, %v678
  %v743 = vpack.c.b16 %v681, %v680
  %v744 = vpack.c.b16 %v683, %v682
  %v745 = vpack.c.b16 %v685, %v684
  %v746 = vpack.c.b16 %v687, %v686
  %v747 = vpack.c.b16 %v689, %v688
  %v748 = vpack.c.b16 %v691, %v690
  %v749 = vpack.c.b16 %v693, %v692
  %v750 = vpack.c.b16 %v695, %v694
  %v751 = vpack.c.b16 %v697, %v696
  %v752 = vpack.c.b16 %v699, %v698
  %v753 = vpack.c.b16 %v701, %v700
  %v754 = vpack.c.b16 %v703, %v702
  %v755 = vpack.c.b16 %v705, %v704
  %v756 = vpack.c.b16 %v707, %v706
  %v757 = vpack.c.b16 %v709, %v708
  %v758 = vpack.c.b16 %v711, %v710
  %v759 = vpack.c.b16 %v713, %v712
  %v760 = vpack.c.b16 %v715, %v714
  %v761 = vpack.c.b16 %v717, %v716
  %v762 = vpack.c.b16 %v719, %v718
  %v763 = vpack.c.b16 %v721, %v720
  %v764 = vpack.c.b16 %v723, %v722
  %v765 = vpack.c.b16 %v725, %v724
  %v766 = vpack.c.b16 %v727, %v726
  %v767 = vpack.c.b16 %v729, %v728
  %v768 = vpack.c.b16 %v731, %v730
  %v769 = vpack.c.b16 %v733, %v732
  %vm806 = vcmask 523264
  %v808 = vsel %vm806, %v450, 0
  %v811 = vsel %vm806, %v455, 0
  %v814 = vsel %vm806, %v460, 0
  %v817 = vsel %vm806, %v465, 0
  %v820 = vsel %vm806, %v470, 0
  %v823 = vsel %vm806, %v475, 0
  %v826 = vsel %vm806, %v480, 0
  %v829 = vsel %vm806, %v485, 0
  %v832 = vsel %vm806, %v490, 0
  %v835 = vsel %vm806, %v495, 0
  %v838 = vsel %vm806, %v500, 0
  %v841 = vsel %vm806, %v505, 0
  %v844 = vsel %vm806, %v510, 0
  %v847 = vsel %vm806, %v515, 0
  %v850 = vsel %vm806, %v520, 0
  %v853 = vsel %vm806, %v525, 0
  %855 = vmatprep.subr.bf16.mxu0 0
  %856 = vmatpush1.bf16.msra.mxu0 %v734
  %857 = vmatprep.subr.bf16.mxu0 0
  %858 = vmatpush1.bf16.msra.mxu0 %v735
  %859 = vmatprep.subr.bf16.mxu0 0
  %860 = vmatpush1.bf16.msra.mxu0 %v736
  %861 = vmatprep.subr.bf16.mxu0 0
  %862 = vmatpush1.bf16.msra.mxu0 %v737
  %863 = vmatprep.subr.bf16.mxu0 0
  %864 = vmatpush1.bf16.msra.mxu0 %v738
  %865 = vmatprep.subr.bf16.mxu0 0
  %866 = vmatpush1.bf16.msra.mxu0 %v739
  %867 = vmatprep.subr.bf16.mxu0 0
  %868 = vmatpush1.bf16.msra.mxu0 %v740
  %869 = vmatprep.subr.bf16.mxu0 0
  %870 = vmatpush1.bf16.msra.mxu0 %v741
  %871 = vmatprep.subr.bf16.mxu0 0
  %872 = vmatpush1.bf16.msra.mxu0 %v742
  %873 = vmatprep.subr.bf16.mxu0 0
  %874 = vmatpush1.bf16.msra.mxu0 %v743
  %875 = vmatprep.subr.bf16.mxu0 0
  %876 = vmatpush1.bf16.msra.mxu0 %v744
  %877 = vmatprep.subr.bf16.mxu0 0
  %878 = vmatpush1.bf16.msra.mxu0 %v745
  %879 = vmatprep.subr.bf16.mxu0 0
  %880 = vmatpush1.bf16.msra.mxu0 %v746
  %881 = vmatprep.subr.bf16.mxu0 0
  %882 = vmatpush1.bf16.msra.mxu0 %v747
  %883 = vmatprep.subr.bf16.mxu0 0
  %884 = vmatpush1.bf16.msra.mxu0 %v748
  %885 = vmatprep.subr.bf16.mxu0 0
  %886 = vmatpush1.bf16.msra.mxu0 %v749
  %887 = vmatprep.mubr.bf16.mxu0 %v447
  %888 = vmatmul.mubr.bf16.gmra.mrb[0].mxu0 %v446
  %v889 = vpop.f32.mrb[0].mxu0
  %v890 = vadd.f32 %v188, %v889
  %v891 = vpop.f32.mrb[0].mxu0
  %v892 = vpop.f32.mrb[0].mxu0
  %v893 = vadd.f32 %v188, %v892
  %v894 = vpop.f32.mrb[0].mxu0
  %895 = vmatprep.mubr.bf16.mxu0 %v452
  %896 = vmatmul.mubr.bf16.gmra.mrb[0].mxu0 %v451
  %v897 = vpop.f32.mrb[0].mxu0
  %v898 = vadd.f32 %v188, %v897
  %v899 = vpop.f32.mrb[0].mxu0
  %v900 = vpop.f32.mrb[0].mxu0
  %v901 = vadd.f32 %v188, %v900
  %v902 = vpop.f32.mrb[0].mxu0
  %903 = vmatprep.mubr.bf16.mxu0 %v457
  %904 = vmatmul.mubr.bf16.gmra.mrb[0].mxu0 %v456
  %v905 = vpop.f32.mrb[0].mxu0
  %v906 = vadd.f32 %v188, %v905
  %v907 = vpop.f32.mrb[0].mxu0
  %v908 = vpop.f32.mrb[0].mxu0
  %v909 = vadd.f32 %v188, %v908
  %v910 = vpop.f32.mrb[0].mxu0
  %911 = vmatprep.mubr.bf16.mxu0 %v462
  %912 = vmatmul.mubr.bf16.gmra.mrb[0].mxu0 %v461
  %v913 = vpop.f32.mrb[0].mxu0
  %v914 = vadd.f32 %v188, %v913
  %v915 = vpop.f32.mrb[0].mxu0
  %v916 = vpop.f32.mrb[0].mxu0
  %v917 = vadd.f32 %v188, %v916
  %v918 = vpop.f32.mrb[0].mxu0
  %919 = vmatprep.mubr.bf16.mxu0 %v467
  %920 = vmatmul.mubr.bf16.gmra.mrb[0].mxu0 %v466
  %v921 = vpop.f32.mrb[0].mxu0
  %v922 = vadd.f32 %v188, %v921
  %v923 = vpop.f32.mrb[0].mxu0
  %v924 = vpop.f32.mrb[0].mxu0
  %v925 = vadd.f32 %v188, %v924
  %v926 = vpop.f32.mrb[0].mxu0
  %927 = vmatprep.mubr.bf16.mxu0 %v472
  %928 = vmatmul.mubr.bf16.gmra.mrb[0].mxu0 %v471
  %v929 = vpop.f32.mrb[0].mxu0
  %v930 = vadd.f32 %v188, %v929
  %v931 = vpop.f32.mrb[0].mxu0
  %v932 = vpop.f32.mrb[0].mxu0
  %v933 = vadd.f32 %v188, %v932
  %v934 = vpop.f32.mrb[0].mxu0
  %935 = vmatprep.mubr.bf16.mxu0 %v477
  %936 = vmatmul.mubr.bf16.gmra.mrb[0].mxu0 %v476
  %v937 = vpop.f32.mrb[0].mxu0
  %v938 = vadd.f32 %v188, %v937
  %v939 = vpop.f32.mrb[0].mxu0
  %v940 = vpop.f32.mrb[0].mxu0
  %v941 = vadd.f32 %v188, %v940
  %v942 = vpop.f32.mrb[0].mxu0
  %943 = vmatprep.mubr.bf16.mxu0 %v482
  %944 = vmatmul.mubr.bf16.gmra.mrb[0].mxu0 %v481
  %v945 = vpop.f32.mrb[0].mxu0
  %v946 = vadd.f32 %v188, %v945
  %v947 = vpop.f32.mrb[0].mxu0
  %v948 = vpop.f32.mrb[0].mxu0
  %v949 = vadd.f32 %v188, %v948
  %v950 = vpop.f32.mrb[0].mxu0
  %951 = vmatprep.mubr.bf16.mxu0 %v487
  %952 = vmatmul.mubr.bf16.gmra.mrb[0].mxu0 %v486
  %v953 = vpop.f32.mrb[0].mxu0
  %v954 = vadd.f32 %v188, %v953
  %v955 = vpop.f32.mrb[0].mxu0
  %v956 = vpop.f32.mrb[0].mxu0
  %v957 = vadd.f32 %v188, %v956
  %v958 = vpop.f32.mrb[0].mxu0
  %959 = vmatprep.mubr.bf16.mxu0 %v492
  %960 = vmatmul.mubr.bf16.gmra.mrb[0].mxu0 %v491
  %v961 = vpop.f32.mrb[0].mxu0
  %v962 = vadd.f32 %v188, %v961
  %v963 = vpop.f32.mrb[0].mxu0
  %v964 = vpop.f32.mrb[0].mxu0
  %v965 = vadd.f32 %v188, %v964
  %v966 = vpop.f32.mrb[0].mxu0
  %967 = vmatprep.mubr.bf16.mxu0 %v497
  %968 = vmatmul.mubr.bf16.gmra.mrb[0].mxu0 %v496
  %v969 = vpop.f32.mrb[0].mxu0
  %v970 = vadd.f32 %v188, %v969
  %v971 = vpop.f32.mrb[0].mxu0
  %v972 = vpop.f32.mrb[0].mxu0
  %v973 = vadd.f32 %v188, %v972
  %v974 = vpop.f32.mrb[0].mxu0
  %975 = vmatprep.mubr.bf16.mxu0 %v502
  %976 = vmatmul.mubr.bf16.gmra.mrb[0].mxu0 %v501
  %v977 = vpop.f32.mrb[0].mxu0
  %v978 = vadd.f32 %v188, %v977
  %v979 = vpop.f32.mrb[0].mxu0
  %v980 = vpop.f32.mrb[0].mxu0
  %v981 = vadd.f32 %v188, %v980
  %v982 = vpop.f32.mrb[0].mxu0
  %983 = vmatprep.mubr.bf16.mxu0 %v507
  %984 = vmatmul.mubr.bf16.gmra.mrb[0].mxu0 %v506
  %v985 = vpop.f32.mrb[0].mxu0
  %v986 = vadd.f32 %v188, %v985
  %v987 = vpop.f32.mrb[0].mxu0
  %v988 = vpop.f32.mrb[0].mxu0
  %v989 = vadd.f32 %v188, %v988
  %v990 = vpop.f32.mrb[0].mxu0
  %991 = vmatprep.mubr.bf16.mxu0 %v512
  %992 = vmatmul.mubr.bf16.gmra.mrb[0].mxu0 %v511
  %v993 = vpop.f32.mrb[0].mxu0
  %v994 = vadd.f32 %v188, %v993
  %v995 = vpop.f32.mrb[0].mxu0
  %v996 = vpop.f32.mrb[0].mxu0
  %v997 = vadd.f32 %v188, %v996
  %v998 = vpop.f32.mrb[0].mxu0
  %999 = vmatprep.mubr.bf16.mxu0 %v517
  %1000 = vmatmul.mubr.bf16.gmra.mrb[0].mxu0 %v516
  %v1001 = vpop.f32.mrb[0].mxu0
  %v1002 = vadd.f32 %v188, %v1001
  %v1003 = vpop.f32.mrb[0].mxu0
  %v1004 = vpop.f32.mrb[0].mxu0
  %v1005 = vadd.f32 %v188, %v1004
  %v1006 = vpop.f32.mrb[0].mxu0
  %1007 = vmatprep.mubr.bf16.mxu0 %v522
  %1008 = vmatmul.mubr.bf16.gmra.mrb[0].mxu0 %v521
  %v1009 = vpop.f32.mrb[0].mxu0
  %v1010 = vadd.f32 %v188, %v1009
  %v1011 = vpop.f32.mrb[0].mxu0
  %v1012 = vpop.f32.mrb[0].mxu0
  %v1013 = vadd.f32 %v188, %v1012
  %v1014 = vpop.f32.mrb[0].mxu0
  %1015 = vdwg.mxu0
  %1016 = vmatprep.subr.bf16.mxu0 0
  %1017 = vmatpush1.bf16.msra.mxu0 %v750
  %1018 = vmatprep.subr.bf16.mxu0 0
  %1019 = vmatpush1.bf16.msra.mxu0 %v751
  %1020 = vmatprep.subr.bf16.mxu0 0
  %1021 = vmatpush1.bf16.msra.mxu0 %v752
  %1022 = vmatprep.subr.bf16.mxu0 0
  %1023 = vmatpush1.bf16.msra.mxu0 %v753
  %1024 = vmatprep.subr.bf16.mxu0 0
  %1025 = vmatpush1.bf16.msra.mxu0 %v754
  %1026 = vmatprep.subr.bf16.mxu0 0
  %1027 = vmatpush1.bf16.msra.mxu0 %v755
  %1028 = vmatprep.subr.bf16.mxu0 0
  %1029 = vmatpush1.bf16.msra.mxu0 %v756
  %1030 = vmatprep.subr.bf16.mxu0 0
  %1031 = vmatpush1.bf16.msra.mxu0 %v757
  %1032 = vmatprep.subr.bf16.mxu0 0
  %1033 = vmatpush1.bf16.msra.mxu0 %v758
  %1034 = vmatprep.subr.bf16.mxu0 0
  %1035 = vmatpush1.bf16.msra.mxu0 %v759
  %1036 = vmatprep.subr.bf16.mxu0 0
  %1037 = vmatpush1.bf16.msra.mxu0 %v760
  %1038 = vmatprep.subr.bf16.mxu0 0
  %1039 = vmatpush1.bf16.msra.mxu0 %v761
  %1040 = vmatprep.subr.bf16.mxu0 0
  %1041 = vmatpush1.bf16.msra.mxu0 %v762
  %1042 = vmatprep.subr.bf16.mxu0 0
  %1043 = vmatpush1.bf16.msra.mxu0 %v763
  %1044 = vmatprep.subr.bf16.mxu0 0
  %1045 = vmatpush1.bf16.msra.mxu0 %v764
  %1046 = vmatprep.subr.bf16.mxu0 0
  %1047 = vmatpush1.bf16.msra.mxu0 %v765
  %1048 = vmatprep.mubr.bf16.mxu0 %v449
  %1049 = vmatmul.mubr.bf16.gmra.mrb[0].mxu0 %v448
  %v1050 = vpop.f32.mrb[0].mxu0
  %v1051 = vadd.f32 %v890, %v1050
  %v1052 = vpop.f32.mrb[0].mxu0
  %v1053 = vpop.f32.mrb[0].mxu0
  %v1054 = vadd.f32 %v893, %v1053
  %v1055 = vpop.f32.mrb[0].mxu0
  %1056 = vmatprep.mubr.bf16.mxu0 %v454
  %1057 = vmatmul.mubr.bf16.gmra.mrb[0].mxu0 %v453
  %v1058 = vpop.f32.mrb[0].mxu0
  %v1059 = vadd.f32 %v898, %v1058
  %v1060 = vpop.f32.mrb[0].mxu0
  %v1061 = vpop.f32.mrb[0].mxu0
  %v1062 = vadd.f32 %v901, %v1061
  %v1063 = vpop.f32.mrb[0].mxu0
  %1064 = vmatprep.mubr.bf16.mxu0 %v459
  %1065 = vmatmul.mubr.bf16.gmra.mrb[0].mxu0 %v458
  %v1066 = vpop.f32.mrb[0].mxu0
  %v1067 = vadd.f32 %v906, %v1066
  %v1068 = vpop.f32.mrb[0].mxu0
  %v1069 = vpop.f32.mrb[0].mxu0
  %v1070 = vadd.f32 %v909, %v1069
  %v1071 = vpop.f32.mrb[0].mxu0
  %1072 = vmatprep.mubr.bf16.mxu0 %v464
  %1073 = vmatmul.mubr.bf16.gmra.mrb[0].mxu0 %v463
  %v1074 = vpop.f32.mrb[0].mxu0
  %v1075 = vadd.f32 %v914, %v1074
  %v1076 = vpop.f32.mrb[0].mxu0
  %v1077 = vpop.f32.mrb[0].mxu0
  %v1078 = vadd.f32 %v917, %v1077
  %v1079 = vpop.f32.mrb[0].mxu0
  %1080 = vmatprep.mubr.bf16.mxu0 %v469
  %1081 = vmatmul.mubr.bf16.gmra.mrb[0].mxu0 %v468
  %v1082 = vpop.f32.mrb[0].mxu0
  %v1083 = vadd.f32 %v922, %v1082
  %v1084 = vpop.f32.mrb[0].mxu0
  %v1085 = vpop.f32.mrb[0].mxu0
  %v1086 = vadd.f32 %v925, %v1085
  %v1087 = vpop.f32.mrb[0].mxu0
  %1088 = vmatprep.mubr.bf16.mxu0 %v474
  %1089 = vmatmul.mubr.bf16.gmra.mrb[0].mxu0 %v473
  %v1090 = vpop.f32.mrb[0].mxu0
  %v1091 = vadd.f32 %v930, %v1090
  %v1092 = vpop.f32.mrb[0].mxu0
  %v1093 = vpop.f32.mrb[0].mxu0
  %v1094 = vadd.f32 %v933, %v1093
  %v1095 = vpop.f32.mrb[0].mxu0
  %1096 = vmatprep.mubr.bf16.mxu0 %v479
  %1097 = vmatmul.mubr.bf16.gmra.mrb[0].mxu0 %v478
  %v1098 = vpop.f32.mrb[0].mxu0
  %v1099 = vadd.f32 %v938, %v1098
  %v1100 = vpop.f32.mrb[0].mxu0
  %v1101 = vpop.f32.mrb[0].mxu0
  %v1102 = vadd.f32 %v941, %v1101
  %v1103 = vpop.f32.mrb[0].mxu0
  %1104 = vmatprep.mubr.bf16.mxu0 %v484
  %1105 = vmatmul.mubr.bf16.gmra.mrb[0].mxu0 %v483
  %v1106 = vpop.f32.mrb[0].mxu0
  %v1107 = vadd.f32 %v946, %v1106
  %v1108 = vpop.f32.mrb[0].mxu0
  %v1109 = vpop.f32.mrb[0].mxu0
  %v1110 = vadd.f32 %v949, %v1109
  %v1111 = vpop.f32.mrb[0].mxu0
  %1112 = vmatprep.mubr.bf16.mxu0 %v489
  %1113 = vmatmul.mubr.bf16.gmra.mrb[0].mxu0 %v488
  %v1114 = vpop.f32.mrb[0].mxu0
  %v1115 = vadd.f32 %v954, %v1114
  %v1116 = vpop.f32.mrb[0].mxu0
  %v1117 = vpop.f32.mrb[0].mxu0
  %v1118 = vadd.f32 %v957, %v1117
  %v1119 = vpop.f32.mrb[0].mxu0
  %1120 = vmatprep.mubr.bf16.mxu0 %v494
  %1121 = vmatmul.mubr.bf16.gmra.mrb[0].mxu0 %v493
  %v1122 = vpop.f32.mrb[0].mxu0
  %v1123 = vadd.f32 %v962, %v1122
  %v1124 = vpop.f32.mrb[0].mxu0
  %v1125 = vpop.f32.mrb[0].mxu0
  %v1126 = vadd.f32 %v965, %v1125
  %v1127 = vpop.f32.mrb[0].mxu0
  %1128 = vmatprep.mubr.bf16.mxu0 %v499
  %1129 = vmatmul.mubr.bf16.gmra.mrb[0].mxu0 %v498
  %v1130 = vpop.f32.mrb[0].mxu0
  %v1131 = vadd.f32 %v970, %v1130
  %v1132 = vpop.f32.mrb[0].mxu0
  %v1133 = vpop.f32.mrb[0].mxu0
  %v1134 = vadd.f32 %v973, %v1133
  %v1135 = vpop.f32.mrb[0].mxu0
  %1136 = vmatprep.mubr.bf16.mxu0 %v504
  %1137 = vmatmul.mubr.bf16.gmra.mrb[0].mxu0 %v503
  %v1138 = vpop.f32.mrb[0].mxu0
  %v1139 = vadd.f32 %v978, %v1138
  %v1140 = vpop.f32.mrb[0].mxu0
  %v1141 = vpop.f32.mrb[0].mxu0
  %v1142 = vadd.f32 %v981, %v1141
  %v1143 = vpop.f32.mrb[0].mxu0
  %1144 = vmatprep.mubr.bf16.mxu0 %v509
  %1145 = vmatmul.mubr.bf16.gmra.mrb[0].mxu0 %v508
  %v1146 = vpop.f32.mrb[0].mxu0
  %v1147 = vadd.f32 %v986, %v1146
  %v1148 = vpop.f32.mrb[0].mxu0
  %v1149 = vpop.f32.mrb[0].mxu0
  %v1150 = vadd.f32 %v989, %v1149
  %v1151 = vpop.f32.mrb[0].mxu0
  %1152 = vmatprep.mubr.bf16.mxu0 %v514
  %1153 = vmatmul.mubr.bf16.gmra.mrb[0].mxu0 %v513
  %v1154 = vpop.f32.mrb[0].mxu0
  %v1155 = vadd.f32 %v994, %v1154
  %v1156 = vpop.f32.mrb[0].mxu0
  %v1157 = vpop.f32.mrb[0].mxu0
  %v1158 = vadd.f32 %v997, %v1157
  %v1159 = vpop.f32.mrb[0].mxu0
  %1160 = vmatprep.mubr.bf16.mxu0 %v519
  %1161 = vmatmul.mubr.bf16.gmra.mrb[0].mxu0 %v518
  %v1162 = vpop.f32.mrb[0].mxu0
  %v1163 = vadd.f32 %v1002, %v1162
  %v1164 = vpop.f32.mrb[0].mxu0
  %v1165 = vpop.f32.mrb[0].mxu0
  %v1166 = vadd.f32 %v1005, %v1165
  %v1167 = vpop.f32.mrb[0].mxu0
  %1168 = vmatprep.mubr.bf16.mxu0 %v524
  %1169 = vmatmul.mubr.bf16.gmra.mrb[0].mxu0 %v523
  %v1170 = vpop.f32.mrb[0].mxu0
  %v1171 = vadd.f32 %v1010, %v1170
  %v1172 = vpop.f32.mrb[0].mxu0
  %v1173 = vpop.f32.mrb[0].mxu0
  %v1174 = vadd.f32 %v1013, %v1173
  %v1175 = vpop.f32.mrb[0].mxu0
  %1176 = vdwg.mxu0
  %1177 = vmatprep.subr.bf16.mxu0 0
  %1178 = vmatpush1.bf16.msra.mxu0 %v766
  %1179 = vmatprep.subr.bf16.mxu0 0
  %1180 = vmatpush1.bf16.msra.mxu0 %v767
  %1181 = vmatprep.subr.bf16.mxu0 0
  %1182 = vmatpush1.bf16.msra.mxu0 %v768
  %1183 = vmatprep.subr.bf16.mxu0 0
  %1184 = vmatpush1.bf16.msra.mxu0 %v769
  %1185 = vmatprep.subr.bf16.mxu0 0
  %1186 = vmatpush1.bf16.msra.mxu0 0
  %1187 = vmatprep.subr.bf16.mxu0 0
  %1188 = vmatpush1.bf16.msra.mxu0 0
  %1189 = vmatprep.subr.bf16.mxu0 0
  %1190 = vmatpush1.bf16.msra.mxu0 0
  %1191 = vmatprep.subr.bf16.mxu0 0
  %1192 = vmatpush1.bf16.msra.mxu0 0
  %1193 = vmatprep.subr.bf16.mxu0 0
  %1194 = vmatpush1.bf16.msra.mxu0 0
  %1195 = vmatprep.subr.bf16.mxu0 0
  %1196 = vmatpush1.bf16.msra.mxu0 0
  %1197 = vmatprep.subr.bf16.mxu0 0
  %1198 = vmatpush1.bf16.msra.mxu0 0
  %1199 = vmatprep.subr.bf16.mxu0 0
  %1200 = vmatpush1.bf16.msra.mxu0 0
  %1201 = vmatprep.subr.bf16.mxu0 0
  %1202 = vmatpush1.bf16.msra.mxu0 0
  %1203 = vmatprep.subr.bf16.mxu0 0
  %1204 = vmatpush1.bf16.msra.mxu0 0
  %1205 = vmatprep.subr.bf16.mxu0 0
  %1206 = vmatpush1.bf16.msra.mxu0 0
  %1207 = vmatprep.subr.bf16.mxu0 0
  %1208 = vmatpush1.bf16.msra.mxu0 0
  %1209 = vmatprep.mubr.bf16.mxu0 0
  %1210 = vmatmul.mubr.bf16.gmra.mrb[0].mxu0 %v808
  %v1211 = vpop.f32.mrb[0].mxu0
  %v1212 = vadd.f32 %v1051, %v1211
  %v1213 = vpop.f32.mrb[0].mxu0
  %v1214 = vpop.f32.mrb[0].mxu0
  %v1215 = vadd.f32 %v1054, %v1214
  %v1216 = vpop.f32.mrb[0].mxu0
  %1217 = vmatprep.mubr.bf16.mxu0 0
  %1218 = vmatmul.mubr.bf16.gmra.mrb[0].mxu0 %v811
  %v1219 = vpop.f32.mrb[0].mxu0
  %v1220 = vadd.f32 %v1059, %v1219
  %v1221 = vpop.f32.mrb[0].mxu0
  %v1222 = vpop.f32.mrb[0].mxu0
  %v1223 = vadd.f32 %v1062, %v1222
  %v1224 = vpop.f32.mrb[0].mxu0
  %1225 = vmatprep.mubr.bf16.mxu0 0
  %1226 = vmatmul.mubr.bf16.gmra.mrb[0].mxu0 %v814
  %v1227 = vpop.f32.mrb[0].mxu0
  %v1228 = vadd.f32 %v1067, %v1227
  %v1229 = vpop.f32.mrb[0].mxu0
  %v1230 = vpop.f32.mrb[0].mxu0
  %v1231 = vadd.f32 %v1070, %v1230
  %v1232 = vpop.f32.mrb[0].mxu0
  %1233 = vmatprep.mubr.bf16.mxu0 0
  %1234 = vmatmul.mubr.bf16.gmra.mrb[0].mxu0 %v817
  %v1235 = vpop.f32.mrb[0].mxu0
  %v1236 = vadd.f32 %v1075, %v1235
  %v1237 = vpop.f32.mrb[0].mxu0
  %v1238 = vpop.f32.mrb[0].mxu0
  %v1239 = vadd.f32 %v1078, %v1238
  %v1240 = vpop.f32.mrb[0].mxu0
  %1241 = vmatprep.mubr.bf16.mxu0 0
  %1242 = vmatmul.mubr.bf16.gmra.mrb[0].mxu0 %v820
  %v1243 = vpop.f32.mrb[0].mxu0
  %v1244 = vadd.f32 %v1083, %v1243
  %v1245 = vpop.f32.mrb[0].mxu0
  %v1246 = vpop.f32.mrb[0].mxu0
  %v1247 = vadd.f32 %v1086, %v1246
  %v1248 = vpop.f32.mrb[0].mxu0
  %1249 = vmatprep.mubr.bf16.mxu0 0
  %1250 = vmatmul.mubr.bf16.gmra.mrb[0].mxu0 %v823
  %v1251 = vpop.f32.mrb[0].mxu0
  %v1252 = vadd.f32 %v1091, %v1251
  %v1253 = vpop.f32.mrb[0].mxu0
  %v1254 = vpop.f32.mrb[0].mxu0
  %v1255 = vadd.f32 %v1094, %v1254
  %v1256 = vpop.f32.mrb[0].mxu0
  %1257 = vmatprep.mubr.bf16.mxu0 0
  %1258 = vmatmul.mubr.bf16.gmra.mrb[0].mxu0 %v826
  %v1259 = vpop.f32.mrb[0].mxu0
  %v1260 = vadd.f32 %v1099, %v1259
  %v1261 = vpop.f32.mrb[0].mxu0
  %v1262 = vpop.f32.mrb[0].mxu0
  %v1263 = vadd.f32 %v1102, %v1262
  %v1264 = vpop.f32.mrb[0].mxu0
  %1265 = vmatprep.mubr.bf16.mxu0 0
  %1266 = vmatmul.mubr.bf16.gmra.mrb[0].mxu0 %v829
  %v1267 = vpop.f32.mrb[0].mxu0
  %v1268 = vadd.f32 %v1107, %v1267
  %v1269 = vpop.f32.mrb[0].mxu0
  %v1270 = vpop.f32.mrb[0].mxu0
  %v1271 = vadd.f32 %v1110, %v1270
  %v1272 = vpop.f32.mrb[0].mxu0
  %1273 = vmatprep.mubr.bf16.mxu0 0
  %1274 = vmatmul.mubr.bf16.gmra.mrb[0].mxu0 %v832
  %v1275 = vpop.f32.mrb[0].mxu0
  %v1276 = vadd.f32 %v1115, %v1275
  %v1277 = vpop.f32.mrb[0].mxu0
  %v1278 = vpop.f32.mrb[0].mxu0
  %v1279 = vadd.f32 %v1118, %v1278
  %v1280 = vpop.f32.mrb[0].mxu0
  %1281 = vmatprep.mubr.bf16.mxu0 0
  %1282 = vmatmul.mubr.bf16.gmra.mrb[0].mxu0 %v835
  %v1283 = vpop.f32.mrb[0].mxu0
  %v1284 = vadd.f32 %v1123, %v1283
  %v1285 = vpop.f32.mrb[0].mxu0
  %v1286 = vpop.f32.mrb[0].mxu0
  %v1287 = vadd.f32 %v1126, %v1286
  %v1288 = vpop.f32.mrb[0].mxu0
  %1289 = vmatprep.mubr.bf16.mxu0 0
  %1290 = vmatmul.mubr.bf16.gmra.mrb[0].mxu0 %v838
  %v1291 = vpop.f32.mrb[0].mxu0
  %v1292 = vadd.f32 %v1131, %v1291
  %v1293 = vpop.f32.mrb[0].mxu0
  %v1294 = vpop.f32.mrb[0].mxu0
  %v1295 = vadd.f32 %v1134, %v1294
  %v1296 = vpop.f32.mrb[0].mxu0
  %1297 = vmatprep.mubr.bf16.mxu0 0
  %1298 = vmatmul.mubr.bf16.gmra.mrb[0].mxu0 %v841
  %v1299 = vpop.f32.mrb[0].mxu0
  %v1300 = vadd.f32 %v1139, %v1299
  %v1301 = vpop.f32.mrb[0].mxu0
  %v1302 = vpop.f32.mrb[0].mxu0
  %v1303 = vadd.f32 %v1142, %v1302
  %v1304 = vpop.f32.mrb[0].mxu0
  %1305 = vmatprep.mubr.bf16.mxu0 0
  %1306 = vmatmul.mubr.bf16.gmra.mrb[0].mxu0 %v844
  %v1307 = vpop.f32.mrb[0].mxu0
  %v1308 = vadd.f32 %v1147, %v1307
  %v1309 = vpop.f32.mrb[0].mxu0
  %v1310 = vpop.f32.mrb[0].mxu0
  %v1311 = vadd.f32 %v1150, %v1310
  %v1312 = vpop.f32.mrb[0].mxu0
  %1313 = vmatprep.mubr.bf16.mxu0 0
  %1314 = vmatmul.mubr.bf16.gmra.mrb[0].mxu0 %v847
  %v1315 = vpop.f32.mrb[0].mxu0
  %v1316 = vadd.f32 %v1155, %v1315
  %v1317 = vpop.f32.mrb[0].mxu0
  %v1318 = vpop.f32.mrb[0].mxu0
  %v1319 = vadd.f32 %v1158, %v1318
  %v1320 = vpop.f32.mrb[0].mxu0
  %1321 = vmatprep.mubr.bf16.mxu0 0
  %1322 = vmatmul.mubr.bf16.gmra.mrb[0].mxu0 %v850
  %v1323 = vpop.f32.mrb[0].mxu0
  %v1324 = vadd.f32 %v1163, %v1323
  %v1325 = vpop.f32.mrb[0].mxu0
  %v1326 = vpop.f32.mrb[0].mxu0
  %v1327 = vadd.f32 %v1166, %v1326
  %v1328 = vpop.f32.mrb[0].mxu0
  %1329 = vmatprep.mubr.bf16.mxu0 0
  %1330 = vmatmul.mubr.bf16.gmra.mrb[0].mxu0 %v853
  %v1331 = vpop.f32.mrb[0].mxu0
  %v1332 = vadd.f32 %v1171, %v1331
  %v1333 = vpop.f32.mrb[0].mxu0
  %v1334 = vpop.f32.mrb[0].mxu0
  %v1335 = vadd.f32 %v1174, %v1334
  %v1336 = vpop.f32.mrb[0].mxu0
  %1337 = vdwg.mxu0
  %v1338 = vmax.f32 %v1212, 0.0
  %v1339 = vmax.f32 %v1215, 0.0
  %v1340 = vmax.f32 %v1220, 0.0
  %v1341 = vmax.f32 %v1223, 0.0
  %v1342 = vmax.f32 %v1228, 0.0
  %v1343 = vmax.f32 %v1231, 0.0
  %v1344 = vmax.f32 %v1236, 0.0
  %v1345 = vmax.f32 %v1239, 0.0
  %v1346 = vmax.f32 %v1244, 0.0
  %v1347 = vmax.f32 %v1247, 0.0
  %v1348 = vmax.f32 %v1252, 0.0
  %v1349 = vmax.f32 %v1255, 0.0
  %v1350 = vmax.f32 %v1260, 0.0
  %v1351 = vmax.f32 %v1263, 0.0
  %v1352 = vmax.f32 %v1268, 0.0
  %v1353 = vmax.f32 %v1271, 0.0
  %v1354 = vmax.f32 %v1276, 0.0
  %v1355 = vmax.f32 %v1279, 0.0
  %v1356 = vmax.f32 %v1284, 0.0
  %v1357 = vmax.f32 %v1287, 0.0
  %v1358 = vmax.f32 %v1292, 0.0
  %v1359 = vmax.f32 %v1295, 0.0
  %v1360 = vmax.f32 %v1300, 0.0
  %v1361 = vmax.f32 %v1303, 0.0
  %v1362 = vmax.f32 %v1308, 0.0
  %v1363 = vmax.f32 %v1311, 0.0
  %v1364 = vmax.f32 %v1316, 0.0
  %v1365 = vmax.f32 %v1319, 0.0
  %v1366 = vmax.f32 %v1324, 0.0
  %v1367 = vmax.f32 %v1327, 0.0
  %v1368 = vmax.f32 %v1332, 0.0
  %v1369 = vmax.f32 %v1335, 0.0
  %v1370 = vpack.c.bf16 %v1339, %v1338
  %v1371 = vpack.c.bf16 %v1341, %v1340
  %v1372 = vpack.c.bf16 %v1343, %v1342
  %v1373 = vpack.c.bf16 %v1345, %v1344
  %v1374 = vpack.c.bf16 %v1347, %v1346
  %v1375 = vpack.c.bf16 %v1349, %v1348
  %v1376 = vpack.c.bf16 %v1351, %v1350
  %v1377 = vpack.c.bf16 %v1353, %v1352
  %v1378 = vpack.c.bf16 %v1355, %v1354
  %v1379 = vpack.c.bf16 %v1357, %v1356
  %v1380 = vpack.c.bf16 %v1359, %v1358
  %v1381 = vpack.c.bf16 %v1361, %v1360
  %v1382 = vpack.c.bf16 %v1363, %v1362
  %v1383 = vpack.c.bf16 %v1365, %v1364
  %v1384 = vpack.c.bf16 %v1367, %v1366
  %v1385 = vpack.c.bf16 %v1369, %v1368
  %v1402 = vunpack.c.l.b16 %v1370
  %v1403 = vunpack.c.h.b16 %v1370
  %v1404 = vunpack.c.l.b16 %v1371
  %v1405 = vunpack.c.h.b16 %v1371
  %v1406 = vunpack.c.l.b16 %v1372
  %v1407 = vunpack.c.h.b16 %v1372
  %v1408 = vunpack.c.l.b16 %v1373
  %v1409 = vunpack.c.h.b16 %v1373
  %v1410 = vunpack.c.l.b16 %v1374
  %v1411 = vunpack.c.h.b16 %v1374
  %v1412 = vunpack.c.l.b16 %v1375
  %v1413 = vunpack.c.h.b16 %v1375
  %v1414 = vunpack.c.l.b16 %v1376
  %v1415 = vunpack.c.h.b16 %v1376
  %v1416 = vunpack.c.l.b16 %v1377
  %v1417 = vunpack.c.h.b16 %v1377
  %v1418 = vunpack.c.l.b16 %v1378
  %v1419 = vunpack.c.h.b16 %v1378
  %v1420 = vunpack.c.l.b16 %v1379
  %v1421 = vunpack.c.h.b16 %v1379
  %v1422 = vunpack.c.l.b16 %v1380
  %v1423 = vunpack.c.h.b16 %v1380
  %v1424 = vunpack.c.l.b16 %v1381
  %v1425 = vunpack.c.h.b16 %v1381
  %v1426 = vunpack.c.l.b16 %v1382
  %v1427 = vunpack.c.h.b16 %v1382
  %v1428 = vunpack.c.l.b16 %v1383
  %v1429 = vunpack.c.h.b16 %v1383
  %v1430 = vunpack.c.l.b16 %v1384
  %v1431 = vunpack.c.h.b16 %v1384
  %v1432 = vunpack.c.l.b16 %v1385
  %v1433 = vunpack.c.h.b16 %v1385
  %v1434 = vpack.c.b16 %v1402, %v1402
  %v1435 = vpack.c.b16 %v1403, %v1403
  %v1436 = vpack.c.b16 %v1404, %v1404
  %v1437 = vpack.c.b16 %v1405, %v1405
  %v1438 = vpack.c.b16 %v1406, %v1406
  %v1439 = vpack.c.b16 %v1407, %v1407
  %v1440 = vpack.c.b16 %v1408, %v1408
  %v1441 = vpack.c.b16 %v1409, %v1409
  %v1442 = vpack.c.b16 %v1410, %v1410
  %v1443 = vpack.c.b16 %v1411, %v1411
  %v1444 = vpack.c.b16 %v1412, %v1412
  %v1445 = vpack.c.b16 %v1413, %v1413
  %v1446 = vpack.c.b16 %v1414, %v1414
  %v1447 = vpack.c.b16 %v1415, %v1415
  %v1448 = vpack.c.b16 %v1416, %v1416
  %v1449 = vpack.c.b16 %v1417, %v1417
  %v1450 = vpack.c.b16 %v1418, %v1418
  %v1451 = vpack.c.b16 %v1419, %v1419
  %v1452 = vpack.c.b16 %v1420, %v1420
  %v1453 = vpack.c.b16 %v1421, %v1421
  %v1454 = vpack.c.b16 %v1422, %v1422
  %v1455 = vpack.c.b16 %v1423, %v1423
  %v1456 = vpack.c.b16 %v1424, %v1424
  %v1457 = vpack.c.b16 %v1425, %v1425
  %v1458 = vpack.c.b16 %v1426, %v1426
  %v1459 = vpack.c.b16 %v1427, %v1427
  %v1460 = vpack.c.b16 %v1428, %v1428
  %v1461 = vpack.c.b16 %v1429, %v1429
  %v1462 = vpack.c.b16 %v1430, %v1430
  %v1463 = vpack.c.b16 %v1431, %v1431
  %v1464 = vpack.c.b16 %v1432, %v1432
  %v1465 = vpack.c.b16 %v1433, %v1433
  %1498 = vst [vmem:[%s3] sm:$0xf] %v1434
  %1499 = vst [vmem:[%s3 + $0x4] sm:$0xf] %v1435
  %1500 = vst [vmem:[%s3 + $0x8] sm:$0xf] %v1436
  %1501 = vst [vmem:[%s3 + $0xc] sm:$0xf] %v1437
  %1502 = vst [vmem:[%s3 + $0x10] sm:$0xf] %v1438
  %1503 = vst [vmem:[%s3 + $0x14] sm:$0xf] %v1439
  %1504 = vst [vmem:[%s3 + $0x18] sm:$0xf] %v1440
  %1505 = vst [vmem:[%s3 + $0x1c] sm:$0xf] %v1441
  %1506 = vst [vmem:[%s3 + $0x20] sm:$0xf] %v1442
  %1507 = vst [vmem:[%s3 + $0x24] sm:$0xf] %v1443
  %1508 = vst [vmem:[%s3 + $0x28] sm:$0xf] %v1444
  %1509 = vst [vmem:[%s3 + $0x2c] sm:$0xf] %v1445
  %1510 = vst [vmem:[%s3 + $0x30] sm:$0xf] %v1446
  %1511 = vst [vmem:[%s3 + $0x34] sm:$0xf] %v1447
  %1512 = vst [vmem:[%s3 + $0x38] sm:$0xf] %v1448
  %1513 = vst [vmem:[%s3 + $0x3c] sm:$0xf] %v1449
  %1514 = vst [vmem:[%s3 + $0x40] sm:$0xf] %v1450
  %1515 = vst [vmem:[%s3 + $0x44] sm:$0xf] %v1451
  %1516 = vst [vmem:[%s3 + $0x48] sm:$0xf] %v1452
  %1517 = vst [vmem:[%s3 + $0x4c] sm:$0xf] %v1453
  %1518 = vst [vmem:[%s3 + $0x50] sm:$0xf] %v1454
  %1519 = vst [vmem:[%s3 + $0x54] sm:$0xf] %v1455
  %1520 = vst [vmem:[%s3 + $0x58] sm:$0xf] %v1456
  %1521 = vst [vmem:[%s3 + $0x5c] sm:$0xf] %v1457
  %1522 = vst [vmem:[%s3 + $0x60] sm:$0xf] %v1458
  %1523 = vst [vmem:[%s3 + $0x64] sm:$0xf] %v1459
  %1524 = vst [vmem:[%s3 + $0x68] sm:$0xf] %v1460
  %1525 = vst [vmem:[%s3 + $0x6c] sm:$0xf] %v1461
  %1526 = vst [vmem:[%s3 + $0x70] sm:$0xf] %v1462
  %1527 = vst [vmem:[%s3 + $0x74] sm:$0xf] %v1463
  %1528 = vst [vmem:[%s3 + $0x78] sm:$0xf] %v1464
  %1529 = vst [vmem:[%s3 + $0x7c] sm:$0xf] %v1465
  // Predicated region
  $region14: #{dqn_forward.6} parent=0 // pred_check
    _
  $region15: #{dqn_forward.6} parent=0 // pred_check_branch
    %1531 = sbr.rel (0) target = $region17
  $region16: #{dqn_forward.6} parent=0 // pred_region
    _
  $region17: #{dqn_forward.6} parent=0 // pred_fallthru
    _
  // Predicated region
  $region18: #{dqn_forward.6} parent=0 // pred_check
    _
  $region19: #{dqn_forward.6} parent=0 // pred_check_branch
    %1533 = sbr.rel (0) target = $region21
  $region20: #{dqn_forward.6} parent=0 // pred_region
    _
  $region21: #{dqn_forward.6} parent=0 // pred_fallthru
    _

// kernel: dqn_forward.7
$region0: #{dqn_forward.7}
  #allocation0 [shape = 'u32[]', space=smem, size = 0x4, offset = 0x4, fixed_abs, tag = 'smem constant byte address 0x4 - core index']
  #allocation1 [shape = 'u32[144,128]{1,0:T(1,128)}', space=vmem, size = 0x12000, scoped, tag = 'internal scratch']
  #allocation2 [shape = 'f32[8,1024]{1,0:T(8,128)}', space=vmem, size = 0x8000, scoped, tag = 'scratch operand']
  %s0 = inlined_call_operand.vmem [shape: bf16[8,5376], index: 0, kind: input, shape index: {}]
  %s1 = inlined_call_operand.vmem [shape: s8[5376,1024], index: 1, kind: input, shape index: {}]
  %s2 = inlined_call_operand.vmem [shape: f32[1,1024], index: 2, kind: input, shape index: {}]
  %s3 = inlined_call_operand.vmem [shape: f32[1,1024], index: 3, kind: input, shape index: {}]
  %s4 = inlined_call_operand.vmem [shape: bf16[512,256], index: 4, kind: input, shape index: {}]
  %s5 = inlined_call_operand.vmem [shape: f32[1,256], index: 5, kind: input, shape index: {}]
  %s6 = inlined_call_operand.vmem [shape: bf16[512,1024], index: 6, kind: input, shape index: {}]
  %s7 = inlined_call_operand.vmem [shape: f32[1,1024], index: 7, kind: input, shape index: {}]
  %s8 = inlined_call_operand.vmem [shape: f32[8,1024], index: 8, kind: output, shape index: {}]
  %s9 = sld [smem:[#allocation0]]
  $region73: #{dqn_forward.7} parent=0
    _
  %s11 = ssub.s32 1, %s9
  %s12 = scalar_select 0, %s11, %s9
  loop: start=0, step=1, limit=4
  $region2: #{dqn_forward.7} parent=0 // loop_pre_header
    _
  $region3: #{dqn_forward.7} parent=0 // loop_header
    %s14 = sphi 0, %s18
    %p15 = scmp.ge.s32.totalorder %s14, 4
    %s24 = sphi 0, %s26
    %s27 = sphi 0, %s24
    %s28 = sphi 0, %s27
    %s44 = sphi 0, %s28
    %s50 = sphi 0, %s52
    %s53 = sphi 0, %s50
    %s54 = sphi 0, %s53
    %s70 = sphi 0, %s54
    %s74 = sphi 0, %s74
    %s76 = sphi 0, %s74
    %s77 = sphi 0, %s76
    %s91 = sphi 0, %s77
    %s95 = sphi 0, %s95
    %s97 = sphi 0, %s95
    %s98 = sphi 0, %s97
    %s112 = sphi 0, %s98
    %s116 = sphi 0, %s116
    %s118 = sphi 0, %s116
    %s119 = sphi 0, %s118
    %s133 = sphi 0, %s119
    %s137 = sphi 0, %s137
    %s139 = sphi 0, %s137
    %s140 = sphi 0, %s139
    %s154 = sphi 0, %s140
    %s158 = sphi 0, %s158
    %s160 = sphi 0, %s158
    %s161 = sphi 0, %s160
    %s175 = sphi 0, %s161
    %s179 = sphi 0, %s179
    %s181 = sphi 0, %s179
    %s182 = sphi 0, %s181
    %s196 = sphi 0, %s182
    %s200 = sphi 0, %s200
    %s202 = sphi 0, %s200
    %s203 = sphi 0, %s202
    %s217 = sphi 0, %s203
  $region4: #{dqn_forward.7} parent=0 // loop_header_branch
    %17 = sbr.rel (%p15) target = $region8
  $region5: #{dqn_forward.7} parent=0 // loop_body
    %s19 = ssub.s32 %s14, 1
    %s20 = ssub.s32 %s14, 2
    %s21 = sadd.s32 %s14, 1
    %s22 = ssub.s32 %s14, %s21
    %p23 = scmp.eq.s32.totalorder %s22, 0
    %s25 = sadd.s32 %s24, 1
    %s26 = scalar_select %p23, %s24, %s25
    %p29 = pneg %p23
    %p30 = scmp.eq.s32.totalorder %s14, 1
    %p31 = por %p29, %p30
    %p32 = scmp.ne.s32.totalorder %s24, %s27
    %p33 = scmp.eq.s32.totalorder %s14, 0
    %p34 = por %p32, %p33
    %p35 = scmp.ne.s32.totalorder %s24, %s27
    %p36 = scmp.eq.s32.totalorder %s19, 1
    %p37 = por %p35, %p36
    %p38 = scmp.ne.s32.totalorder %s27, %s28
    %p39 = scmp.eq.s32.totalorder %s19, 0
    %p40 = por %p38, %p39
    %p41 = scmp.ne.s32.totalorder %s27, %s28
    %p42 = scmp.eq.s32.totalorder %s20, 1
    %p43 = por %p41, %p42
    %p45 = scmp.ne.s32.totalorder %s28, %s44
    %p46 = scmp.eq.s32.totalorder %s20, 0
    %p47 = por %p45, %p46
    %s48 = ssub.s32 %s14, %s21
    %p49 = scmp.eq.s32.totalorder %s48, 0
    %s51 = sadd.s32 %s50, 1
    %s52 = scalar_select %p49, %s50, %s51
    %p55 = pneg %p49
    %p56 = scmp.eq.s32.totalorder %s14, 1
    %p57 = por %p55, %p56
    %p58 = scmp.ne.s32.totalorder %s50, %s53
    %p59 = scmp.eq.s32.totalorder %s14, 0
    %p60 = por %p58, %p59
    %p61 = scmp.ne.s32.totalorder %s50, %s53
    %p62 = scmp.eq.s32.totalorder %s19, 1
    %p63 = por %p61, %p62
    %p64 = scmp.ne.s32.totalorder %s53, %s54
    %p65 = scmp.eq.s32.totalorder %s19, 0
    %p66 = por %p64, %p65
    %p67 = scmp.ne.s32.totalorder %s53, %s54
    %p68 = scmp.eq.s32.totalorder %s20, 1
    %p69 = por %p67, %p68
    %p71 = scmp.ne.s32.totalorder %s54, %s70
    %p72 = scmp.eq.s32.totalorder %s20, 0
    %p73 = por %p71, %p72
    %s75 = sadd.s32 %s74, 1
    %p78 = scmp.eq.s32.totalorder %s14, 1
    %p79 = scmp.ne.s32.totalorder %s74, %s76
    %p80 = scmp.eq.s32.totalorder %s14, 0
    %p81 = por %p79, %p80
    %p82 = scmp.ne.s32.totalorder %s74, %s76
    %p83 = scmp.eq.s32.totalorder %s19, 1
    %p84 = por %p82, %p83
    %p85 = scmp.ne.s32.totalorder %s76, %s77
    %p86 = scmp.eq.s32.totalorder %s19, 0
    %p87 = por %p85, %p86
    %p88 = scmp.ne.s32.totalorder %s76, %s77
    %p89 = scmp.eq.s32.totalorder %s20, 1
    %p90 = por %p88, %p89
    %p92 = scmp.ne.s32.totalorder %s77, %s91
    %p93 = scmp.eq.s32.totalorder %s20, 0
    %p94 = por %p92, %p93
    %s96 = sadd.s32 %s95, 1
    %p99 = scmp.eq.s32.totalorder %s14, 1
    %p100 = scmp.ne.s32.totalorder %s95, %s97
    %p101 = scmp.eq.s32.totalorder %s14, 0
    %p102 = por %p100, %p101
    %p103 = scmp.ne.s32.totalorder %s95, %s97
    %p104 = scmp.eq.s32.totalorder %s19, 1
    %p105 = por %p103, %p104
    %p106 = scmp.ne.s32.totalorder %s97, %s98
    %p107 = scmp.eq.s32.totalorder %s19, 0
    %p108 = por %p106, %p107
    %p109 = scmp.ne.s32.totalorder %s97, %s98
    %p110 = scmp.eq.s32.totalorder %s20, 1
    %p111 = por %p109, %p110
    %p113 = scmp.ne.s32.totalorder %s98, %s112
    %p114 = scmp.eq.s32.totalorder %s20, 0
    %p115 = por %p113, %p114
    %s117 = sadd.s32 %s116, 1
    %p120 = scmp.eq.s32.totalorder %s14, 1
    %p121 = scmp.ne.s32.totalorder %s116, %s118
    %p122 = scmp.eq.s32.totalorder %s14, 0
    %p123 = por %p121, %p122
    %p124 = scmp.ne.s32.totalorder %s116, %s118
    %p125 = scmp.eq.s32.totalorder %s19, 1
    %p126 = por %p124, %p125
    %p127 = scmp.ne.s32.totalorder %s118, %s119
    %p128 = scmp.eq.s32.totalorder %s19, 0
    %p129 = por %p127, %p128
    %p130 = scmp.ne.s32.totalorder %s118, %s119
    %p131 = scmp.eq.s32.totalorder %s20, 1
    %p132 = por %p130, %p131
    %p134 = scmp.ne.s32.totalorder %s119, %s133
    %p135 = scmp.eq.s32.totalorder %s20, 0
    %p136 = por %p134, %p135
    %s138 = sadd.s32 %s137, 1
    %p141 = scmp.eq.s32.totalorder %s14, 1
    %p142 = scmp.ne.s32.totalorder %s137, %s139
    %p143 = scmp.eq.s32.totalorder %s14, 0
    %p144 = por %p142, %p143
    %p145 = scmp.ne.s32.totalorder %s137, %s139
    %p146 = scmp.eq.s32.totalorder %s19, 1
    %p147 = por %p145, %p146
    %p148 = scmp.ne.s32.totalorder %s139, %s140
    %p149 = scmp.eq.s32.totalorder %s19, 0
    %p150 = por %p148, %p149
    %p151 = scmp.ne.s32.totalorder %s139, %s140
    %p152 = scmp.eq.s32.totalorder %s20, 1
    %p153 = por %p151, %p152
    %p155 = scmp.ne.s32.totalorder %s140, %s154
    %p156 = scmp.eq.s32.totalorder %s20, 0
    %p157 = por %p155, %p156
    %s159 = sadd.s32 %s158, 1
    %p162 = scmp.eq.s32.totalorder %s14, 1
    %p163 = scmp.ne.s32.totalorder %s158, %s160
    %p164 = scmp.eq.s32.totalorder %s14, 0
    %p165 = por %p163, %p164
    %p166 = scmp.ne.s32.totalorder %s158, %s160
    %p167 = scmp.eq.s32.totalorder %s19, 1
    %p168 = por %p166, %p167
    %p169 = scmp.ne.s32.totalorder %s160, %s161
    %p170 = scmp.eq.s32.totalorder %s19, 0
    %p171 = por %p169, %p170
    %p172 = scmp.ne.s32.totalorder %s160, %s161
    %p173 = scmp.eq.s32.totalorder %s20, 1
    %p174 = por %p172, %p173
    %p176 = scmp.ne.s32.totalorder %s161, %s175
    %p177 = scmp.eq.s32.totalorder %s20, 0
    %p178 = por %p176, %p177
    %s180 = sadd.s32 %s179, 1
    %p183 = scmp.eq.s32.totalorder %s14, 1
    %p184 = scmp.ne.s32.totalorder %s179, %s181
    %p185 = scmp.eq.s32.totalorder %s14, 0
    %p186 = por %p184, %p185
    %p187 = scmp.ne.s32.totalorder %s179, %s181
    %p188 = scmp.eq.s32.totalorder %s19, 1
    %p189 = por %p187, %p188
    %p190 = scmp.ne.s32.totalorder %s181, %s182
    %p191 = scmp.eq.s32.totalorder %s19, 0
    %p192 = por %p190, %p191
    %p193 = scmp.ne.s32.totalorder %s181, %s182
    %p194 = scmp.eq.s32.totalorder %s20, 1
    %p195 = por %p193, %p194
    %p197 = scmp.ne.s32.totalorder %s182, %s196
    %p198 = scmp.eq.s32.totalorder %s20, 0
    %p199 = por %p197, %p198
    %s201 = sadd.s32 %s200, 1
    %p204 = scmp.eq.s32.totalorder %s14, 1
    %p205 = scmp.ne.s32.totalorder %s200, %s202
    %p206 = scmp.eq.s32.totalorder %s14, 0
    %p207 = por %p205, %p206
    %p208 = scmp.ne.s32.totalorder %s200, %s202
    %p209 = scmp.eq.s32.totalorder %s19, 1
    %p210 = por %p208, %p209
    %p211 = scmp.ne.s32.totalorder %s202, %s203
    %p212 = scmp.eq.s32.totalorder %s19, 0
    %p213 = por %p211, %p212
    %p214 = scmp.ne.s32.totalorder %s202, %s203
    %p215 = scmp.eq.s32.totalorder %s20, 1
    %p216 = por %p214, %p215
    %p218 = scmp.ne.s32.totalorder %s203, %s217
    %p219 = scmp.eq.s32.totalorder %s20, 0
    %p220 = por %p218, %p219
    %p221 = scmp.le.s32.totalorder 1, %s14
    %p222 = scmp.lt.s32.totalorder %s14, 3
    %p223 = pnand %p221, %p222
    %p224 = pneg %p223
    // Predicated region
    $region9: #{dqn_forward.7} parent=5 // pred_check
      _
    $region10: #{dqn_forward.7} parent=5 // pred_check_branch
      %226 = sbr.rel (%p223) target = $region12
    $region11: #{dqn_forward.7} parent=5 // pred_region
      %s227 = ssub.s32 %s14, 1
      // Predicated region
      $region13: #{dqn_forward.7} parent=11 // pred_check
        %p228 = pneg %p87
      $region14: #{dqn_forward.7} parent=11 // pred_check_branch
        %230 = sbr.rel (%p228) target = $region16
      $region15: #{dqn_forward.7} parent=11 // pred_region
        _
      $region16: #{dqn_forward.7} parent=11 // pred_fallthru
        _
      // Predicated region
      $region17: #{dqn_forward.7} parent=11 // pred_check
        %p231 = pneg %p108
      $region18: #{dqn_forward.7} parent=11 // pred_check_branch
        %233 = sbr.rel (%p231) target = $region20
      $region19: #{dqn_forward.7} parent=11 // pred_region
        _
      $region20: #{dqn_forward.7} parent=11 // pred_fallthru
        _
      // Predicated region
      $region21: #{dqn_forward.7} parent=11 // pred_check
        %p234 = pneg %p129
      $region22: #{dqn_forward.7} parent=11 // pred_check_branch
        %236 = sbr.rel (%p234) target = $region24
      $region23: #{dqn_forward.7} parent=11 // pred_region
        _
      $region24: #{dqn_forward.7} parent=11 // pred_fallthru
        _
      // Predicated region
      $region25: #{dqn_forward.7} parent=11 // pred_check
        %p237 = pneg %p150
      $region26: #{dqn_forward.7} parent=11 // pred_check_branch
        %239 = sbr.rel (%p237) target = $region28
      $region27: #{dqn_forward.7} parent=11 // pred_region
        _
      $region28: #{dqn_forward.7} parent=11 // pred_fallthru
        _
      // Predicated region
      $region29: #{dqn_forward.7} parent=11 // pred_check
        %p240 = pneg %p171
      $region30: #{dqn_forward.7} parent=11 // pred_check_branch
        %242 = sbr.rel (%p240) target = $region32
      $region31: #{dqn_forward.7} parent=11 // pred_region
        _
      $region32: #{dqn_forward.7} parent=11 // pred_fallthru
        _
      // Predicated region
      $region33: #{dqn_forward.7} parent=11 // pred_check
        %p243 = pneg %p192
      $region34: #{dqn_forward.7} parent=11 // pred_check_branch
        %245 = sbr.rel (%p243) target = $region36
      $region35: #{dqn_forward.7} parent=11 // pred_region
        _
      $region36: #{dqn_forward.7} parent=11 // pred_fallthru
        _
    $region12: #{dqn_forward.7} parent=5 // pred_fallthru
      _
    %p246 = scmp.lt.s32.totalorder %s14, 2
    // Predicated region
    $region37: #{dqn_forward.7} parent=5 // pred_check
      %p247 = pneg %p246
    $region38: #{dqn_forward.7} parent=5 // pred_check_branch
      %249 = sbr.rel (%p247) target = $region40
    $region39: #{dqn_forward.7} parent=5 // pred_region
      // Predicated region
      $region41: #{dqn_forward.7} parent=39 // pred_check
        %p250 = pneg %p34
      $region42: #{dqn_forward.7} parent=39 // pred_check_branch
        %252 = sbr.rel (%p250) target = $region44
      $region43: #{dqn_forward.7} parent=39 // pred_region
        %s253 = smul.u32 21, %s14
        %p254 = scmp.lt.s32.totalorder %s253, 41
        %s255 = scalar_select %p254, %s253, 41
        %s256 = smul.addr %s255, 4
        %s257 = scalar_lea.vmem %s0, %s256
        %s258 = smul.u32 21, %s14
      $region44: #{dqn_forward.7} parent=39 // pred_fallthru
        _
      // Predicated region
      $region45: #{dqn_forward.7} parent=39 // pred_check
        %p259 = pneg %p60
      $region46: #{dqn_forward.7} parent=39 // pred_check_branch
        %261 = sbr.rel (%p259) target = $region48
      $region47: #{dqn_forward.7} parent=39 // pred_region
        %s262 = smul.u32 84, %s14
        %p263 = scmp.lt.s32.totalorder %s262, 167
        %s264 = scalar_select %p263, %s262, 167
        %s265 = smul.addr %s264, 8
        %s266 = smul.addr %s265, 8
        %s267 = scalar_lea.vmem %s1, %s266
        %s268 = smul.u32 84, %s14
      $region48: #{dqn_forward.7} parent=39 // pred_fallthru
        _
    $region40: #{dqn_forward.7} parent=5 // pred_fallthru
      _
    %p269 = scmp.le.s32.totalorder 1, %s14
    %p270 = scmp.lt.s32.totalorder %s14, 3
    %p271 = pnand %p269, %p270
    %p272 = pneg %p271
    // Predicated region
    $region49: #{dqn_forward.7} parent=5 // pred_check
      _
    $region50: #{dqn_forward.7} parent=5 // pred_check_branch
      %274 = sbr.rel (%p271) target = $region52
    $region51: #{dqn_forward.7} parent=5 // pred_region
      %s275 = ssub.s32 %s14, 1
      %s276 = smul.u32 21, %s19
      %p277 = scmp.lt.s32.totalorder %s276, 41
      %s278 = scalar_select %p277, %s276, 41
      %s279 = smul.addr %s278, 4
      %s280 = scalar_lea.vmem %s0, %s279
      %p281 = pneg %p40
      %p282 = pneg %p37
      %s283 = smul.u32 84, %s19
      %p284 = scmp.lt.s32.totalorder %s283, 167
      %s285 = scalar_select %p284, %s283, 167
      %s286 = smul.addr %s285, 8
      %s287 = smul.addr %s286, 8
      %s288 = scalar_lea.vmem %s1, %s287
      %p289 = pneg %p66
      %p290 = pneg %p63
      %p291 = pneg %p87
      %p292 = pneg %p84
      %p293 = pneg %p108
      %p294 = pneg %p105
      %p295 = pneg %p129
      %p296 = pneg %p126
      %p297 = pneg %p150
      %p298 = pneg %p147
      %p299 = pneg %p171
      %p300 = pneg %p168
      %p301 = pneg %p192
      %p302 = pneg %p189
      %p303 = pneg %p213
      %p304 = pneg %p210
      %s305 = smul.u32 21, %s19
      %p306 = scmp.lt.s32.totalorder %s305, 41
      %s307 = scalar_select %p306, %s305, 41
      %s308 = smul.addr %s307, 4
      %s309 = scalar_lea.vmem %s0, %s308
      %s310 = smul.u32 21, %s19
      %s311 = smul.u32 84, %s19
      %p312 = scmp.lt.s32.totalorder %s311, 167
      %s313 = scalar_select %p312, %s311, 167
      %s314 = smul.addr %s313, 8
      %s315 = smul.addr %s314, 8
      %s316 = scalar_lea.vmem %s1, %s315
      %s317 = smul.u32 84, %s19
      %p319 = scmp.eq.s32.totalorder %s19, 0
      // Predicated region
      $region53: #{dqn_forward.7} parent=51 // pred_check
        %p320 = pneg %p319
      $region54: #{dqn_forward.7} parent=51 // pred_check_branch
        %322 = sbr.rel (%p320) target = $region56
      $region55: #{dqn_forward.7} parent=51 // pred_region
        %323 = vst [vmem:[#allocation2] sm:$0xff] 0.0
        %324 = vst [vmem:[#allocation2 + $0x8] sm:$0xff] 0.0
        %325 = vst [vmem:[#allocation2 + $0x10] sm:$0xff] 0.0
        %326 = vst [vmem:[#allocation2 + $0x18] sm:$0xff] 0.0
        %327 = vst [vmem:[#allocation2 + $0x20] sm:$0xff] 0.0
        %328 = vst [vmem:[#allocation2 + $0x28] sm:$0xff] 0.0
        %329 = vst [vmem:[#allocation2 + $0x30] sm:$0xff] 0.0
        %330 = vst [vmem:[#allocation2 + $0x38] sm:$0xff] 0.0
      $region56: #{dqn_forward.7} parent=51 // pred_fallthru
        _
      %v331 = vld [vmem:[#allocation2] sm:$0xff]
      %v332 = vld [vmem:[#allocation2 + $0x8] sm:$0xff]
      %v333 = vld [vmem:[#allocation2 + $0x10] sm:$0xff]
      %v334 = vld [vmem:[#allocation2 + $0x18] sm:$0xff]
      %v335 = vld [vmem:[#allocation2 + $0x20] sm:$0xff]
      %v336 = vld [vmem:[#allocation2 + $0x28] sm:$0xff]
      %v337 = vld [vmem:[#allocation2 + $0x30] sm:$0xff]
      %v338 = vld [vmem:[#allocation2 + $0x38] sm:$0xff]
      %v339 = vld [vmem:[%s309] sm:$0xff]
      %v340 = vld [vmem:[%s309 + $0x8] sm:$0xff]
      %v341 = vld [vmem:[%s309 + $0x10] sm:$0xff]
      %v342 = vld [vmem:[%s309 + $0x18] sm:$0xff]
      %v343 = vld [vmem:[%s309 + $0x20] sm:$0xff]
      %v344 = vld [vmem:[%s309 + $0x28] sm:$0xff]
      %v345 = vld [vmem:[%s309 + $0x30] sm:$0xff]
      %v346 = vld [vmem:[%s309 + $0x38] sm:$0xff]
      %v347 = vld [vmem:[%s309 + $0x40] sm:$0xff]
      %v348 = vld [vmem:[%s309 + $0x48] sm:$0xff]
      %v349 = vld [vmem:[%s309 + $0x50] sm:$0xf]
      %v350 = vld [vmem:[%s316] sm:$0xff]
      %v351 = vld [vmem:[%s316 + $0x8] sm:$0xff]
      %v352 = vld [vmem:[%s316 + $0x10] sm:$0xff]
      %v353 = vld [vmem:[%s316 + $0x18] sm:$0xff]
      %v354 = vld [vmem:[%s316 + $0x20] sm:$0xff]
      %v355 = vld [vmem:[%s316 + $0x28] sm:$0xff]
      %v356 = vld [vmem:[%s316 + $0x30] sm:$0xff]
      %v357 = vld [vmem:[%s316 + $0x38] sm:$0xff]
      %v358 = vld [vmem:[%s316 + $0x40] sm:$0xff]
      %v359 = vld [vmem:[%s316 + $0x48] sm:$0xff]
      %v360 = vld [vmem:[%s316 + $0x50] sm:$0xff]
      %v361 = vld [vmem:[%s316 + $0x58] sm:$0xff]
      %v362 = vld [vmem:[%s316 + $0x60] sm:$0xff]
      %v363 = vld [vmem:[%s316 + $0x68] sm:$0xff]
      %v364 = vld [vmem:[%s316 + $0x70] sm:$0xff]
      %v365 = vld [vmem:[%s316 + $0x78] sm:$0xff]
      %v366 = vld [vmem:[%s316 + $0x80] sm:$0xff]
      %v367 = vld [vmem:[%s316 + $0x88] sm:$0xff]
      %v368 = vld [vmem:[%s316 + $0x90] sm:$0xff]
      %v369 = vld [vmem:[%s316 + $0x98] sm:$0xff]
      %v370 = vld [vmem:[%s316 + $0xa0] sm:$0xff]
      %v371 = vld [vmem:[%s316 + $0xa8] sm:$0xff]
      %v372 = vld [vmem:[%s316 + $0xb0] sm:$0xff]
      %v373 = vld [vmem:[%s316 + $0xb8] sm:$0xff]
      %v374 = vld [vmem:[%s316 + $0xc0] sm:$0xff]
      %v375 = vld [vmem:[%s316 + $0xc8] sm:$0xff]
      %v376 = vld [vmem:[%s316 + $0xd0] sm:$0xff]
      %v377 = vld [vmem:[%s316 + $0xd8] sm:$0xff]
      %v378 = vld [vmem:[%s316 + $0xe0] sm:$0xff]
      %v379 = vld [vmem:[%s316 + $0xe8] sm:$0xff]
      %v380 = vld [vmem:[%s316 + $0xf0] sm:$0xff]
      %v381 = vld [vmem:[%s316 + $0xf8] sm:$0xff]
      %v382 = vld [vmem:[%s316 + $0x100] sm:$0xff]
      %v383 = vld [vmem:[%s316 + $0x108] sm:$0xff]
      %v384 = vld [vmem:[%s316 + $0x110] sm:$0xff]
      %v385 = vld [vmem:[%s316 + $0x118] sm:$0xff]
      %v386 = vld [vmem:[%s316 + $0x120] sm:$0xff]
      %v387 = vld [vmem:[%s316 + $0x128] sm:$0xff]
      %v388 = vld [vmem:[%s316 + $0x130] sm:$0xff]
      %v389 = vld [vmem:[%s316 + $0x138] sm:$0xff]
      %v390 = vld [vmem:[%s316 + $0x140] sm:$0xff]
      %v391 = vld [vmem:[%s316 + $0x148] sm:$0xff]
      %v392 = vld [vmem:[%s316 + $0x150] sm:$0xff]
      %v393 = vld [vmem:[%s316 + $0x158] sm:$0xff]
      %v394 = vld [vmem:[%s316 + $0x160] sm:$0xff]
      %v395 = vld [vmem:[%s316 + $0x168] sm:$0xff]
      %v396 = vld [vmem:[%s316 + $0x170] sm:$0xff]
      %v397 = vld [vmem:[%s316 + $0x178] sm:$0xff]
      %v398 = vld [vmem:[%s316 + $0x180] sm:$0xff]
      %v399 = vld [vmem:[%s316 + $0x188] sm:$0xff]
      %v400 = vld [vmem:[%s316 + $0x190] sm:$0xff]
      %v401 = vld [vmem:[%s316 + $0x198] sm:$0xff]
      %v402 = vld [vmem:[%s316 + $0x1a0] sm:$0xff]
      %v403 = vld [vmem:[%s316 + $0x1a8] sm:$0xff]
      %v404 = vld [vmem:[%s316 + $0x1b0] sm:$0xff]
      %v405 = vld [vmem:[%s316 + $0x1b8] sm:$0xff]
      %v406 = vld [vmem:[%s316 + $0x1c0] sm:$0xff]
      %v407 = vld [vmem:[%s316 + $0x1c8] sm:$0xff]
      %v408 = vld [vmem:[%s316 + $0x1d0] sm:$0xff]
      %v409 = vld [vmem:[%s316 + $0x1d8] sm:$0xff]
      %v410 = vld [vmem:[%s316 + $0x1e0] sm:$0xff]
      %v411 = vld [vmem:[%s316 + $0x1e8] sm:$0xff]
      %v412 = vld [vmem:[%s316 + $0x1f0] sm:$0xff]
      %v413 = vld [vmem:[%s316 + $0x1f8] sm:$0xff]
      %v414 = vld [vmem:[%s316 + $0x200] sm:$0xff]
      %v415 = vld [vmem:[%s316 + $0x208] sm:$0xff]
      %v416 = vld [vmem:[%s316 + $0x210] sm:$0xff]
      %v417 = vld [vmem:[%s316 + $0x218] sm:$0xff]
      %v418 = vld [vmem:[%s316 + $0x220] sm:$0xff]
      %v419 = vld [vmem:[%s316 + $0x228] sm:$0xff]
      %v420 = vld [vmem:[%s316 + $0x230] sm:$0xff]
      %v421 = vld [vmem:[%s316 + $0x238] sm:$0xff]
      %v422 = vld [vmem:[%s316 + $0x240] sm:$0xff]
      %v423 = vld [vmem:[%s316 + $0x248] sm:$0xff]
      %v424 = vld [vmem:[%s316 + $0x250] sm:$0xff]
      %v425 = vld [vmem:[%s316 + $0x258] sm:$0xff]
      %v426 = vld [vmem:[%s316 + $0x260] sm:$0xff]
      %v427 = vld [vmem:[%s316 + $0x268] sm:$0xff]
      %v428 = vld [vmem:[%s316 + $0x270] sm:$0xff]
      %v429 = vld [vmem:[%s316 + $0x278] sm:$0xff]
      %v430 = vld [vmem:[%s316 + $0x280] sm:$0xff]
      %v431 = vld [vmem:[%s316 + $0x288] sm:$0xff]
      %v432 = vld [vmem:[%s316 + $0x290] sm:$0xff]
      %v433 = vld [vmem:[%s316 + $0x298] sm:$0xff]
      %v434 = vld [vmem:[%s316 + $0x2a0] sm:$0xff]
      %v435 = vld [vmem:[%s316 + $0x2a8] sm:$0xff]
      %v436 = vld [vmem:[%s316 + $0x2b0] sm:$0xff]
      %v437 = vld [vmem:[%s316 + $0x2b8] sm:$0xff]
      %v438 = vld [vmem:[%s316 + $0x2c0] sm:$0xff]
      %v439 = vld [vmem:[%s316 + $0x2c8] sm:$0xff]
      %v440 = vld [vmem:[%s316 + $0x2d0] sm:$0xff]
      %v441 = vld [vmem:[%s316 + $0x2d8] sm:$0xff]
      %v442 = vld [vmem:[%s316 + $0x2e0] sm:$0xff]
      %v443 = vld [vmem:[%s316 + $0x2e8] sm:$0xff]
      %v444 = vld [vmem:[%s316 + $0x2f0] sm:$0xff]
      %v445 = vld [vmem:[%s316 + $0x2f8] sm:$0xff]
      %v446 = vld [vmem:[%s316 + $0x300] sm:$0xff]
      %v447 = vld [vmem:[%s316 + $0x308] sm:$0xff]
      %v448 = vld [vmem:[%s316 + $0x310] sm:$0xff]
      %v449 = vld [vmem:[%s316 + $0x318] sm:$0xff]
      %v450 = vld [vmem:[%s316 + $0x320] sm:$0xff]
      %v451 = vld [vmem:[%s316 + $0x328] sm:$0xff]
      %v452 = vld [vmem:[%s316 + $0x330] sm:$0xff]
      %v453 = vld [vmem:[%s316 + $0x338] sm:$0xff]
      %v454 = vld [vmem:[%s316 + $0x340] sm:$0xff]
      %v455 = vld [vmem:[%s316 + $0x348] sm:$0xff]
      %v456 = vld [vmem:[%s316 + $0x350] sm:$0xff]
      %v457 = vld [vmem:[%s316 + $0x358] sm:$0xff]
      %v458 = vld [vmem:[%s316 + $0x360] sm:$0xff]
      %v459 = vld [vmem:[%s316 + $0x368] sm:$0xff]
      %v460 = vld [vmem:[%s316 + $0x370] sm:$0xff]
      %v461 = vld [vmem:[%s316 + $0x378] sm:$0xff]
      %v462 = vld [vmem:[%s316 + $0x380] sm:$0xff]
      %v463 = vld [vmem:[%s316 + $0x388] sm:$0xff]
      %v464 = vld [vmem:[%s316 + $0x390] sm:$0xff]
      %v465 = vld [vmem:[%s316 + $0x398] sm:$0xff]
      %v466 = vld [vmem:[%s316 + $0x3a0] sm:$0xff]
      %v467 = vld [vmem:[%s316 + $0x3a8] sm:$0xff]
      %v468 = vld [vmem:[%s316 + $0x3b0] sm:$0xff]
      %v469 = vld [vmem:[%s316 + $0x3b8] sm:$0xff]
      %v470 = vld [vmem:[%s316 + $0x3c0] sm:$0xff]
      %v471 = vld [vmem:[%s316 + $0x3c8] sm:$0xff]
      %v472 = vld [vmem:[%s316 + $0x3d0] sm:$0xff]
      %v473 = vld [vmem:[%s316 + $0x3d8] sm:$0xff]
      %v474 = vld [vmem:[%s316 + $0x3e0] sm:$0xff]
      %v475 = vld [vmem:[%s316 + $0x3e8] sm:$0xff]
      %v476 = vld [vmem:[%s316 + $0x3f0] sm:$0xff]
      %v477 = vld [vmem:[%s316 + $0x3f8] sm:$0xff]
      %v478 = vld [vmem:[%s316 + $0x400] sm:$0xff]
      %v479 = vld [vmem:[%s316 + $0x408] sm:$0xff]
      %v480 = vld [vmem:[%s316 + $0x410] sm:$0xff]
      %v481 = vld [vmem:[%s316 + $0x418] sm:$0xff]
      %v482 = vld [vmem:[%s316 + $0x420] sm:$0xff]
      %v483 = vld [vmem:[%s316 + $0x428] sm:$0xff]
      %v484 = vld [vmem:[%s316 + $0x430] sm:$0xff]
      %v485 = vld [vmem:[%s316 + $0x438] sm:$0xff]
      %v486 = vld [vmem:[%s316 + $0x440] sm:$0xff]
      %v487 = vld [vmem:[%s316 + $0x448] sm:$0xff]
      %v488 = vld [vmem:[%s316 + $0x450] sm:$0xff]
      %v489 = vld [vmem:[%s316 + $0x458] sm:$0xff]
      %v490 = vld [vmem:[%s316 + $0x460] sm:$0xff]
      %v491 = vld [vmem:[%s316 + $0x468] sm:$0xff]
      %v492 = vld [vmem:[%s316 + $0x470] sm:$0xff]
      %v493 = vld [vmem:[%s316 + $0x478] sm:$0xff]
      %v494 = vld [vmem:[%s316 + $0x480] sm:$0xff]
      %v495 = vld [vmem:[%s316 + $0x488] sm:$0xff]
      %v496 = vld [vmem:[%s316 + $0x490] sm:$0xff]
      %v497 = vld [vmem:[%s316 + $0x498] sm:$0xff]
      %v498 = vld [vmem:[%s316 + $0x4a0] sm:$0xff]
      %v499 = vld [vmem:[%s316 + $0x4a8] sm:$0xff]
      %v500 = vld [vmem:[%s316 + $0x4b0] sm:$0xff]
      %v501 = vld [vmem:[%s316 + $0x4b8] sm:$0xff]
      %v502 = vld [vmem:[%s316 + $0x4c0] sm:$0xff]
      %v503 = vld [vmem:[%s316 + $0x4c8] sm:$0xff]
      %v504 = vld [vmem:[%s316 + $0x4d0] sm:$0xff]
      %v505 = vld [vmem:[%s316 + $0x4d8] sm:$0xff]
      %v506 = vld [vmem:[%s316 + $0x4e0] sm:$0xff]
      %v507 = vld [vmem:[%s316 + $0x4e8] sm:$0xff]
      %v508 = vld [vmem:[%s316 + $0x4f0] sm:$0xff]
      %v509 = vld [vmem:[%s316 + $0x4f8] sm:$0xff]
      %v510 = vld [vmem:[%s316 + $0x500] sm:$0xff]
      %v511 = vld [vmem:[%s316 + $0x508] sm:$0xff]
      %v512 = vld [vmem:[%s316 + $0x510] sm:$0xff]
      %v513 = vld [vmem:[%s316 + $0x518] sm:$0xff]
      %v514 = vld [vmem:[%s316 + $0x520] sm:$0xff]
      %v515 = vld [vmem:[%s316 + $0x528] sm:$0xff]
      %v516 = vld [vmem:[%s316 + $0x530] sm:$0xff]
      %v517 = vld [vmem:[%s316 + $0x538] sm:$0xff]
      %v518 = vld [vmem:[%s316 + $0x540] sm:$0xff]
      %v519 = vld [vmem:[%s316 + $0x548] sm:$0xff]
      %v520 = vld [vmem:[%s316 + $0x550] sm:$0xff]
      %v521 = vld [vmem:[%s316 + $0x558] sm:$0xff]
      %v522 = vld [vmem:[%s316 + $0x560] sm:$0xff]
      %v523 = vld [vmem:[%s316 + $0x568] sm:$0xff]
      %v524 = vld [vmem:[%s316 + $0x570] sm:$0xff]
      %v525 = vld [vmem:[%s316 + $0x578] sm:$0xff]
      %v526 = vld [vmem:[%s316 + $0x580] sm:$0xff]
      %v527 = vld [vmem:[%s316 + $0x588] sm:$0xff]
      %v528 = vld [vmem:[%s316 + $0x590] sm:$0xff]
      %v529 = vld [vmem:[%s316 + $0x598] sm:$0xff]
      %v530 = vld [vmem:[%s316 + $0x5a0] sm:$0xff]
      %v531 = vld [vmem:[%s316 + $0x5a8] sm:$0xff]
      %v532 = vld [vmem:[%s316 + $0x5b0] sm:$0xff]
      %v533 = vld [vmem:[%s316 + $0x5b8] sm:$0xff]
      %v534 = vld [vmem:[%s316 + $0x5c0] sm:$0xff]
      %v535 = vld [vmem:[%s316 + $0x5c8] sm:$0xff]
      %v536 = vld [vmem:[%s316 + $0x5d0] sm:$0xff]
      %v537 = vld [vmem:[%s316 + $0x5d8] sm:$0xff]
      %v538 = vld [vmem:[%s316 + $0x5e0] sm:$0xff]
      %v539 = vld [vmem:[%s316 + $0x5e8] sm:$0xff]
      %v540 = vld [vmem:[%s316 + $0x5f0] sm:$0xff]
      %v541 = vld [vmem:[%s316 + $0x5f8] sm:$0xff]
      %v542 = vld [vmem:[%s316 + $0x600] sm:$0xff]
      %v543 = vld [vmem:[%s316 + $0x608] sm:$0xff]
      %v544 = vld [vmem:[%s316 + $0x610] sm:$0xff]
      %v545 = vld [vmem:[%s316 + $0x618] sm:$0xff]
      %v546 = vld [vmem:[%s316 + $0x620] sm:$0xff]
      %v547 = vld [vmem:[%s316 + $0x628] sm:$0xff]
      %v548 = vld [vmem:[%s316 + $0x630] sm:$0xff]
      %v549 = vld [vmem:[%s316 + $0x638] sm:$0xff]
      %v550 = vld [vmem:[%s316 + $0x640] sm:$0xff]
      %v551 = vld [vmem:[%s316 + $0x648] sm:$0xff]
      %v552 = vld [vmem:[%s316 + $0x650] sm:$0xff]
      %v553 = vld [vmem:[%s316 + $0x658] sm:$0xff]
      %v554 = vld [vmem:[%s316 + $0x660] sm:$0xff]
      %v555 = vld [vmem:[%s316 + $0x668] sm:$0xff]
      %v556 = vld [vmem:[%s316 + $0x670] sm:$0xff]
      %v557 = vld [vmem:[%s316 + $0x678] sm:$0xff]
      %v558 = vld [vmem:[%s316 + $0x680] sm:$0xff]
      %v559 = vld [vmem:[%s316 + $0x688] sm:$0xff]
      %v560 = vld [vmem:[%s316 + $0x690] sm:$0xff]
      %v561 = vld [vmem:[%s316 + $0x698] sm:$0xff]
      %v562 = vld [vmem:[%s316 + $0x6a0] sm:$0xff]
      %v563 = vld [vmem:[%s316 + $0x6a8] sm:$0xff]
      %v564 = vld [vmem:[%s316 + $0x6b0] sm:$0xff]
      %v565 = vld [vmem:[%s316 + $0x6b8] sm:$0xff]
      %v566 = vld [vmem:[%s316 + $0x6c0] sm:$0xff]
      %v567 = vld [vmem:[%s316 + $0x6c8] sm:$0xff]
      %v568 = vld [vmem:[%s316 + $0x6d0] sm:$0xff]
      %v569 = vld [vmem:[%s316 + $0x6d8] sm:$0xff]
      %v570 = vld [vmem:[%s316 + $0x6e0] sm:$0xff]
      %v571 = vld [vmem:[%s316 + $0x6e8] sm:$0xff]
      %v572 = vld [vmem:[%s316 + $0x6f0] sm:$0xff]
      %v573 = vld [vmem:[%s316 + $0x6f8] sm:$0xff]
      %v574 = vld [vmem:[%s316 + $0x700] sm:$0xff]
      %v575 = vld [vmem:[%s316 + $0x708] sm:$0xff]
      %v576 = vld [vmem:[%s316 + $0x710] sm:$0xff]
      %v577 = vld [vmem:[%s316 + $0x718] sm:$0xff]
      %v578 = vld [vmem:[%s316 + $0x720] sm:$0xff]
      %v579 = vld [vmem:[%s316 + $0x728] sm:$0xff]
      %v580 = vld [vmem:[%s316 + $0x730] sm:$0xff]
      %v581 = vld [vmem:[%s316 + $0x738] sm:$0xff]
      %v582 = vld [vmem:[%s316 + $0x740] sm:$0xff]
      %v583 = vld [vmem:[%s316 + $0x748] sm:$0xff]
      %v584 = vld [vmem:[%s316 + $0x750] sm:$0xff]
      %v585 = vld [vmem:[%s316 + $0x758] sm:$0xff]
      %v586 = vld [vmem:[%s316 + $0x760] sm:$0xff]
      %v587 = vld [vmem:[%s316 + $0x768] sm:$0xff]
      %v588 = vld [vmem:[%s316 + $0x770] sm:$0xff]
      %v589 = vld [vmem:[%s316 + $0x778] sm:$0xff]
      %v590 = vld [vmem:[%s316 + $0x780] sm:$0xff]
      %v591 = vld [vmem:[%s316 + $0x788] sm:$0xff]
      %v592 = vld [vmem:[%s316 + $0x790] sm:$0xff]
      %v593 = vld [vmem:[%s316 + $0x798] sm:$0xff]
      %v594 = vld [vmem:[%s316 + $0x7a0] sm:$0xff]
      %v595 = vld [vmem:[%s316 + $0x7a8] sm:$0xff]
      %v596 = vld [vmem:[%s316 + $0x7b0] sm:$0xff]
      %v597 = vld [vmem:[%s316 + $0x7b8] sm:$0xff]
      %v598 = vld [vmem:[%s316 + $0x7c0] sm:$0xff]
      %v599 = vld [vmem:[%s316 + $0x7c8] sm:$0xff]
      %v600 = vld [vmem:[%s316 + $0x7d0] sm:$0xff]
      %v601 = vld [vmem:[%s316 + $0x7d8] sm:$0xff]
      %v602 = vld [vmem:[%s316 + $0x7e0] sm:$0xff]
      %v603 = vld [vmem:[%s316 + $0x7e8] sm:$0xff]
      %v604 = vld [vmem:[%s316 + $0x7f0] sm:$0xff]
      %v605 = vld [vmem:[%s316 + $0x7f8] sm:$0xff]
      %v606 = vld [vmem:[%s316 + $0x800] sm:$0xff]
      %v607 = vld [vmem:[%s316 + $0x808] sm:$0xff]
      %v608 = vld [vmem:[%s316 + $0x810] sm:$0xff]
      %v609 = vld [vmem:[%s316 + $0x818] sm:$0xff]
      %v610 = vld [vmem:[%s316 + $0x820] sm:$0xff]
      %v611 = vld [vmem:[%s316 + $0x828] sm:$0xff]
      %v612 = vld [vmem:[%s316 + $0x830] sm:$0xff]
      %v613 = vld [vmem:[%s316 + $0x838] sm:$0xff]
      %v614 = vld [vmem:[%s316 + $0x840] sm:$0xff]
      %v615 = vld [vmem:[%s316 + $0x848] sm:$0xff]
      %v616 = vld [vmem:[%s316 + $0x850] sm:$0xff]
      %v617 = vld [vmem:[%s316 + $0x858] sm:$0xff]
      %v618 = vld [vmem:[%s316 + $0x860] sm:$0xff]
      %v619 = vld [vmem:[%s316 + $0x868] sm:$0xff]
      %v620 = vld [vmem:[%s316 + $0x870] sm:$0xff]
      %v621 = vld [vmem:[%s316 + $0x878] sm:$0xff]
      %v622 = vld [vmem:[%s316 + $0x880] sm:$0xff]
      %v623 = vld [vmem:[%s316 + $0x888] sm:$0xff]
      %v624 = vld [vmem:[%s316 + $0x890] sm:$0xff]
      %v625 = vld [vmem:[%s316 + $0x898] sm:$0xff]
      %v626 = vld [vmem:[%s316 + $0x8a0] sm:$0xff]
      %v627 = vld [vmem:[%s316 + $0x8a8] sm:$0xff]
      %v628 = vld [vmem:[%s316 + $0x8b0] sm:$0xff]
      %v629 = vld [vmem:[%s316 + $0x8b8] sm:$0xff]
      %v630 = vld [vmem:[%s316 + $0x8c0] sm:$0xff]
      %v631 = vld [vmem:[%s316 + $0x8c8] sm:$0xff]
      %v632 = vld [vmem:[%s316 + $0x8d0] sm:$0xff]
      %v633 = vld [vmem:[%s316 + $0x8d8] sm:$0xff]
      %v634 = vld [vmem:[%s316 + $0x8e0] sm:$0xff]
      %v635 = vld [vmem:[%s316 + $0x8e8] sm:$0xff]
      %v636 = vld [vmem:[%s316 + $0x8f0] sm:$0xff]
      %v637 = vld [vmem:[%s316 + $0x8f8] sm:$0xff]
      %v638 = vld [vmem:[%s316 + $0x900] sm:$0xff]
      %v639 = vld [vmem:[%s316 + $0x908] sm:$0xff]
      %v640 = vld [vmem:[%s316 + $0x910] sm:$0xff]
      %v641 = vld [vmem:[%s316 + $0x918] sm:$0xff]
      %v642 = vld [vmem:[%s316 + $0x920] sm:$0xff]
      %v643 = vld [vmem:[%s316 + $0x928] sm:$0xff]
      %v644 = vld [vmem:[%s316 + $0x930] sm:$0xff]
      %v645 = vld [vmem:[%s316 + $0x938] sm:$0xff]
      %v646 = vld [vmem:[%s316 + $0x940] sm:$0xff]
      %v647 = vld [vmem:[%s316 + $0x948] sm:$0xff]
      %v648 = vld [vmem:[%s316 + $0x950] sm:$0xff]
      %v649 = vld [vmem:[%s316 + $0x958] sm:$0xff]
      %v650 = vld [vmem:[%s316 + $0x960] sm:$0xff]
      %v651 = vld [vmem:[%s316 + $0x968] sm:$0xff]
      %v652 = vld [vmem:[%s316 + $0x970] sm:$0xff]
      %v653 = vld [vmem:[%s316 + $0x978] sm:$0xff]
      %v654 = vld [vmem:[%s316 + $0x980] sm:$0xff]
      %v655 = vld [vmem:[%s316 + $0x988] sm:$0xff]
      %v656 = vld [vmem:[%s316 + $0x990] sm:$0xff]
      %v657 = vld [vmem:[%s316 + $0x998] sm:$0xff]
      %v658 = vld [vmem:[%s316 + $0x9a0] sm:$0xff]
      %v659 = vld [vmem:[%s316 + $0x9a8] sm:$0xff]
      %v660 = vld [vmem:[%s316 + $0x9b0] sm:$0xff]
      %v661 = vld [vmem:[%s316 + $0x9b8] sm:$0xff]
      %v662 = vld [vmem:[%s316 + $0x9c0] sm:$0xff]
      %v663 = vld [vmem:[%s316 + $0x9c8] sm:$0xff]
      %v664 = vld [vmem:[%s316 + $0x9d0] sm:$0xff]
      %v665 = vld [vmem:[%s316 + $0x9d8] sm:$0xff]
      %v666 = vld [vmem:[%s316 + $0x9e0] sm:$0xff]
      %v667 = vld [vmem:[%s316 + $0x9e8] sm:$0xff]
      %v668 = vld [vmem:[%s316 + $0x9f0] sm:$0xff]
      %v669 = vld [vmem:[%s316 + $0x9f8] sm:$0xff]
      %v670 = vld [vmem:[%s316 + $0xa00] sm:$0xff]
      %v671 = vld [vmem:[%s316 + $0xa08] sm:$0xff]
      %v672 = vld [vmem:[%s316 + $0xa10] sm:$0xff]
      %v673 = vld [vmem:[%s316 + $0xa18] sm:$0xff]
      %v674 = vld [vmem:[%s316 + $0xa20] sm:$0xff]
      %v675 = vld [vmem:[%s316 + $0xa28] sm:$0xff]
      %v676 = vld [vmem:[%s316 + $0xa30] sm:$0xff]
      %v677 = vld [vmem:[%s316 + $0xa38] sm:$0xff]
      %v678 = vld [vmem:[%s316 + $0xa40] sm:$0xff]
      %v679 = vld [vmem:[%s316 + $0xa48] sm:$0xff]
      %v680 = vld [vmem:[%s316 + $0xa50] sm:$0xff]
      %v681 = vld [vmem:[%s316 + $0xa58] sm:$0xff]
      %v682 = vld [vmem:[%s316 + $0xa60] sm:$0xff]
      %v683 = vld [vmem:[%s316 + $0xa68] sm:$0xff]
      %v684 = vld [vmem:[%s316 + $0xa70] sm:$0xff]
      %v685 = vld [vmem:[%s316 + $0xa78] sm:$0xff]
      %v686 = vld [vmem:[%s316 + $0xa80] sm:$0xff]
      %v687 = vld [vmem:[%s316 + $0xa88] sm:$0xff]
      %v688 = vld [vmem:[%s316 + $0xa90] sm:$0xff]
      %v689 = vld [vmem:[%s316 + $0xa98] sm:$0xff]
      %v690 = vld [vmem:[%s316 + $0xaa0] sm:$0xff]
      %v691 = vld [vmem:[%s316 + $0xaa8] sm:$0xff]
      %v692 = vld [vmem:[%s316 + $0xab0] sm:$0xff]
      %v693 = vld [vmem:[%s316 + $0xab8] sm:$0xff]
      %v694 = vld [vmem:[%s316 + $0xac0] sm:$0xff]
      %v695 = vld [vmem:[%s316 + $0xac8] sm:$0xff]
      %v696 = vld [vmem:[%s316 + $0xad0] sm:$0xff]
      %v697 = vld [vmem:[%s316 + $0xad8] sm:$0xff]
      %v698 = vld [vmem:[%s316 + $0xae0] sm:$0xff]
      %v699 = vld [vmem:[%s316 + $0xae8] sm:$0xff]
      %v700 = vld [vmem:[%s316 + $0xaf0] sm:$0xff]
      %v701 = vld [vmem:[%s316 + $0xaf8] sm:$0xff]
      %v702 = vld [vmem:[%s316 + $0xb00] sm:$0xff]
      %v703 = vld [vmem:[%s316 + $0xb08] sm:$0xff]
      %v704 = vld [vmem:[%s316 + $0xb10] sm:$0xff]
      %v705 = vld [vmem:[%s316 + $0xb18] sm:$0xff]
      %v706 = vld [vmem:[%s316 + $0xb20] sm:$0xff]
      %v707 = vld [vmem:[%s316 + $0xb28] sm:$0xff]
      %v708 = vld [vmem:[%s316 + $0xb30] sm:$0xff]
      %v709 = vld [vmem:[%s316 + $0xb38] sm:$0xff]
      %v710 = vld [vmem:[%s316 + $0xb40] sm:$0xff]
      %v711 = vld [vmem:[%s316 + $0xb48] sm:$0xff]
      %v712 = vld [vmem:[%s316 + $0xb50] sm:$0xff]
      %v713 = vld [vmem:[%s316 + $0xb58] sm:$0xff]
      %v714 = vld [vmem:[%s316 + $0xb60] sm:$0xff]
      %v715 = vld [vmem:[%s316 + $0xb68] sm:$0xff]
      %v716 = vld [vmem:[%s316 + $0xb70] sm:$0xff]
      %v717 = vld [vmem:[%s316 + $0xb78] sm:$0xff]
      %v718 = vld [vmem:[%s316 + $0xb80] sm:$0xff]
      %v719 = vld [vmem:[%s316 + $0xb88] sm:$0xff]
      %v720 = vld [vmem:[%s316 + $0xb90] sm:$0xff]
      %v721 = vld [vmem:[%s316 + $0xb98] sm:$0xff]
      %v722 = vld [vmem:[%s316 + $0xba0] sm:$0xff]
      %v723 = vld [vmem:[%s316 + $0xba8] sm:$0xff]
      %v724 = vld [vmem:[%s316 + $0xbb0] sm:$0xff]
      %v725 = vld [vmem:[%s316 + $0xbb8] sm:$0xff]
      %v726 = vld [vmem:[%s316 + $0xbc0] sm:$0xff]
      %v727 = vld [vmem:[%s316 + $0xbc8] sm:$0xff]
      %v728 = vld [vmem:[%s316 + $0xbd0] sm:$0xff]
      %v729 = vld [vmem:[%s316 + $0xbd8] sm:$0xff]
      %v730 = vld [vmem:[%s316 + $0xbe0] sm:$0xff]
      %v731 = vld [vmem:[%s316 + $0xbe8] sm:$0xff]
      %v732 = vld [vmem:[%s316 + $0xbf0] sm:$0xff]
      %v733 = vld [vmem:[%s316 + $0xbf8] sm:$0xff]
      %v734 = vld [vmem:[%s316 + $0xc00] sm:$0xff]
      %v735 = vld [vmem:[%s316 + $0xc08] sm:$0xff]
      %v736 = vld [vmem:[%s316 + $0xc10] sm:$0xff]
      %v737 = vld [vmem:[%s316 + $0xc18] sm:$0xff]
      %v738 = vld [vmem:[%s316 + $0xc20] sm:$0xff]
      %v739 = vld [vmem:[%s316 + $0xc28] sm:$0xff]
      %v740 = vld [vmem:[%s316 + $0xc30] sm:$0xff]
      %v741 = vld [vmem:[%s316 + $0xc38] sm:$0xff]
      %v742 = vld [vmem:[%s316 + $0xc40] sm:$0xff]
      %v743 = vld [vmem:[%s316 + $0xc48] sm:$0xff]
      %v744 = vld [vmem:[%s316 + $0xc50] sm:$0xff]
      %v745 = vld [vmem:[%s316 + $0xc58] sm:$0xff]
      %v746 = vld [vmem:[%s316 + $0xc60] sm:$0xff]
      %v747 = vld [vmem:[%s316 + $0xc68] sm:$0xff]
      %v748 = vld [vmem:[%s316 + $0xc70] sm:$0xff]
      %v749 = vld [vmem:[%s316 + $0xc78] sm:$0xff]
      %v750 = vld [vmem:[%s316 + $0xc80] sm:$0xff]
      %v751 = vld [vmem:[%s316 + $0xc88] sm:$0xff]
      %v752 = vld [vmem:[%s316 + $0xc90] sm:$0xff]
      %v753 = vld [vmem:[%s316 + $0xc98] sm:$0xff]
      %v754 = vld [vmem:[%s316 + $0xca0] sm:$0xff]
      %v755 = vld [vmem:[%s316 + $0xca8] sm:$0xff]
      %v756 = vld [vmem:[%s316 + $0xcb0] sm:$0xff]
      %v757 = vld [vmem:[%s316 + $0xcb8] sm:$0xff]
      %v758 = vld [vmem:[%s316 + $0xcc0] sm:$0xff]
      %v759 = vld [vmem:[%s316 + $0xcc8] sm:$0xff]
      %v760 = vld [vmem:[%s316 + $0xcd0] sm:$0xff]
      %v761 = vld [vmem:[%s316 + $0xcd8] sm:$0xff]
      %v762 = vld [vmem:[%s316 + $0xce0] sm:$0xff]
      %v763 = vld [vmem:[%s316 + $0xce8] sm:$0xff]
      %v764 = vld [vmem:[%s316 + $0xcf0] sm:$0xff]
      %v765 = vld [vmem:[%s316 + $0xcf8] sm:$0xff]
      %v766 = vld [vmem:[%s316 + $0xd00] sm:$0xff]
      %v767 = vld [vmem:[%s316 + $0xd08] sm:$0xff]
      %v768 = vld [vmem:[%s316 + $0xd10] sm:$0xff]
      %v769 = vld [vmem:[%s316 + $0xd18] sm:$0xff]
      %v770 = vld [vmem:[%s316 + $0xd20] sm:$0xff]
      %v771 = vld [vmem:[%s316 + $0xd28] sm:$0xff]
      %v772 = vld [vmem:[%s316 + $0xd30] sm:$0xff]
      %v773 = vld [vmem:[%s316 + $0xd38] sm:$0xff]
      %v774 = vld [vmem:[%s316 + $0xd40] sm:$0xff]
      %v775 = vld [vmem:[%s316 + $0xd48] sm:$0xff]
      %v776 = vld [vmem:[%s316 + $0xd50] sm:$0xff]
      %v777 = vld [vmem:[%s316 + $0xd58] sm:$0xff]
      %v778 = vld [vmem:[%s316 + $0xd60] sm:$0xff]
      %v779 = vld [vmem:[%s316 + $0xd68] sm:$0xff]
      %v780 = vld [vmem:[%s316 + $0xd70] sm:$0xff]
      %v781 = vld [vmem:[%s316 + $0xd78] sm:$0xff]
      %v782 = vld [vmem:[%s316 + $0xd80] sm:$0xff]
      %v783 = vld [vmem:[%s316 + $0xd88] sm:$0xff]
      %v784 = vld [vmem:[%s316 + $0xd90] sm:$0xff]
      %v785 = vld [vmem:[%s316 + $0xd98] sm:$0xff]
      %v786 = vld [vmem:[%s316 + $0xda0] sm:$0xff]
      %v787 = vld [vmem:[%s316 + $0xda8] sm:$0xff]
      %v788 = vld [vmem:[%s316 + $0xdb0] sm:$0xff]
      %v789 = vld [vmem:[%s316 + $0xdb8] sm:$0xff]
      %v790 = vld [vmem:[%s316 + $0xdc0] sm:$0xff]
      %v791 = vld [vmem:[%s316 + $0xdc8] sm:$0xff]
      %v792 = vld [vmem:[%s316 + $0xdd0] sm:$0xff]
      %v793 = vld [vmem:[%s316 + $0xdd8] sm:$0xff]
      %v794 = vld [vmem:[%s316 + $0xde0] sm:$0xff]
      %v795 = vld [vmem:[%s316 + $0xde8] sm:$0xff]
      %v796 = vld [vmem:[%s316 + $0xdf0] sm:$0xff]
      %v797 = vld [vmem:[%s316 + $0xdf8] sm:$0xff]
      %v798 = vld [vmem:[%s316 + $0xe00] sm:$0xff]
      %v799 = vld [vmem:[%s316 + $0xe08] sm:$0xff]
      %v800 = vld [vmem:[%s316 + $0xe10] sm:$0xff]
      %v801 = vld [vmem:[%s316 + $0xe18] sm:$0xff]
      %v802 = vld [vmem:[%s316 + $0xe20] sm:$0xff]
      %v803 = vld [vmem:[%s316 + $0xe28] sm:$0xff]
      %v804 = vld [vmem:[%s316 + $0xe30] sm:$0xff]
      %v805 = vld [vmem:[%s316 + $0xe38] sm:$0xff]
      %v806 = vld [vmem:[%s316 + $0xe40] sm:$0xff]
      %v807 = vld [vmem:[%s316 + $0xe48] sm:$0xff]
      %v808 = vld [vmem:[%s316 + $0xe50] sm:$0xff]
      %v809 = vld [vmem:[%s316 + $0xe58] sm:$0xff]
      %v810 = vld [vmem:[%s316 + $0xe60] sm:$0xff]
      %v811 = vld [vmem:[%s316 + $0xe68] sm:$0xff]
      %v812 = vld [vmem:[%s316 + $0xe70] sm:$0xff]
      %v813 = vld [vmem:[%s316 + $0xe78] sm:$0xff]
      %v814 = vld [vmem:[%s316 + $0xe80] sm:$0xff]
      %v815 = vld [vmem:[%s316 + $0xe88] sm:$0xff]
      %v816 = vld [vmem:[%s316 + $0xe90] sm:$0xff]
      %v817 = vld [vmem:[%s316 + $0xe98] sm:$0xff]
      %v818 = vld [vmem:[%s316 + $0xea0] sm:$0xff]
      %v819 = vld [vmem:[%s316 + $0xea8] sm:$0xff]
      %v820 = vld [vmem:[%s316 + $0xeb0] sm:$0xff]
      %v821 = vld [vmem:[%s316 + $0xeb8] sm:$0xff]
      %v822 = vld [vmem:[%s316 + $0xec0] sm:$0xff]
      %v823 = vld [vmem:[%s316 + $0xec8] sm:$0xff]
      %v824 = vld [vmem:[%s316 + $0xed0] sm:$0xff]
      %v825 = vld [vmem:[%s316 + $0xed8] sm:$0xff]
      %v826 = vld [vmem:[%s316 + $0xee0] sm:$0xff]
      %v827 = vld [vmem:[%s316 + $0xee8] sm:$0xff]
      %v828 = vld [vmem:[%s316 + $0xef0] sm:$0xff]
      %v829 = vld [vmem:[%s316 + $0xef8] sm:$0xff]
      %v830 = vld [vmem:[%s316 + $0xf00] sm:$0xff]
      %v831 = vld [vmem:[%s316 + $0xf08] sm:$0xff]
      %v832 = vld [vmem:[%s316 + $0xf10] sm:$0xff]
      %v833 = vld [vmem:[%s316 + $0xf18] sm:$0xff]
      %v834 = vld [vmem:[%s316 + $0xf20] sm:$0xff]
      %v835 = vld [vmem:[%s316 + $0xf28] sm:$0xff]
      %v836 = vld [vmem:[%s316 + $0xf30] sm:$0xff]
      %v837 = vld [vmem:[%s316 + $0xf38] sm:$0xff]
      %v838 = vld [vmem:[%s316 + $0xf40] sm:$0xff]
      %v839 = vld [vmem:[%s316 + $0xf48] sm:$0xff]
      %v840 = vld [vmem:[%s316 + $0xf50] sm:$0xff]
      %v841 = vld [vmem:[%s316 + $0xf58] sm:$0xff]
      %v842 = vld [vmem:[%s316 + $0xf60] sm:$0xff]
      %v843 = vld [vmem:[%s316 + $0xf68] sm:$0xff]
      %v844 = vld [vmem:[%s316 + $0xf70] sm:$0xff]
      %v845 = vld [vmem:[%s316 + $0xf78] sm:$0xff]
      %v846 = vld [vmem:[%s316 + $0xf80] sm:$0xff]
      %v847 = vld [vmem:[%s316 + $0xf88] sm:$0xff]
      %v848 = vld [vmem:[%s316 + $0xf90] sm:$0xff]
      %v849 = vld [vmem:[%s316 + $0xf98] sm:$0xff]
      %v850 = vld [vmem:[%s316 + $0xfa0] sm:$0xff]
      %v851 = vld [vmem:[%s316 + $0xfa8] sm:$0xff]
      %v852 = vld [vmem:[%s316 + $0xfb0] sm:$0xff]
      %v853 = vld [vmem:[%s316 + $0xfb8] sm:$0xff]
      %v854 = vld [vmem:[%s316 + $0xfc0] sm:$0xff]
      %v855 = vld [vmem:[%s316 + $0xfc8] sm:$0xff]
      %v856 = vld [vmem:[%s316 + $0xfd0] sm:$0xff]
      %v857 = vld [vmem:[%s316 + $0xfd8] sm:$0xff]
      %v858 = vld [vmem:[%s316 + $0xfe0] sm:$0xff]
      %v859 = vld [vmem:[%s316 + $0xfe8] sm:$0xff]
      %v860 = vld [vmem:[%s316 + $0xff0] sm:$0xff]
      %v861 = vld [vmem:[%s316 + $0xff8] sm:$0xff]
      %v862 = vld [vmem:[%s316 + $0x1000] sm:$0xff]
      %v863 = vld [vmem:[%s316 + $0x1008] sm:$0xff]
      %v864 = vld [vmem:[%s316 + $0x1010] sm:$0xff]
      %v865 = vld [vmem:[%s316 + $0x1018] sm:$0xff]
      %v866 = vld [vmem:[%s316 + $0x1020] sm:$0xff]
      %v867 = vld [vmem:[%s316 + $0x1028] sm:$0xff]
      %v868 = vld [vmem:[%s316 + $0x1030] sm:$0xff]
      %v869 = vld [vmem:[%s316 + $0x1038] sm:$0xff]
      %v870 = vld [vmem:[%s316 + $0x1040] sm:$0xff]
      %v871 = vld [vmem:[%s316 + $0x1048] sm:$0xff]
      %v872 = vld [vmem:[%s316 + $0x1050] sm:$0xff]
      %v873 = vld [vmem:[%s316 + $0x1058] sm:$0xff]
      %v874 = vld [vmem:[%s316 + $0x1060] sm:$0xff]
      %v875 = vld [vmem:[%s316 + $0x1068] sm:$0xff]
      %v876 = vld [vmem:[%s316 + $0x1070] sm:$0xff]
      %v877 = vld [vmem:[%s316 + $0x1078] sm:$0xff]
      %v878 = vld [vmem:[%s316 + $0x1080] sm:$0xff]
      %v879 = vld [vmem:[%s316 + $0x1088] sm:$0xff]
      %v880 = vld [vmem:[%s316 + $0x1090] sm:$0xff]
      %v881 = vld [vmem:[%s316 + $0x1098] sm:$0xff]
      %v882 = vld [vmem:[%s316 + $0x10a0] sm:$0xff]
      %v883 = vld [vmem:[%s316 + $0x10a8] sm:$0xff]
      %v884 = vld [vmem:[%s316 + $0x10b0] sm:$0xff]
      %v885 = vld [vmem:[%s316 + $0x10b8] sm:$0xff]
      %v886 = vld [vmem:[%s316 + $0x10c0] sm:$0xff]
      %v887 = vld [vmem:[%s316 + $0x10c8] sm:$0xff]
      %v888 = vld [vmem:[%s316 + $0x10d0] sm:$0xff]
      %v889 = vld [vmem:[%s316 + $0x10d8] sm:$0xff]
      %v890 = vld [vmem:[%s316 + $0x10e0] sm:$0xff]
      %v891 = vld [vmem:[%s316 + $0x10e8] sm:$0xff]
      %v892 = vld [vmem:[%s316 + $0x10f0] sm:$0xff]
      %v893 = vld [vmem:[%s316 + $0x10f8] sm:$0xff]
      %v894 = vld [vmem:[%s316 + $0x1100] sm:$0xff]
      %v895 = vld [vmem:[%s316 + $0x1108] sm:$0xff]
      %v896 = vld [vmem:[%s316 + $0x1110] sm:$0xff]
      %v897 = vld [vmem:[%s316 + $0x1118] sm:$0xff]
      %v898 = vld [vmem:[%s316 + $0x1120] sm:$0xff]
      %v899 = vld [vmem:[%s316 + $0x1128] sm:$0xff]
      %v900 = vld [vmem:[%s316 + $0x1130] sm:$0xff]
      %v901 = vld [vmem:[%s316 + $0x1138] sm:$0xff]
      %v902 = vld [vmem:[%s316 + $0x1140] sm:$0xff]
      %v903 = vld [vmem:[%s316 + $0x1148] sm:$0xff]
      %v904 = vld [vmem:[%s316 + $0x1150] sm:$0xff]
      %v905 = vld [vmem:[%s316 + $0x1158] sm:$0xff]
      %v906 = vld [vmem:[%s316 + $0x1160] sm:$0xff]
      %v907 = vld [vmem:[%s316 + $0x1168] sm:$0xff]
      %v908 = vld [vmem:[%s316 + $0x1170] sm:$0xff]
      %v909 = vld [vmem:[%s316 + $0x1178] sm:$0xff]
      %v910 = vld [vmem:[%s316 + $0x1180] sm:$0xff]
      %v911 = vld [vmem:[%s316 + $0x1188] sm:$0xff]
      %v912 = vld [vmem:[%s316 + $0x1190] sm:$0xff]
      %v913 = vld [vmem:[%s316 + $0x1198] sm:$0xff]
      %v914 = vld [vmem:[%s316 + $0x11a0] sm:$0xff]
      %v915 = vld [vmem:[%s316 + $0x11a8] sm:$0xff]
      %v916 = vld [vmem:[%s316 + $0x11b0] sm:$0xff]
      %v917 = vld [vmem:[%s316 + $0x11b8] sm:$0xff]
      %v918 = vld [vmem:[%s316 + $0x11c0] sm:$0xff]
      %v919 = vld [vmem:[%s316 + $0x11c8] sm:$0xff]
      %v920 = vld [vmem:[%s316 + $0x11d0] sm:$0xff]
      %v921 = vld [vmem:[%s316 + $0x11d8] sm:$0xff]
      %v922 = vld [vmem:[%s316 + $0x11e0] sm:$0xff]
      %v923 = vld [vmem:[%s316 + $0x11e8] sm:$0xff]
      %v924 = vld [vmem:[%s316 + $0x11f0] sm:$0xff]
      %v925 = vld [vmem:[%s316 + $0x11f8] sm:$0xff]
      %v926 = vld [vmem:[%s316 + $0x1200] sm:$0xff]
      %v927 = vld [vmem:[%s316 + $0x1208] sm:$0xff]
      %v928 = vld [vmem:[%s316 + $0x1210] sm:$0xff]
      %v929 = vld [vmem:[%s316 + $0x1218] sm:$0xff]
      %v930 = vld [vmem:[%s316 + $0x1220] sm:$0xff]
      %v931 = vld [vmem:[%s316 + $0x1228] sm:$0xff]
      %v932 = vld [vmem:[%s316 + $0x1230] sm:$0xff]
      %v933 = vld [vmem:[%s316 + $0x1238] sm:$0xff]
      %v934 = vld [vmem:[%s316 + $0x1240] sm:$0xff]
      %v935 = vld [vmem:[%s316 + $0x1248] sm:$0xff]
      %v936 = vld [vmem:[%s316 + $0x1250] sm:$0xff]
      %v937 = vld [vmem:[%s316 + $0x1258] sm:$0xff]
      %v938 = vld [vmem:[%s316 + $0x1260] sm:$0xff]
      %v939 = vld [vmem:[%s316 + $0x1268] sm:$0xff]
      %v940 = vld [vmem:[%s316 + $0x1270] sm:$0xff]
      %v941 = vld [vmem:[%s316 + $0x1278] sm:$0xff]
      %v942 = vld [vmem:[%s316 + $0x1280] sm:$0xff]
      %v943 = vld [vmem:[%s316 + $0x1288] sm:$0xff]
      %v944 = vld [vmem:[%s316 + $0x1290] sm:$0xff]
      %v945 = vld [vmem:[%s316 + $0x1298] sm:$0xff]
      %v946 = vld [vmem:[%s316 + $0x12a0] sm:$0xff]
      %v947 = vld [vmem:[%s316 + $0x12a8] sm:$0xff]
      %v948 = vld [vmem:[%s316 + $0x12b0] sm:$0xff]
      %v949 = vld [vmem:[%s316 + $0x12b8] sm:$0xff]
      %v950 = vld [vmem:[%s316 + $0x12c0] sm:$0xff]
      %v951 = vld [vmem:[%s316 + $0x12c8] sm:$0xff]
      %v952 = vld [vmem:[%s316 + $0x12d0] sm:$0xff]
      %v953 = vld [vmem:[%s316 + $0x12d8] sm:$0xff]
      %v954 = vld [vmem:[%s316 + $0x12e0] sm:$0xff]
      %v955 = vld [vmem:[%s316 + $0x12e8] sm:$0xff]
      %v956 = vld [vmem:[%s316 + $0x12f0] sm:$0xff]
      %v957 = vld [vmem:[%s316 + $0x12f8] sm:$0xff]
      %v958 = vld [vmem:[%s316 + $0x1300] sm:$0xff]
      %v959 = vld [vmem:[%s316 + $0x1308] sm:$0xff]
      %v960 = vld [vmem:[%s316 + $0x1310] sm:$0xff]
      %v961 = vld [vmem:[%s316 + $0x1318] sm:$0xff]
      %v962 = vld [vmem:[%s316 + $0x1320] sm:$0xff]
      %v963 = vld [vmem:[%s316 + $0x1328] sm:$0xff]
      %v964 = vld [vmem:[%s316 + $0x1330] sm:$0xff]
      %v965 = vld [vmem:[%s316 + $0x1338] sm:$0xff]
      %v966 = vld [vmem:[%s316 + $0x1340] sm:$0xff]
      %v967 = vld [vmem:[%s316 + $0x1348] sm:$0xff]
      %v968 = vld [vmem:[%s316 + $0x1350] sm:$0xff]
      %v969 = vld [vmem:[%s316 + $0x1358] sm:$0xff]
      %v970 = vld [vmem:[%s316 + $0x1360] sm:$0xff]
      %v971 = vld [vmem:[%s316 + $0x1368] sm:$0xff]
      %v972 = vld [vmem:[%s316 + $0x1370] sm:$0xff]
      %v973 = vld [vmem:[%s316 + $0x1378] sm:$0xff]
      %v974 = vld [vmem:[%s316 + $0x1380] sm:$0xff]
      %v975 = vld [vmem:[%s316 + $0x1388] sm:$0xff]
      %v976 = vld [vmem:[%s316 + $0x1390] sm:$0xff]
      %v977 = vld [vmem:[%s316 + $0x1398] sm:$0xff]
      %v978 = vld [vmem:[%s316 + $0x13a0] sm:$0xff]
      %v979 = vld [vmem:[%s316 + $0x13a8] sm:$0xff]
      %v980 = vld [vmem:[%s316 + $0x13b0] sm:$0xff]
      %v981 = vld [vmem:[%s316 + $0x13b8] sm:$0xff]
      %v982 = vld [vmem:[%s316 + $0x13c0] sm:$0xff]
      %v983 = vld [vmem:[%s316 + $0x13c8] sm:$0xff]
      %v984 = vld [vmem:[%s316 + $0x13d0] sm:$0xff]
      %v985 = vld [vmem:[%s316 + $0x13d8] sm:$0xff]
      %v986 = vld [vmem:[%s316 + $0x13e0] sm:$0xff]
      %v987 = vld [vmem:[%s316 + $0x13e8] sm:$0xff]
      %v988 = vld [vmem:[%s316 + $0x13f0] sm:$0xff]
      %v989 = vld [vmem:[%s316 + $0x13f8] sm:$0xff]
      %v990 = vld [vmem:[%s316 + $0x1400] sm:$0xff]
      %v991 = vld [vmem:[%s316 + $0x1408] sm:$0xff]
      %v992 = vld [vmem:[%s316 + $0x1410] sm:$0xff]
      %v993 = vld [vmem:[%s316 + $0x1418] sm:$0xff]
      %v994 = vld [vmem:[%s316 + $0x1420] sm:$0xff]
      %v995 = vld [vmem:[%s316 + $0x1428] sm:$0xff]
      %v996 = vld [vmem:[%s316 + $0x1430] sm:$0xff]
      %v997 = vld [vmem:[%s316 + $0x1438] sm:$0xff]
      %v998 = vld [vmem:[%s316 + $0x1440] sm:$0xff]
      %v999 = vld [vmem:[%s316 + $0x1448] sm:$0xff]
      %v1000 = vld [vmem:[%s316 + $0x1450] sm:$0xff]
      %v1001 = vld [vmem:[%s316 + $0x1458] sm:$0xff]
      %v1002 = vld [vmem:[%s316 + $0x1460] sm:$0xff]
      %v1003 = vld [vmem:[%s316 + $0x1468] sm:$0xff]
      %v1004 = vld [vmem:[%s316 + $0x1470] sm:$0xff]
      %v1005 = vld [vmem:[%s316 + $0x1478] sm:$0xff]
      %v1006 = vld [vmem:[%s316 + $0x1480] sm:$0xff]
      %v1007 = vld [vmem:[%s316 + $0x1488] sm:$0xff]
      %v1008 = vld [vmem:[%s316 + $0x1490] sm:$0xff]
      %v1009 = vld [vmem:[%s316 + $0x1498] sm:$0xff]
      %v1010 = vld [vmem:[%s316 + $0x14a0] sm:$0xff]
      %v1011 = vld [vmem:[%s316 + $0x14a8] sm:$0xff]
      %v1012 = vld [vmem:[%s316 + $0x14b0] sm:$0xff]
      %v1013 = vld [vmem:[%s316 + $0x14b8] sm:$0xff]
      %v1014 = vld [vmem:[%s316 + $0x14c0] sm:$0xff]
      %v1015 = vld [vmem:[%s316 + $0x14c8] sm:$0xff]
      %v1016 = vld [vmem:[%s316 + $0x14d0] sm:$0xff]
      %v1017 = vld [vmem:[%s316 + $0x14d8] sm:$0xff]
      %v1018 = vld [vmem:[%s316 + $0x14e0] sm:$0xff]
      %v1019 = vld [vmem:[%s316 + $0x14e8] sm:$0xff]
      %v1020 = vld [vmem:[%s316 + $0x14f0] sm:$0xff]
      %v1021 = vld [vmem:[%s316 + $0x14f8] sm:$0xff]
      %v1022 = vunpack.c.l.s8.bf16 %v350
      %v1023 = vunpack.c.l.s8.bf16 %v351
      %v1024 = vunpack.c.l.s8.bf16 %v352
      %v1025 = vunpack.c.l.s8.bf16 %v353
      %v1026 = vunpack.c.l.s8.bf16 %v354
      %v1027 = vunpack.c.l.s8.bf16 %v355
      %v1028 = vunpack.c.l.s8.bf16 %v356
      %v1029 = vunpack.c.l.s8.bf16 %v357
      %v1030 = vunpack.c.h.s8.bf16 %v350
      %v1031 = vunpack.c.h.s8.bf16 %v351
      %v1032 = vunpack.c.h.s8.bf16 %v352
      %v1033 = vunpack.c.h.s8.bf16 %v353
      %v1034 = vunpack.c.h.s8.bf16 %v354
      %v1035 = vunpack.c.h.s8.bf16 %v355
      %v1036 = vunpack.c.h.s8.bf16 %v356
      %v1037 = vunpack.c.h.s8.bf16 %v357
      %v1038 = vunpack.c.l.s8.bf16 %v358
      %v1039 = vunpack.c.l.s8.bf16 %v359
      %v1040 = vunpack.c.l.s8.bf16 %v360
      %v1041 = vunpack.c.l.s8.bf16 %v361
      %v1042 = vunpack.c.l.s8.bf16 %v362
      %v1043 = vunpack.c.l.s8.bf16 %v363
      %v1044 = vunpack.c.l.s8.bf16 %v364
      %v1045 = vunpack.c.l.s8.bf16 %v365
      %v1046 = vunpack.c.h.s8.bf16 %v358
      %v1047 = vunpack.c.h.s8.bf16 %v359
      %v1048 = vunpack.c.h.s8.bf16 %v360
      %v1049 = vunpack.c.h.s8.bf16 %v361
      %v1050 = vunpack.c.h.s8.bf16 %v362
      %v1051 = vunpack.c.h.s8.bf16 %v363
      %v1052 = vunpack.c.h.s8.bf16 %v364
      %v1053 = vunpack.c.h.s8.bf16 %v365
      %v1054 = vunpack.c.l.s8.bf16 %v366
      %v1055 = vunpack.c.l.s8.bf16 %v367
      %v1056 = vunpack.c.l.s8.bf16 %v368
      %v1057 = vunpack.c.l.s8.bf16 %v369
      %v1058 = vunpack.c.l.s8.bf16 %v370
      %v1059 = vunpack.c.l.s8.bf16 %v371
      %v1060 = vunpack.c.l.s8.bf16 %v372
      %v1061 = vunpack.c.l.s8.bf16 %v373
      %v1062 = vunpack.c.h.s8.bf16 %v366
      %v1063 = vunpack.c.h.s8.bf16 %v367
      %v1064 = vunpack.c.h.s8.bf16 %v368
      %v1065 = vunpack.c.h.s8.bf16 %v369
      %v1066 = vunpack.c.h.s8.bf16 %v370
      %v1067 = vunpack.c.h.s8.bf16 %v371
      %v1068 = vunpack.c.h.s8.bf16 %v372
      %v1069 = vunpack.c.h.s8.bf16 %v373
      %v1070 = vunpack.c.l.s8.bf16 %v374
      %v1071 = vunpack.c.l.s8.bf16 %v375
      %v1072 = vunpack.c.l.s8.bf16 %v376
      %v1073 = vunpack.c.l.s8.bf16 %v377
      %v1074 = vunpack.c.l.s8.bf16 %v378
      %v1075 = vunpack.c.l.s8.bf16 %v379
      %v1076 = vunpack.c.l.s8.bf16 %v380
      %v1077 = vunpack.c.l.s8.bf16 %v381
      %v1078 = vunpack.c.h.s8.bf16 %v374
      %v1079 = vunpack.c.h.s8.bf16 %v375
      %v1080 = vunpack.c.h.s8.bf16 %v376
      %v1081 = vunpack.c.h.s8.bf16 %v377
      %v1082 = vunpack.c.h.s8.bf16 %v378
      %v1083 = vunpack.c.h.s8.bf16 %v379
      %v1084 = vunpack.c.h.s8.bf16 %v380
      %v1085 = vunpack.c.h.s8.bf16 %v381
      %v1086 = vunpack.c.l.s8.bf16 %v382
      %v1087 = vunpack.c.l.s8.bf16 %v383
      %v1088 = vunpack.c.l.s8.bf16 %v384
      %v1089 = vunpack.c.l.s8.bf16 %v385
      %v1090 = vunpack.c.l.s8.bf16 %v386
      %v1091 = vunpack.c.l.s8.bf16 %v387
      %v1092 = vunpack.c.l.s8.bf16 %v388
      %v1093 = vunpack.c.l.s8.bf16 %v389
      %v1094 = vunpack.c.h.s8.bf16 %v382
      %v1095 = vunpack.c.h.s8.bf16 %v383
      %v1096 = vunpack.c.h.s8.bf16 %v384
      %v1097 = vunpack.c.h.s8.bf16 %v385
      %v1098 = vunpack.c.h.s8.bf16 %v386
      %v1099 = vunpack.c.h.s8.bf16 %v387
      %v1100 = vunpack.c.h.s8.bf16 %v388
      %v1101 = vunpack.c.h.s8.bf16 %v389
      %v1102 = vunpack.c.l.s8.bf16 %v390
      %v1103 = vunpack.c.l.s8.bf16 %v391
      %v1104 = vunpack.c.l.s8.bf16 %v392
      %v1105 = vunpack.c.l.s8.bf16 %v393
      %v1106 = vunpack.c.l.s8.bf16 %v394
      %v1107 = vunpack.c.l.s8.bf16 %v395
      %v1108 = vunpack.c.l.s8.bf16 %v396
      %v1109 = vunpack.c.l.s8.bf16 %v397
      %v1110 = vunpack.c.h.s8.bf16 %v390
      %v1111 = vunpack.c.h.s8.bf16 %v391
      %v1112 = vunpack.c.h.s8.bf16 %v392
      %v1113 = vunpack.c.h.s8.bf16 %v393
      %v1114 = vunpack.c.h.s8.bf16 %v394
      %v1115 = vunpack.c.h.s8.bf16 %v395
      %v1116 = vunpack.c.h.s8.bf16 %v396
      %v1117 = vunpack.c.h.s8.bf16 %v397
      %v1118 = vunpack.c.l.s8.bf16 %v398
      %v1119 = vunpack.c.l.s8.bf16 %v399
      %v1120 = vunpack.c.l.s8.bf16 %v400
      %v1121 = vunpack.c.l.s8.bf16 %v401
      %v1122 = vunpack.c.l.s8.bf16 %v402
      %v1123 = vunpack.c.l.s8.bf16 %v403
      %v1124 = vunpack.c.l.s8.bf16 %v404
      %v1125 = vunpack.c.l.s8.bf16 %v405
      %v1126 = vunpack.c.h.s8.bf16 %v398
      %v1127 = vunpack.c.h.s8.bf16 %v399
      %v1128 = vunpack.c.h.s8.bf16 %v400
      %v1129 = vunpack.c.h.s8.bf16 %v401
      %v1130 = vunpack.c.h.s8.bf16 %v402
      %v1131 = vunpack.c.h.s8.bf16 %v403
      %v1132 = vunpack.c.h.s8.bf16 %v404
      %v1133 = vunpack.c.h.s8.bf16 %v405
      %v1134 = vunpack.c.l.s8.bf16 %v406
      %v1135 = vunpack.c.l.s8.bf16 %v407
      %v1136 = vunpack.c.l.s8.bf16 %v408
      %v1137 = vunpack.c.l.s8.bf16 %v409
      %v1138 = vunpack.c.l.s8.bf16 %v410
      %v1139 = vunpack.c.l.s8.bf16 %v411
      %v1140 = vunpack.c.l.s8.bf16 %v412
      %v1141 = vunpack.c.l.s8.bf16 %v413
      %v1142 = vunpack.c.h.s8.bf16 %v406
      %v1143 = vunpack.c.h.s8.bf16 %v407
      %v1144 = vunpack.c.h.s8.bf16 %v408
      %v1145 = vunpack.c.h.s8.bf16 %v409
      %v1146 = vunpack.c.h.s8.bf16 %v410
      %v1147 = vunpack.c.h.s8.bf16 %v411
      %v1148 = vunpack.c.h.s8.bf16 %v412
      %v1149 = vunpack.c.h.s8.bf16 %v413
      %v1150 = vunpack.c.l.s8.bf16 %v414
      %v1151 = vunpack.c.l.s8.bf16 %v415
      %v1152 = vunpack.c.l.s8.bf16 %v416
      %v1153 = vunpack.c.l.s8.bf16 %v417
      %v1154 = vunpack.c.l.s8.bf16 %v418
      %v1155 = vunpack.c.l.s8.bf16 %v419
      %v1156 = vunpack.c.l.s8.bf16 %v420
      %v1157 = vunpack.c.l.s8.bf16 %v421
      %v1158 = vunpack.c.h.s8.bf16 %v414
      %v1159 = vunpack.c.h.s8.bf16 %v415
      %v1160 = vunpack.c.h.s8.bf16 %v416
      %v1161 = vunpack.c.h.s8.bf16 %v417
      %v1162 = vunpack.c.h.s8.bf16 %v418
      %v1163 = vunpack.c.h.s8.bf16 %v419
      %v1164 = vunpack.c.h.s8.bf16 %v420
      %v1165 = vunpack.c.h.s8.bf16 %v421
      %v1166 = vunpack.c.l.s8.bf16 %v422
      %v1167 = vunpack.c.l.s8.bf16 %v423
      %v1168 = vunpack.c.l.s8.bf16 %v424
      %v1169 = vunpack.c.l.s8.bf16 %v425
      %v1170 = vunpack.c.l.s8.bf16 %v426
      %v1171 = vunpack.c.l.s8.bf16 %v427
      %v1172 = vunpack.c.l.s8.bf16 %v428
      %v1173 = vunpack.c.l.s8.bf16 %v429
      %v1174 = vunpack.c.h.s8.bf16 %v422
      %v1175 = vunpack.c.h.s8.bf16 %v423
      %v1176 = vunpack.c.h.s8.bf16 %v424
      %v1177 = vunpack.c.h.s8.bf16 %v425
      %v1178 = vunpack.c.h.s8.bf16 %v426
      %v1179 = vunpack.c.h.s8.bf16 %v427
      %v1180 = vunpack.c.h.s8.bf16 %v428
      %v1181 = vunpack.c.h.s8.bf16 %v429
      %v1182 = vunpack.c.l.s8.bf16 %v430
      %v1183 = vunpack.c.l.s8.bf16 %v431
      %v1184 = vunpack.c.l.s8.bf16 %v432
      %v1185 = vunpack.c.l.s8.bf16 %v433
      %v1186 = vunpack.c.l.s8.bf16 %v434
      %v1187 = vunpack.c.l.s8.bf16 %v435
      %v1188 = vunpack.c.l.s8.bf16 %v436
      %v1189 = vunpack.c.l.s8.bf16 %v437
      %v1190 = vunpack.c.h.s8.bf16 %v430
      %v1191 = vunpack.c.h.s8.bf16 %v431
      %v1192 = vunpack.c.h.s8.bf16 %v432
      %v1193 = vunpack.c.h.s8.bf16 %v433
      %v1194 = vunpack.c.h.s8.bf16 %v434
      %v1195 = vunpack.c.h.s8.bf16 %v435
      %v1196 = vunpack.c.h.s8.bf16 %v436
      %v1197 = vunpack.c.h.s8.bf16 %v437
      %v1198 = vunpack.c.l.s8.bf16 %v438
      %v1199 = vunpack.c.l.s8.bf16 %v439
      %v1200 = vunpack.c.l.s8.bf16 %v440
      %v1201 = vunpack.c.l.s8.bf16 %v441
      %v1202 = vunpack.c.l.s8.bf16 %v442
      %v1203 = vunpack.c.l.s8.bf16 %v443
      %v1204 = vunpack.c.l.s8.bf16 %v444
      %v1205 = vunpack.c.l.s8.bf16 %v445
      %v1206 = vunpack.c.h.s8.bf16 %v438
      %v1207 = vunpack.c.h.s8.bf16 %v439
      %v1208 = vunpack.c.h.s8.bf16 %v440
      %v1209 = vunpack.c.h.s8.bf16 %v441
      %v1210 = vunpack.c.h.s8.bf16 %v442
      %v1211 = vunpack.c.h.s8.bf16 %v443
      %v1212 = vunpack.c.h.s8.bf16 %v444
      %v1213 = vunpack.c.h.s8.bf16 %v445
      %v1214 = vunpack.c.l.s8.bf16 %v446
      %v1215 = vunpack.c.l.s8.bf16 %v447
      %v1216 = vunpack.c.l.s8.bf16 %v448
      %v1217 = vunpack.c.l.s8.bf16 %v449
      %v1218 = vunpack.c.l.s8.bf16 %v450
      %v1219 = vunpack.c.l.s8.bf16 %v451
      %v1220 = vunpack.c.l.s8.bf16 %v452
      %v1221 = vunpack.c.l.s8.bf16 %v453
      %v1222 = vunpack.c.h.s8.bf16 %v446
      %v1223 = vunpack.c.h.s8.bf16 %v447
      %v1224 = vunpack.c.h.s8.bf16 %v448
      %v1225 = vunpack.c.h.s8.bf16 %v449
      %v1226 = vunpack.c.h.s8.bf16 %v450
      %v1227 = vunpack.c.h.s8.bf16 %v451
      %v1228 = vunpack.c.h.s8.bf16 %v452
      %v1229 = vunpack.c.h.s8.bf16 %v453
      %v1230 = vunpack.c.l.s8.bf16 %v454
      %v1231 = vunpack.c.l.s8.bf16 %v455
      %v1232 = vunpack.c.l.s8.bf16 %v456
      %v1233 = vunpack.c.l.s8.bf16 %v457
      %v1234 = vunpack.c.l.s8.bf16 %v458
      %v1235 = vunpack.c.l.s8.bf16 %v459
      %v1236 = vunpack.c.l.s8.bf16 %v460
      %v1237 = vunpack.c.l.s8.bf16 %v461
      %v1238 = vunpack.c.h.s8.bf16 %v454
      %v1239 = vunpack.c.h.s8.bf16 %v455
      %v1240 = vunpack.c.h.s8.bf16 %v456
      %v1241 = vunpack.c.h.s8.bf16 %v457
      %v1242 = vunpack.c.h.s8.bf16 %v458
      %v1243 = vunpack.c.h.s8.bf16 %v459
      %v1244 = vunpack.c.h.s8.bf16 %v460
      %v1245 = vunpack.c.h.s8.bf16 %v461
      %v1246 = vunpack.c.l.s8.bf16 %v462
      %v1247 = vunpack.c.l.s8.bf16 %v463
      %v1248 = vunpack.c.l.s8.bf16 %v464
      %v1249 = vunpack.c.l.s8.bf16 %v465
      %v1250 = vunpack.c.l.s8.bf16 %v466
      %v1251 = vunpack.c.l.s8.bf16 %v467
      %v1252 = vunpack.c.l.s8.bf16 %v468
      %v1253 = vunpack.c.l.s8.bf16 %v469
      %v1254 = vunpack.c.h.s8.bf16 %v462
      %v1255 = vunpack.c.h.s8.bf16 %v463
      %v1256 = vunpack.c.h.s8.bf16 %v464
      %v1257 = vunpack.c.h.s8.bf16 %v465
      %v1258 = vunpack.c.h.s8.bf16 %v466
      %v1259 = vunpack.c.h.s8.bf16 %v467
      %v1260 = vunpack.c.h.s8.bf16 %v468
      %v1261 = vunpack.c.h.s8.bf16 %v469
      %v1262 = vunpack.c.l.s8.bf16 %v470
      %v1263 = vunpack.c.l.s8.bf16 %v471
      %v1264 = vunpack.c.l.s8.bf16 %v472
      %v1265 = vunpack.c.l.s8.bf16 %v473
      %v1266 = vunpack.c.l.s8.bf16 %v474
      %v1267 = vunpack.c.l.s8.bf16 %v475
      %v1268 = vunpack.c.l.s8.bf16 %v476
      %v1269 = vunpack.c.l.s8.bf16 %v477
      %v1270 = vunpack.c.h.s8.bf16 %v470
      %v1271 = vunpack.c.h.s8.bf16 %v471
      %v1272 = vunpack.c.h.s8.bf16 %v472
      %v1273 = vunpack.c.h.s8.bf16 %v473
      %v1274 = vunpack.c.h.s8.bf16 %v474
      %v1275 = vunpack.c.h.s8.bf16 %v475
      %v1276 = vunpack.c.h.s8.bf16 %v476
      %v1277 = vunpack.c.h.s8.bf16 %v477
      %v1278 = vunpack.c.l.s8.bf16 %v478
      %v1279 = vunpack.c.l.s8.bf16 %v479
      %v1280 = vunpack.c.l.s8.bf16 %v480
      %v1281 = vunpack.c.l.s8.bf16 %v481
      %v1282 = vunpack.c.l.s8.bf16 %v482
      %v1283 = vunpack.c.l.s8.bf16 %v483
      %v1284 = vunpack.c.l.s8.bf16 %v484
      %v1285 = vunpack.c.l.s8.bf16 %v485
      %v1286 = vunpack.c.h.s8.bf16 %v478
      %v1287 = vunpack.c.h.s8.bf16 %v479
      %v1288 = vunpack.c.h.s8.bf16 %v480
      %v1289 = vunpack.c.h.s8.bf16 %v481
      %v1290 = vunpack.c.h.s8.bf16 %v482
      %v1291 = vunpack.c.h.s8.bf16 %v483
      %v1292 = vunpack.c.h.s8.bf16 %v484
      %v1293 = vunpack.c.h.s8.bf16 %v485
      %v1294 = vunpack.c.l.s8.bf16 %v486
      %v1295 = vunpack.c.l.s8.bf16 %v487
      %v1296 = vunpack.c.l.s8.bf16 %v488
      %v1297 = vunpack.c.l.s8.bf16 %v489
      %v1298 = vunpack.c.l.s8.bf16 %v490
      %v1299 = vunpack.c.l.s8.bf16 %v491
      %v1300 = vunpack.c.l.s8.bf16 %v492
      %v1301 = vunpack.c.l.s8.bf16 %v493
      %v1302 = vunpack.c.h.s8.bf16 %v486
      %v1303 = vunpack.c.h.s8.bf16 %v487
      %v1304 = vunpack.c.h.s8.bf16 %v488
      %v1305 = vunpack.c.h.s8.bf16 %v489
      %v1306 = vunpack.c.h.s8.bf16 %v490
      %v1307 = vunpack.c.h.s8.bf16 %v491
      %v1308 = vunpack.c.h.s8.bf16 %v492
      %v1309 = vunpack.c.h.s8.bf16 %v493
      %v1310 = vunpack.c.l.s8.bf16 %v494
      %v1311 = vunpack.c.l.s8.bf16 %v495
      %v1312 = vunpack.c.l.s8.bf16 %v496
      %v1313 = vunpack.c.l.s8.bf16 %v497
      %v1314 = vunpack.c.l.s8.bf16 %v498
      %v1315 = vunpack.c.l.s8.bf16 %v499
      %v1316 = vunpack.c.l.s8.bf16 %v500
      %v1317 = vunpack.c.l.s8.bf16 %v501
      %v1318 = vunpack.c.h.s8.bf16 %v494
      %v1319 = vunpack.c.h.s8.bf16 %v495
      %v1320 = vunpack.c.h.s8.bf16 %v496
      %v1321 = vunpack.c.h.s8.bf16 %v497
      %v1322 = vunpack.c.h.s8.bf16 %v498
      %v1323 = vunpack.c.h.s8.bf16 %v499
      %v1324 = vunpack.c.h.s8.bf16 %v500
      %v1325 = vunpack.c.h.s8.bf16 %v501
      %v1326 = vunpack.c.l.s8.bf16 %v502
      %v1327 = vunpack.c.l.s8.bf16 %v503
      %v1328 = vunpack.c.l.s8.bf16 %v504
      %v1329 = vunpack.c.l.s8.bf16 %v505
      %v1330 = vunpack.c.l.s8.bf16 %v506
      %v1331 = vunpack.c.l.s8.bf16 %v507
      %v1332 = vunpack.c.l.s8.bf16 %v508
      %v1333 = vunpack.c.l.s8.bf16 %v509
      %v1334 = vunpack.c.h.s8.bf16 %v502
      %v1335 = vunpack.c.h.s8.bf16 %v503
      %v1336 = vunpack.c.h.s8.bf16 %v504
      %v1337 = vunpack.c.h.s8.bf16 %v505
      %v1338 = vunpack.c.h.s8.bf16 %v506
      %v1339 = vunpack.c.h.s8.bf16 %v507
      %v1340 = vunpack.c.h.s8.bf16 %v508
      %v1341 = vunpack.c.h.s8.bf16 %v509
      %v1342 = vunpack.c.l.s8.bf16 %v510
      %v1343 = vunpack.c.l.s8.bf16 %v511
      %v1344 = vunpack.c.l.s8.bf16 %v512
      %v1345 = vunpack.c.l.s8.bf16 %v513
      %v1346 = vunpack.c.l.s8.bf16 %v514
      %v1347 = vunpack.c.l.s8.bf16 %v515
      %v1348 = vunpack.c.l.s8.bf16 %v516
      %v1349 = vunpack.c.l.s8.bf16 %v517
      %v1350 = vunpack.c.h.s8.bf16 %v510
      %v1351 = vunpack.c.h.s8.bf16 %v511
      %v1352 = vunpack.c.h.s8.bf16 %v512
      %v1353 = vunpack.c.h.s8.bf16 %v513
      %v1354 = vunpack.c.h.s8.bf16 %v514
      %v1355 = vunpack.c.h.s8.bf16 %v515
      %v1356 = vunpack.c.h.s8.bf16 %v516
      %v1357 = vunpack.c.h.s8.bf16 %v517
      %v1358 = vunpack.c.l.s8.bf16 %v518
      %v1359 = vunpack.c.l.s8.bf16 %v519
      %v1360 = vunpack.c.l.s8.bf16 %v520
      %v1361 = vunpack.c.l.s8.bf16 %v521
      %v1362 = vunpack.c.l.s8.bf16 %v522
      %v1363 = vunpack.c.l.s8.bf16 %v523
      %v1364 = vunpack.c.l.s8.bf16 %v524
      %v1365 = vunpack.c.l.s8.bf16 %v525
      %v1366 = vunpack.c.h.s8.bf16 %v518
      %v1367 = vunpack.c.h.s8.bf16 %v519
      %v1368 = vunpack.c.h.s8.bf16 %v520
      %v1369 = vunpack.c.h.s8.bf16 %v521
      %v1370 = vunpack.c.h.s8.bf16 %v522
      %v1371 = vunpack.c.h.s8.bf16 %v523
      %v1372 = vunpack.c.h.s8.bf16 %v524
      %v1373 = vunpack.c.h.s8.bf16 %v525
      %v1374 = vunpack.c.l.s8.bf16 %v526
      %v1375 = vunpack.c.l.s8.bf16 %v527
      %v1376 = vunpack.c.l.s8.bf16 %v528
      %v1377 = vunpack.c.l.s8.bf16 %v529
      %v1378 = vunpack.c.l.s8.bf16 %v530
      %v1379 = vunpack.c.l.s8.bf16 %v531
      %v1380 = vunpack.c.l.s8.bf16 %v532
      %v1381 = vunpack.c.l.s8.bf16 %v533
      %v1382 = vunpack.c.h.s8.bf16 %v526
      %v1383 = vunpack.c.h.s8.bf16 %v527
      %v1384 = vunpack.c.h.s8.bf16 %v528
      %v1385 = vunpack.c.h.s8.bf16 %v529
      %v1386 = vunpack.c.h.s8.bf16 %v530
      %v1387 = vunpack.c.h.s8.bf16 %v531
      %v1388 = vunpack.c.h.s8.bf16 %v532
      %v1389 = vunpack.c.h.s8.bf16 %v533
      %v1390 = vunpack.c.l.s8.bf16 %v534
      %v1391 = vunpack.c.l.s8.bf16 %v535
      %v1392 = vunpack.c.l.s8.bf16 %v536
      %v1393 = vunpack.c.l.s8.bf16 %v537
      %v1394 = vunpack.c.l.s8.bf16 %v538
      %v1395 = vunpack.c.l.s8.bf16 %v539
      %v1396 = vunpack.c.l.s8.bf16 %v540
      %v1397 = vunpack.c.l.s8.bf16 %v541
      %v1398 = vunpack.c.h.s8.bf16 %v534
      %v1399 = vunpack.c.h.s8.bf16 %v535
      %v1400 = vunpack.c.h.s8.bf16 %v536
      %v1401 = vunpack.c.h.s8.bf16 %v537
      %v1402 = vunpack.c.h.s8.bf16 %v538
      %v1403 = vunpack.c.h.s8.bf16 %v539
      %v1404 = vunpack.c.h.s8.bf16 %v540
      %v1405 = vunpack.c.h.s8.bf16 %v541
      %v1406 = vunpack.c.l.s8.bf16 %v542
      %v1407 = vunpack.c.l.s8.bf16 %v543
      %v1408 = vunpack.c.l.s8.bf16 %v544
      %v1409 = vunpack.c.l.s8.bf16 %v545
      %v1410 = vunpack.c.l.s8.bf16 %v546
      %v1411 = vunpack.c.l.s8.bf16 %v547
      %v1412 = vunpack.c.l.s8.bf16 %v548
      %v1413 = vunpack.c.l.s8.bf16 %v549
      %v1414 = vunpack.c.h.s8.bf16 %v542
      %v1415 = vunpack.c.h.s8.bf16 %v543
      %v1416 = vunpack.c.h.s8.bf16 %v544
      %v1417 = vunpack.c.h.s8.bf16 %v545
      %v1418 = vunpack.c.h.s8.bf16 %v546
      %v1419 = vunpack.c.h.s8.bf16 %v547
      %v1420 = vunpack.c.h.s8.bf16 %v548
      %v1421 = vunpack.c.h.s8.bf16 %v549
      %v1422 = vunpack.c.l.s8.bf16 %v550
      %v1423 = vunpack.c.l.s8.bf16 %v551
      %v1424 = vunpack.c.l.s8.bf16 %v552
      %v1425 = vunpack.c.l.s8.bf16 %v553
      %v1426 = vunpack.c.l.s8.bf16 %v554
      %v1427 = vunpack.c.l.s8.bf16 %v555
      %v1428 = vunpack.c.l.s8.bf16 %v556
      %v1429 = vunpack.c.l.s8.bf16 %v557
      %v1430 = vunpack.c.h.s8.bf16 %v550
      %v1431 = vunpack.c.h.s8.bf16 %v551
      %v1432 = vunpack.c.h.s8.bf16 %v552
      %v1433 = vunpack.c.h.s8.bf16 %v553
      %v1434 = vunpack.c.h.s8.bf16 %v554
      %v1435 = vunpack.c.h.s8.bf16 %v555
      %v1436 = vunpack.c.h.s8.bf16 %v556
      %v1437 = vunpack.c.h.s8.bf16 %v557
      %v1438 = vunpack.c.l.s8.bf16 %v558
      %v1439 = vunpack.c.l.s8.bf16 %v559
      %v1440 = vunpack.c.l.s8.bf16 %v560
      %v1441 = vunpack.c.l.s8.bf16 %v561
      %v1442 = vunpack.c.l.s8.bf16 %v562
      %v1443 = vunpack.c.l.s8.bf16 %v563
      %v1444 = vunpack.c.l.s8.bf16 %v564
      %v1445 = vunpack.c.l.s8.bf16 %v565
      %v1446 = vunpack.c.h.s8.bf16 %v558
      %v1447 = vunpack.c.h.s8.bf16 %v559
      %v1448 = vunpack.c.h.s8.bf16 %v560
      %v1449 = vunpack.c.h.s8.bf16 %v561
      %v1450 = vunpack.c.h.s8.bf16 %v562
      %v1451 = vunpack.c.h.s8.bf16 %v563
      %v1452 = vunpack.c.h.s8.bf16 %v564
      %v1453 = vunpack.c.h.s8.bf16 %v565
      %v1454 = vunpack.c.l.s8.bf16 %v566
      %v1455 = vunpack.c.l.s8.bf16 %v567
      %v1456 = vunpack.c.l.s8.bf16 %v568
      %v1457 = vunpack.c.l.s8.bf16 %v569
      %v1458 = vunpack.c.l.s8.bf16 %v570
      %v1459 = vunpack.c.l.s8.bf16 %v571
      %v1460 = vunpack.c.l.s8.bf16 %v572
      %v1461 = vunpack.c.l.s8.bf16 %v573
      %v1462 = vunpack.c.h.s8.bf16 %v566
      %v1463 = vunpack.c.h.s8.bf16 %v567
      %v1464 = vunpack.c.h.s8.bf16 %v568
      %v1465 = vunpack.c.h.s8.bf16 %v569
      %v1466 = vunpack.c.h.s8.bf16 %v570
      %v1467 = vunpack.c.h.s8.bf16 %v571
      %v1468 = vunpack.c.h.s8.bf16 %v572
      %v1469 = vunpack.c.h.s8.bf16 %v573
      %v1470 = vunpack.c.l.s8.bf16 %v574
      %v1471 = vunpack.c.l.s8.bf16 %v575
      %v1472 = vunpack.c.l.s8.bf16 %v576
      %v1473 = vunpack.c.l.s8.bf16 %v577
      %v1474 = vunpack.c.l.s8.bf16 %v578
      %v1475 = vunpack.c.l.s8.bf16 %v579
      %v1476 = vunpack.c.l.s8.bf16 %v580
      %v1477 = vunpack.c.l.s8.bf16 %v581
      %v1478 = vunpack.c.h.s8.bf16 %v574
      %v1479 = vunpack.c.h.s8.bf16 %v575
      %v1480 = vunpack.c.h.s8.bf16 %v576
      %v1481 = vunpack.c.h.s8.bf16 %v577
      %v1482 = vunpack.c.h.s8.bf16 %v578
      %v1483 = vunpack.c.h.s8.bf16 %v579
      %v1484 = vunpack.c.h.s8.bf16 %v580
      %v1485 = vunpack.c.h.s8.bf16 %v581
      %v1486 = vunpack.c.l.s8.bf16 %v582
      %v1487 = vunpack.c.l.s8.bf16 %v583
      %v1488 = vunpack.c.l.s8.bf16 %v584
      %v1489 = vunpack.c.l.s8.bf16 %v585
      %v1490 = vunpack.c.l.s8.bf16 %v586
      %v1491 = vunpack.c.l.s8.bf16 %v587
      %v1492 = vunpack.c.l.s8.bf16 %v588
      %v1493 = vunpack.c.l.s8.bf16 %v589
      %v1494 = vunpack.c.h.s8.bf16 %v582
      %v1495 = vunpack.c.h.s8.bf16 %v583
      %v1496 = vunpack.c.h.s8.bf16 %v584
      %v1497 = vunpack.c.h.s8.bf16 %v585
      %v1498 = vunpack.c.h.s8.bf16 %v586
      %v1499 = vunpack.c.h.s8.bf16 %v587
      %v1500 = vunpack.c.h.s8.bf16 %v588
      %v1501 = vunpack.c.h.s8.bf16 %v589
      %v1502 = vunpack.c.l.s8.bf16 %v590
      %v1503 = vunpack.c.l.s8.bf16 %v591
      %v1504 = vunpack.c.l.s8.bf16 %v592
      %v1505 = vunpack.c.l.s8.bf16 %v593
      %v1506 = vunpack.c.l.s8.bf16 %v594
      %v1507 = vunpack.c.l.s8.bf16 %v595
      %v1508 = vunpack.c.l.s8.bf16 %v596
      %v1509 = vunpack.c.l.s8.bf16 %v597
      %v1510 = vunpack.c.h.s8.bf16 %v590
      %v1511 = vunpack.c.h.s8.bf16 %v591
      %v1512 = vunpack.c.h.s8.bf16 %v592
      %v1513 = vunpack.c.h.s8.bf16 %v593
      %v1514 = vunpack.c.h.s8.bf16 %v594
      %v1515 = vunpack.c.h.s8.bf16 %v595
      %v1516 = vunpack.c.h.s8.bf16 %v596
      %v1517 = vunpack.c.h.s8.bf16 %v597
      %v1518 = vunpack.c.l.s8.bf16 %v598
      %v1519 = vunpack.c.l.s8.bf16 %v599
      %v1520 = vunpack.c.l.s8.bf16 %v600
      %v1521 = vunpack.c.l.s8.bf16 %v601
      %v1522 = vunpack.c.l.s8.bf16 %v602
      %v1523 = vunpack.c.l.s8.bf16 %v603
      %v1524 = vunpack.c.l.s8.bf16 %v604
      %v1525 = vunpack.c.l.s8.bf16 %v605
      %v1526 = vunpack.c.h.s8.bf16 %v598
      %v1527 = vunpack.c.h.s8.bf16 %v599
      %v1528 = vunpack.c.h.s8.bf16 %v600
      %v1529 = vunpack.c.h.s8.bf16 %v601
      %v1530 = vunpack.c.h.s8.bf16 %v602
      %v1531 = vunpack.c.h.s8.bf16 %v603
      %v1532 = vunpack.c.h.s8.bf16 %v604
      %v1533 = vunpack.c.h.s8.bf16 %v605
      %v1534 = vunpack.c.l.s8.bf16 %v606
      %v1535 = vunpack.c.l.s8.bf16 %v607
      %v1536 = vunpack.c.l.s8.bf16 %v608
      %v1537 = vunpack.c.l.s8.bf16 %v609
      %v1538 = vunpack.c.l.s8.bf16 %v610
      %v1539 = vunpack.c.l.s8.bf16 %v611
      %v1540 = vunpack.c.l.s8.bf16 %v612
      %v1541 = vunpack.c.l.s8.bf16 %v613
      %v1542 = vunpack.c.h.s8.bf16 %v606
      %v1543 = vunpack.c.h.s8.bf16 %v607
      %v1544 = vunpack.c.h.s8.bf16 %v608
      %v1545 = vunpack.c.h.s8.bf16 %v609
      %v1546 = vunpack.c.h.s8.bf16 %v610
      %v1547 = vunpack.c.h.s8.bf16 %v611
      %v1548 = vunpack.c.h.s8.bf16 %v612
      %v1549 = vunpack.c.h.s8.bf16 %v613
      %v1550 = vunpack.c.l.s8.bf16 %v614
      %v1551 = vunpack.c.l.s8.bf16 %v615
      %v1552 = vunpack.c.l.s8.bf16 %v616
      %v1553 = vunpack.c.l.s8.bf16 %v617
      %v1554 = vunpack.c.l.s8.bf16 %v618
      %v1555 = vunpack.c.l.s8.bf16 %v619
      %v1556 = vunpack.c.l.s8.bf16 %v620
      %v1557 = vunpack.c.l.s8.bf16 %v621
      %v1558 = vunpack.c.h.s8.bf16 %v614
      %v1559 = vunpack.c.h.s8.bf16 %v615
      %v1560 = vunpack.c.h.s8.bf16 %v616
      %v1561 = vunpack.c.h.s8.bf16 %v617
      %v1562 = vunpack.c.h.s8.bf16 %v618
      %v1563 = vunpack.c.h.s8.bf16 %v619
      %v1564 = vunpack.c.h.s8.bf16 %v620
      %v1565 = vunpack.c.h.s8.bf16 %v621
      %v1566 = vunpack.c.l.s8.bf16 %v622
      %v1567 = vunpack.c.l.s8.bf16 %v623
      %v1568 = vunpack.c.l.s8.bf16 %v624
      %v1569 = vunpack.c.l.s8.bf16 %v625
      %v1570 = vunpack.c.l.s8.bf16 %v626
      %v1571 = vunpack.c.l.s8.bf16 %v627
      %v1572 = vunpack.c.l.s8.bf16 %v628
      %v1573 = vunpack.c.l.s8.bf16 %v629
      %v1574 = vunpack.c.h.s8.bf16 %v622
      %v1575 = vunpack.c.h.s8.bf16 %v623
      %v1576 = vunpack.c.h.s8.bf16 %v624
      %v1577 = vunpack.c.h.s8.bf16 %v625
      %v1578 = vunpack.c.h.s8.bf16 %v626
      %v1579 = vunpack.c.h.s8.bf16 %v627
      %v1580 = vunpack.c.h.s8.bf16 %v628
      %v1581 = vunpack.c.h.s8.bf16 %v629
      %v1582 = vunpack.c.l.s8.bf16 %v630
      %v1583 = vunpack.c.l.s8.bf16 %v631
      %v1584 = vunpack.c.l.s8.bf16 %v632
      %v1585 = vunpack.c.l.s8.bf16 %v633
      %v1586 = vunpack.c.l.s8.bf16 %v634
      %v1587 = vunpack.c.l.s8.bf16 %v635
      %v1588 = vunpack.c.l.s8.bf16 %v636
      %v1589 = vunpack.c.l.s8.bf16 %v637
      %v1590 = vunpack.c.h.s8.bf16 %v630
      %v1591 = vunpack.c.h.s8.bf16 %v631
      %v1592 = vunpack.c.h.s8.bf16 %v632
      %v1593 = vunpack.c.h.s8.bf16 %v633
      %v1594 = vunpack.c.h.s8.bf16 %v634
      %v1595 = vunpack.c.h.s8.bf16 %v635
      %v1596 = vunpack.c.h.s8.bf16 %v636
      %v1597 = vunpack.c.h.s8.bf16 %v637
      %v1598 = vunpack.c.l.s8.bf16 %v638
      %v1599 = vunpack.c.l.s8.bf16 %v639
      %v1600 = vunpack.c.l.s8.bf16 %v640
      %v1601 = vunpack.c.l.s8.bf16 %v641
      %v1602 = vunpack.c.l.s8.bf16 %v642
      %v1603 = vunpack.c.l.s8.bf16 %v643
      %v1604 = vunpack.c.l.s8.bf16 %v644
      %v1605 = vunpack.c.l.s8.bf16 %v645
      %v1606 = vunpack.c.h.s8.bf16 %v638
      %v1607 = vunpack.c.h.s8.bf16 %v639
      %v1608 = vunpack.c.h.s8.bf16 %v640
      %v1609 = vunpack.c.h.s8.bf16 %v641
      %v1610 = vunpack.c.h.s8.bf16 %v642
      %v1611 = vunpack.c.h.s8.bf16 %v643
      %v1612 = vunpack.c.h.s8.bf16 %v644
      %v1613 = vunpack.c.h.s8.bf16 %v645
      %v1614 = vunpack.c.l.s8.bf16 %v646
      %v1615 = vunpack.c.l.s8.bf16 %v647
      %v1616 = vunpack.c.l.s8.bf16 %v648
      %v1617 = vunpack.c.l.s8.bf16 %v649
      %v1618 = vunpack.c.l.s8.bf16 %v650
      %v1619 = vunpack.c.l.s8.bf16 %v651
      %v1620 = vunpack.c.l.s8.bf16 %v652
      %v1621 = vunpack.c.l.s8.bf16 %v653
      %v1622 = vunpack.c.h.s8.bf16 %v646
      %v1623 = vunpack.c.h.s8.bf16 %v647
      %v1624 = vunpack.c.h.s8.bf16 %v648
      %v1625 = vunpack.c.h.s8.bf16 %v649
      %v1626 = vunpack.c.h.s8.bf16 %v650
      %v1627 = vunpack.c.h.s8.bf16 %v651
      %v1628 = vunpack.c.h.s8.bf16 %v652
      %v1629 = vunpack.c.h.s8.bf16 %v653
      %v1630 = vunpack.c.l.s8.bf16 %v654
      %v1631 = vunpack.c.l.s8.bf16 %v655
      %v1632 = vunpack.c.l.s8.bf16 %v656
      %v1633 = vunpack.c.l.s8.bf16 %v657
      %v1634 = vunpack.c.l.s8.bf16 %v658
      %v1635 = vunpack.c.l.s8.bf16 %v659
      %v1636 = vunpack.c.l.s8.bf16 %v660
      %v1637 = vunpack.c.l.s8.bf16 %v661
      %v1638 = vunpack.c.h.s8.bf16 %v654
      %v1639 = vunpack.c.h.s8.bf16 %v655
      %v1640 = vunpack.c.h.s8.bf16 %v656
      %v1641 = vunpack.c.h.s8.bf16 %v657
      %v1642 = vunpack.c.h.s8.bf16 %v658
      %v1643 = vunpack.c.h.s8.bf16 %v659
      %v1644 = vunpack.c.h.s8.bf16 %v660
      %v1645 = vunpack.c.h.s8.bf16 %v661
      %v1646 = vunpack.c.l.s8.bf16 %v662
      %v1647 = vunpack.c.l.s8.bf16 %v663
      %v1648 = vunpack.c.l.s8.bf16 %v664
      %v1649 = vunpack.c.l.s8.bf16 %v665
      %v1650 = vunpack.c.l.s8.bf16 %v666
      %v1651 = vunpack.c.l.s8.bf16 %v667
      %v1652 = vunpack.c.l.s8.bf16 %v668
      %v1653 = vunpack.c.l.s8.bf16 %v669
      %v1654 = vunpack.c.h.s8.bf16 %v662
      %v1655 = vunpack.c.h.s8.bf16 %v663
      %v1656 = vunpack.c.h.s8.bf16 %v664
      %v1657 = vunpack.c.h.s8.bf16 %v665
      %v1658 = vunpack.c.h.s8.bf16 %v666
      %v1659 = vunpack.c.h.s8.bf16 %v667
      %v1660 = vunpack.c.h.s8.bf16 %v668
      %v1661 = vunpack.c.h.s8.bf16 %v669
      %v1662 = vunpack.c.l.s8.bf16 %v670
      %v1663 = vunpack.c.l.s8.bf16 %v671
      %v1664 = vunpack.c.l.s8.bf16 %v672
      %v1665 = vunpack.c.l.s8.bf16 %v673
      %v1666 = vunpack.c.l.s8.bf16 %v674
      %v1667 = vunpack.c.l.s8.bf16 %v675
      %v1668 = vunpack.c.l.s8.bf16 %v676
      %v1669 = vunpack.c.l.s8.bf16 %v677
      %v1670 = vunpack.c.h.s8.bf16 %v670
      %v1671 = vunpack.c.h.s8.bf16 %v671
      %v1672 = vunpack.c.h.s8.bf16 %v672
      %v1673 = vunpack.c.h.s8.bf16 %v673
      %v1674 = vunpack.c.h.s8.bf16 %v674
      %v1675 = vunpack.c.h.s8.bf16 %v675
      %v1676 = vunpack.c.h.s8.bf16 %v676
      %v1677 = vunpack.c.h.s8.bf16 %v677
      %v1678 = vunpack.c.l.s8.bf16 %v678
      %v1679 = vunpack.c.l.s8.bf16 %v679
      %v1680 = vunpack.c.l.s8.bf16 %v680
      %v1681 = vunpack.c.l.s8.bf16 %v681
      %v1682 = vunpack.c.l.s8.bf16 %v682
      %v1683 = vunpack.c.l.s8.bf16 %v683
      %v1684 = vunpack.c.l.s8.bf16 %v684
      %v1685 = vunpack.c.l.s8.bf16 %v685
      %v1686 = vunpack.c.h.s8.bf16 %v678
      %v1687 = vunpack.c.h.s8.bf16 %v679
      %v1688 = vunpack.c.h.s8.bf16 %v680
      %v1689 = vunpack.c.h.s8.bf16 %v681
      %v1690 = vunpack.c.h.s8.bf16 %v682
      %v1691 = vunpack.c.h.s8.bf16 %v683
      %v1692 = vunpack.c.h.s8.bf16 %v684
      %v1693 = vunpack.c.h.s8.bf16 %v685
      %v1694 = vunpack.c.l.s8.bf16 %v686
      %v1695 = vunpack.c.l.s8.bf16 %v687
      %v1696 = vunpack.c.l.s8.bf16 %v688
      %v1697 = vunpack.c.l.s8.bf16 %v689
      %v1698 = vunpack.c.l.s8.bf16 %v690
      %v1699 = vunpack.c.l.s8.bf16 %v691
      %v1700 = vunpack.c.l.s8.bf16 %v692
      %v1701 = vunpack.c.l.s8.bf16 %v693
      %v1702 = vunpack.c.h.s8.bf16 %v686
      %v1703 = vunpack.c.h.s8.bf16 %v687
      %v1704 = vunpack.c.h.s8.bf16 %v688
      %v1705 = vunpack.c.h.s8.bf16 %v689
      %v1706 = vunpack.c.h.s8.bf16 %v690
      %v1707 = vunpack.c.h.s8.bf16 %v691
      %v1708 = vunpack.c.h.s8.bf16 %v692
      %v1709 = vunpack.c.h.s8.bf16 %v693
      %v1710 = vunpack.c.l.s8.bf16 %v694
      %v1711 = vunpack.c.l.s8.bf16 %v695
      %v1712 = vunpack.c.l.s8.bf16 %v696
      %v1713 = vunpack.c.l.s8.bf16 %v697
      %v1714 = vunpack.c.l.s8.bf16 %v698
      %v1715 = vunpack.c.l.s8.bf16 %v699
      %v1716 = vunpack.c.l.s8.bf16 %v700
      %v1717 = vunpack.c.l.s8.bf16 %v701
      %v1718 = vunpack.c.h.s8.bf16 %v694
      %v1719 = vunpack.c.h.s8.bf16 %v695
      %v1720 = vunpack.c.h.s8.bf16 %v696
      %v1721 = vunpack.c.h.s8.bf16 %v697
      %v1722 = vunpack.c.h.s8.bf16 %v698
      %v1723 = vunpack.c.h.s8.bf16 %v699
      %v1724 = vunpack.c.h.s8.bf16 %v700
      %v1725 = vunpack.c.h.s8.bf16 %v701
      %v1726 = vunpack.c.l.s8.bf16 %v702
      %v1727 = vunpack.c.l.s8.bf16 %v703
      %v1728 = vunpack.c.l.s8.bf16 %v704
      %v1729 = vunpack.c.l.s8.bf16 %v705
      %v1730 = vunpack.c.l.s8.bf16 %v706
      %v1731 = vunpack.c.l.s8.bf16 %v707
      %v1732 = vunpack.c.l.s8.bf16 %v708
      %v1733 = vunpack.c.l.s8.bf16 %v709
      %v1734 = vunpack.c.h.s8.bf16 %v702
      %v1735 = vunpack.c.h.s8.bf16 %v703
      %v1736 = vunpack.c.h.s8.bf16 %v704
      %v1737 = vunpack.c.h.s8.bf16 %v705
      %v1738 = vunpack.c.h.s8.bf16 %v706
      %v1739 = vunpack.c.h.s8.bf16 %v707
      %v1740 = vunpack.c.h.s8.bf16 %v708
      %v1741 = vunpack.c.h.s8.bf16 %v709
      %v1742 = vunpack.c.l.s8.bf16 %v710
      %v1743 = vunpack.c.l.s8.bf16 %v711
      %v1744 = vunpack.c.l.s8.bf16 %v712
      %v1745 = vunpack.c.l.s8.bf16 %v713
      %v1746 = vunpack.c.l.s8.bf16 %v714
      %v1747 = vunpack.c.l.s8.bf16 %v715
      %v1748 = vunpack.c.l.s8.bf16 %v716
      %v1749 = vunpack.c.l.s8.bf16 %v717
      %v1750 = vunpack.c.h.s8.bf16 %v710
      %v1751 = vunpack.c.h.s8.bf16 %v711
      %v1752 = vunpack.c.h.s8.bf16 %v712
      %v1753 = vunpack.c.h.s8.bf16 %v713
      %v1754 = vunpack.c.h.s8.bf16 %v714
      %v1755 = vunpack.c.h.s8.bf16 %v715
      %v1756 = vunpack.c.h.s8.bf16 %v716
      %v1757 = vunpack.c.h.s8.bf16 %v717
      %v1758 = vunpack.c.l.s8.bf16 %v718
      %v1759 = vunpack.c.l.s8.bf16 %v719
      %v1760 = vunpack.c.l.s8.bf16 %v720
      %v1761 = vunpack.c.l.s8.bf16 %v721
      %v1762 = vunpack.c.l.s8.bf16 %v722
      %v1763 = vunpack.c.l.s8.bf16 %v723
      %v1764 = vunpack.c.l.s8.bf16 %v724
      %v1765 = vunpack.c.l.s8.bf16 %v725
      %v1766 = vunpack.c.h.s8.bf16 %v718
      %v1767 = vunpack.c.h.s8.bf16 %v719
      %v1768 = vunpack.c.h.s8.bf16 %v720
      %v1769 = vunpack.c.h.s8.bf16 %v721
      %v1770 = vunpack.c.h.s8.bf16 %v722
      %v1771 = vunpack.c.h.s8.bf16 %v723
      %v1772 = vunpack.c.h.s8.bf16 %v724
      %v1773 = vunpack.c.h.s8.bf16 %v725
      %v1774 = vunpack.c.l.s8.bf16 %v726
      %v1775 = vunpack.c.l.s8.bf16 %v727
      %v1776 = vunpack.c.l.s8.bf16 %v728
      %v1777 = vunpack.c.l.s8.bf16 %v729
      %v1778 = vunpack.c.l.s8.bf16 %v730
      %v1779 = vunpack.c.l.s8.bf16 %v731
      %v1780 = vunpack.c.l.s8.bf16 %v732
      %v1781 = vunpack.c.l.s8.bf16 %v733
      %v1782 = vunpack.c.h.s8.bf16 %v726
      %v1783 = vunpack.c.h.s8.bf16 %v727
      %v1784 = vunpack.c.h.s8.bf16 %v728
      %v1785 = vunpack.c.h.s8.bf16 %v729
      %v1786 = vunpack.c.h.s8.bf16 %v730
      %v1787 = vunpack.c.h.s8.bf16 %v731
      %v1788 = vunpack.c.h.s8.bf16 %v732
      %v1789 = vunpack.c.h.s8.bf16 %v733
      %v1790 = vunpack.c.l.s8.bf16 %v734
      %v1791 = vunpack.c.l.s8.bf16 %v735
      %v1792 = vunpack.c.l.s8.bf16 %v736
      %v1793 = vunpack.c.l.s8.bf16 %v737
      %v1794 = vunpack.c.l.s8.bf16 %v738
      %v1795 = vunpack.c.l.s8.bf16 %v739
      %v1796 = vunpack.c.l.s8.bf16 %v740
      %v1797 = vunpack.c.l.s8.bf16 %v741
      %v1798 = vunpack.c.h.s8.bf16 %v734
      %v1799 = vunpack.c.h.s8.bf16 %v735
      %v1800 = vunpack.c.h.s8.bf16 %v736
      %v1801 = vunpack.c.h.s8.bf16 %v737
      %v1802 = vunpack.c.h.s8.bf16 %v738
      %v1803 = vunpack.c.h.s8.bf16 %v739
      %v1804 = vunpack.c.h.s8.bf16 %v740
      %v1805 = vunpack.c.h.s8.bf16 %v741
      %v1806 = vunpack.c.l.s8.bf16 %v742
      %v1807 = vunpack.c.l.s8.bf16 %v743
      %v1808 = vunpack.c.l.s8.bf16 %v744
      %v1809 = vunpack.c.l.s8.bf16 %v745
      %v1810 = vunpack.c.l.s8.bf16 %v746
      %v1811 = vunpack.c.l.s8.bf16 %v747
      %v1812 = vunpack.c.l.s8.bf16 %v748
      %v1813 = vunpack.c.l.s8.bf16 %v749
      %v1814 = vunpack.c.h.s8.bf16 %v742
      %v1815 = vunpack.c.h.s8.bf16 %v743
      %v1816 = vunpack.c.h.s8.bf16 %v744
      %v1817 = vunpack.c.h.s8.bf16 %v745
      %v1818 = vunpack.c.h.s8.bf16 %v746
      %v1819 = vunpack.c.h.s8.bf16 %v747
      %v1820 = vunpack.c.h.s8.bf16 %v748
      %v1821 = vunpack.c.h.s8.bf16 %v749
      %v1822 = vunpack.c.l.s8.bf16 %v750
      %v1823 = vunpack.c.l.s8.bf16 %v751
      %v1824 = vunpack.c.l.s8.bf16 %v752
      %v1825 = vunpack.c.l.s8.bf16 %v753
      %v1826 = vunpack.c.l.s8.bf16 %v754
      %v1827 = vunpack.c.l.s8.bf16 %v755
      %v1828 = vunpack.c.l.s8.bf16 %v756
      %v1829 = vunpack.c.l.s8.bf16 %v757
      %v1830 = vunpack.c.h.s8.bf16 %v750
      %v1831 = vunpack.c.h.s8.bf16 %v751
      %v1832 = vunpack.c.h.s8.bf16 %v752
      %v1833 = vunpack.c.h.s8.bf16 %v753
      %v1834 = vunpack.c.h.s8.bf16 %v754
      %v1835 = vunpack.c.h.s8.bf16 %v755
      %v1836 = vunpack.c.h.s8.bf16 %v756
      %v1837 = vunpack.c.h.s8.bf16 %v757
      %v1838 = vunpack.c.l.s8.bf16 %v758
      %v1839 = vunpack.c.l.s8.bf16 %v759
      %v1840 = vunpack.c.l.s8.bf16 %v760
      %v1841 = vunpack.c.l.s8.bf16 %v761
      %v1842 = vunpack.c.l.s8.bf16 %v762
      %v1843 = vunpack.c.l.s8.bf16 %v763
      %v1844 = vunpack.c.l.s8.bf16 %v764
      %v1845 = vunpack.c.l.s8.bf16 %v765
      %v1846 = vunpack.c.h.s8.bf16 %v758
      %v1847 = vunpack.c.h.s8.bf16 %v759
      %v1848 = vunpack.c.h.s8.bf16 %v760
      %v1849 = vunpack.c.h.s8.bf16 %v761
      %v1850 = vunpack.c.h.s8.bf16 %v762
      %v1851 = vunpack.c.h.s8.bf16 %v763
      %v1852 = vunpack.c.h.s8.bf16 %v764
      %v1853 = vunpack.c.h.s8.bf16 %v765
      %v1854 = vunpack.c.l.s8.bf16 %v766
      %v1855 = vunpack.c.l.s8.bf16 %v767
      %v1856 = vunpack.c.l.s8.bf16 %v768
      %v1857 = vunpack.c.l.s8.bf16 %v769
      %v1858 = vunpack.c.l.s8.bf16 %v770
      %v1859 = vunpack.c.l.s8.bf16 %v771
      %v1860 = vunpack.c.l.s8.bf16 %v772
      %v1861 = vunpack.c.l.s8.bf16 %v773
      %v1862 = vunpack.c.h.s8.bf16 %v766
      %v1863 = vunpack.c.h.s8.bf16 %v767
      %v1864 = vunpack.c.h.s8.bf16 %v768
      %v1865 = vunpack.c.h.s8.bf16 %v769
      %v1866 = vunpack.c.h.s8.bf16 %v770
      %v1867 = vunpack.c.h.s8.bf16 %v771
      %v1868 = vunpack.c.h.s8.bf16 %v772
      %v1869 = vunpack.c.h.s8.bf16 %v773
      %v1870 = vunpack.c.l.s8.bf16 %v774
      %v1871 = vunpack.c.l.s8.bf16 %v775
      %v1872 = vunpack.c.l.s8.bf16 %v776
      %v1873 = vunpack.c.l.s8.bf16 %v777
      %v1874 = vunpack.c.l.s8.bf16 %v778
      %v1875 = vunpack.c.l.s8.bf16 %v779
      %v1876 = vunpack.c.l.s8.bf16 %v780
      %v1877 = vunpack.c.l.s8.bf16 %v781
      %v1878 = vunpack.c.h.s8.bf16 %v774
      %v1879 = vunpack.c.h.s8.bf16 %v775
      %v1880 = vunpack.c.h.s8.bf16 %v776
      %v1881 = vunpack.c.h.s8.bf16 %v777
      %v1882 = vunpack.c.h.s8.bf16 %v778
      %v1883 = vunpack.c.h.s8.bf16 %v779
      %v1884 = vunpack.c.h.s8.bf16 %v780
      %v1885 = vunpack.c.h.s8.bf16 %v781
      %v1886 = vunpack.c.l.s8.bf16 %v782
      %v1887 = vunpack.c.l.s8.bf16 %v783
      %v1888 = vunpack.c.l.s8.bf16 %v784
      %v1889 = vunpack.c.l.s8.bf16 %v785
      %v1890 = vunpack.c.l.s8.bf16 %v786
      %v1891 = vunpack.c.l.s8.bf16 %v787
      %v1892 = vunpack.c.l.s8.bf16 %v788
      %v1893 = vunpack.c.l.s8.bf16 %v789
      %v1894 = vunpack.c.h.s8.bf16 %v782
      %v1895 = vunpack.c.h.s8.bf16 %v783
      %v1896 = vunpack.c.h.s8.bf16 %v784
      %v1897 = vunpack.c.h.s8.bf16 %v785
      %v1898 = vunpack.c.h.s8.bf16 %v786
      %v1899 = vunpack.c.h.s8.bf16 %v787
      %v1900 = vunpack.c.h.s8.bf16 %v788
      %v1901 = vunpack.c.h.s8.bf16 %v789
      %v1902 = vunpack.c.l.s8.bf16 %v790
      %v1903 = vunpack.c.l.s8.bf16 %v791
      %v1904 = vunpack.c.l.s8.bf16 %v792
      %v1905 = vunpack.c.l.s8.bf16 %v793
      %v1906 = vunpack.c.l.s8.bf16 %v794
      %v1907 = vunpack.c.l.s8.bf16 %v795
      %v1908 = vunpack.c.l.s8.bf16 %v796
      %v1909 = vunpack.c.l.s8.bf16 %v797
      %v1910 = vunpack.c.h.s8.bf16 %v790
      %v1911 = vunpack.c.h.s8.bf16 %v791
      %v1912 = vunpack.c.h.s8.bf16 %v792
      %v1913 = vunpack.c.h.s8.bf16 %v793
      %v1914 = vunpack.c.h.s8.bf16 %v794
      %v1915 = vunpack.c.h.s8.bf16 %v795
      %v1916 = vunpack.c.h.s8.bf16 %v796
      %v1917 = vunpack.c.h.s8.bf16 %v797
      %v1918 = vunpack.c.l.s8.bf16 %v798
      %v1919 = vunpack.c.l.s8.bf16 %v799
      %v1920 = vunpack.c.l.s8.bf16 %v800
      %v1921 = vunpack.c.l.s8.bf16 %v801
      %v1922 = vunpack.c.l.s8.bf16 %v802
      %v1923 = vunpack.c.l.s8.bf16 %v803
      %v1924 = vunpack.c.l.s8.bf16 %v804
      %v1925 = vunpack.c.l.s8.bf16 %v805
      %v1926 = vunpack.c.h.s8.bf16 %v798
      %v1927 = vunpack.c.h.s8.bf16 %v799
      %v1928 = vunpack.c.h.s8.bf16 %v800
      %v1929 = vunpack.c.h.s8.bf16 %v801
      %v1930 = vunpack.c.h.s8.bf16 %v802
      %v1931 = vunpack.c.h.s8.bf16 %v803
      %v1932 = vunpack.c.h.s8.bf16 %v804
      %v1933 = vunpack.c.h.s8.bf16 %v805
      %v1934 = vunpack.c.l.s8.bf16 %v806
      %v1935 = vunpack.c.l.s8.bf16 %v807
      %v1936 = vunpack.c.l.s8.bf16 %v808
      %v1937 = vunpack.c.l.s8.bf16 %v809
      %v1938 = vunpack.c.l.s8.bf16 %v810
      %v1939 = vunpack.c.l.s8.bf16 %v811
      %v1940 = vunpack.c.l.s8.bf16 %v812
      %v1941 = vunpack.c.l.s8.bf16 %v813
      %v1942 = vunpack.c.h.s8.bf16 %v806
      %v1943 = vunpack.c.h.s8.bf16 %v807
      %v1944 = vunpack.c.h.s8.bf16 %v808
      %v1945 = vunpack.c.h.s8.bf16 %v809
      %v1946 = vunpack.c.h.s8.bf16 %v810
      %v1947 = vunpack.c.h.s8.bf16 %v811
      %v1948 = vunpack.c.h.s8.bf16 %v812
      %v1949 = vunpack.c.h.s8.bf16 %v813
      %v1950 = vunpack.c.l.s8.bf16 %v814
      %v1951 = vunpack.c.l.s8.bf16 %v815
      %v1952 = vunpack.c.l.s8.bf16 %v816
      %v1953 = vunpack.c.l.s8.bf16 %v817
      %v1954 = vunpack.c.l.s8.bf16 %v818
      %v1955 = vunpack.c.l.s8.bf16 %v819
      %v1956 = vunpack.c.l.s8.bf16 %v820
      %v1957 = vunpack.c.l.s8.bf16 %v821
      %v1958 = vunpack.c.h.s8.bf16 %v814
      %v1959 = vunpack.c.h.s8.bf16 %v815
      %v1960 = vunpack.c.h.s8.bf16 %v816
      %v1961 = vunpack.c.h.s8.bf16 %v817
      %v1962 = vunpack.c.h.s8.bf16 %v818
      %v1963 = vunpack.c.h.s8.bf16 %v819
      %v1964 = vunpack.c.h.s8.bf16 %v820
      %v1965 = vunpack.c.h.s8.bf16 %v821
      %v1966 = vunpack.c.l.s8.bf16 %v822
      %v1967 = vunpack.c.l.s8.bf16 %v823
      %v1968 = vunpack.c.l.s8.bf16 %v824
      %v1969 = vunpack.c.l.s8.bf16 %v825
      %v1970 = vunpack.c.l.s8.bf16 %v826
      %v1971 = vunpack.c.l.s8.bf16 %v827
      %v1972 = vunpack.c.l.s8.bf16 %v828
      %v1973 = vunpack.c.l.s8.bf16 %v829
      %v1974 = vunpack.c.h.s8.bf16 %v822
      %v1975 = vunpack.c.h.s8.bf16 %v823
      %v1976 = vunpack.c.h.s8.bf16 %v824
      %v1977 = vunpack.c.h.s8.bf16 %v825
      %v1978 = vunpack.c.h.s8.bf16 %v826
      %v1979 = vunpack.c.h.s8.bf16 %v827
      %v1980 = vunpack.c.h.s8.bf16 %v828
      %v1981 = vunpack.c.h.s8.bf16 %v829
      %v1982 = vunpack.c.l.s8.bf16 %v830
      %v1983 = vunpack.c.l.s8.bf16 %v831
      %v1984 = vunpack.c.l.s8.bf16 %v832
      %v1985 = vunpack.c.l.s8.bf16 %v833
      %v1986 = vunpack.c.l.s8.bf16 %v834
      %v1987 = vunpack.c.l.s8.bf16 %v835
      %v1988 = vunpack.c.l.s8.bf16 %v836
      %v1989 = vunpack.c.l.s8.bf16 %v837
      %v1990 = vunpack.c.h.s8.bf16 %v830
      %v1991 = vunpack.c.h.s8.bf16 %v831
      %v1992 = vunpack.c.h.s8.bf16 %v832
      %v1993 = vunpack.c.h.s8.bf16 %v833
      %v1994 = vunpack.c.h.s8.bf16 %v834
      %v1995 = vunpack.c.h.s8.bf16 %v835
      %v1996 = vunpack.c.h.s8.bf16 %v836
      %v1997 = vunpack.c.h.s8.bf16 %v837
      %v1998 = vunpack.c.l.s8.bf16 %v838
      %v1999 = vunpack.c.l.s8.bf16 %v839
      %v2000 = vunpack.c.l.s8.bf16 %v840
      %v2001 = vunpack.c.l.s8.bf16 %v841
      %v2002 = vunpack.c.l.s8.bf16 %v842
      %v2003 = vunpack.c.l.s8.bf16 %v843
      %v2004 = vunpack.c.l.s8.bf16 %v844
      %v2005 = vunpack.c.l.s8.bf16 %v845
      %v2006 = vunpack.c.h.s8.bf16 %v838
      %v2007 = vunpack.c.h.s8.bf16 %v839
      %v2008 = vunpack.c.h.s8.bf16 %v840
      %v2009 = vunpack.c.h.s8.bf16 %v841
      %v2010 = vunpack.c.h.s8.bf16 %v842
      %v2011 = vunpack.c.h.s8.bf16 %v843
      %v2012 = vunpack.c.h.s8.bf16 %v844
      %v2013 = vunpack.c.h.s8.bf16 %v845
      %v2014 = vunpack.c.l.s8.bf16 %v846
      %v2015 = vunpack.c.l.s8.bf16 %v847
      %v2016 = vunpack.c.l.s8.bf16 %v848
      %v2017 = vunpack.c.l.s8.bf16 %v849
      %v2018 = vunpack.c.l.s8.bf16 %v850
      %v2019 = vunpack.c.l.s8.bf16 %v851
      %v2020 = vunpack.c.l.s8.bf16 %v852
      %v2021 = vunpack.c.l.s8.bf16 %v853
      %v2022 = vunpack.c.h.s8.bf16 %v846
      %v2023 = vunpack.c.h.s8.bf16 %v847
      %v2024 = vunpack.c.h.s8.bf16 %v848
      %v2025 = vunpack.c.h.s8.bf16 %v849
      %v2026 = vunpack.c.h.s8.bf16 %v850
      %v2027 = vunpack.c.h.s8.bf16 %v851
      %v2028 = vunpack.c.h.s8.bf16 %v852
      %v2029 = vunpack.c.h.s8.bf16 %v853
      %v2030 = vunpack.c.l.s8.bf16 %v854
      %v2031 = vunpack.c.l.s8.bf16 %v855
      %v2032 = vunpack.c.l.s8.bf16 %v856
      %v2033 = vunpack.c.l.s8.bf16 %v857
      %v2034 = vunpack.c.l.s8.bf16 %v858
      %v2035 = vunpack.c.l.s8.bf16 %v859
      %v2036 = vunpack.c.l.s8.bf16 %v860
      %v2037 = vunpack.c.l.s8.bf16 %v861
      %v2038 = vunpack.c.h.s8.bf16 %v854
      %v2039 = vunpack.c.h.s8.bf16 %v855
      %v2040 = vunpack.c.h.s8.bf16 %v856
      %v2041 = vunpack.c.h.s8.bf16 %v857
      %v2042 = vunpack.c.h.s8.bf16 %v858
      %v2043 = vunpack.c.h.s8.bf16 %v859
      %v2044 = vunpack.c.h.s8.bf16 %v860
      %v2045 = vunpack.c.h.s8.bf16 %v861
      %v2046 = vunpack.c.l.s8.bf16 %v862
      %v2047 = vunpack.c.l.s8.bf16 %v863
      %v2048 = vunpack.c.l.s8.bf16 %v864
      %v2049 = vunpack.c.l.s8.bf16 %v865
      %v2050 = vunpack.c.l.s8.bf16 %v866
      %v2051 = vunpack.c.l.s8.bf16 %v867
      %v2052 = vunpack.c.l.s8.bf16 %v868
      %v2053 = vunpack.c.l.s8.bf16 %v869
      %v2054 = vunpack.c.h.s8.bf16 %v862
      %v2055 = vunpack.c.h.s8.bf16 %v863
      %v2056 = vunpack.c.h.s8.bf16 %v864
      %v2057 = vunpack.c.h.s8.bf16 %v865
      %v2058 = vunpack.c.h.s8.bf16 %v866
      %v2059 = vunpack.c.h.s8.bf16 %v867
      %v2060 = vunpack.c.h.s8.bf16 %v868
      %v2061 = vunpack.c.h.s8.bf16 %v869
      %v2062 = vunpack.c.l.s8.bf16 %v870
      %v2063 = vunpack.c.l.s8.bf16 %v871
      %v2064 = vunpack.c.l.s8.bf16 %v872
      %v2065 = vunpack.c.l.s8.bf16 %v873
      %v2066 = vunpack.c.l.s8.bf16 %v874
      %v2067 = vunpack.c.l.s8.bf16 %v875
      %v2068 = vunpack.c.l.s8.bf16 %v876
      %v2069 = vunpack.c.l.s8.bf16 %v877
      %v2070 = vunpack.c.h.s8.bf16 %v870
      %v2071 = vunpack.c.h.s8.bf16 %v871
      %v2072 = vunpack.c.h.s8.bf16 %v872
      %v2073 = vunpack.c.h.s8.bf16 %v873
      %v2074 = vunpack.c.h.s8.bf16 %v874
      %v2075 = vunpack.c.h.s8.bf16 %v875
      %v2076 = vunpack.c.h.s8.bf16 %v876
      %v2077 = vunpack.c.h.s8.bf16 %v877
      %v2078 = vunpack.c.l.s8.bf16 %v878
      %v2079 = vunpack.c.l.s8.bf16 %v879
      %v2080 = vunpack.c.l.s8.bf16 %v880
      %v2081 = vunpack.c.l.s8.bf16 %v881
      %v2082 = vunpack.c.l.s8.bf16 %v882
      %v2083 = vunpack.c.l.s8.bf16 %v883
      %v2084 = vunpack.c.l.s8.bf16 %v884
      %v2085 = vunpack.c.l.s8.bf16 %v885
      %v2086 = vunpack.c.h.s8.bf16 %v878
      %v2087 = vunpack.c.h.s8.bf16 %v879
      %v2088 = vunpack.c.h.s8.bf16 %v880
      %v2089 = vunpack.c.h.s8.bf16 %v881
      %v2090 = vunpack.c.h.s8.bf16 %v882
      %v2091 = vunpack.c.h.s8.bf16 %v883
      %v2092 = vunpack.c.h.s8.bf16 %v884
      %v2093 = vunpack.c.h.s8.bf16 %v885
      %v2094 = vunpack.c.l.s8.bf16 %v886
      %v2095 = vunpack.c.l.s8.bf16 %v887
      %v2096 = vunpack.c.l.s8.bf16 %v888
      %v2097 = vunpack.c.l.s8.bf16 %v889
      %v2098 = vunpack.c.l.s8.bf16 %v890
      %v2099 = vunpack.c.l.s8.bf16 %v891
      %v2100 = vunpack.c.l.s8.bf16 %v892
      %v2101 = vunpack.c.l.s8.bf16 %v893
      %v2102 = vunpack.c.h.s8.bf16 %v886
      %v2103 = vunpack.c.h.s8.bf16 %v887
      %v2104 = vunpack.c.h.s8.bf16 %v888
      %v2105 = vunpack.c.h.s8.bf16 %v889
      %v2106 = vunpack.c.h.s8.bf16 %v890
      %v2107 = vunpack.c.h.s8.bf16 %v891
      %v2108 = vunpack.c.h.s8.bf16 %v892
      %v2109 = vunpack.c.h.s8.bf16 %v893
      %v2110 = vunpack.c.l.s8.bf16 %v894
      %v2111 = vunpack.c.l.s8.bf16 %v895
      %v2112 = vunpack.c.l.s8.bf16 %v896
      %v2113 = vunpack.c.l.s8.bf16 %v897
      %v2114 = vunpack.c.l.s8.bf16 %v898
      %v2115 = vunpack.c.l.s8.bf16 %v899
      %v2116 = vunpack.c.l.s8.bf16 %v900
      %v2117 = vunpack.c.l.s8.bf16 %v901
      %v2118 = vunpack.c.h.s8.bf16 %v894
      %v2119 = vunpack.c.h.s8.bf16 %v895
      %v2120 = vunpack.c.h.s8.bf16 %v896
      %v2121 = vunpack.c.h.s8.bf16 %v897
      %v2122 = vunpack.c.h.s8.bf16 %v898
      %v2123 = vunpack.c.h.s8.bf16 %v899
      %v2124 = vunpack.c.h.s8.bf16 %v900
      %v2125 = vunpack.c.h.s8.bf16 %v901
      %v2126 = vunpack.c.l.s8.bf16 %v902
      %v2127 = vunpack.c.l.s8.bf16 %v903
      %v2128 = vunpack.c.l.s8.bf16 %v904
      %v2129 = vunpack.c.l.s8.bf16 %v905
      %v2130 = vunpack.c.l.s8.bf16 %v906
      %v2131 = vunpack.c.l.s8.bf16 %v907
      %v2132 = vunpack.c.l.s8.bf16 %v908
      %v2133 = vunpack.c.l.s8.bf16 %v909
      %v2134 = vunpack.c.h.s8.bf16 %v902
      %v2135 = vunpack.c.h.s8.bf16 %v903
      %v2136 = vunpack.c.h.s8.bf16 %v904
      %v2137 = vunpack.c.h.s8.bf16 %v905
      %v2138 = vunpack.c.h.s8.bf16 %v906
      %v2139 = vunpack.c.h.s8.bf16 %v907
      %v2140 = vunpack.c.h.s8.bf16 %v908
      %v2141 = vunpack.c.h.s8.bf16 %v909
      %v2142 = vunpack.c.l.s8.bf16 %v910
      %v2143 = vunpack.c.l.s8.bf16 %v911
      %v2144 = vunpack.c.l.s8.bf16 %v912
      %v2145 = vunpack.c.l.s8.bf16 %v913
      %v2146 = vunpack.c.l.s8.bf16 %v914
      %v2147 = vunpack.c.l.s8.bf16 %v915
      %v2148 = vunpack.c.l.s8.bf16 %v916
      %v2149 = vunpack.c.l.s8.bf16 %v917
      %v2150 = vunpack.c.h.s8.bf16 %v910
      %v2151 = vunpack.c.h.s8.bf16 %v911
      %v2152 = vunpack.c.h.s8.bf16 %v912
      %v2153 = vunpack.c.h.s8.bf16 %v913
      %v2154 = vunpack.c.h.s8.bf16 %v914
      %v2155 = vunpack.c.h.s8.bf16 %v915
      %v2156 = vunpack.c.h.s8.bf16 %v916
      %v2157 = vunpack.c.h.s8.bf16 %v917
      %v2158 = vunpack.c.l.s8.bf16 %v918
      %v2159 = vunpack.c.l.s8.bf16 %v919
      %v2160 = vunpack.c.l.s8.bf16 %v920
      %v2161 = vunpack.c.l.s8.bf16 %v921
      %v2162 = vunpack.c.l.s8.bf16 %v922
      %v2163 = vunpack.c.l.s8.bf16 %v923
      %v2164 = vunpack.c.l.s8.bf16 %v924
      %v2165 = vunpack.c.l.s8.bf16 %v925
      %v2166 = vunpack.c.h.s8.bf16 %v918
      %v2167 = vunpack.c.h.s8.bf16 %v919
      %v2168 = vunpack.c.h.s8.bf16 %v920
      %v2169 = vunpack.c.h.s8.bf16 %v921
      %v2170 = vunpack.c.h.s8.bf16 %v922
      %v2171 = vunpack.c.h.s8.bf16 %v923
      %v2172 = vunpack.c.h.s8.bf16 %v924
      %v2173 = vunpack.c.h.s8.bf16 %v925
      %v2174 = vunpack.c.l.s8.bf16 %v926
      %v2175 = vunpack.c.l.s8.bf16 %v927
      %v2176 = vunpack.c.l.s8.bf16 %v928
      %v2177 = vunpack.c.l.s8.bf16 %v929
      %v2178 = vunpack.c.l.s8.bf16 %v930
      %v2179 = vunpack.c.l.s8.bf16 %v931
      %v2180 = vunpack.c.l.s8.bf16 %v932
      %v2181 = vunpack.c.l.s8.bf16 %v933
      %v2182 = vunpack.c.h.s8.bf16 %v926
      %v2183 = vunpack.c.h.s8.bf16 %v927
      %v2184 = vunpack.c.h.s8.bf16 %v928
      %v2185 = vunpack.c.h.s8.bf16 %v929
      %v2186 = vunpack.c.h.s8.bf16 %v930
      %v2187 = vunpack.c.h.s8.bf16 %v931
      %v2188 = vunpack.c.h.s8.bf16 %v932
      %v2189 = vunpack.c.h.s8.bf16 %v933
      %v2190 = vunpack.c.l.s8.bf16 %v934
      %v2191 = vunpack.c.l.s8.bf16 %v935
      %v2192 = vunpack.c.l.s8.bf16 %v936
      %v2193 = vunpack.c.l.s8.bf16 %v937
      %v2194 = vunpack.c.l.s8.bf16 %v938
      %v2195 = vunpack.c.l.s8.bf16 %v939
      %v2196 = vunpack.c.l.s8.bf16 %v940
      %v2197 = vunpack.c.l.s8.bf16 %v941
      %v2198 = vunpack.c.h.s8.bf16 %v934
      %v2199 = vunpack.c.h.s8.bf16 %v935
      %v2200 = vunpack.c.h.s8.bf16 %v936
      %v2201 = vunpack.c.h.s8.bf16 %v937
      %v2202 = vunpack.c.h.s8.bf16 %v938
      %v2203 = vunpack.c.h.s8.bf16 %v939
      %v2204 = vunpack.c.h.s8.bf16 %v940
      %v2205 = vunpack.c.h.s8.bf16 %v941
      %v2206 = vunpack.c.l.s8.bf16 %v942
      %v2207 = vunpack.c.l.s8.bf16 %v943
      %v2208 = vunpack.c.l.s8.bf16 %v944
      %v2209 = vunpack.c.l.s8.bf16 %v945
      %v2210 = vunpack.c.l.s8.bf16 %v946
      %v2211 = vunpack.c.l.s8.bf16 %v947
      %v2212 = vunpack.c.l.s8.bf16 %v948
      %v2213 = vunpack.c.l.s8.bf16 %v949
      %v2214 = vunpack.c.h.s8.bf16 %v942
      %v2215 = vunpack.c.h.s8.bf16 %v943
      %v2216 = vunpack.c.h.s8.bf16 %v944
      %v2217 = vunpack.c.h.s8.bf16 %v945
      %v2218 = vunpack.c.h.s8.bf16 %v946
      %v2219 = vunpack.c.h.s8.bf16 %v947
      %v2220 = vunpack.c.h.s8.bf16 %v948
      %v2221 = vunpack.c.h.s8.bf16 %v949
      %v2222 = vunpack.c.l.s8.bf16 %v950
      %v2223 = vunpack.c.l.s8.bf16 %v951
      %v2224 = vunpack.c.l.s8.bf16 %v952
      %v2225 = vunpack.c.l.s8.bf16 %v953
      %v2226 = vunpack.c.l.s8.bf16 %v954
      %v2227 = vunpack.c.l.s8.bf16 %v955
      %v2228 = vunpack.c.l.s8.bf16 %v956
      %v2229 = vunpack.c.l.s8.bf16 %v957
      %v2230 = vunpack.c.h.s8.bf16 %v950
      %v2231 = vunpack.c.h.s8.bf16 %v951
      %v2232 = vunpack.c.h.s8.bf16 %v952
      %v2233 = vunpack.c.h.s8.bf16 %v953
      %v2234 = vunpack.c.h.s8.bf16 %v954
      %v2235 = vunpack.c.h.s8.bf16 %v955
      %v2236 = vunpack.c.h.s8.bf16 %v956
      %v2237 = vunpack.c.h.s8.bf16 %v957
      %v2238 = vunpack.c.l.s8.bf16 %v958
      %v2239 = vunpack.c.l.s8.bf16 %v959
      %v2240 = vunpack.c.l.s8.bf16 %v960
      %v2241 = vunpack.c.l.s8.bf16 %v961
      %v2242 = vunpack.c.l.s8.bf16 %v962
      %v2243 = vunpack.c.l.s8.bf16 %v963
      %v2244 = vunpack.c.l.s8.bf16 %v964
      %v2245 = vunpack.c.l.s8.bf16 %v965
      %v2246 = vunpack.c.h.s8.bf16 %v958
      %v2247 = vunpack.c.h.s8.bf16 %v959
      %v2248 = vunpack.c.h.s8.bf16 %v960
      %v2249 = vunpack.c.h.s8.bf16 %v961
      %v2250 = vunpack.c.h.s8.bf16 %v962
      %v2251 = vunpack.c.h.s8.bf16 %v963
      %v2252 = vunpack.c.h.s8.bf16 %v964
      %v2253 = vunpack.c.h.s8.bf16 %v965
      %v2254 = vunpack.c.l.s8.bf16 %v966
      %v2255 = vunpack.c.l.s8.bf16 %v967
      %v2256 = vunpack.c.l.s8.bf16 %v968
      %v2257 = vunpack.c.l.s8.bf16 %v969
      %v2258 = vunpack.c.l.s8.bf16 %v970
      %v2259 = vunpack.c.l.s8.bf16 %v971
      %v2260 = vunpack.c.l.s8.bf16 %v972
      %v2261 = vunpack.c.l.s8.bf16 %v973
      %v2262 = vunpack.c.h.s8.bf16 %v966
      %v2263 = vunpack.c.h.s8.bf16 %v967
      %v2264 = vunpack.c.h.s8.bf16 %v968
      %v2265 = vunpack.c.h.s8.bf16 %v969
      %v2266 = vunpack.c.h.s8.bf16 %v970
      %v2267 = vunpack.c.h.s8.bf16 %v971
      %v2268 = vunpack.c.h.s8.bf16 %v972
      %v2269 = vunpack.c.h.s8.bf16 %v973
      %v2270 = vunpack.c.l.s8.bf16 %v974
      %v2271 = vunpack.c.l.s8.bf16 %v975
      %v2272 = vunpack.c.l.s8.bf16 %v976
      %v2273 = vunpack.c.l.s8.bf16 %v977
      %v2274 = vunpack.c.l.s8.bf16 %v978
      %v2275 = vunpack.c.l.s8.bf16 %v979
      %v2276 = vunpack.c.l.s8.bf16 %v980
      %v2277 = vunpack.c.l.s8.bf16 %v981
      %v2278 = vunpack.c.h.s8.bf16 %v974
      %v2279 = vunpack.c.h.s8.bf16 %v975
      %v2280 = vunpack.c.h.s8.bf16 %v976
      %v2281 = vunpack.c.h.s8.bf16 %v977
      %v2282 = vunpack.c.h.s8.bf16 %v978
      %v2283 = vunpack.c.h.s8.bf16 %v979
      %v2284 = vunpack.c.h.s8.bf16 %v980
      %v2285 = vunpack.c.h.s8.bf16 %v981
      %v2286 = vunpack.c.l.s8.bf16 %v982
      %v2287 = vunpack.c.l.s8.bf16 %v983
      %v2288 = vunpack.c.l.s8.bf16 %v984
      %v2289 = vunpack.c.l.s8.bf16 %v985
      %v2290 = vunpack.c.l.s8.bf16 %v986
      %v2291 = vunpack.c.l.s8.bf16 %v987
      %v2292 = vunpack.c.l.s8.bf16 %v988
      %v2293 = vunpack.c.l.s8.bf16 %v989
      %v2294 = vunpack.c.h.s8.bf16 %v982
      %v2295 = vunpack.c.h.s8.bf16 %v983
      %v2296 = vunpack.c.h.s8.bf16 %v984
      %v2297 = vunpack.c.h.s8.bf16 %v985
      %v2298 = vunpack.c.h.s8.bf16 %v986
      %v2299 = vunpack.c.h.s8.bf16 %v987
      %v2300 = vunpack.c.h.s8.bf16 %v988
      %v2301 = vunpack.c.h.s8.bf16 %v989
      %v2302 = vunpack.c.l.s8.bf16 %v990
      %v2303 = vunpack.c.l.s8.bf16 %v991
      %v2304 = vunpack.c.l.s8.bf16 %v992
      %v2305 = vunpack.c.l.s8.bf16 %v993
      %v2306 = vunpack.c.l.s8.bf16 %v994
      %v2307 = vunpack.c.l.s8.bf16 %v995
      %v2308 = vunpack.c.l.s8.bf16 %v996
      %v2309 = vunpack.c.l.s8.bf16 %v997
      %v2310 = vunpack.c.h.s8.bf16 %v990
      %v2311 = vunpack.c.h.s8.bf16 %v991
      %v2312 = vunpack.c.h.s8.bf16 %v992
      %v2313 = vunpack.c.h.s8.bf16 %v993
      %v2314 = vunpack.c.h.s8.bf16 %v994
      %v2315 = vunpack.c.h.s8.bf16 %v995
      %v2316 = vunpack.c.h.s8.bf16 %v996
      %v2317 = vunpack.c.h.s8.bf16 %v997
      %v2318 = vunpack.c.l.s8.bf16 %v998
      %v2319 = vunpack.c.l.s8.bf16 %v999
      %v2320 = vunpack.c.l.s8.bf16 %v1000
      %v2321 = vunpack.c.l.s8.bf16 %v1001
      %v2322 = vunpack.c.l.s8.bf16 %v1002
      %v2323 = vunpack.c.l.s8.bf16 %v1003
      %v2324 = vunpack.c.l.s8.bf16 %v1004
      %v2325 = vunpack.c.l.s8.bf16 %v1005
      %v2326 = vunpack.c.h.s8.bf16 %v998
      %v2327 = vunpack.c.h.s8.bf16 %v999
      %v2328 = vunpack.c.h.s8.bf16 %v1000
      %v2329 = vunpack.c.h.s8.bf16 %v1001
      %v2330 = vunpack.c.h.s8.bf16 %v1002
      %v2331 = vunpack.c.h.s8.bf16 %v1003
      %v2332 = vunpack.c.h.s8.bf16 %v1004
      %v2333 = vunpack.c.h.s8.bf16 %v1005
      %v2334 = vunpack.c.l.s8.bf16 %v1006
      %v2335 = vunpack.c.l.s8.bf16 %v1007
      %v2336 = vunpack.c.l.s8.bf16 %v1008
      %v2337 = vunpack.c.l.s8.bf16 %v1009
      %v2338 = vunpack.c.l.s8.bf16 %v1010
      %v2339 = vunpack.c.l.s8.bf16 %v1011
      %v2340 = vunpack.c.l.s8.bf16 %v1012
      %v2341 = vunpack.c.l.s8.bf16 %v1013
      %v2342 = vunpack.c.h.s8.bf16 %v1006
      %v2343 = vunpack.c.h.s8.bf16 %v1007
      %v2344 = vunpack.c.h.s8.bf16 %v1008
      %v2345 = vunpack.c.h.s8.bf16 %v1009
      %v2346 = vunpack.c.h.s8.bf16 %v1010
      %v2347 = vunpack.c.h.s8.bf16 %v1011
      %v2348 = vunpack.c.h.s8.bf16 %v1012
      %v2349 = vunpack.c.h.s8.bf16 %v1013
      %v2350 = vunpack.c.l.s8.bf16 %v1014
      %v2351 = vunpack.c.l.s8.bf16 %v1015
      %v2352 = vunpack.c.l.s8.bf16 %v1016
      %v2353 = vunpack.c.l.s8.bf16 %v1017
      %v2354 = vunpack.c.l.s8.bf16 %v1018
      %v2355 = vunpack.c.l.s8.bf16 %v1019
      %v2356 = vunpack.c.l.s8.bf16 %v1020
      %v2357 = vunpack.c.l.s8.bf16 %v1021
      %v2358 = vunpack.c.h.s8.bf16 %v1014
      %v2359 = vunpack.c.h.s8.bf16 %v1015
      %v2360 = vunpack.c.h.s8.bf16 %v1016
      %v2361 = vunpack.c.h.s8.bf16 %v1017
      %v2362 = vunpack.c.h.s8.bf16 %v1018
      %v2363 = vunpack.c.h.s8.bf16 %v1019
      %v2364 = vunpack.c.h.s8.bf16 %v1020
      %v2365 = vunpack.c.h.s8.bf16 %v1021
      %v2377 = vunpack.c.l.b16 %v339
      %v2378 = vunpack.c.h.b16 %v339
      %v2379 = vunpack.c.l.b16 %v340
      %v2380 = vunpack.c.h.b16 %v340
      %v2381 = vunpack.c.l.b16 %v341
      %v2382 = vunpack.c.h.b16 %v341
      %v2383 = vunpack.c.l.b16 %v342
      %v2384 = vunpack.c.h.b16 %v342
      %v2385 = vunpack.c.l.b16 %v343
      %v2386 = vunpack.c.h.b16 %v343
      %v2387 = vunpack.c.l.b16 %v344
      %v2388 = vunpack.c.h.b16 %v344
      %v2389 = vunpack.c.l.b16 %v345
      %v2390 = vunpack.c.h.b16 %v345
      %v2391 = vunpack.c.l.b16 %v346
      %v2392 = vunpack.c.h.b16 %v346
      %v2393 = vunpack.c.l.b16 %v347
      %v2394 = vunpack.c.h.b16 %v347
      %v2395 = vunpack.c.l.b16 %v348
      %v2396 = vunpack.c.h.b16 %v348
      %v2397 = vunpack.c.l.b16 %v349
      %v2398 = vpack.c.b16 %v2377, %v2377
      %v2399 = vpack.c.b16 %v2378, %v2378
      %v2400 = vpack.c.b16 %v2379, %v2379
      %v2401 = vpack.c.b16 %v2380, %v2380
      %v2402 = vpack.c.b16 %v2381, %v2381
      %v2403 = vpack.c.b16 %v2382, %v2382
      %v2404 = vpack.c.b16 %v2383, %v2383
      %v2405 = vpack.c.b16 %v2384, %v2384
      %v2406 = vpack.c.b16 %v2385, %v2385
      %v2407 = vpack.c.b16 %v2386, %v2386
      %v2408 = vpack.c.b16 %v2387, %v2387
      %v2409 = vpack.c.b16 %v2388, %v2388
      %v2410 = vpack.c.b16 %v2389, %v2389
      %v2411 = vpack.c.b16 %v2390, %v2390
      %v2412 = vpack.c.b16 %v2391, %v2391
      %v2413 = vpack.c.b16 %v2392, %v2392
      %v2414 = vpack.c.b16 %v2393, %v2393
      %v2415 = vpack.c.b16 %v2394, %v2394
      %v2416 = vpack.c.b16 %v2395, %v2395
      %v2417 = vpack.c.b16 %v2396, %v2396
      %v2418 = vpack.c.b16 %v2397, %v2397
      %2440 = vmatprep.subr.bf16.mxu0 %v1023
      %2441 = vmatpush1.bf16.msra.mxu0 %v1022
      %2442 = vmatprep.subr.bf16.mxu0 %v1031
      %2443 = vmatpush1.bf16.msra.mxu0 %v1030
      %2444 = vmatprep.subr.bf16.mxu0 %v1039
      %2445 = vmatpush1.bf16.msra.mxu0 %v1038
      %2446 = vmatprep.subr.bf16.mxu0 %v1047
      %2447 = vmatpush1.bf16.msra.mxu0 %v1046
      %2448 = vmatprep.subr.bf16.mxu0 %v1055
      %2449 = vmatpush1.bf16.msra.mxu0 %v1054
      %2450 = vmatprep.subr.bf16.mxu0 %v1063
      %2451 = vmatpush1.bf16.msra.mxu0 %v1062
      %2452 = vmatprep.subr.bf16.mxu0 %v1071
      %2453 = vmatpush1.bf16.msra.mxu0 %v1070
      %2454 = vmatprep.subr.bf16.mxu0 %v1079
      %2455 = vmatpush1.bf16.msra.mxu0 %v1078
      %2456 = vmatprep.subr.bf16.mxu0 %v1087
      %2457 = vmatpush1.bf16.msra.mxu0 %v1086
      %2458 = vmatprep.subr.bf16.mxu0 %v1095
      %2459 = vmatpush1.bf16.msra.mxu0 %v1094
      %2460 = vmatprep.subr.bf16.mxu0 %v1103
      %2461 = vmatpush1.bf16.msra.mxu0 %v1102
      %2462 = vmatprep.subr.bf16.mxu0 %v1111
      %2463 = vmatpush1.bf16.msra.mxu0 %v1110
      %2464 = vmatprep.subr.bf16.mxu0 %v1119
      %2465 = vmatpush1.bf16.msra.mxu0 %v1118
      %2466 = vmatprep.subr.bf16.mxu0 %v1127
      %2467 = vmatpush1.bf16.msra.mxu0 %v1126
      %2468 = vmatprep.subr.bf16.mxu0 %v1135
      %2469 = vmatpush1.bf16.msra.mxu0 %v1134
      %2470 = vmatprep.subr.bf16.mxu0 %v1143
      %2471 = vmatpush1.bf16.msra.mxu0 %v1142
      %2472 = vmatprep.mubr.bf16.mxu0 %v2399
      %2473 = vmatmul.mubr.bf16.gmra.mrb[0].mxu0 %v2398
      %v2474 = vpop.f32.mrb[0].mxu0
      %v2475 = vadd.f32 0.0, %v2474
      %v2476 = vpop.f32.mrb[0].mxu0
      %v2477 = vadd.f32 0.0, %v2476
      %v2478 = vpop.f32.mrb[0].mxu0
      %v2479 = vpop.f32.mrb[0].mxu0
      %2480 = vdwg.mxu0
      %2481 = vmatprep.subr.bf16.mxu0 %v1151
      %2482 = vmatpush1.bf16.msra.mxu0 %v1150
      %2483 = vmatprep.subr.bf16.mxu0 %v1159
      %2484 = vmatpush1.bf16.msra.mxu0 %v1158
      %2485 = vmatprep.subr.bf16.mxu0 %v1167
      %2486 = vmatpush1.bf16.msra.mxu0 %v1166
      %2487 = vmatprep.subr.bf16.mxu0 %v1175
      %2488 = vmatpush1.bf16.msra.mxu0 %v1174
      %2489 = vmatprep.subr.bf16.mxu0 %v1183
      %2490 = vmatpush1.bf16.msra.mxu0 %v1182
      %2491 = vmatprep.subr.bf16.mxu0 %v1191
      %2492 = vmatpush1.bf16.msra.mxu0 %v1190
      %2493 = vmatprep.subr.bf16.mxu0 %v1199
      %2494 = vmatpush1.bf16.msra.mxu0 %v1198
      %2495 = vmatprep.subr.bf16.mxu0 %v1207
      %2496 = vmatpush1.bf16.msra.mxu0 %v1206
      %2497 = vmatprep.subr.bf16.mxu0 %v1215
      %2498 = vmatpush1.bf16.msra.mxu0 %v1214
      %2499 = vmatprep.subr.bf16.mxu0 %v1223
      %2500 = vmatpush1.bf16.msra.mxu0 %v1222
      %2501 = vmatprep.subr.bf16.mxu0 %v1231
      %2502 = vmatpush1.bf16.msra.mxu0 %v1230
      %2503 = vmatprep.subr.bf16.mxu0 %v1239
      %2504 = vmatpush1.bf16.msra.mxu0 %v1238
      %2505 = vmatprep.subr.bf16.mxu0 %v1247
      %2506 = vmatpush1.bf16.msra.mxu0 %v1246
      %2507 = vmatprep.subr.bf16.mxu0 %v1255
      %2508 = vmatpush1.bf16.msra.mxu0 %v1254
      %2509 = vmatprep.subr.bf16.mxu0 %v1263
      %2510 = vmatpush1.bf16.msra.mxu0 %v1262
      %2511 = vmatprep.subr.bf16.mxu0 %v1271
      %2512 = vmatpush1.bf16.msra.mxu0 %v1270
      %2513 = vmatprep.mubr.bf16.mxu0 %v2401
      %2514 = vmatmul.mubr.bf16.gmra.mrb[0].mxu0 %v2400
      %v2515 = vpop.f32.mrb[0].mxu0
      %v2516 = vadd.f32 %v2475, %v2515
      %v2517 = vpop.f32.mrb[0].mxu0
      %v2518 = vadd.f32 %v2477, %v2517
      %v2519 = vpop.f32.mrb[0].mxu0
      %v2520 = vpop.f32.mrb[0].mxu0
      %2521 = vdwg.mxu0
      %2522 = vmatprep.subr.bf16.mxu0 %v1279
      %2523 = vmatpush1.bf16.msra.mxu0 %v1278
      %2524 = vmatprep.subr.bf16.mxu0 %v1287
      %2525 = vmatpush1.bf16.msra.mxu0 %v1286
      %2526 = vmatprep.subr.bf16.mxu0 %v1295
      %2527 = vmatpush1.bf16.msra.mxu0 %v1294
      %2528 = vmatprep.subr.bf16.mxu0 %v1303
      %2529 = vmatpush1.bf16.msra.mxu0 %v1302
      %2530 = vmatprep.subr.bf16.mxu0 %v1311
      %2531 = vmatpush1.bf16.msra.mxu0 %v1310
      %2532 = vmatprep.subr.bf16.mxu0 %v1319
      %2533 = vmatpush1.bf16.msra.mxu0 %v1318
      %2534 = vmatprep.subr.bf16.mxu0 %v1327
      %2535 = vmatpush1.bf16.msra.mxu0 %v1326
      %2536 = vmatprep.subr.bf16.mxu0 %v1335
      %2537 = vmatpush1.bf16.msra.mxu0 %v1334
      %2538 = vmatprep.subr.bf16.mxu0 %v1343
      %2539 = vmatpush1.bf16.msra.mxu0 %v1342
      %2540 = vmatprep.subr.bf16.mxu0 %v1351
      %2541 = vmatpush1.bf16.msra.mxu0 %v1350
      %2542 = vmatprep.subr.bf16.mxu0 %v1359
      %2543 = vmatpush1.bf16.msra.mxu0 %v1358
      %2544 = vmatprep.subr.bf16.mxu0 %v1367
      %2545 = vmatpush1.bf16.msra.mxu0 %v1366
      %2546 = vmatprep.subr.bf16.mxu0 %v1375
      %2547 = vmatpush1.bf16.msra.mxu0 %v1374
      %2548 = vmatprep.subr.bf16.mxu0 %v1383
      %2549 = vmatpush1.bf16.msra.mxu0 %v1382
      %2550 = vmatprep.subr.bf16.mxu0 %v1391
      %2551 = vmatpush1.bf16.msra.mxu0 %v1390
      %2552 = vmatprep.subr.bf16.mxu0 %v1399
      %2553 = vmatpush1.bf16.msra.mxu0 %v1398
      %2554 = vmatprep.mubr.bf16.mxu0 %v2403
      %2555 = vmatmul.mubr.bf16.gmra.mrb[0].mxu0 %v2402
      %v2556 = vpop.f32.mrb[0].mxu0
      %v2557 = vadd.f32 %v2516, %v2556
      %v2558 = vpop.f32.mrb[0].mxu0
      %v2559 = vadd.f32 %v2518, %v2558
      %v2560 = vpop.f32.mrb[0].mxu0
      %v2561 = vpop.f32.mrb[0].mxu0
      %2562 = vdwg.mxu0
      %2563 = vmatprep.subr.bf16.mxu0 %v1407
      %2564 = vmatpush1.bf16.msra.mxu0 %v1406
      %2565 = vmatprep.subr.bf16.mxu0 %v1415
      %2566 = vmatpush1.bf16.msra.mxu0 %v1414
      %2567 = vmatprep.subr.bf16.mxu0 %v1423
      %2568 = vmatpush1.bf16.msra.mxu0 %v1422
      %2569 = vmatprep.subr.bf16.mxu0 %v1431
      %2570 = vmatpush1.bf16.msra.mxu0 %v1430
      %2571 = vmatprep.subr.bf16.mxu0 %v1439
      %2572 = vmatpush1.bf16.msra.mxu0 %v1438
      %2573 = vmatprep.subr.bf16.mxu0 %v1447
      %2574 = vmatpush1.bf16.msra.mxu0 %v1446
      %2575 = vmatprep.subr.bf16.mxu0 %v1455
      %2576 = vmatpush1.bf16.msra.mxu0 %v1454
      %2577 = vmatprep.subr.bf16.mxu0 %v1463
      %2578 = vmatpush1.bf16.msra.mxu0 %v1462
      %2579 = vmatprep.subr.bf16.mxu0 %v1471
      %2580 = vmatpush1.bf16.msra.mxu0 %v1470
      %2581 = vmatprep.subr.bf16.mxu0 %v1479
      %2582 = vmatpush1.bf16.msra.mxu0 %v1478
      %2583 = vmatprep.subr.bf16.mxu0 %v1487
      %2584 = vmatpush1.bf16.msra.mxu0 %v1486
      %2585 = vmatprep.subr.bf16.mxu0 %v1495
      %2586 = vmatpush1.bf16.msra.mxu0 %v1494
      %2587 = vmatprep.subr.bf16.mxu0 %v1503
      %2588 = vmatpush1.bf16.msra.mxu0 %v1502
      %2589 = vmatprep.subr.bf16.mxu0 %v1511
      %2590 = vmatpush1.bf16.msra.mxu0 %v1510
      %2591 = vmatprep.subr.bf16.mxu0 %v1519
      %2592 = vmatpush1.bf16.msra.mxu0 %v1518
      %2593 = vmatprep.subr.bf16.mxu0 %v1527
      %2594 = vmatpush1.bf16.msra.mxu0 %v1526
      %2595 = vmatprep.mubr.bf16.mxu0 %v2405
      %2596 = vmatmul.mubr.bf16.gmra.mrb[0].mxu0 %v2404
      %v2597 = vpop.f32.mrb[0].mxu0
      %v2598 = vadd.f32 %v2557, %v2597
      %v2599 = vpop.f32.mrb[0].mxu0
      %v2600 = vadd.f32 %v2559, %v2599
      %v2601 = vpop.f32.mrb[0].mxu0
      %v2602 = vpop.f32.mrb[0].mxu0
      %2603 = vdwg.mxu0
      %2604 = vmatprep.subr.bf16.mxu0 %v1535
      %2605 = vmatpush1.bf16.msra.mxu0 %v1534
      %2606 = vmatprep.subr.bf16.mxu0 %v1543
      %2607 = vmatpush1.bf16.msra.mxu0 %v1542
      %2608 = vmatprep.subr.bf16.mxu0 %v1551
      %2609 = vmatpush1.bf16.msra.mxu0 %v1550
      %2610 = vmatprep.subr.bf16.mxu0 %v1559
      %2611 = vmatpush1.bf16.msra.mxu0 %v1558
      %2612 = vmatprep.subr.bf16.mxu0 %v1567
      %2613 = vmatpush1.bf16.msra.mxu0 %v1566
      %2614 = vmatprep.subr.bf16.mxu0 %v1575
      %2615 = vmatpush1.bf16.msra.mxu0 %v1574
      %2616 = vmatprep.subr.bf16.mxu0 %v1583
      %2617 = vmatpush1.bf16.msra.mxu0 %v1582
      %2618 = vmatprep.subr.bf16.mxu0 %v1591
      %2619 = vmatpush1.bf16.msra.mxu0 %v1590
      %2620 = vmatprep.subr.bf16.mxu0 %v1599
      %2621 = vmatpush1.bf16.msra.mxu0 %v1598
      %2622 = vmatprep.subr.bf16.mxu0 %v1607
      %2623 = vmatpush1.bf16.msra.mxu0 %v1606
      %2624 = vmatprep.subr.bf16.mxu0 %v1615
      %2625 = vmatpush1.bf16.msra.mxu0 %v1614
      %2626 = vmatprep.subr.bf16.mxu0 %v1623
      %2627 = vmatpush1.bf16.msra.mxu0 %v1622
      %2628 = vmatprep.subr.bf16.mxu0 %v1631
      %2629 = vmatpush1.bf16.msra.mxu0 %v1630
      %2630 = vmatprep.subr.bf16.mxu0 %v1639
      %2631 = vmatpush1.bf16.msra.mxu0 %v1638
      %2632 = vmatprep.subr.bf16.mxu0 %v1647
      %2633 = vmatpush1.bf16.msra.mxu0 %v1646
      %2634 = vmatprep.subr.bf16.mxu0 %v1655
      %2635 = vmatpush1.bf16.msra.mxu0 %v1654
      %2636 = vmatprep.mubr.bf16.mxu0 %v2407
      %2637 = vmatmul.mubr.bf16.gmra.mrb[0].mxu0 %v2406
      %v2638 = vpop.f32.mrb[0].mxu0
      %v2639 = vadd.f32 %v2598, %v2638
      %v2640 = vpop.f32.mrb[0].mxu0
      %v2641 = vadd.f32 %v2600, %v2640
      %v2642 = vpop.f32.mrb[0].mxu0
      %v2643 = vpop.f32.mrb[0].mxu0
      %2644 = vdwg.mxu0
      %2645 = vmatprep.subr.bf16.mxu0 %v1663
      %2646 = vmatpush1.bf16.msra.mxu0 %v1662
      %2647 = vmatprep.subr.bf16.mxu0 %v1671
      %2648 = vmatpush1.bf16.msra.mxu0 %v1670
      %2649 = vmatprep.subr.bf16.mxu0 %v1679
      %2650 = vmatpush1.bf16.msra.mxu0 %v1678
      %2651 = vmatprep.subr.bf16.mxu0 %v1687
      %2652 = vmatpush1.bf16.msra.mxu0 %v1686
      %2653 = vmatprep.subr.bf16.mxu0 %v1695
      %2654 = vmatpush1.bf16.msra.mxu0 %v1694
      %2655 = vmatprep.subr.bf16.mxu0 %v1703
      %2656 = vmatpush1.bf16.msra.mxu0 %v1702
      %2657 = vmatprep.subr.bf16.mxu0 %v1711
      %2658 = vmatpush1.bf16.msra.mxu0 %v1710
      %2659 = vmatprep.subr.bf16.mxu0 %v1719
      %2660 = vmatpush1.bf16.msra.mxu0 %v1718
      %2661 = vmatprep.subr.bf16.mxu0 %v1727
      %2662 = vmatpush1.bf16.msra.mxu0 %v1726
      %2663 = vmatprep.subr.bf16.mxu0 %v1735
      %2664 = vmatpush1.bf16.msra.mxu0 %v1734
      %2665 = vmatprep.subr.bf16.mxu0 %v1743
      %2666 = vmatpush1.bf16.msra.mxu0 %v1742
      %2667 = vmatprep.subr.bf16.mxu0 %v1751
      %2668 = vmatpush1.bf16.msra.mxu0 %v1750
      %2669 = vmatprep.subr.bf16.mxu0 %v1759
      %2670 = vmatpush1.bf16.msra.mxu0 %v1758
      %2671 = vmatprep.subr.bf16.mxu0 %v1767
      %2672 = vmatpush1.bf16.msra.mxu0 %v1766
      %2673 = vmatprep.subr.bf16.mxu0 %v1775
      %2674 = vmatpush1.bf16.msra.mxu0 %v1774
      %2675 = vmatprep.subr.bf16.mxu0 %v1783
      %2676 = vmatpush1.bf16.msra.mxu0 %v1782
      %2677 = vmatprep.mubr.bf16.mxu0 %v2409
      %2678 = vmatmul.mubr.bf16.gmra.mrb[0].mxu0 %v2408
      %v2679 = vpop.f32.mrb[0].mxu0
      %v2680 = vadd.f32 %v2639, %v2679
      %v2681 = vpop.f32.mrb[0].mxu0
      %v2682 = vadd.f32 %v2641, %v2681
      %v2683 = vpop.f32.mrb[0].mxu0
      %v2684 = vpop.f32.mrb[0].mxu0
      %2685 = vdwg.mxu0
      %2686 = vmatprep.subr.bf16.mxu0 %v1791
      %2687 = vmatpush1.bf16.msra.mxu0 %v1790
      %2688 = vmatprep.subr.bf16.mxu0 %v1799
      %2689 = vmatpush1.bf16.msra.mxu0 %v1798
      %2690 = vmatprep.subr.bf16.mxu0 %v1807
      %2691 = vmatpush1.bf16.msra.mxu0 %v1806
      %2692 = vmatprep.subr.bf16.mxu0 %v1815
      %2693 = vmatpush1.bf16.msra.mxu0 %v1814
      %2694 = vmatprep.subr.bf16.mxu0 %v1823
      %2695 = vmatpush1.bf16.msra.mxu0 %v1822
      %2696 = vmatprep.subr.bf16.mxu0 %v1831
      %2697 = vmatpush1.bf16.msra.mxu0 %v1830
      %2698 = vmatprep.subr.bf16.mxu0 %v1839
      %2699 = vmatpush1.bf16.msra.mxu0 %v1838
      %2700 = vmatprep.subr.bf16.mxu0 %v1847
      %2701 = vmatpush1.bf16.msra.mxu0 %v1846
      %2702 = vmatprep.subr.bf16.mxu0 %v1855
      %2703 = vmatpush1.bf16.msra.mxu0 %v1854
      %2704 = vmatprep.subr.bf16.mxu0 %v1863
      %2705 = vmatpush1.bf16.msra.mxu0 %v1862
      %2706 = vmatprep.subr.bf16.mxu0 %v1871
      %2707 = vmatpush1.bf16.msra.mxu0 %v1870
      %2708 = vmatprep.subr.bf16.mxu0 %v1879
      %2709 = vmatpush1.bf16.msra.mxu0 %v1878
      %2710 = vmatprep.subr.bf16.mxu0 %v1887
      %2711 = vmatpush1.bf16.msra.mxu0 %v1886
      %2712 = vmatprep.subr.bf16.mxu0 %v1895
      %2713 = vmatpush1.bf16.msra.mxu0 %v1894
      %2714 = vmatprep.subr.bf16.mxu0 %v1903
      %2715 = vmatpush1.bf16.msra.mxu0 %v1902
      %2716 = vmatprep.subr.bf16.mxu0 %v1911
      %2717 = vmatpush1.bf16.msra.mxu0 %v1910
      %2718 = vmatprep.mubr.bf16.mxu0 %v2411
      %2719 = vmatmul.mubr.bf16.gmra.mrb[0].mxu0 %v2410
      %v2720 = vpop.f32.mrb[0].mxu0
      %v2721 = vadd.f32 %v2680, %v2720
      %v2722 = vpop.f32.mrb[0].mxu0
      %v2723 = vadd.f32 %v2682, %v2722
      %v2724 = vpop.f32.mrb[0].mxu0
      %v2725 = vpop.f32.mrb[0].mxu0
      %2726 = vdwg.mxu0
      %2727 = vmatprep.subr.bf16.mxu0 %v1919
      %2728 = vmatpush1.bf16.msra.mxu0 %v1918
      %2729 = vmatprep.subr.bf16.mxu0 %v1927
      %2730 = vmatpush1.bf16.msra.mxu0 %v1926
      %2731 = vmatprep.subr.bf16.mxu0 %v1935
      %2732 = vmatpush1.bf16.msra.mxu0 %v1934
      %2733 = vmatprep.subr.bf16.mxu0 %v1943
      %2734 = vmatpush1.bf16.msra.mxu0 %v1942
      %2735 = vmatprep.subr.bf16.mxu0 %v1951
      %2736 = vmatpush1.bf16.msra.mxu0 %v1950
      %2737 = vmatprep.subr.bf16.mxu0 %v1959
      %2738 = vmatpush1.bf16.msra.mxu0 %v1958
      %2739 = vmatprep.subr.bf16.mxu0 %v1967
      %2740 = vmatpush1.bf16.msra.mxu0 %v1966
      %2741 = vmatprep.subr.bf16.mxu0 %v1975
      %2742 = vmatpush1.bf16.msra.mxu0 %v1974
      %2743 = vmatprep.subr.bf16.mxu0 %v1983
      %2744 = vmatpush1.bf16.msra.mxu0 %v1982
      %2745 = vmatprep.subr.bf16.mxu0 %v1991
      %2746 = vmatpush1.bf16.msra.mxu0 %v1990
      %2747 = vmatprep.subr.bf16.mxu0 %v1999
      %2748 = vmatpush1.bf16.msra.mxu0 %v1998
      %2749 = vmatprep.subr.bf16.mxu0 %v2007
      %2750 = vmatpush1.bf16.msra.mxu0 %v2006
      %2751 = vmatprep.subr.bf16.mxu0 %v2015
      %2752 = vmatpush1.bf16.msra.mxu0 %v2014
      %2753 = vmatprep.subr.bf16.mxu0 %v2023
      %2754 = vmatpush1.bf16.msra.mxu0 %v2022
      %2755 = vmatprep.subr.bf16.mxu0 %v2031
      %2756 = vmatpush1.bf16.msra.mxu0 %v2030
      %2757 = vmatprep.subr.bf16.mxu0 %v2039
      %2758 = vmatpush1.bf16.msra.mxu0 %v2038
      %2759 = vmatprep.mubr.bf16.mxu0 %v2413
      %2760 = vmatmul.mubr.bf16.gmra.mrb[0].mxu0 %v2412
      %v2761 = vpop.f32.mrb[0].mxu0
      %v2762 = vadd.f32 %v2721, %v2761
      %v2763 = vpop.f32.mrb[0].mxu0
      %v2764 = vadd.f32 %v2723, %v2763
      %v2765 = vpop.f32.mrb[0].mxu0
      %v2766 = vpop.f32.mrb[0].mxu0
      %2767 = vdwg.mxu0
      %2768 = vmatprep.subr.bf16.mxu0 %v2047
      %2769 = vmatpush1.bf16.msra.mxu0 %v2046
      %2770 = vmatprep.subr.bf16.mxu0 %v2055
      %2771 = vmatpush1.bf16.msra.mxu0 %v2054
      %2772 = vmatprep.subr.bf16.mxu0 %v2063
      %2773 = vmatpush1.bf16.msra.mxu0 %v2062
      %2774 = vmatprep.subr.bf16.mxu0 %v2071
      %2775 = vmatpush1.bf16.msra.mxu0 %v2070
      %2776 = vmatprep.subr.bf16.mxu0 %v2079
      %2777 = vmatpush1.bf16.msra.mxu0 %v2078
      %2778 = vmatprep.subr.bf16.mxu0 %v2087
      %2779 = vmatpush1.bf16.msra.mxu0 %v2086
      %2780 = vmatprep.subr.bf16.mxu0 %v2095
      %2781 = vmatpush1.bf16.msra.mxu0 %v2094
      %2782 = vmatprep.subr.bf16.mxu0 %v2103
      %2783 = vmatpush1.bf16.msra.mxu0 %v2102
      %2784 = vmatprep.subr.bf16.mxu0 %v2111
      %2785 = vmatpush1.bf16.msra.mxu0 %v2110
      %2786 = vmatprep.subr.bf16.mxu0 %v2119
      %2787 = vmatpush1.bf16.msra.mxu0 %v2118
      %2788 = vmatprep.subr.bf16.mxu0 %v2127
      %2789 = vmatpush1.bf16.msra.mxu0 %v2126
      %2790 = vmatprep.subr.bf16.mxu0 %v2135
      %2791 = vmatpush1.bf16.msra.mxu0 %v2134
      %2792 = vmatprep.subr.bf16.mxu0 %v2143
      %2793 = vmatpush1.bf16.msra.mxu0 %v2142
      %2794 = vmatprep.subr.bf16.mxu0 %v2151
      %2795 = vmatpush1.bf16.msra.mxu0 %v2150
      %2796 = vmatprep.subr.bf16.mxu0 %v2159
      %2797 = vmatpush1.bf16.msra.mxu0 %v2158
      %2798 = vmatprep.subr.bf16.mxu0 %v2167
      %2799 = vmatpush1.bf16.msra.mxu0 %v2166
      %2800 = vmatprep.mubr.bf16.mxu0 %v2415
      %2801 = vmatmul.mubr.bf16.gmra.mrb[0].mxu0 %v2414
      %v2802 = vpop.f32.mrb[0].mxu0
      %v2803 = vadd.f32 %v2762, %v2802
      %v2804 = vpop.f32.mrb[0].mxu0
      %v2805 = vadd.f32 %v2764, %v2804
      %v2806 = vpop.f32.mrb[0].mxu0
      %v2807 = vpop.f32.mrb[0].mxu0
      %2808 = vdwg.mxu0
      %2809 = vmatprep.subr.bf16.mxu0 %v2175
      %2810 = vmatpush1.bf16.msra.mxu0 %v2174
      %2811 = vmatprep.subr.bf16.mxu0 %v2183
      %2812 = vmatpush1.bf16.msra.mxu0 %v2182
      %2813 = vmatprep.subr.bf16.mxu0 %v2191
      %2814 = vmatpush1.bf16.msra.mxu0 %v2190
      %2815 = vmatprep.subr.bf16.mxu0 %v2199
      %2816 = vmatpush1.bf16.msra.mxu0 %v2198
      %2817 = vmatprep.subr.bf16.mxu0 %v2207
      %2818 = vmatpush1.bf16.msra.mxu0 %v2206
      %2819 = vmatprep.subr.bf16.mxu0 %v2215
      %2820 = vmatpush1.bf16.msra.mxu0 %v2214
      %2821 = vmatprep.subr.bf16.mxu0 %v2223
      %2822 = vmatpush1.bf16.msra.mxu0 %v2222
      %2823 = vmatprep.subr.bf16.mxu0 %v2231
      %2824 = vmatpush1.bf16.msra.mxu0 %v2230
      %2825 = vmatprep.subr.bf16.mxu0 %v2239
      %2826 = vmatpush1.bf16.msra.mxu0 %v2238
      %2827 = vmatprep.subr.bf16.mxu0 %v2247
      %2828 = vmatpush1.bf16.msra.mxu0 %v2246
      %2829 = vmatprep.subr.bf16.mxu0 %v2255
      %2830 = vmatpush1.bf16.msra.mxu0 %v2254
      %2831 = vmatprep.subr.bf16.mxu0 %v2263
      %2832 = vmatpush1.bf16.msra.mxu0 %v2262
      %2833 = vmatprep.subr.bf16.mxu0 %v2271
      %2834 = vmatpush1.bf16.msra.mxu0 %v2270
      %2835 = vmatprep.subr.bf16.mxu0 %v2279
      %2836 = vmatpush1.bf16.msra.mxu0 %v2278
      %2837 = vmatprep.subr.bf16.mxu0 %v2287
      %2838 = vmatpush1.bf16.msra.mxu0 %v2286
      %2839 = vmatprep.subr.bf16.mxu0 %v2295
      %2840 = vmatpush1.bf16.msra.mxu0 %v2294
      %2841 = vmatprep.mubr.bf16.mxu0 %v2417
      %2842 = vmatmul.mubr.bf16.gmra.mrb[0].mxu0 %v2416
      %v2843 = vpop.f32.mrb[0].mxu0
      %v2844 = vadd.f32 %v2803, %v2843
      %v2845 = vpop.f32.mrb[0].mxu0
      %v2846 = vadd.f32 %v2805, %v2845
      %v2847 = vpop.f32.mrb[0].mxu0
      %v2848 = vpop.f32.mrb[0].mxu0
      %2849 = vdwg.mxu0
      %2850 = vmatprep.subr.bf16.mxu0 %v2303
      %2851 = vmatpush1.bf16.msra.mxu0 %v2302
      %2852 = vmatprep.subr.bf16.mxu0 %v2311
      %2853 = vmatpush1.bf16.msra.mxu0 %v2310
      %2854 = vmatprep.subr.bf16.mxu0 %v2319
      %2855 = vmatpush1.bf16.msra.mxu0 %v2318
      %2856 = vmatprep.subr.bf16.mxu0 %v2327
      %2857 = vmatpush1.bf16.msra.mxu0 %v2326
      %2858 = vmatprep.subr.bf16.mxu0 %v2335
      %2859 = vmatpush1.bf16.msra.mxu0 %v2334
      %2860 = vmatprep.subr.bf16.mxu0 %v2343
      %2861 = vmatpush1.bf16.msra.mxu0 %v2342
      %2862 = vmatprep.subr.bf16.mxu0 %v2351
      %2863 = vmatpush1.bf16.msra.mxu0 %v2350
      %2864 = vmatprep.subr.bf16.mxu0 %v2359
      %2865 = vmatpush1.bf16.msra.mxu0 %v2358
      %2866 = vmatprep.subr.bf16.mxu0 0
      %2867 = vmatpush1.bf16.msra.mxu0 0
      %2868 = vmatprep.subr.bf16.mxu0 0
      %2869 = vmatpush1.bf16.msra.mxu0 0
      %2870 = vmatprep.subr.bf16.mxu0 0
      %2871 = vmatpush1.bf16.msra.mxu0 0
      %2872 = vmatprep.subr.bf16.mxu0 0
      %2873 = vmatpush1.bf16.msra.mxu0 0
      %2874 = vmatprep.subr.bf16.mxu0 0
      %2875 = vmatpush1.bf16.msra.mxu0 0
      %2876 = vmatprep.subr.bf16.mxu0 0
      %2877 = vmatpush1.bf16.msra.mxu0 0
      %2878 = vmatprep.subr.bf16.mxu0 0
      %2879 = vmatpush1.bf16.msra.mxu0 0
      %2880 = vmatprep.subr.bf16.mxu0 0
      %2881 = vmatpush1.bf16.msra.mxu0 0
      %2882 = vmatprep.mubr.bf16.mxu0 0
      %2883 = vmatmul.mubr.bf16.gmra.mrb[0].mxu0 %v2418
      %v2884 = vpop.f32.mrb[0].mxu0
      %v2885 = vadd.f32 %v2844, %v2884
      %v2886 = vpop.f32.mrb[0].mxu0
      %v2887 = vadd.f32 %v2846, %v2886
      %v2888 = vpop.f32.mrb[0].mxu0
      %v2889 = vpop.f32.mrb[0].mxu0
      %2890 = vdwg.mxu0
      %2891 = vmatprep.subr.bf16.mxu0 %v1025
      %2892 = vmatpush1.bf16.msra.mxu0 %v1024
      %2893 = vmatprep.subr.bf16.mxu0 %v1033
      %2894 = vmatpush1.bf16.msra.mxu0 %v1032
      %2895 = vmatprep.subr.bf16.mxu0 %v1041
      %2896 = vmatpush1.bf16.msra.mxu0 %v1040
      %2897 = vmatprep.subr.bf16.mxu0 %v1049
      %2898 = vmatpush1.bf16.msra.mxu0 %v1048
      %2899 = vmatprep.subr.bf16.mxu0 %v1057
      %2900 = vmatpush1.bf16.msra.mxu0 %v1056
      %2901 = vmatprep.subr.bf16.mxu0 %v1065
      %2902 = vmatpush1.bf16.msra.mxu0 %v1064
      %2903 = vmatprep.subr.bf16.mxu0 %v1073
      %2904 = vmatpush1.bf16.msra.mxu0 %v1072
      %2905 = vmatprep.subr.bf16.mxu0 %v1081
      %2906 = vmatpush1.bf16.msra.mxu0 %v1080
      %2907 = vmatprep.subr.bf16.mxu0 %v1089
      %2908 = vmatpush1.bf16.msra.mxu0 %v1088
      %2909 = vmatprep.subr.bf16.mxu0 %v1097
      %2910 = vmatpush1.bf16.msra.mxu0 %v1096
      %2911 = vmatprep.subr.bf16.mxu0 %v1105
      %2912 = vmatpush1.bf16.msra.mxu0 %v1104
      %2913 = vmatprep.subr.bf16.mxu0 %v1113
      %2914 = vmatpush1.bf16.msra.mxu0 %v1112
      %2915 = vmatprep.subr.bf16.mxu0 %v1121
      %2916 = vmatpush1.bf16.msra.mxu0 %v1120
      %2917 = vmatprep.subr.bf16.mxu0 %v1129
      %2918 = vmatpush1.bf16.msra.mxu0 %v1128
      %2919 = vmatprep.subr.bf16.mxu0 %v1137
      %2920 = vmatpush1.bf16.msra.mxu0 %v1136
      %2921 = vmatprep.subr.bf16.mxu0 %v1145
      %2922 = vmatpush1.bf16.msra.mxu0 %v1144
      %2923 = vmatprep.mubr.bf16.mxu0 %v2399
      %2924 = vmatmul.mubr.bf16.gmra.mrb[0].mxu0 %v2398
      %v2925 = vpop.f32.mrb[0].mxu0
      %v2926 = vadd.f32 0.0, %v2925
      %v2927 = vpop.f32.mrb[0].mxu0
      %v2928 = vadd.f32 0.0, %v2927
      %v2929 = vpop.f32.mrb[0].mxu0
      %v2930 = vpop.f32.mrb[0].mxu0
      %2931 = vdwg.mxu0
      %2932 = vmatprep.subr.bf16.mxu0 %v1153
      %2933 = vmatpush1.bf16.msra.mxu0 %v1152
      %2934 = vmatprep.subr.bf16.mxu0 %v1161
      %2935 = vmatpush1.bf16.msra.mxu0 %v1160
      %2936 = vmatprep.subr.bf16.mxu0 %v1169
      %2937 = vmatpush1.bf16.msra.mxu0 %v1168
      %2938 = vmatprep.subr.bf16.mxu0 %v1177
      %2939 = vmatpush1.bf16.msra.mxu0 %v1176
      %2940 = vmatprep.subr.bf16.mxu0 %v1185
      %2941 = vmatpush1.bf16.msra.mxu0 %v1184
      %2942 = vmatprep.subr.bf16.mxu0 %v1193
      %2943 = vmatpush1.bf16.msra.mxu0 %v1192
      %2944 = vmatprep.subr.bf16.mxu0 %v1201
      %2945 = vmatpush1.bf16.msra.mxu0 %v1200
      %2946 = vmatprep.subr.bf16.mxu0 %v1209
      %2947 = vmatpush1.bf16.msra.mxu0 %v1208
      %2948 = vmatprep.subr.bf16.mxu0 %v1217
      %2949 = vmatpush1.bf16.msra.mxu0 %v1216
      %2950 = vmatprep.subr.bf16.mxu0 %v1225
      %2951 = vmatpush1.bf16.msra.mxu0 %v1224
      %2952 = vmatprep.subr.bf16.mxu0 %v1233
      %2953 = vmatpush1.bf16.msra.mxu0 %v1232
      %2954 = vmatprep.subr.bf16.mxu0 %v1241
      %2955 = vmatpush1.bf16.msra.mxu0 %v1240
      %2956 = vmatprep.subr.bf16.mxu0 %v1249
      %2957 = vmatpush1.bf16.msra.mxu0 %v1248
      %2958 = vmatprep.subr.bf16.mxu0 %v1257
      %2959 = vmatpush1.bf16.msra.mxu0 %v1256
      %2960 = vmatprep.subr.bf16.mxu0 %v1265
      %2961 = vmatpush1.bf16.msra.mxu0 %v1264
      %2962 = vmatprep.subr.bf16.mxu0 %v1273
      %2963 = vmatpush1.bf16.msra.mxu0 %v1272
      %2964 = vmatprep.mubr.bf16.mxu0 %v2401
      %2965 = vmatmul.mubr.bf16.gmra.mrb[0].mxu0 %v2400
      %v2966 = vpop.f32.mrb[0].mxu0
      %v2967 = vadd.f32 %v2926, %v2966
      %v2968 = vpop.f32.mrb[0].mxu0
      %v2969 = vadd.f32 %v2928, %v2968
      %v2970 = vpop.f32.mrb[0].mxu0
      %v2971 = vpop.f32.mrb[0].mxu0
      %2972 = vdwg.mxu0
      %2973 = vmatprep.subr.bf16.mxu0 %v1281
      %2974 = vmatpush1.bf16.msra.mxu0 %v1280
      %2975 = vmatprep.subr.bf16.mxu0 %v1289
      %2976 = vmatpush1.bf16.msra.mxu0 %v1288
      %2977 = vmatprep.subr.bf16.mxu0 %v1297
      %2978 = vmatpush1.bf16.msra.mxu0 %v1296
      %2979 = vmatprep.subr.bf16.mxu0 %v1305
      %2980 = vmatpush1.bf16.msra.mxu0 %v1304
      %2981 = vmatprep.subr.bf16.mxu0 %v1313
      %2982 = vmatpush1.bf16.msra.mxu0 %v1312
      %2983 = vmatprep.subr.bf16.mxu0 %v1321
      %2984 = vmatpush1.bf16.msra.mxu0 %v1320
      %2985 = vmatprep.subr.bf16.mxu0 %v1329
      %2986 = vmatpush1.bf16.msra.mxu0 %v1328
      %2987 = vmatprep.subr.bf16.mxu0 %v1337
      %2988 = vmatpush1.bf16.msra.mxu0 %v1336
      %2989 = vmatprep.subr.bf16.mxu0 %v1345
      %2990 = vmatpush1.bf16.msra.mxu0 %v1344
      %2991 = vmatprep.subr.bf16.mxu0 %v1353
      %2992 = vmatpush1.bf16.msra.mxu0 %v1352
      %2993 = vmatprep.subr.bf16.mxu0 %v1361
      %2994 = vmatpush1.bf16.msra.mxu0 %v1360
      %2995 = vmatprep.subr.bf16.mxu0 %v1369
      %2996 = vmatpush1.bf16.msra.mxu0 %v1368
      %2997 = vmatprep.subr.bf16.mxu0 %v1377
      %2998 = vmatpush1.bf16.msra.mxu0 %v1376
      %2999 = vmatprep.subr.bf16.mxu0 %v1385
      %3000 = vmatpush1.bf16.msra.mxu0 %v1384
      %3001 = vmatprep.subr.bf16.mxu0 %v1393
      %3002 = vmatpush1.bf16.msra.mxu0 %v1392
      %3003 = vmatprep.subr.bf16.mxu0 %v1401
      %3004 = vmatpush1.bf16.msra.mxu0 %v1400
      %3005 = vmatprep.mubr.bf16.mxu0 %v2403
      %3006 = vmatmul.mubr.bf16.gmra.mrb[0].mxu0 %v2402
      %v3007 = vpop.f32.mrb[0].mxu0
      %v3008 = vadd.f32 %v2967, %v3007
      %v3009 = vpop.f32.mrb[0].mxu0
      %v3010 = vadd.f32 %v2969, %v3009
      %v3011 = vpop.f32.mrb[0].mxu0
      %v3012 = vpop.f32.mrb[0].mxu0
      %3013 = vdwg.mxu0
      %3014 = vmatprep.subr.bf16.mxu0 %v1409
      %3015 = vmatpush1.bf16.msra.mxu0 %v1408
      %3016 = vmatprep.subr.bf16.mxu0 %v1417
      %3017 = vmatpush1.bf16.msra.mxu0 %v1416
      %3018 = vmatprep.subr.bf16.mxu0 %v1425
      %3019 = vmatpush1.bf16.msra.mxu0 %v1424
      %3020 = vmatprep.subr.bf16.mxu0 %v1433
      %3021 = vmatpush1.bf16.msra.mxu0 %v1432
      %3022 = vmatprep.subr.bf16.mxu0 %v1441
      %3023 = vmatpush1.bf16.msra.mxu0 %v1440
      %3024 = vmatprep.subr.bf16.mxu0 %v1449
      %3025 = vmatpush1.bf16.msra.mxu0 %v1448
      %3026 = vmatprep.subr.bf16.mxu0 %v1457
      %3027 = vmatpush1.bf16.msra.mxu0 %v1456
      %3028 = vmatprep.subr.bf16.mxu0 %v1465
      %3029 = vmatpush1.bf16.msra.mxu0 %v1464
      %3030 = vmatprep.subr.bf16.mxu0 %v1473
      %3031 = vmatpush1.bf16.msra.mxu0 %v1472
      %3032 = vmatprep.subr.bf16.mxu0 %v1481
      %3033 = vmatpush1.bf16.msra.mxu0 %v1480
      %3034 = vmatprep.subr.bf16.mxu0 %v1489
      %3035 = vmatpush1.bf16.msra.mxu0 %v1488
      %3036 = vmatprep.subr.bf16.mxu0 %v1497
      %3037 = vmatpush1.bf16.msra.mxu0 %v1496
      %3038 = vmatprep.subr.bf16.mxu0 %v1505
      %3039 = vmatpush1.bf16.msra.mxu0 %v1504
      %3040 = vmatprep.subr.bf16.mxu0 %v1513
      %3041 = vmatpush1.bf16.msra.mxu0 %v1512
      %3042 = vmatprep.subr.bf16.mxu0 %v1521
      %3043 = vmatpush1.bf16.msra.mxu0 %v1520
      %3044 = vmatprep.subr.bf16.mxu0 %v1529
      %3045 = vmatpush1.bf16.msra.mxu0 %v1528
      %3046 = vmatprep.mubr.bf16.mxu0 %v2405
      %3047 = vmatmul.mubr.bf16.gmra.mrb[0].mxu0 %v2404
      %v3048 = vpop.f32.mrb[0].mxu0
      %v3049 = vadd.f32 %v3008, %v3048
      %v3050 = vpop.f32.mrb[0].mxu0
      %v3051 = vadd.f32 %v3010, %v3050
      %v3052 = vpop.f32.mrb[0].mxu0
      %v3053 = vpop.f32.mrb[0].mxu0
      %3054 = vdwg.mxu0
      %3055 = vmatprep.subr.bf16.mxu0 %v1537
      %3056 = vmatpush1.bf16.msra.mxu0 %v1536
      %3057 = vmatprep.subr.bf16.mxu0 %v1545
      %3058 = vmatpush1.bf16.msra.mxu0 %v1544
      %3059 = vmatprep.subr.bf16.mxu0 %v1553
      %3060 = vmatpush1.bf16.msra.mxu0 %v1552
      %3061 = vmatprep.subr.bf16.mxu0 %v1561
      %3062 = vmatpush1.bf16.msra.mxu0 %v1560
      %3063 = vmatprep.subr.bf16.mxu0 %v1569
      %3064 = vmatpush1.bf16.msra.mxu0 %v1568
      %3065 = vmatprep.subr.bf16.mxu0 %v1577
      %3066 = vmatpush1.bf16.msra.mxu0 %v1576
      %3067 = vmatprep.subr.bf16.mxu0 %v1585
      %3068 = vmatpush1.bf16.msra.mxu0 %v1584
      %3069 = vmatprep.subr.bf16.mxu0 %v1593
      %3070 = vmatpush1.bf16.msra.mxu0 %v1592
      %3071 = vmatprep.subr.bf16.mxu0 %v1601
      %3072 = vmatpush1.bf16.msra.mxu0 %v1600
      %3073 = vmatprep.subr.bf16.mxu0 %v1609
      %3074 = vmatpush1.bf16.msra.mxu0 %v1608
      %3075 = vmatprep.subr.bf16.mxu0 %v1617
      %3076 = vmatpush1.bf16.msra.mxu0 %v1616
      %3077 = vmatprep.subr.bf16.mxu0 %v1625
      %3078 = vmatpush1.bf16.msra.mxu0 %v1624
      %3079 = vmatprep.subr.bf16.mxu0 %v1633
      %3080 = vmatpush1.bf16.msra.mxu0 %v1632
      %3081 = vmatprep.subr.bf16.mxu0 %v1641
      %3082 = vmatpush1.bf16.msra.mxu0 %v1640
      %3083 = vmatprep.subr.bf16.mxu0 %v1649
      %3084 = vmatpush1.bf16.msra.mxu0 %v1648
      %3085 = vmatprep.subr.bf16.mxu0 %v1657
      %3086 = vmatpush1.bf16.msra.mxu0 %v1656
      %3087 = vmatprep.mubr.bf16.mxu0 %v2407
      %3088 = vmatmul.mubr.bf16.gmra.mrb[0].mxu0 %v2406
      %v3089 = vpop.f32.mrb[0].mxu0
      %v3090 = vadd.f32 %v3049, %v3089
      %v3091 = vpop.f32.mrb[0].mxu0
      %v3092 = vadd.f32 %v3051, %v3091
      %v3093 = vpop.f32.mrb[0].mxu0
      %v3094 = vpop.f32.mrb[0].mxu0
      %3095 = vdwg.mxu0
      %3096 = vmatprep.subr.bf16.mxu0 %v1665
      %3097 = vmatpush1.bf16.msra.mxu0 %v1664
      %3098 = vmatprep.subr.bf16.mxu0 %v1673
      %3099 = vmatpush1.bf16.msra.mxu0 %v1672
      %3100 = vmatprep.subr.bf16.mxu0 %v1681
      %3101 = vmatpush1.bf16.msra.mxu0 %v1680
      %3102 = vmatprep.subr.bf16.mxu0 %v1689
      %3103 = vmatpush1.bf16.msra.mxu0 %v1688
      %3104 = vmatprep.subr.bf16.mxu0 %v1697
      %3105 = vmatpush1.bf16.msra.mxu0 %v1696
      %3106 = vmatprep.subr.bf16.mxu0 %v1705
      %3107 = vmatpush1.bf16.msra.mxu0 %v1704
      %3108 = vmatprep.subr.bf16.mxu0 %v1713
      %3109 = vmatpush1.bf16.msra.mxu0 %v1712
      %3110 = vmatprep.subr.bf16.mxu0 %v1721
      %3111 = vmatpush1.bf16.msra.mxu0 %v1720
      %3112 = vmatprep.subr.bf16.mxu0 %v1729
      %3113 = vmatpush1.bf16.msra.mxu0 %v1728
      %3114 = vmatprep.subr.bf16.mxu0 %v1737
      %3115 = vmatpush1.bf16.msra.mxu0 %v1736
      %3116 = vmatprep.subr.bf16.mxu0 %v1745
      %3117 = vmatpush1.bf16.msra.mxu0 %v1744
      %3118 = vmatprep.subr.bf16.mxu0 %v1753
      %3119 = vmatpush1.bf16.msra.mxu0 %v1752
      %3120 = vmatprep.subr.bf16.mxu0 %v1761
      %3121 = vmatpush1.bf16.msra.mxu0 %v1760
      %3122 = vmatprep.subr.bf16.mxu0 %v1769
      %3123 = vmatpush1.bf16.msra.mxu0 %v1768
      %3124 = vmatprep.subr.bf16.mxu0 %v1777
      %3125 = vmatpush1.bf16.msra.mxu0 %v1776
      %3126 = vmatprep.subr.bf16.mxu0 %v1785
      %3127 = vmatpush1.bf16.msra.mxu0 %v1784
      %3128 = vmatprep.mubr.bf16.mxu0 %v2409
      %3129 = vmatmul.mubr.bf16.gmra.mrb[0].mxu0 %v2408
      %v3130 = vpop.f32.mrb[0].mxu0
      %v3131 = vadd.f32 %v3090, %v3130
      %v3132 = vpop.f32.mrb[0].mxu0
      %v3133 = vadd.f32 %v3092, %v3132
      %v3134 = vpop.f32.mrb[0].mxu0
      %v3135 = vpop.f32.mrb[0].mxu0
      %3136 = vdwg.mxu0
      %3137 = vmatprep.subr.bf16.mxu0 %v1793
      %3138 = vmatpush1.bf16.msra.mxu0 %v1792
      %3139 = vmatprep.subr.bf16.mxu0 %v1801
      %3140 = vmatpush1.bf16.msra.mxu0 %v1800
      %3141 = vmatprep.subr.bf16.mxu0 %v1809
      %3142 = vmatpush1.bf16.msra.mxu0 %v1808
      %3143 = vmatprep.subr.bf16.mxu0 %v1817
      %3144 = vmatpush1.bf16.msra.mxu0 %v1816
      %3145 = vmatprep.subr.bf16.mxu0 %v1825
      %3146 = vmatpush1.bf16.msra.mxu0 %v1824
      %3147 = vmatprep.subr.bf16.mxu0 %v1833
      %3148 = vmatpush1.bf16.msra.mxu0 %v1832
      %3149 = vmatprep.subr.bf16.mxu0 %v1841
      %3150 = vmatpush1.bf16.msra.mxu0 %v1840
      %3151 = vmatprep.subr.bf16.mxu0 %v1849
      %3152 = vmatpush1.bf16.msra.mxu0 %v1848
      %3153 = vmatprep.subr.bf16.mxu0 %v1857
      %3154 = vmatpush1.bf16.msra.mxu0 %v1856
      %3155 = vmatprep.subr.bf16.mxu0 %v1865
      %3156 = vmatpush1.bf16.msra.mxu0 %v1864
      %3157 = vmatprep.subr.bf16.mxu0 %v1873
      %3158 = vmatpush1.bf16.msra.mxu0 %v1872
      %3159 = vmatprep.subr.bf16.mxu0 %v1881
      %3160 = vmatpush1.bf16.msra.mxu0 %v1880
      %3161 = vmatprep.subr.bf16.mxu0 %v1889
      %3162 = vmatpush1.bf16.msra.mxu0 %v1888
      %3163 = vmatprep.subr.bf16.mxu0 %v1897
      %3164 = vmatpush1.bf16.msra.mxu0 %v1896
      %3165 = vmatprep.subr.bf16.mxu0 %v1905
      %3166 = vmatpush1.bf16.msra.mxu0 %v1904
      %3167 = vmatprep.subr.bf16.mxu0 %v1913
      %3168 = vmatpush1.bf16.msra.mxu0 %v1912
      %3169 = vmatprep.mubr.bf16.mxu0 %v2411
      %3170 = vmatmul.mubr.bf16.gmra.mrb[0].mxu0 %v2410
      %v3171 = vpop.f32.mrb[0].mxu0
      %v3172 = vadd.f32 %v3131, %v3171
      %v3173 = vpop.f32.mrb[0].mxu0
      %v3174 = vadd.f32 %v3133, %v3173
      %v3175 = vpop.f32.mrb[0].mxu0
      %v3176 = vpop.f32.mrb[0].mxu0
      %3177 = vdwg.mxu0
      %3178 = vmatprep.subr.bf16.mxu0 %v1921
      %3179 = vmatpush1.bf16.msra.mxu0 %v1920
      %3180 = vmatprep.subr.bf16.mxu0 %v1929
      %3181 = vmatpush1.bf16.msra.mxu0 %v1928
      %3182 = vmatprep.subr.bf16.mxu0 %v1937
      %3183 = vmatpush1.bf16.msra.mxu0 %v1936
      %3184 = vmatprep.subr.bf16.mxu0 %v1945
      %3185 = vmatpush1.bf16.msra.mxu0 %v1944
      %3186 = vmatprep.subr.bf16.mxu0 %v1953
      %3187 = vmatpush1.bf16.msra.mxu0 %v1952
      %3188 = vmatprep.subr.bf16.mxu0 %v1961
      %3189 = vmatpush1.bf16.msra.mxu0 %v1960
      %3190 = vmatprep.subr.bf16.mxu0 %v1969
      %3191 = vmatpush1.bf16.msra.mxu0 %v1968
      %3192 = vmatprep.subr.bf16.mxu0 %v1977
      %3193 = vmatpush1.bf16.msra.mxu0 %v1976
      %3194 = vmatprep.subr.bf16.mxu0 %v1985
      %3195 = vmatpush1.bf16.msra.mxu0 %v1984
      %3196 = vmatprep.subr.bf16.mxu0 %v1993
      %3197 = vmatpush1.bf16.msra.mxu0 %v1992
      %3198 = vmatprep.subr.bf16.mxu0 %v2001
      %3199 = vmatpush1.bf16.msra.mxu0 %v2000
      %3200 = vmatprep.subr.bf16.mxu0 %v2009
      %3201 = vmatpush1.bf16.msra.mxu0 %v2008
      %3202 = vmatprep.subr.bf16.mxu0 %v2017
      %3203 = vmatpush1.bf16.msra.mxu0 %v2016
      %3204 = vmatprep.subr.bf16.mxu0 %v2025
      %3205 = vmatpush1.bf16.msra.mxu0 %v2024
      %3206 = vmatprep.subr.bf16.mxu0 %v2033
      %3207 = vmatpush1.bf16.msra.mxu0 %v2032
      %3208 = vmatprep.subr.bf16.mxu0 %v2041
      %3209 = vmatpush1.bf16.msra.mxu0 %v2040
      %3210 = vmatprep.mubr.bf16.mxu0 %v2413
      %3211 = vmatmul.mubr.bf16.gmra.mrb[0].mxu0 %v2412
      %v3212 = vpop.f32.mrb[0].mxu0
      %v3213 = vadd.f32 %v3172, %v3212
      %v3214 = vpop.f32.mrb[0].mxu0
      %v3215 = vadd.f32 %v3174, %v3214
      %v3216 = vpop.f32.mrb[0].mxu0
      %v3217 = vpop.f32.mrb[0].mxu0
      %3218 = vdwg.mxu0
      %3219 = vmatprep.subr.bf16.mxu0 %v2049
      %3220 = vmatpush1.bf16.msra.mxu0 %v2048
      %3221 = vmatprep.subr.bf16.mxu0 %v2057
      %3222 = vmatpush1.bf16.msra.mxu0 %v2056
      %3223 = vmatprep.subr.bf16.mxu0 %v2065
      %3224 = vmatpush1.bf16.msra.mxu0 %v2064
      %3225 = vmatprep.subr.bf16.mxu0 %v2073
      %3226 = vmatpush1.bf16.msra.mxu0 %v2072
      %3227 = vmatprep.subr.bf16.mxu0 %v2081
      %3228 = vmatpush1.bf16.msra.mxu0 %v2080
      %3229 = vmatprep.subr.bf16.mxu0 %v2089
      %3230 = vmatpush1.bf16.msra.mxu0 %v2088
      %3231 = vmatprep.subr.bf16.mxu0 %v2097
      %3232 = vmatpush1.bf16.msra.mxu0 %v2096
      %3233 = vmatprep.subr.bf16.mxu0 %v2105
      %3234 = vmatpush1.bf16.msra.mxu0 %v2104
      %3235 = vmatprep.subr.bf16.mxu0 %v2113
      %3236 = vmatpush1.bf16.msra.mxu0 %v2112
      %3237 = vmatprep.subr.bf16.mxu0 %v2121
      %3238 = vmatpush1.bf16.msra.mxu0 %v2120
      %3239 = vmatprep.subr.bf16.mxu0 %v2129
      %3240 = vmatpush1.bf16.msra.mxu0 %v2128
      %3241 = vmatprep.subr.bf16.mxu0 %v2137
      %3242 = vmatpush1.bf16.msra.mxu0 %v2136
      %3243 = vmatprep.subr.bf16.mxu0 %v2145
      %3244 = vmatpush1.bf16.msra.mxu0 %v2144
      %3245 = vmatprep.subr.bf16.mxu0 %v2153
      %3246 = vmatpush1.bf16.msra.mxu0 %v2152
      %3247 = vmatprep.subr.bf16.mxu0 %v2161
      %3248 = vmatpush1.bf16.msra.mxu0 %v2160
      %3249 = vmatprep.subr.bf16.mxu0 %v2169
      %3250 = vmatpush1.bf16.msra.mxu0 %v2168
      %3251 = vmatprep.mubr.bf16.mxu0 %v2415
      %3252 = vmatmul.mubr.bf16.gmra.mrb[0].mxu0 %v2414
      %v3253 = vpop.f32.mrb[0].mxu0
      %v3254 = vadd.f32 %v3213, %v3253
      %v3255 = vpop.f32.mrb[0].mxu0
      %v3256 = vadd.f32 %v3215, %v3255
      %v3257 = vpop.f32.mrb[0].mxu0
      %v3258 = vpop.f32.mrb[0].mxu0
      %3259 = vdwg.mxu0
      %3260 = vmatprep.subr.bf16.mxu0 %v2177
      %3261 = vmatpush1.bf16.msra.mxu0 %v2176
      %3262 = vmatprep.subr.bf16.mxu0 %v2185
      %3263 = vmatpush1.bf16.msra.mxu0 %v2184
      %3264 = vmatprep.subr.bf16.mxu0 %v2193
      %3265 = vmatpush1.bf16.msra.mxu0 %v2192
      %3266 = vmatprep.subr.bf16.mxu0 %v2201
      %3267 = vmatpush1.bf16.msra.mxu0 %v2200
      %3268 = vmatprep.subr.bf16.mxu0 %v2209
      %3269 = vmatpush1.bf16.msra.mxu0 %v2208
      %3270 = vmatprep.subr.bf16.mxu0 %v2217
      %3271 = vmatpush1.bf16.msra.mxu0 %v2216
      %3272 = vmatprep.subr.bf16.mxu0 %v2225
      %3273 = vmatpush1.bf16.msra.mxu0 %v2224
      %3274 = vmatprep.subr.bf16.mxu0 %v2233
      %3275 = vmatpush1.bf16.msra.mxu0 %v2232
      %3276 = vmatprep.subr.bf16.mxu0 %v2241
      %3277 = vmatpush1.bf16.msra.mxu0 %v2240
      %3278 = vmatprep.subr.bf16.mxu0 %v2249
      %3279 = vmatpush1.bf16.msra.mxu0 %v2248
      %3280 = vmatprep.subr.bf16.mxu0 %v2257
      %3281 = vmatpush1.bf16.msra.mxu0 %v2256
      %3282 = vmatprep.subr.bf16.mxu0 %v2265
      %3283 = vmatpush1.bf16.msra.mxu0 %v2264
      %3284 = vmatprep.subr.bf16.mxu0 %v2273
      %3285 = vmatpush1.bf16.msra.mxu0 %v2272
      %3286 = vmatprep.subr.bf16.mxu0 %v2281
      %3287 = vmatpush1.bf16.msra.mxu0 %v2280
      %3288 = vmatprep.subr.bf16.mxu0 %v2289
      %3289 = vmatpush1.bf16.msra.mxu0 %v2288
      %3290 = vmatprep.subr.bf16.mxu0 %v2297
      %3291 = vmatpush1.bf16.msra.mxu0 %v2296
      %3292 = vmatprep.mubr.bf16.mxu0 %v2417
      %3293 = vmatmul.mubr.bf16.gmra.mrb[0].mxu0 %v2416
      %v3294 = vpop.f32.mrb[0].mxu0
      %v3295 = vadd.f32 %v3254, %v3294
      %v3296 = vpop.f32.mrb[0].mxu0
      %v3297 = vadd.f32 %v3256, %v3296
      %v3298 = vpop.f32.mrb[0].mxu0
      %v3299 = vpop.f32.mrb[0].mxu0
      %3300 = vdwg.mxu0
      %3301 = vmatprep.subr.bf16.mxu0 %v2305
      %3302 = vmatpush1.bf16.msra.mxu0 %v2304
      %3303 = vmatprep.subr.bf16.mxu0 %v2313
      %3304 = vmatpush1.bf16.msra.mxu0 %v2312
      %3305 = vmatprep.subr.bf16.mxu0 %v2321
      %3306 = vmatpush1.bf16.msra.mxu0 %v2320
      %3307 = vmatprep.subr.bf16.mxu0 %v2329
      %3308 = vmatpush1.bf16.msra.mxu0 %v2328
      %3309 = vmatprep.subr.bf16.mxu0 %v2337
      %3310 = vmatpush1.bf16.msra.mxu0 %v2336
      %3311 = vmatprep.subr.bf16.mxu0 %v2345
      %3312 = vmatpush1.bf16.msra.mxu0 %v2344
      %3313 = vmatprep.subr.bf16.mxu0 %v2353
      %3314 = vmatpush1.bf16.msra.mxu0 %v2352
      %3315 = vmatprep.subr.bf16.mxu0 %v2361
      %3316 = vmatpush1.bf16.msra.mxu0 %v2360
      %3317 = vmatprep.subr.bf16.mxu0 0
      %3318 = vmatpush1.bf16.msra.mxu0 0
      %3319 = vmatprep.subr.bf16.mxu0 0
      %3320 = vmatpush1.bf16.msra.mxu0 0
      %3321 = vmatprep.subr.bf16.mxu0 0
      %3322 = vmatpush1.bf16.msra.mxu0 0
      %3323 = vmatprep.subr.bf16.mxu0 0
      %3324 = vmatpush1.bf16.msra.mxu0 0
      %3325 = vmatprep.subr.bf16.mxu0 0
      %3326 = vmatpush1.bf16.msra.mxu0 0
      %3327 = vmatprep.subr.bf16.mxu0 0
      %3328 = vmatpush1.bf16.msra.mxu0 0
      %3329 = vmatprep.subr.bf16.mxu0 0
      %3330 = vmatpush1.bf16.msra.mxu0 0
      %3331 = vmatprep.subr.bf16.mxu0 0
      %3332 = vmatpush1.bf16.msra.mxu0 0
      %3333 = vmatprep.mubr.bf16.mxu0 0
      %3334 = vmatmul.mubr.bf16.gmra.mrb[0].mxu0 %v2418
      %v3335 = vpop.f32.mrb[0].mxu0
      %v3336 = vadd.f32 %v3295, %v3335
      %v3337 = vpop.f32.mrb[0].mxu0
      %v3338 = vadd.f32 %v3297, %v3337
      %v3339 = vpop.f32.mrb[0].mxu0
      %v3340 = vpop.f32.mrb[0].mxu0
      %3341 = vdwg.mxu0
      %3342 = vmatprep.subr.bf16.mxu0 %v1027
      %3343 = vmatpush1.bf16.msra.mxu0 %v1026
      %3344 = vmatprep.subr.bf16.mxu0 %v1035
      %3345 = vmatpush1.bf16.msra.mxu0 %v1034
      %3346 = vmatprep.subr.bf16.mxu0 %v1043
      %3347 = vmatpush1.bf16.msra.mxu0 %v1042
      %3348 = vmatprep.subr.bf16.mxu0 %v1051
      %3349 = vmatpush1.bf16.msra.mxu0 %v1050
      %3350 = vmatprep.subr.bf16.mxu0 %v1059
      %3351 = vmatpush1.bf16.msra.mxu0 %v1058
      %3352 = vmatprep.subr.bf16.mxu0 %v1067
      %3353 = vmatpush1.bf16.msra.mxu0 %v1066
      %3354 = vmatprep.subr.bf16.mxu0 %v1075
      %3355 = vmatpush1.bf16.msra.mxu0 %v1074
      %3356 = vmatprep.subr.bf16.mxu0 %v1083
      %3357 = vmatpush1.bf16.msra.mxu0 %v1082
      %3358 = vmatprep.subr.bf16.mxu0 %v1091
      %3359 = vmatpush1.bf16.msra.mxu0 %v1090
      %3360 = vmatprep.subr.bf16.mxu0 %v1099
      %3361 = vmatpush1.bf16.msra.mxu0 %v1098
      %3362 = vmatprep.subr.bf16.mxu0 %v1107
      %3363 = vmatpush1.bf16.msra.mxu0 %v1106
      %3364 = vmatprep.subr.bf16.mxu0 %v1115
      %3365 = vmatpush1.bf16.msra.mxu0 %v1114
      %3366 = vmatprep.subr.bf16.mxu0 %v1123
      %3367 = vmatpush1.bf16.msra.mxu0 %v1122
      %3368 = vmatprep.subr.bf16.mxu0 %v1131
      %3369 = vmatpush1.bf16.msra.mxu0 %v1130
      %3370 = vmatprep.subr.bf16.mxu0 %v1139
      %3371 = vmatpush1.bf16.msra.mxu0 %v1138
      %3372 = vmatprep.subr.bf16.mxu0 %v1147
      %3373 = vmatpush1.bf16.msra.mxu0 %v1146
      %3374 = vmatprep.mubr.bf16.mxu0 %v2399
      %3375 = vmatmul.mubr.bf16.gmra.mrb[0].mxu0 %v2398
      %v3376 = vpop.f32.mrb[0].mxu0
      %v3377 = vadd.f32 0.0, %v3376
      %v3378 = vpop.f32.mrb[0].mxu0
      %v3379 = vadd.f32 0.0, %v3378
      %v3380 = vpop.f32.mrb[0].mxu0
      %v3381 = vpop.f32.mrb[0].mxu0
      %3382 = vdwg.mxu0
      %3383 = vmatprep.subr.bf16.mxu0 %v1155
      %3384 = vmatpush1.bf16.msra.mxu0 %v1154
      %3385 = vmatprep.subr.bf16.mxu0 %v1163
      %3386 = vmatpush1.bf16.msra.mxu0 %v1162
      %3387 = vmatprep.subr.bf16.mxu0 %v1171
      %3388 = vmatpush1.bf16.msra.mxu0 %v1170
      %3389 = vmatprep.subr.bf16.mxu0 %v1179
      %3390 = vmatpush1.bf16.msra.mxu0 %v1178
      %3391 = vmatprep.subr.bf16.mxu0 %v1187
      %3392 = vmatpush1.bf16.msra.mxu0 %v1186
      %3393 = vmatprep.subr.bf16.mxu0 %v1195
      %3394 = vmatpush1.bf16.msra.mxu0 %v1194
      %3395 = vmatprep.subr.bf16.mxu0 %v1203
      %3396 = vmatpush1.bf16.msra.mxu0 %v1202
      %3397 = vmatprep.subr.bf16.mxu0 %v1211
      %3398 = vmatpush1.bf16.msra.mxu0 %v1210
      %3399 = vmatprep.subr.bf16.mxu0 %v1219
      %3400 = vmatpush1.bf16.msra.mxu0 %v1218
      %3401 = vmatprep.subr.bf16.mxu0 %v1227
      %3402 = vmatpush1.bf16.msra.mxu0 %v1226
      %3403 = vmatprep.subr.bf16.mxu0 %v1235
      %3404 = vmatpush1.bf16.msra.mxu0 %v1234
      %3405 = vmatprep.subr.bf16.mxu0 %v1243
      %3406 = vmatpush1.bf16.msra.mxu0 %v1242
      %3407 = vmatprep.subr.bf16.mxu0 %v1251
      %3408 = vmatpush1.bf16.msra.mxu0 %v1250
      %3409 = vmatprep.subr.bf16.mxu0 %v1259
      %3410 = vmatpush1.bf16.msra.mxu0 %v1258
      %3411 = vmatprep.subr.bf16.mxu0 %v1267
      %3412 = vmatpush1.bf16.msra.mxu0 %v1266
      %3413 = vmatprep.subr.bf16.mxu0 %v1275
      %3414 = vmatpush1.bf16.msra.mxu0 %v1274
      %3415 = vmatprep.mubr.bf16.mxu0 %v2401
      %3416 = vmatmul.mubr.bf16.gmra.mrb[0].mxu0 %v2400
      %v3417 = vpop.f32.mrb[0].mxu0
      %v3418 = vadd.f32 %v3377, %v3417
      %v3419 = vpop.f32.mrb[0].mxu0
      %v3420 = vadd.f32 %v3379, %v3419
      %v3421 = vpop.f32.mrb[0].mxu0
      %v3422 = vpop.f32.mrb[0].mxu0
      %3423 = vdwg.mxu0
      %3424 = vmatprep.subr.bf16.mxu0 %v1283
      %3425 = vmatpush1.bf16.msra.mxu0 %v1282
      %3426 = vmatprep.subr.bf16.mxu0 %v1291
      %3427 = vmatpush1.bf16.msra.mxu0 %v1290
      %3428 = vmatprep.subr.bf16.mxu0 %v1299
      %3429 = vmatpush1.bf16.msra.mxu0 %v1298
      %3430 = vmatprep.subr.bf16.mxu0 %v1307
      %3431 = vmatpush1.bf16.msra.mxu0 %v1306
      %3432 = vmatprep.subr.bf16.mxu0 %v1315
      %3433 = vmatpush1.bf16.msra.mxu0 %v1314
      %3434 = vmatprep.subr.bf16.mxu0 %v1323
      %3435 = vmatpush1.bf16.msra.mxu0 %v1322
      %3436 = vmatprep.subr.bf16.mxu0 %v1331
      %3437 = vmatpush1.bf16.msra.mxu0 %v1330
      %3438 = vmatprep.subr.bf16.mxu0 %v1339
      %3439 = vmatpush1.bf16.msra.mxu0 %v1338
      %3440 = vmatprep.subr.bf16.mxu0 %v1347
      %3441 = vmatpush1.bf16.msra.mxu0 %v1346
      %3442 = vmatprep.subr.bf16.mxu0 %v1355
      %3443 = vmatpush1.bf16.msra.mxu0 %v1354
      %3444 = vmatprep.subr.bf16.mxu0 %v1363
      %3445 = vmatpush1.bf16.msra.mxu0 %v1362
      %3446 = vmatprep.subr.bf16.mxu0 %v1371
      %3447 = vmatpush1.bf16.msra.mxu0 %v1370
      %3448 = vmatprep.subr.bf16.mxu0 %v1379
      %3449 = vmatpush1.bf16.msra.mxu0 %v1378
      %3450 = vmatprep.subr.bf16.mxu0 %v1387
      %3451 = vmatpush1.bf16.msra.mxu0 %v1386
      %3452 = vmatprep.subr.bf16.mxu0 %v1395
      %3453 = vmatpush1.bf16.msra.mxu0 %v1394
      %3454 = vmatprep.subr.bf16.mxu0 %v1403
      %3455 = vmatpush1.bf16.msra.mxu0 %v1402
      %3456 = vmatprep.mubr.bf16.mxu0 %v2403
      %3457 = vmatmul.mubr.bf16.gmra.mrb[0].mxu0 %v2402
      %v3458 = vpop.f32.mrb[0].mxu0
      %v3459 = vadd.f32 %v3418, %v3458
      %v3460 = vpop.f32.mrb[0].mxu0
      %v3461 = vadd.f32 %v3420, %v3460
      %v3462 = vpop.f32.mrb[0].mxu0
      %v3463 = vpop.f32.mrb[0].mxu0
      %3464 = vdwg.mxu0
      %3465 = vmatprep.subr.bf16.mxu0 %v1411
      %3466 = vmatpush1.bf16.msra.mxu0 %v1410
      %3467 = vmatprep.subr.bf16.mxu0 %v1419
      %3468 = vmatpush1.bf16.msra.mxu0 %v1418
      %3469 = vmatprep.subr.bf16.mxu0 %v1427
      %3470 = vmatpush1.bf16.msra.mxu0 %v1426
      %3471 = vmatprep.subr.bf16.mxu0 %v1435
      %3472 = vmatpush1.bf16.msra.mxu0 %v1434
      %3473 = vmatprep.subr.bf16.mxu0 %v1443
      %3474 = vmatpush1.bf16.msra.mxu0 %v1442
      %3475 = vmatprep.subr.bf16.mxu0 %v1451
      %3476 = vmatpush1.bf16.msra.mxu0 %v1450
      %3477 = vmatprep.subr.bf16.mxu0 %v1459
      %3478 = vmatpush1.bf16.msra.mxu0 %v1458
      %3479 = vmatprep.subr.bf16.mxu0 %v1467
      %3480 = vmatpush1.bf16.msra.mxu0 %v1466
      %3481 = vmatprep.subr.bf16.mxu0 %v1475
      %3482 = vmatpush1.bf16.msra.mxu0 %v1474
      %3483 = vmatprep.subr.bf16.mxu0 %v1483
      %3484 = vmatpush1.bf16.msra.mxu0 %v1482
      %3485 = vmatprep.subr.bf16.mxu0 %v1491
      %3486 = vmatpush1.bf16.msra.mxu0 %v1490
      %3487 = vmatprep.subr.bf16.mxu0 %v1499
      %3488 = vmatpush1.bf16.msra.mxu0 %v1498
      %3489 = vmatprep.subr.bf16.mxu0 %v1507
      %3490 = vmatpush1.bf16.msra.mxu0 %v1506
      %3491 = vmatprep.subr.bf16.mxu0 %v1515
      %3492 = vmatpush1.bf16.msra.mxu0 %v1514
      %3493 = vmatprep.subr.bf16.mxu0 %v1523
      %3494 = vmatpush1.bf16.msra.mxu0 %v1522
      %3495 = vmatprep.subr.bf16.mxu0 %v1531
      %3496 = vmatpush1.bf16.msra.mxu0 %v1530
      %3497 = vmatprep.mubr.bf16.mxu0 %v2405
      %3498 = vmatmul.mubr.bf16.gmra.mrb[0].mxu0 %v2404
      %v3499 = vpop.f32.mrb[0].mxu0
      %v3500 = vadd.f32 %v3459, %v3499
      %v3501 = vpop.f32.mrb[0].mxu0
      %v3502 = vadd.f32 %v3461, %v3501
      %v3503 = vpop.f32.mrb[0].mxu0
      %v3504 = vpop.f32.mrb[0].mxu0
      %3505 = vdwg.mxu0
      %3506 = vmatprep.subr.bf16.mxu0 %v1539
      %3507 = vmatpush1.bf16.msra.mxu0 %v1538
      %3508 = vmatprep.subr.bf16.mxu0 %v1547
      %3509 = vmatpush1.bf16.msra.mxu0 %v1546
      %3510 = vmatprep.subr.bf16.mxu0 %v1555
      %3511 = vmatpush1.bf16.msra.mxu0 %v1554
      %3512 = vmatprep.subr.bf16.mxu0 %v1563
      %3513 = vmatpush1.bf16.msra.mxu0 %v1562
      %3514 = vmatprep.subr.bf16.mxu0 %v1571
      %3515 = vmatpush1.bf16.msra.mxu0 %v1570
      %3516 = vmatprep.subr.bf16.mxu0 %v1579
      %3517 = vmatpush1.bf16.msra.mxu0 %v1578
      %3518 = vmatprep.subr.bf16.mxu0 %v1587
      %3519 = vmatpush1.bf16.msra.mxu0 %v1586
      %3520 = vmatprep.subr.bf16.mxu0 %v1595
      %3521 = vmatpush1.bf16.msra.mxu0 %v1594
      %3522 = vmatprep.subr.bf16.mxu0 %v1603
      %3523 = vmatpush1.bf16.msra.mxu0 %v1602
      %3524 = vmatprep.subr.bf16.mxu0 %v1611
      %3525 = vmatpush1.bf16.msra.mxu0 %v1610
      %3526 = vmatprep.subr.bf16.mxu0 %v1619
      %3527 = vmatpush1.bf16.msra.mxu0 %v1618
      %3528 = vmatprep.subr.bf16.mxu0 %v1627
      %3529 = vmatpush1.bf16.msra.mxu0 %v1626
      %3530 = vmatprep.subr.bf16.mxu0 %v1635
      %3531 = vmatpush1.bf16.msra.mxu0 %v1634
      %3532 = vmatprep.subr.bf16.mxu0 %v1643
      %3533 = vmatpush1.bf16.msra.mxu0 %v1642
      %3534 = vmatprep.subr.bf16.mxu0 %v1651
      %3535 = vmatpush1.bf16.msra.mxu0 %v1650
      %3536 = vmatprep.subr.bf16.mxu0 %v1659
      %3537 = vmatpush1.bf16.msra.mxu0 %v1658
      %3538 = vmatprep.mubr.bf16.mxu0 %v2407
      %3539 = vmatmul.mubr.bf16.gmra.mrb[0].mxu0 %v2406
      %v3540 = vpop.f32.mrb[0].mxu0
      %v3541 = vadd.f32 %v3500, %v3540
      %v3542 = vpop.f32.mrb[0].mxu0
      %v3543 = vadd.f32 %v3502, %v3542
      %v3544 = vpop.f32.mrb[0].mxu0
      %v3545 = vpop.f32.mrb[0].mxu0
      %3546 = vdwg.mxu0
      %3547 = vmatprep.subr.bf16.mxu0 %v1667
      %3548 = vmatpush1.bf16.msra.mxu0 %v1666
      %3549 = vmatprep.subr.bf16.mxu0 %v1675
      %3550 = vmatpush1.bf16.msra.mxu0 %v1674
      %3551 = vmatprep.subr.bf16.mxu0 %v1683
      %3552 = vmatpush1.bf16.msra.mxu0 %v1682
      %3553 = vmatprep.subr.bf16.mxu0 %v1691
      %3554 = vmatpush1.bf16.msra.mxu0 %v1690
      %3555 = vmatprep.subr.bf16.mxu0 %v1699
      %3556 = vmatpush1.bf16.msra.mxu0 %v1698
      %3557 = vmatprep.subr.bf16.mxu0 %v1707
      %3558 = vmatpush1.bf16.msra.mxu0 %v1706
      %3559 = vmatprep.subr.bf16.mxu0 %v1715
      %3560 = vmatpush1.bf16.msra.mxu0 %v1714
      %3561 = vmatprep.subr.bf16.mxu0 %v1723
      %3562 = vmatpush1.bf16.msra.mxu0 %v1722
      %3563 = vmatprep.subr.bf16.mxu0 %v1731
      %3564 = vmatpush1.bf16.msra.mxu0 %v1730
      %3565 = vmatprep.subr.bf16.mxu0 %v1739
      %3566 = vmatpush1.bf16.msra.mxu0 %v1738
      %3567 = vmatprep.subr.bf16.mxu0 %v1747
      %3568 = vmatpush1.bf16.msra.mxu0 %v1746
      %3569 = vmatprep.subr.bf16.mxu0 %v1755
      %3570 = vmatpush1.bf16.msra.mxu0 %v1754
      %3571 = vmatprep.subr.bf16.mxu0 %v1763
      %3572 = vmatpush1.bf16.msra.mxu0 %v1762
      %3573 = vmatprep.subr.bf16.mxu0 %v1771
      %3574 = vmatpush1.bf16.msra.mxu0 %v1770
      %3575 = vmatprep.subr.bf16.mxu0 %v1779
      %3576 = vmatpush1.bf16.msra.mxu0 %v1778
      %3577 = vmatprep.subr.bf16.mxu0 %v1787
      %3578 = vmatpush1.bf16.msra.mxu0 %v1786
      %3579 = vmatprep.mubr.bf16.mxu0 %v2409
      %3580 = vmatmul.mubr.bf16.gmra.mrb[0].mxu0 %v2408
      %v3581 = vpop.f32.mrb[0].mxu0
      %v3582 = vadd.f32 %v3541, %v3581
      %v3583 = vpop.f32.mrb[0].mxu0
      %v3584 = vadd.f32 %v3543, %v3583
      %v3585 = vpop.f32.mrb[0].mxu0
      %v3586 = vpop.f32.mrb[0].mxu0
      %3587 = vdwg.mxu0
      %3588 = vmatprep.subr.bf16.mxu0 %v1795
      %3589 = vmatpush1.bf16.msra.mxu0 %v1794
      %3590 = vmatprep.subr.bf16.mxu0 %v1803
      %3591 = vmatpush1.bf16.msra.mxu0 %v1802
      %3592 = vmatprep.subr.bf16.mxu0 %v1811
      %3593 = vmatpush1.bf16.msra.mxu0 %v1810
      %3594 = vmatprep.subr.bf16.mxu0 %v1819
      %3595 = vmatpush1.bf16.msra.mxu0 %v1818
      %3596 = vmatprep.subr.bf16.mxu0 %v1827
      %3597 = vmatpush1.bf16.msra.mxu0 %v1826
      %3598 = vmatprep.subr.bf16.mxu0 %v1835
      %3599 = vmatpush1.bf16.msra.mxu0 %v1834
      %3600 = vmatprep.subr.bf16.mxu0 %v1843
      %3601 = vmatpush1.bf16.msra.mxu0 %v1842
      %3602 = vmatprep.subr.bf16.mxu0 %v1851
      %3603 = vmatpush1.bf16.msra.mxu0 %v1850
      %3604 = vmatprep.subr.bf16.mxu0 %v1859
      %3605 = vmatpush1.bf16.msra.mxu0 %v1858
      %3606 = vmatprep.subr.bf16.mxu0 %v1867
      %3607 = vmatpush1.bf16.msra.mxu0 %v1866
      %3608 = vmatprep.subr.bf16.mxu0 %v1875
      %3609 = vmatpush1.bf16.msra.mxu0 %v1874
      %3610 = vmatprep.subr.bf16.mxu0 %v1883
      %3611 = vmatpush1.bf16.msra.mxu0 %v1882
      %3612 = vmatprep.subr.bf16.mxu0 %v1891
      %3613 = vmatpush1.bf16.msra.mxu0 %v1890
      %3614 = vmatprep.subr.bf16.mxu0 %v1899
      %3615 = vmatpush1.bf16.msra.mxu0 %v1898
      %3616 = vmatprep.subr.bf16.mxu0 %v1907
      %3617 = vmatpush1.bf16.msra.mxu0 %v1906
      %3618 = vmatprep.subr.bf16.mxu0 %v1915
      %3619 = vmatpush1.bf16.msra.mxu0 %v1914
      %3620 = vmatprep.mubr.bf16.mxu0 %v2411
      %3621 = vmatmul.mubr.bf16.gmra.mrb[0].mxu0 %v2410
      %v3622 = vpop.f32.mrb[0].mxu0
      %v3623 = vadd.f32 %v3582, %v3622
      %v3624 = vpop.f32.mrb[0].mxu0
      %v3625 = vadd.f32 %v3584, %v3624
      %v3626 = vpop.f32.mrb[0].mxu0
      %v3627 = vpop.f32.mrb[0].mxu0
      %3628 = vdwg.mxu0
      %3629 = vmatprep.subr.bf16.mxu0 %v1923
      %3630 = vmatpush1.bf16.msra.mxu0 %v1922
      %3631 = vmatprep.subr.bf16.mxu0 %v1931
      %3632 = vmatpush1.bf16.msra.mxu0 %v1930
      %3633 = vmatprep.subr.bf16.mxu0 %v1939
      %3634 = vmatpush1.bf16.msra.mxu0 %v1938
      %3635 = vmatprep.subr.bf16.mxu0 %v1947
      %3636 = vmatpush1.bf16.msra.mxu0 %v1946
      %3637 = vmatprep.subr.bf16.mxu0 %v1955
      %3638 = vmatpush1.bf16.msra.mxu0 %v1954
      %3639 = vmatprep.subr.bf16.mxu0 %v1963
      %3640 = vmatpush1.bf16.msra.mxu0 %v1962
      %3641 = vmatprep.subr.bf16.mxu0 %v1971
      %3642 = vmatpush1.bf16.msra.mxu0 %v1970
      %3643 = vmatprep.subr.bf16.mxu0 %v1979
      %3644 = vmatpush1.bf16.msra.mxu0 %v1978
      %3645 = vmatprep.subr.bf16.mxu0 %v1987
      %3646 = vmatpush1.bf16.msra.mxu0 %v1986
      %3647 = vmatprep.subr.bf16.mxu0 %v1995
      %3648 = vmatpush1.bf16.msra.mxu0 %v1994
      %3649 = vmatprep.subr.bf16.mxu0 %v2003
      %3650 = vmatpush1.bf16.msra.mxu0 %v2002
      %3651 = vmatprep.subr.bf16.mxu0 %v2011
      %3652 = vmatpush1.bf16.msra.mxu0 %v2010
      %3653 = vmatprep.subr.bf16.mxu0 %v2019
      %3654 = vmatpush1.bf16.msra.mxu0 %v2018
      %3655 = vmatprep.subr.bf16.mxu0 %v2027
      %3656 = vmatpush1.bf16.msra.mxu0 %v2026
      %3657 = vmatprep.subr.bf16.mxu0 %v2035
      %3658 = vmatpush1.bf16.msra.mxu0 %v2034
      %3659 = vmatprep.subr.bf16.mxu0 %v2043
      %3660 = vmatpush1.bf16.msra.mxu0 %v2042
      %3661 = vmatprep.mubr.bf16.mxu0 %v2413
      %3662 = vmatmul.mubr.bf16.gmra.mrb[0].mxu0 %v2412
      %v3663 = vpop.f32.mrb[0].mxu0
      %v3664 = vadd.f32 %v3623, %v3663
      %v3665 = vpop.f32.mrb[0].mxu0
      %v3666 = vadd.f32 %v3625, %v3665
      %v3667 = vpop.f32.mrb[0].mxu0
      %v3668 = vpop.f32.mrb[0].mxu0
      %3669 = vdwg.mxu0
      %3670 = vmatprep.subr.bf16.mxu0 %v2051
      %3671 = vmatpush1.bf16.msra.mxu0 %v2050
      %3672 = vmatprep.subr.bf16.mxu0 %v2059
      %3673 = vmatpush1.bf16.msra.mxu0 %v2058
      %3674 = vmatprep.subr.bf16.mxu0 %v2067
      %3675 = vmatpush1.bf16.msra.mxu0 %v2066
      %3676 = vmatprep.subr.bf16.mxu0 %v2075
      %3677 = vmatpush1.bf16.msra.mxu0 %v2074
      %3678 = vmatprep.subr.bf16.mxu0 %v2083
      %3679 = vmatpush1.bf16.msra.mxu0 %v2082
      %3680 = vmatprep.subr.bf16.mxu0 %v2091
      %3681 = vmatpush1.bf16.msra.mxu0 %v2090
      %3682 = vmatprep.subr.bf16.mxu0 %v2099
      %3683 = vmatpush1.bf16.msra.mxu0 %v2098
      %3684 = vmatprep.subr.bf16.mxu0 %v2107
      %3685 = vmatpush1.bf16.msra.mxu0 %v2106
      %3686 = vmatprep.subr.bf16.mxu0 %v2115
      %3687 = vmatpush1.bf16.msra.mxu0 %v2114
      %3688 = vmatprep.subr.bf16.mxu0 %v2123
      %3689 = vmatpush1.bf16.msra.mxu0 %v2122
      %3690 = vmatprep.subr.bf16.mxu0 %v2131
      %3691 = vmatpush1.bf16.msra.mxu0 %v2130
      %3692 = vmatprep.subr.bf16.mxu0 %v2139
      %3693 = vmatpush1.bf16.msra.mxu0 %v2138
      %3694 = vmatprep.subr.bf16.mxu0 %v2147
      %3695 = vmatpush1.bf16.msra.mxu0 %v2146
      %3696 = vmatprep.subr.bf16.mxu0 %v2155
      %3697 = vmatpush1.bf16.msra.mxu0 %v2154
      %3698 = vmatprep.subr.bf16.mxu0 %v2163
      %3699 = vmatpush1.bf16.msra.mxu0 %v2162
      %3700 = vmatprep.subr.bf16.mxu0 %v2171
      %3701 = vmatpush1.bf16.msra.mxu0 %v2170
      %3702 = vmatprep.mubr.bf16.mxu0 %v2415
      %3703 = vmatmul.mubr.bf16.gmra.mrb[0].mxu0 %v2414
      %v3704 = vpop.f32.mrb[0].mxu0
      %v3705 = vadd.f32 %v3664, %v3704
      %v3706 = vpop.f32.mrb[0].mxu0
      %v3707 = vadd.f32 %v3666, %v3706
      %v3708 = vpop.f32.mrb[0].mxu0
      %v3709 = vpop.f32.mrb[0].mxu0
      %3710 = vdwg.mxu0
      %3711 = vmatprep.subr.bf16.mxu0 %v2179
      %3712 = vmatpush1.bf16.msra.mxu0 %v2178
      %3713 = vmatprep.subr.bf16.mxu0 %v2187
      %3714 = vmatpush1.bf16.msra.mxu0 %v2186
      %3715 = vmatprep.subr.bf16.mxu0 %v2195
      %3716 = vmatpush1.bf16.msra.mxu0 %v2194
      %3717 = vmatprep.subr.bf16.mxu0 %v2203
      %3718 = vmatpush1.bf16.msra.mxu0 %v2202
      %3719 = vmatprep.subr.bf16.mxu0 %v2211
      %3720 = vmatpush1.bf16.msra.mxu0 %v2210
      %3721 = vmatprep.subr.bf16.mxu0 %v2219
      %3722 = vmatpush1.bf16.msra.mxu0 %v2218
      %3723 = vmatprep.subr.bf16.mxu0 %v2227
      %3724 = vmatpush1.bf16.msra.mxu0 %v2226
      %3725 = vmatprep.subr.bf16.mxu0 %v2235
      %3726 = vmatpush1.bf16.msra.mxu0 %v2234
      %3727 = vmatprep.subr.bf16.mxu0 %v2243
      %3728 = vmatpush1.bf16.msra.mxu0 %v2242
      %3729 = vmatprep.subr.bf16.mxu0 %v2251
      %3730 = vmatpush1.bf16.msra.mxu0 %v2250
      %3731 = vmatprep.subr.bf16.mxu0 %v2259
      %3732 = vmatpush1.bf16.msra.mxu0 %v2258
      %3733 = vmatprep.subr.bf16.mxu0 %v2267
      %3734 = vmatpush1.bf16.msra.mxu0 %v2266
      %3735 = vmatprep.subr.bf16.mxu0 %v2275
      %3736 = vmatpush1.bf16.msra.mxu0 %v2274
      %3737 = vmatprep.subr.bf16.mxu0 %v2283
      %3738 = vmatpush1.bf16.msra.mxu0 %v2282
      %3739 = vmatprep.subr.bf16.mxu0 %v2291
      %3740 = vmatpush1.bf16.msra.mxu0 %v2290
      %3741 = vmatprep.subr.bf16.mxu0 %v2299
      %3742 = vmatpush1.bf16.msra.mxu0 %v2298
      %3743 = vmatprep.mubr.bf16.mxu0 %v2417
      %3744 = vmatmul.mubr.bf16.gmra.mrb[0].mxu0 %v2416
      %v3745 = vpop.f32.mrb[0].mxu0
      %v3746 = vadd.f32 %v3705, %v3745
      %v3747 = vpop.f32.mrb[0].mxu0
      %v3748 = vadd.f32 %v3707, %v3747
      %v3749 = vpop.f32.mrb[0].mxu0
      %v3750 = vpop.f32.mrb[0].mxu0
      %3751 = vdwg.mxu0
      %3752 = vmatprep.subr.bf16.mxu0 %v2307
      %3753 = vmatpush1.bf16.msra.mxu0 %v2306
      %3754 = vmatprep.subr.bf16.mxu0 %v2315
      %3755 = vmatpush1.bf16.msra.mxu0 %v2314
      %3756 = vmatprep.subr.bf16.mxu0 %v2323
      %3757 = vmatpush1.bf16.msra.mxu0 %v2322
      %3758 = vmatprep.subr.bf16.mxu0 %v2331
      %3759 = vmatpush1.bf16.msra.mxu0 %v2330
      %3760 = vmatprep.subr.bf16.mxu0 %v2339
      %3761 = vmatpush1.bf16.msra.mxu0 %v2338
      %3762 = vmatprep.subr.bf16.mxu0 %v2347
      %3763 = vmatpush1.bf16.msra.mxu0 %v2346
      %3764 = vmatprep.subr.bf16.mxu0 %v2355
      %3765 = vmatpush1.bf16.msra.mxu0 %v2354
      %3766 = vmatprep.subr.bf16.mxu0 %v2363
      %3767 = vmatpush1.bf16.msra.mxu0 %v2362
      %3768 = vmatprep.subr.bf16.mxu0 0
      %3769 = vmatpush1.bf16.msra.mxu0 0
      %3770 = vmatprep.subr.bf16.mxu0 0
      %3771 = vmatpush1.bf16.msra.mxu0 0
      %3772 = vmatprep.subr.bf16.mxu0 0
      %3773 = vmatpush1.bf16.msra.mxu0 0
      %3774 = vmatprep.subr.bf16.mxu0 0
      %3775 = vmatpush1.bf16.msra.mxu0 0
      %3776 = vmatprep.subr.bf16.mxu0 0
      %3777 = vmatpush1.bf16.msra.mxu0 0
      %3778 = vmatprep.subr.bf16.mxu0 0
      %3779 = vmatpush1.bf16.msra.mxu0 0
      %3780 = vmatprep.subr.bf16.mxu0 0
      %3781 = vmatpush1.bf16.msra.mxu0 0
      %3782 = vmatprep.subr.bf16.mxu0 0
      %3783 = vmatpush1.bf16.msra.mxu0 0
      %3784 = vmatprep.mubr.bf16.mxu0 0
      %3785 = vmatmul.mubr.bf16.gmra.mrb[0].mxu0 %v2418
      %v3786 = vpop.f32.mrb[0].mxu0
      %v3787 = vadd.f32 %v3746, %v3786
      %v3788 = vpop.f32.mrb[0].mxu0
      %v3789 = vadd.f32 %v3748, %v3788
      %v3790 = vpop.f32.mrb[0].mxu0
      %v3791 = vpop.f32.mrb[0].mxu0
      %3792 = vdwg.mxu0
      %3793 = vmatprep.subr.bf16.mxu0 %v1029
      %3794 = vmatpush1.bf16.msra.mxu0 %v1028
      %3795 = vmatprep.subr.bf16.mxu0 %v1037
      %3796 = vmatpush1.bf16.msra.mxu0 %v1036
      %3797 = vmatprep.subr.bf16.mxu0 %v1045
      %3798 = vmatpush1.bf16.msra.mxu0 %v1044
      %3799 = vmatprep.subr.bf16.mxu0 %v1053
      %3800 = vmatpush1.bf16.msra.mxu0 %v1052
      %3801 = vmatprep.subr.bf16.mxu0 %v1061
      %3802 = vmatpush1.bf16.msra.mxu0 %v1060
      %3803 = vmatprep.subr.bf16.mxu0 %v1069
      %3804 = vmatpush1.bf16.msra.mxu0 %v1068
      %3805 = vmatprep.subr.bf16.mxu0 %v1077
      %3806 = vmatpush1.bf16.msra.mxu0 %v1076
      %3807 = vmatprep.subr.bf16.mxu0 %v1085
      %3808 = vmatpush1.bf16.msra.mxu0 %v1084
      %3809 = vmatprep.subr.bf16.mxu0 %v1093
      %3810 = vmatpush1.bf16.msra.mxu0 %v1092
      %3811 = vmatprep.subr.bf16.mxu0 %v1101
      %3812 = vmatpush1.bf16.msra.mxu0 %v1100
      %3813 = vmatprep.subr.bf16.mxu0 %v1109
      %3814 = vmatpush1.bf16.msra.mxu0 %v1108
      %3815 = vmatprep.subr.bf16.mxu0 %v1117
      %3816 = vmatpush1.bf16.msra.mxu0 %v1116
      %3817 = vmatprep.subr.bf16.mxu0 %v1125
      %3818 = vmatpush1.bf16.msra.mxu0 %v1124
      %3819 = vmatprep.subr.bf16.mxu0 %v1133
      %3820 = vmatpush1.bf16.msra.mxu0 %v1132
      %3821 = vmatprep.subr.bf16.mxu0 %v1141
      %3822 = vmatpush1.bf16.msra.mxu0 %v1140
      %3823 = vmatprep.subr.bf16.mxu0 %v1149
      %3824 = vmatpush1.bf16.msra.mxu0 %v1148
      %3825 = vmatprep.mubr.bf16.mxu0 %v2399
      %3826 = vmatmul.mubr.bf16.gmra.mrb[0].mxu0 %v2398
      %v3827 = vpop.f32.mrb[0].mxu0
      %v3828 = vadd.f32 0.0, %v3827
      %v3829 = vpop.f32.mrb[0].mxu0
      %v3830 = vadd.f32 0.0, %v3829
      %v3831 = vpop.f32.mrb[0].mxu0
      %v3832 = vpop.f32.mrb[0].mxu0
      %3833 = vdwg.mxu0
      %3834 = vmatprep.subr.bf16.mxu0 %v1157
      %3835 = vmatpush1.bf16.msra.mxu0 %v1156
      %3836 = vmatprep.subr.bf16.mxu0 %v1165
      %3837 = vmatpush1.bf16.msra.mxu0 %v1164
      %3838 = vmatprep.subr.bf16.mxu0 %v1173
      %3839 = vmatpush1.bf16.msra.mxu0 %v1172
      %3840 = vmatprep.subr.bf16.mxu0 %v1181
      %3841 = vmatpush1.bf16.msra.mxu0 %v1180
      %3842 = vmatprep.subr.bf16.mxu0 %v1189
      %3843 = vmatpush1.bf16.msra.mxu0 %v1188
      %3844 = vmatprep.subr.bf16.mxu0 %v1197
      %3845 = vmatpush1.bf16.msra.mxu0 %v1196
      %3846 = vmatprep.subr.bf16.mxu0 %v1205
      %3847 = vmatpush1.bf16.msra.mxu0 %v1204
      %3848 = vmatprep.subr.bf16.mxu0 %v1213
      %3849 = vmatpush1.bf16.msra.mxu0 %v1212
      %3850 = vmatprep.subr.bf16.mxu0 %v1221
      %3851 = vmatpush1.bf16.msra.mxu0 %v1220
      %3852 = vmatprep.subr.bf16.mxu0 %v1229
      %3853 = vmatpush1.bf16.msra.mxu0 %v1228
      %3854 = vmatprep.subr.bf16.mxu0 %v1237
      %3855 = vmatpush1.bf16.msra.mxu0 %v1236
      %3856 = vmatprep.subr.bf16.mxu0 %v1245
      %3857 = vmatpush1.bf16.msra.mxu0 %v1244
      %3858 = vmatprep.subr.bf16.mxu0 %v1253
      %3859 = vmatpush1.bf16.msra.mxu0 %v1252
      %3860 = vmatprep.subr.bf16.mxu0 %v1261
      %3861 = vmatpush1.bf16.msra.mxu0 %v1260
      %3862 = vmatprep.subr.bf16.mxu0 %v1269
      %3863 = vmatpush1.bf16.msra.mxu0 %v1268
      %3864 = vmatprep.subr.bf16.mxu0 %v1277
      %3865 = vmatpush1.bf16.msra.mxu0 %v1276
      %3866 = vmatprep.mubr.bf16.mxu0 %v2401
      %3867 = vmatmul.mubr.bf16.gmra.mrb[0].mxu0 %v2400
      %v3868 = vpop.f32.mrb[0].mxu0
      %v3869 = vadd.f32 %v3828, %v3868
      %v3870 = vpop.f32.mrb[0].mxu0
      %v3871 = vadd.f32 %v3830, %v3870
      %v3872 = vpop.f32.mrb[0].mxu0
      %v3873 = vpop.f32.mrb[0].mxu0
      %3874 = vdwg.mxu0
      %3875 = vmatprep.subr.bf16.mxu0 %v1285
      %3876 = vmatpush1.bf16.msra.mxu0 %v1284
      %3877 = vmatprep.subr.bf16.mxu0 %v1293
      %3878 = vmatpush1.bf16.msra.mxu0 %v1292
      %3879 = vmatprep.subr.bf16.mxu0 %v1301
      %3880 = vmatpush1.bf16.msra.mxu0 %v1300
      %3881 = vmatprep.subr.bf16.mxu0 %v1309
      %3882 = vmatpush1.bf16.msra.mxu0 %v1308
      %3883 = vmatprep.subr.bf16.mxu0 %v1317
      %3884 = vmatpush1.bf16.msra.mxu0 %v1316
      %3885 = vmatprep.subr.bf16.mxu0 %v1325
      %3886 = vmatpush1.bf16.msra.mxu0 %v1324
      %3887 = vmatprep.subr.bf16.mxu0 %v1333
      %3888 = vmatpush1.bf16.msra.mxu0 %v1332
      %3889 = vmatprep.subr.bf16.mxu0 %v1341
      %3890 = vmatpush1.bf16.msra.mxu0 %v1340
      %3891 = vmatprep.subr.bf16.mxu0 %v1349
      %3892 = vmatpush1.bf16.msra.mxu0 %v1348
      %3893 = vmatprep.subr.bf16.mxu0 %v1357
      %3894 = vmatpush1.bf16.msra.mxu0 %v1356
      %3895 = vmatprep.subr.bf16.mxu0 %v1365
      %3896 = vmatpush1.bf16.msra.mxu0 %v1364
      %3897 = vmatprep.subr.bf16.mxu0 %v1373
      %3898 = vmatpush1.bf16.msra.mxu0 %v1372
      %3899 = vmatprep.subr.bf16.mxu0 %v1381
      %3900 = vmatpush1.bf16.msra.mxu0 %v1380
      %3901 = vmatprep.subr.bf16.mxu0 %v1389
      %3902 = vmatpush1.bf16.msra.mxu0 %v1388
      %3903 = vmatprep.subr.bf16.mxu0 %v1397
      %3904 = vmatpush1.bf16.msra.mxu0 %v1396
      %3905 = vmatprep.subr.bf16.mxu0 %v1405
      %3906 = vmatpush1.bf16.msra.mxu0 %v1404
      %3907 = vmatprep.mubr.bf16.mxu0 %v2403
      %3908 = vmatmul.mubr.bf16.gmra.mrb[0].mxu0 %v2402
      %v3909 = vpop.f32.mrb[0].mxu0
      %v3910 = vadd.f32 %v3869, %v3909
      %v3911 = vpop.f32.mrb[0].mxu0
      %v3912 = vadd.f32 %v3871, %v3911
      %v3913 = vpop.f32.mrb[0].mxu0
      %v3914 = vpop.f32.mrb[0].mxu0
      %3915 = vdwg.mxu0
      %3916 = vmatprep.subr.bf16.mxu0 %v1413
      %3917 = vmatpush1.bf16.msra.mxu0 %v1412
      %3918 = vmatprep.subr.bf16.mxu0 %v1421
      %3919 = vmatpush1.bf16.msra.mxu0 %v1420
      %3920 = vmatprep.subr.bf16.mxu0 %v1429
      %3921 = vmatpush1.bf16.msra.mxu0 %v1428
      %3922 = vmatprep.subr.bf16.mxu0 %v1437
      %3923 = vmatpush1.bf16.msra.mxu0 %v1436
      %3924 = vmatprep.subr.bf16.mxu0 %v1445
      %3925 = vmatpush1.bf16.msra.mxu0 %v1444
      %3926 = vmatprep.subr.bf16.mxu0 %v1453
      %3927 = vmatpush1.bf16.msra.mxu0 %v1452
      %3928 = vmatprep.subr.bf16.mxu0 %v1461
      %3929 = vmatpush1.bf16.msra.mxu0 %v1460
      %3930 = vmatprep.subr.bf16.mxu0 %v1469
      %3931 = vmatpush1.bf16.msra.mxu0 %v1468
      %3932 = vmatprep.subr.bf16.mxu0 %v1477
      %3933 = vmatpush1.bf16.msra.mxu0 %v1476
      %3934 = vmatprep.subr.bf16.mxu0 %v1485
      %3935 = vmatpush1.bf16.msra.mxu0 %v1484
      %3936 = vmatprep.subr.bf16.mxu0 %v1493
      %3937 = vmatpush1.bf16.msra.mxu0 %v1492
      %3938 = vmatprep.subr.bf16.mxu0 %v1501
      %3939 = vmatpush1.bf16.msra.mxu0 %v1500
      %3940 = vmatprep.subr.bf16.mxu0 %v1509
      %3941 = vmatpush1.bf16.msra.mxu0 %v1508
      %3942 = vmatprep.subr.bf16.mxu0 %v1517
      %3943 = vmatpush1.bf16.msra.mxu0 %v1516
      %3944 = vmatprep.subr.bf16.mxu0 %v1525
      %3945 = vmatpush1.bf16.msra.mxu0 %v1524
      %3946 = vmatprep.subr.bf16.mxu0 %v1533
      %3947 = vmatpush1.bf16.msra.mxu0 %v1532
      %3948 = vmatprep.mubr.bf16.mxu0 %v2405
      %3949 = vmatmul.mubr.bf16.gmra.mrb[0].mxu0 %v2404
      %v3950 = vpop.f32.mrb[0].mxu0
      %v3951 = vadd.f32 %v3910, %v3950
      %v3952 = vpop.f32.mrb[0].mxu0
      %v3953 = vadd.f32 %v3912, %v3952
      %v3954 = vpop.f32.mrb[0].mxu0
      %v3955 = vpop.f32.mrb[0].mxu0
      %3956 = vdwg.mxu0
      %3957 = vmatprep.subr.bf16.mxu0 %v1541
      %3958 = vmatpush1.bf16.msra.mxu0 %v1540
      %3959 = vmatprep.subr.bf16.mxu0 %v1549
      %3960 = vmatpush1.bf16.msra.mxu0 %v1548
      %3961 = vmatprep.subr.bf16.mxu0 %v1557
      %3962 = vmatpush1.bf16.msra.mxu0 %v1556
      %3963 = vmatprep.subr.bf16.mxu0 %v1565
      %3964 = vmatpush1.bf16.msra.mxu0 %v1564
      %3965 = vmatprep.subr.bf16.mxu0 %v1573
      %3966 = vmatpush1.bf16.msra.mxu0 %v1572
      %3967 = vmatprep.subr.bf16.mxu0 %v1581
      %3968 = vmatpush1.bf16.msra.mxu0 %v1580
      %3969 = vmatprep.subr.bf16.mxu0 %v1589
      %3970 = vmatpush1.bf16.msra.mxu0 %v1588
      %3971 = vmatprep.subr.bf16.mxu0 %v1597
      %3972 = vmatpush1.bf16.msra.mxu0 %v1596
      %3973 = vmatprep.subr.bf16.mxu0 %v1605
      %3974 = vmatpush1.bf16.msra.mxu0 %v1604
      %3975 = vmatprep.subr.bf16.mxu0 %v1613
      %3976 = vmatpush1.bf16.msra.mxu0 %v1612
      %3977 = vmatprep.subr.bf16.mxu0 %v1621
      %3978 = vmatpush1.bf16.msra.mxu0 %v1620
      %3979 = vmatprep.subr.bf16.mxu0 %v1629
      %3980 = vmatpush1.bf16.msra.mxu0 %v1628
      %3981 = vmatprep.subr.bf16.mxu0 %v1637
      %3982 = vmatpush1.bf16.msra.mxu0 %v1636
      %3983 = vmatprep.subr.bf16.mxu0 %v1645
      %3984 = vmatpush1.bf16.msra.mxu0 %v1644
      %3985 = vmatprep.subr.bf16.mxu0 %v1653
      %3986 = vmatpush1.bf16.msra.mxu0 %v1652
      %3987 = vmatprep.subr.bf16.mxu0 %v1661
      %3988 = vmatpush1.bf16.msra.mxu0 %v1660
      %3989 = vmatprep.mubr.bf16.mxu0 %v2407
      %3990 = vmatmul.mubr.bf16.gmra.mrb[0].mxu0 %v2406
      %v3991 = vpop.f32.mrb[0].mxu0
      %v3992 = vadd.f32 %v3951, %v3991
      %v3993 = vpop.f32.mrb[0].mxu0
      %v3994 = vadd.f32 %v3953, %v3993
      %v3995 = vpop.f32.mrb[0].mxu0
      %v3996 = vpop.f32.mrb[0].mxu0
      %3997 = vdwg.mxu0
      %3998 = vmatprep.subr.bf16.mxu0 %v1669
      %3999 = vmatpush1.bf16.msra.mxu0 %v1668
      %4000 = vmatprep.subr.bf16.mxu0 %v1677
      %4001 = vmatpush1.bf16.msra.mxu0 %v1676
      %4002 = vmatprep.subr.bf16.mxu0 %v1685
      %4003 = vmatpush1.bf16.msra.mxu0 %v1684
      %4004 = vmatprep.subr.bf16.mxu0 %v1693
      %4005 = vmatpush1.bf16.msra.mxu0 %v1692
      %4006 = vmatprep.subr.bf16.mxu0 %v1701
      %4007 = vmatpush1.bf16.msra.mxu0 %v1700
      %4008 = vmatprep.subr.bf16.mxu0 %v1709
      %4009 = vmatpush1.bf16.msra.mxu0 %v1708
      %4010 = vmatprep.subr.bf16.mxu0 %v1717
      %4011 = vmatpush1.bf16.msra.mxu0 %v1716
      %4012 = vmatprep.subr.bf16.mxu0 %v1725
      %4013 = vmatpush1.bf16.msra.mxu0 %v1724
      %4014 = vmatprep.subr.bf16.mxu0 %v1733
      %4015 = vmatpush1.bf16.msra.mxu0 %v1732
      %4016 = vmatprep.subr.bf16.mxu0 %v1741
      %4017 = vmatpush1.bf16.msra.mxu0 %v1740
      %4018 = vmatprep.subr.bf16.mxu0 %v1749
      %4019 = vmatpush1.bf16.msra.mxu0 %v1748
      %4020 = vmatprep.subr.bf16.mxu0 %v1757
      %4021 = vmatpush1.bf16.msra.mxu0 %v1756
      %4022 = vmatprep.subr.bf16.mxu0 %v1765
      %4023 = vmatpush1.bf16.msra.mxu0 %v1764
      %4024 = vmatprep.subr.bf16.mxu0 %v1773
      %4025 = vmatpush1.bf16.msra.mxu0 %v1772
      %4026 = vmatprep.subr.bf16.mxu0 %v1781
      %4027 = vmatpush1.bf16.msra.mxu0 %v1780
      %4028 = vmatprep.subr.bf16.mxu0 %v1789
      %4029 = vmatpush1.bf16.msra.mxu0 %v1788
      %4030 = vmatprep.mubr.bf16.mxu0 %v2409
      %4031 = vmatmul.mubr.bf16.gmra.mrb[0].mxu0 %v2408
      %v4032 = vpop.f32.mrb[0].mxu0
      %v4033 = vadd.f32 %v3992, %v4032
      %v4034 = vpop.f32.mrb[0].mxu0
      %v4035 = vadd.f32 %v3994, %v4034
      %v4036 = vpop.f32.mrb[0].mxu0
      %v4037 = vpop.f32.mrb[0].mxu0
      %4038 = vdwg.mxu0
      %4039 = vmatprep.subr.bf16.mxu0 %v1797
      %4040 = vmatpush1.bf16.msra.mxu0 %v1796
      %4041 = vmatprep.subr.bf16.mxu0 %v1805
      %4042 = vmatpush1.bf16.msra.mxu0 %v1804
      %4043 = vmatprep.subr.bf16.mxu0 %v1813
      %4044 = vmatpush1.bf16.msra.mxu0 %v1812
      %4045 = vmatprep.subr.bf16.mxu0 %v1821
      %4046 = vmatpush1.bf16.msra.mxu0 %v1820
      %4047 = vmatprep.subr.bf16.mxu0 %v1829
      %4048 = vmatpush1.bf16.msra.mxu0 %v1828
      %4049 = vmatprep.subr.bf16.mxu0 %v1837
      %4050 = vmatpush1.bf16.msra.mxu0 %v1836
      %4051 = vmatprep.subr.bf16.mxu0 %v1845
      %4052 = vmatpush1.bf16.msra.mxu0 %v1844
      %4053 = vmatprep.subr.bf16.mxu0 %v1853
      %4054 = vmatpush1.bf16.msra.mxu0 %v1852
      %4055 = vmatprep.subr.bf16.mxu0 %v1861
      %4056 = vmatpush1.bf16.msra.mxu0 %v1860
      %4057 = vmatprep.subr.bf16.mxu0 %v1869
      %4058 = vmatpush1.bf16.msra.mxu0 %v1868
      %4059 = vmatprep.subr.bf16.mxu0 %v1877
      %4060 = vmatpush1.bf16.msra.mxu0 %v1876
      %4061 = vmatprep.subr.bf16.mxu0 %v1885
      %4062 = vmatpush1.bf16.msra.mxu0 %v1884
      %4063 = vmatprep.subr.bf16.mxu0 %v1893
      %4064 = vmatpush1.bf16.msra.mxu0 %v1892
      %4065 = vmatprep.subr.bf16.mxu0 %v1901
      %4066 = vmatpush1.bf16.msra.mxu0 %v1900
      %4067 = vmatprep.subr.bf16.mxu0 %v1909
      %4068 = vmatpush1.bf16.msra.mxu0 %v1908
      %4069 = vmatprep.subr.bf16.mxu0 %v1917
      %4070 = vmatpush1.bf16.msra.mxu0 %v1916
      %4071 = vmatprep.mubr.bf16.mxu0 %v2411
      %4072 = vmatmul.mubr.bf16.gmra.mrb[0].mxu0 %v2410
      %v4073 = vpop.f32.mrb[0].mxu0
      %v4074 = vadd.f32 %v4033, %v4073
      %v4075 = vpop.f32.mrb[0].mxu0
      %v4076 = vadd.f32 %v4035, %v4075
      %v4077 = vpop.f32.mrb[0].mxu0
      %v4078 = vpop.f32.mrb[0].mxu0
      %4079 = vdwg.mxu0
      %4080 = vmatprep.subr.bf16.mxu0 %v1925
      %4081 = vmatpush1.bf16.msra.mxu0 %v1924
      %4082 = vmatprep.subr.bf16.mxu0 %v1933
      %4083 = vmatpush1.bf16.msra.mxu0 %v1932
      %4084 = vmatprep.subr.bf16.mxu0 %v1941
      %4085 = vmatpush1.bf16.msra.mxu0 %v1940
      %4086 = vmatprep.subr.bf16.mxu0 %v1949
      %4087 = vmatpush1.bf16.msra.mxu0 %v1948
      %4088 = vmatprep.subr.bf16.mxu0 %v1957
      %4089 = vmatpush1.bf16.msra.mxu0 %v1956
      %4090 = vmatprep.subr.bf16.mxu0 %v1965
      %4091 = vmatpush1.bf16.msra.mxu0 %v1964
      %4092 = vmatprep.subr.bf16.mxu0 %v1973
      %4093 = vmatpush1.bf16.msra.mxu0 %v1972
      %4094 = vmatprep.subr.bf16.mxu0 %v1981
      %4095 = vmatpush1.bf16.msra.mxu0 %v1980
      %4096 = vmatprep.subr.bf16.mxu0 %v1989
      %4097 = vmatpush1.bf16.msra.mxu0 %v1988
      %4098 = vmatprep.subr.bf16.mxu0 %v1997
      %4099 = vmatpush1.bf16.msra.mxu0 %v1996
      %4100 = vmatprep.subr.bf16.mxu0 %v2005
      %4101 = vmatpush1.bf16.msra.mxu0 %v2004
      %4102 = vmatprep.subr.bf16.mxu0 %v2013
      %4103 = vmatpush1.bf16.msra.mxu0 %v2012
      %4104 = vmatprep.subr.bf16.mxu0 %v2021
      %4105 = vmatpush1.bf16.msra.mxu0 %v2020
      %4106 = vmatprep.subr.bf16.mxu0 %v2029
      %4107 = vmatpush1.bf16.msra.mxu0 %v2028
      %4108 = vmatprep.subr.bf16.mxu0 %v2037
      %4109 = vmatpush1.bf16.msra.mxu0 %v2036
      %4110 = vmatprep.subr.bf16.mxu0 %v2045
      %4111 = vmatpush1.bf16.msra.mxu0 %v2044
      %4112 = vmatprep.mubr.bf16.mxu0 %v2413
      %4113 = vmatmul.mubr.bf16.gmra.mrb[0].mxu0 %v2412
      %v4114 = vpop.f32.mrb[0].mxu0
      %v4115 = vadd.f32 %v4074, %v4114
      %v4116 = vpop.f32.mrb[0].mxu0
      %v4117 = vadd.f32 %v4076, %v4116
      %v4118 = vpop.f32.mrb[0].mxu0
      %v4119 = vpop.f32.mrb[0].mxu0
      %4120 = vdwg.mxu0
      %4121 = vmatprep.subr.bf16.mxu0 %v2053
      %4122 = vmatpush1.bf16.msra.mxu0 %v2052
      %4123 = vmatprep.subr.bf16.mxu0 %v2061
      %4124 = vmatpush1.bf16.msra.mxu0 %v2060
      %4125 = vmatprep.subr.bf16.mxu0 %v2069
      %4126 = vmatpush1.bf16.msra.mxu0 %v2068
      %4127 = vmatprep.subr.bf16.mxu0 %v2077
      %4128 = vmatpush1.bf16.msra.mxu0 %v2076
      %4129 = vmatprep.subr.bf16.mxu0 %v2085
      %4130 = vmatpush1.bf16.msra.mxu0 %v2084
      %4131 = vmatprep.subr.bf16.mxu0 %v2093
      %4132 = vmatpush1.bf16.msra.mxu0 %v2092
      %4133 = vmatprep.subr.bf16.mxu0 %v2101
      %4134 = vmatpush1.bf16.msra.mxu0 %v2100
      %4135 = vmatprep.subr.bf16.mxu0 %v2109
      %4136 = vmatpush1.bf16.msra.mxu0 %v2108
      %4137 = vmatprep.subr.bf16.mxu0 %v2117
      %4138 = vmatpush1.bf16.msra.mxu0 %v2116
      %4139 = vmatprep.subr.bf16.mxu0 %v2125
      %4140 = vmatpush1.bf16.msra.mxu0 %v2124
      %4141 = vmatprep.subr.bf16.mxu0 %v2133
      %4142 = vmatpush1.bf16.msra.mxu0 %v2132
      %4143 = vmatprep.subr.bf16.mxu0 %v2141
      %4144 = vmatpush1.bf16.msra.mxu0 %v2140
      %4145 = vmatprep.subr.bf16.mxu0 %v2149
      %4146 = vmatpush1.bf16.msra.mxu0 %v2148
      %4147 = vmatprep.subr.bf16.mxu0 %v2157
      %4148 = vmatpush1.bf16.msra.mxu0 %v2156
      %4149 = vmatprep.subr.bf16.mxu0 %v2165
      %4150 = vmatpush1.bf16.msra.mxu0 %v2164
      %4151 = vmatprep.subr.bf16.mxu0 %v2173
      %4152 = vmatpush1.bf16.msra.mxu0 %v2172
      %4153 = vmatprep.mubr.bf16.mxu0 %v2415
      %4154 = vmatmul.mubr.bf16.gmra.mrb[0].mxu0 %v2414
      %v4155 = vpop.f32.mrb[0].mxu0
      %v4156 = vadd.f32 %v4115, %v4155
      %v4157 = vpop.f32.mrb[0].mxu0
      %v4158 = vadd.f32 %v4117, %v4157
      %v4159 = vpop.f32.mrb[0].mxu0
      %v4160 = vpop.f32.mrb[0].mxu0
      %4161 = vdwg.mxu0
      %4162 = vmatprep.subr.bf16.mxu0 %v2181
      %4163 = vmatpush1.bf16.msra.mxu0 %v2180
      %4164 = vmatprep.subr.bf16.mxu0 %v2189
      %4165 = vmatpush1.bf16.msra.mxu0 %v2188
      %4166 = vmatprep.subr.bf16.mxu0 %v2197
      %4167 = vmatpush1.bf16.msra.mxu0 %v2196
      %4168 = vmatprep.subr.bf16.mxu0 %v2205
      %4169 = vmatpush1.bf16.msra.mxu0 %v2204
      %4170 = vmatprep.subr.bf16.mxu0 %v2213
      %4171 = vmatpush1.bf16.msra.mxu0 %v2212
      %4172 = vmatprep.subr.bf16.mxu0 %v2221
      %4173 = vmatpush1.bf16.msra.mxu0 %v2220
      %4174 = vmatprep.subr.bf16.mxu0 %v2229
      %4175 = vmatpush1.bf16.msra.mxu0 %v2228
      %4176 = vmatprep.subr.bf16.mxu0 %v2237
      %4177 = vmatpush1.bf16.msra.mxu0 %v2236
      %4178 = vmatprep.subr.bf16.mxu0 %v2245
      %4179 = vmatpush1.bf16.msra.mxu0 %v2244
      %4180 = vmatprep.subr.bf16.mxu0 %v2253
      %4181 = vmatpush1.bf16.msra.mxu0 %v2252
      %4182 = vmatprep.subr.bf16.mxu0 %v2261
      %4183 = vmatpush1.bf16.msra.mxu0 %v2260
      %4184 = vmatprep.subr.bf16.mxu0 %v2269
      %4185 = vmatpush1.bf16.msra.mxu0 %v2268
      %4186 = vmatprep.subr.bf16.mxu0 %v2277
      %4187 = vmatpush1.bf16.msra.mxu0 %v2276
      %4188 = vmatprep.subr.bf16.mxu0 %v2285
      %4189 = vmatpush1.bf16.msra.mxu0 %v2284
      %4190 = vmatprep.subr.bf16.mxu0 %v2293
      %4191 = vmatpush1.bf16.msra.mxu0 %v2292
      %4192 = vmatprep.subr.bf16.mxu0 %v2301
      %4193 = vmatpush1.bf16.msra.mxu0 %v2300
      %4194 = vmatprep.mubr.bf16.mxu0 %v2417
      %4195 = vmatmul.mubr.bf16.gmra.mrb[0].mxu0 %v2416
      %v4196 = vpop.f32.mrb[0].mxu0
      %v4197 = vadd.f32 %v4156, %v4196
      %v4198 = vpop.f32.mrb[0].mxu0
      %v4199 = vadd.f32 %v4158, %v4198
      %v4200 = vpop.f32.mrb[0].mxu0
      %v4201 = vpop.f32.mrb[0].mxu0
      %4202 = vdwg.mxu0
      %4203 = vmatprep.subr.bf16.mxu0 %v2309
      %4204 = vmatpush1.bf16.msra.mxu0 %v2308
      %4205 = vmatprep.subr.bf16.mxu0 %v2317
      %4206 = vmatpush1.bf16.msra.mxu0 %v2316
      %4207 = vmatprep.subr.bf16.mxu0 %v2325
      %4208 = vmatpush1.bf16.msra.mxu0 %v2324
      %4209 = vmatprep.subr.bf16.mxu0 %v2333
      %4210 = vmatpush1.bf16.msra.mxu0 %v2332
      %4211 = vmatprep.subr.bf16.mxu0 %v2341
      %4212 = vmatpush1.bf16.msra.mxu0 %v2340
      %4213 = vmatprep.subr.bf16.mxu0 %v2349
      %4214 = vmatpush1.bf16.msra.mxu0 %v2348
      %4215 = vmatprep.subr.bf16.mxu0 %v2357
      %4216 = vmatpush1.bf16.msra.mxu0 %v2356
      %4217 = vmatprep.subr.bf16.mxu0 %v2365
      %4218 = vmatpush1.bf16.msra.mxu0 %v2364
      %4219 = vmatprep.subr.bf16.mxu0 0
      %4220 = vmatpush1.bf16.msra.mxu0 0
      %4221 = vmatprep.subr.bf16.mxu0 0
      %4222 = vmatpush1.bf16.msra.mxu0 0
      %4223 = vmatprep.subr.bf16.mxu0 0
      %4224 = vmatpush1.bf16.msra.mxu0 0
      %4225 = vmatprep.subr.bf16.mxu0 0
      %4226 = vmatpush1.bf16.msra.mxu0 0
      %4227 = vmatprep.subr.bf16.mxu0 0
      %4228 = vmatpush1.bf16.msra.mxu0 0
      %4229 = vmatprep.subr.bf16.mxu0 0
      %4230 = vmatpush1.bf16.msra.mxu0 0
      %4231 = vmatprep.subr.bf16.mxu0 0
      %4232 = vmatpush1.bf16.msra.mxu0 0
      %4233 = vmatprep.subr.bf16.mxu0 0
      %4234 = vmatpush1.bf16.msra.mxu0 0
      %4235 = vmatprep.mubr.bf16.mxu0 0
      %4236 = vmatmul.mubr.bf16.gmra.mrb[0].mxu0 %v2418
      %v4237 = vpop.f32.mrb[0].mxu0
      %v4238 = vadd.f32 %v4197, %v4237
      %v4239 = vpop.f32.mrb[0].mxu0
      %v4240 = vadd.f32 %v4199, %v4239
      %v4241 = vpop.f32.mrb[0].mxu0
      %v4242 = vpop.f32.mrb[0].mxu0
      %4243 = vdwg.mxu0
      %v4244 = vadd.f32 %v331, %v2885
      %v4245 = vadd.f32 %v332, %v2887
      %v4246 = vadd.f32 %v333, %v3336
      %v4247 = vadd.f32 %v334, %v3338
      %v4248 = vadd.f32 %v335, %v3787
      %v4249 = vadd.f32 %v336, %v3789
      %v4250 = vadd.f32 %v337, %v4238
      %v4251 = vadd.f32 %v338, %v4240
      %4252 = vst [vmem:[#allocation2] sm:$0xff] %v4244
      %4253 = vst [vmem:[#allocation2 + $0x8] sm:$0xff] %v4245
      %4254 = vst [vmem:[#allocation2 + $0x10] sm:$0xff] %v4246
      %4255 = vst [vmem:[#allocation2 + $0x18] sm:$0xff] %v4247
      %4256 = vst [vmem:[#allocation2 + $0x20] sm:$0xff] %v4248
      %4257 = vst [vmem:[#allocation2 + $0x28] sm:$0xff] %v4249
      %4258 = vst [vmem:[#allocation2 + $0x30] sm:$0xff] %v4250
      %4259 = vst [vmem:[#allocation2 + $0x38] sm:$0xff] %v4251
      %p4260 = scmp.eq.s32.totalorder %s19, 1
      // Predicated region
      $region57: #{dqn_forward.7} parent=51 // pred_check
        %p4261 = pneg %p4260
      $region58: #{dqn_forward.7} parent=51 // pred_check_branch
        %4263 = sbr.rel (%p4261) target = $region60
      $region59: #{dqn_forward.7} parent=51 // pred_region
        %v4264 = vld [vmem:[#allocation2] sm:$0xff]
        %v4265 = vld [vmem:[#allocation2 + $0x8] sm:$0xff]
        %v4266 = vld [vmem:[#allocation2 + $0x10] sm:$0xff]
        %v4267 = vld [vmem:[#allocation2 + $0x18] sm:$0xff]
        %v4268 = vld [vmem:[#allocation2 + $0x20] sm:$0xff]
        %v4269 = vld [vmem:[#allocation2 + $0x28] sm:$0xff]
        %v4270 = vld [vmem:[#allocation2 + $0x30] sm:$0xff]
        %v4271 = vld [vmem:[#allocation2 + $0x38] sm:$0xff]
        %v4272 = vld [vmem:[%s2] sm:$0xff]
        %v4274 = vlaneseq
        %v4275 = vshrl.u32 %v4274, 7
        %v4276 = vsub.s32 0, %v4275
        %v4277 = vrot.slane %v4272, %v4276
        %v4278 = vlaneseq
        %v4279 = vshrl.u32 %v4278, 7
        %v4280 = vsub.s32 1, %v4279
        %v4281 = vrot.slane %v4272, %v4280
        %v4282 = vlaneseq
        %v4283 = vshrl.u32 %v4282, 7
        %v4284 = vsub.s32 2, %v4283
        %v4285 = vrot.slane %v4272, %v4284
        %v4286 = vlaneseq
        %v4287 = vshrl.u32 %v4286, 7
        %v4288 = vsub.s32 3, %v4287
        %v4289 = vrot.slane %v4272, %v4288
        %v4290 = vlaneseq
        %v4291 = vshrl.u32 %v4290, 7
        %v4292 = vsub.s32 4, %v4291
        %v4293 = vrot.slane %v4272, %v4292
        %v4294 = vlaneseq
        %v4295 = vshrl.u32 %v4294, 7
        %v4296 = vsub.s32 5, %v4295
        %v4297 = vrot.slane %v4272, %v4296
        %v4298 = vlaneseq
        %v4299 = vshrl.u32 %v4298, 7
        %v4300 = vsub.s32 6, %v4299
        %v4301 = vrot.slane %v4272, %v4300
        %v4302 = vlaneseq
        %v4303 = vshrl.u32 %v4302, 7
        %v4304 = vsub.s32 7, %v4303
        %v4305 = vrot.slane %v4272, %v4304
        %v4314 = vmul.f32 %v4264, %v4277
        %v4315 = vmul.f32 %v4265, %v4281
        %v4316 = vmul.f32 %v4266, %v4285
        %v4317 = vmul.f32 %v4267, %v4289
        %v4318 = vmul.f32 %v4268, %v4293
        %v4319 = vmul.f32 %v4269, %v4297
        %v4320 = vmul.f32 %v4270, %v4301
        %v4321 = vmul.f32 %v4271, %v4305
        %v4322 = vld [vmem:[%s3] sm:$0xff]
        %v4324 = vlaneseq
        %v4325 = vshrl.u32 %v4324, 7
        %v4326 = vsub.s32 0, %v4325
        %v4327 = vrot.slane %v4322, %v4326
        %v4328 = vlaneseq
        %v4329 = vshrl.u32 %v4328, 7
        %v4330 = vsub.s32 1, %v4329
        %v4331 = vrot.slane %v4322, %v4330
        %v4332 = vlaneseq
        %v4333 = vshrl.u32 %v4332, 7
        %v4334 = vsub.s32 2, %v4333
        %v4335 = vrot.slane %v4322, %v4334
        %v4336 = vlaneseq
        %v4337 = vshrl.u32 %v4336, 7
        %v4338 = vsub.s32 3, %v4337
        %v4339 = vrot.slane %v4322, %v4338
        %v4340 = vlaneseq
        %v4341 = vshrl.u32 %v4340, 7
        %v4342 = vsub.s32 4, %v4341
        %v4343 = vrot.slane %v4322, %v4342
        %v4344 = vlaneseq
        %v4345 = vshrl.u32 %v4344, 7
        %v4346 = vsub.s32 5, %v4345
        %v4347 = vrot.slane %v4322, %v4346
        %v4348 = vlaneseq
        %v4349 = vshrl.u32 %v4348, 7
        %v4350 = vsub.s32 6, %v4349
        %v4351 = vrot.slane %v4322, %v4350
        %v4352 = vlaneseq
        %v4353 = vshrl.u32 %v4352, 7
        %v4354 = vsub.s32 7, %v4353
        %v4355 = vrot.slane %v4322, %v4354
        %v4364 = vadd.f32 %v4314, %v4327
        %v4365 = vadd.f32 %v4315, %v4331
        %v4366 = vadd.f32 %v4316, %v4335
        %v4367 = vadd.f32 %v4317, %v4339
        %v4368 = vadd.f32 %v4318, %v4343
        %v4369 = vadd.f32 %v4319, %v4347
        %v4370 = vadd.f32 %v4320, %v4351
        %v4371 = vadd.f32 %v4321, %v4355
        %v4372 = vmax.f32 %v4364, 0.0
        %v4373 = vmax.f32 %v4365, 0.0
        %v4374 = vmax.f32 %v4366, 0.0
        %v4375 = vmax.f32 %v4367, 0.0
        %v4376 = vmax.f32 %v4368, 0.0
        %v4377 = vmax.f32 %v4369, 0.0
        %v4378 = vmax.f32 %v4370, 0.0
        %v4379 = vmax.f32 %v4371, 0.0
        %v4380 = vpack.c.bf16 %v4372, %v4372
        %v4381 = vpack.c.bf16 %v4373, %v4373
        %v4382 = vpack.c.bf16 %v4374, %v4374
        %v4383 = vpack.c.bf16 %v4375, %v4375
        %v4384 = vpack.c.bf16 %v4376, %v4376
        %v4385 = vpack.c.bf16 %v4377, %v4377
        %v4386 = vpack.c.bf16 %v4378, %v4378
        %v4387 = vpack.c.bf16 %v4379, %v4379
        %v4388 = vld [vmem:[%s4] sm:$0xff]
        %v4389 = vld [vmem:[%s4 + $0x8] sm:$0xff]
        %v4390 = vld [vmem:[%s4 + $0x10] sm:$0xff]
        %v4391 = vld [vmem:[%s4 + $0x18] sm:$0xff]
        %v4392 = vld [vmem:[%s4 + $0x20] sm:$0xff]
        %v4393 = vld [vmem:[%s4 + $0x28] sm:$0xff]
        %v4394 = vld [vmem:[%s4 + $0x30] sm:$0xff]
        %v4395 = vld [vmem:[%s4 + $0x38] sm:$0xff]
        %v4396 = vld [vmem:[%s4 + $0x40] sm:$0xff]
        %v4397 = vld [vmem:[%s4 + $0x48] sm:$0xff]
        %v4398 = vld [vmem:[%s4 + $0x50] sm:$0xff]
        %v4399 = vld [vmem:[%s4 + $0x58] sm:$0xff]
        %v4400 = vld [vmem:[%s4 + $0x60] sm:$0xff]
        %v4401 = vld [vmem:[%s4 + $0x68] sm:$0xff]
        %v4402 = vld [vmem:[%s4 + $0x70] sm:$0xff]
        %v4403 = vld [vmem:[%s4 + $0x78] sm:$0xff]
        %v4404 = vld [vmem:[%s4 + $0x80] sm:$0xff]
        %v4405 = vld [vmem:[%s4 + $0x88] sm:$0xff]
        %v4406 = vld [vmem:[%s4 + $0x90] sm:$0xff]
        %v4407 = vld [vmem:[%s4 + $0x98] sm:$0xff]
        %v4408 = vld [vmem:[%s4 + $0xa0] sm:$0xff]
        %v4409 = vld [vmem:[%s4 + $0xa8] sm:$0xff]
        %v4410 = vld [vmem:[%s4 + $0xb0] sm:$0xff]
        %v4411 = vld [vmem:[%s4 + $0xb8] sm:$0xff]
        %v4412 = vld [vmem:[%s4 + $0xc0] sm:$0xff]
        %v4413 = vld [vmem:[%s4 + $0xc8] sm:$0xff]
        %v4414 = vld [vmem:[%s4 + $0xd0] sm:$0xff]
        %v4415 = vld [vmem:[%s4 + $0xd8] sm:$0xff]
        %v4416 = vld [vmem:[%s4 + $0xe0] sm:$0xff]
        %v4417 = vld [vmem:[%s4 + $0xe8] sm:$0xff]
        %v4418 = vld [vmem:[%s4 + $0xf0] sm:$0xff]
        %v4419 = vld [vmem:[%s4 + $0xf8] sm:$0xff]
        %v4420 = vld [vmem:[%s4 + $0x100] sm:$0xff]
        %v4421 = vld [vmem:[%s4 + $0x108] sm:$0xff]
        %v4422 = vld [vmem:[%s4 + $0x110] sm:$0xff]
        %v4423 = vld [vmem:[%s4 + $0x118] sm:$0xff]
        %v4424 = vld [vmem:[%s4 + $0x120] sm:$0xff]
        %v4425 = vld [vmem:[%s4 + $0x128] sm:$0xff]
        %v4426 = vld [vmem:[%s4 + $0x130] sm:$0xff]
        %v4427 = vld [vmem:[%s4 + $0x138] sm:$0xff]
        %v4428 = vld [vmem:[%s4 + $0x140] sm:$0xff]
        %v4429 = vld [vmem:[%s4 + $0x148] sm:$0xff]
        %v4430 = vld [vmem:[%s4 + $0x150] sm:$0xff]
        %v4431 = vld [vmem:[%s4 + $0x158] sm:$0xff]
        %v4432 = vld [vmem:[%s4 + $0x160] sm:$0xff]
        %v4433 = vld [vmem:[%s4 + $0x168] sm:$0xff]
        %v4434 = vld [vmem:[%s4 + $0x170] sm:$0xff]
        %v4435 = vld [vmem:[%s4 + $0x178] sm:$0xff]
        %v4436 = vld [vmem:[%s4 + $0x180] sm:$0xff]
        %v4437 = vld [vmem:[%s4 + $0x188] sm:$0xff]
        %v4438 = vld [vmem:[%s4 + $0x190] sm:$0xff]
        %v4439 = vld [vmem:[%s4 + $0x198] sm:$0xff]
        %v4440 = vld [vmem:[%s4 + $0x1a0] sm:$0xff]
        %v4441 = vld [vmem:[%s4 + $0x1a8] sm:$0xff]
        %v4442 = vld [vmem:[%s4 + $0x1b0] sm:$0xff]
        %v4443 = vld [vmem:[%s4 + $0x1b8] sm:$0xff]
        %v4444 = vld [vmem:[%s4 + $0x1c0] sm:$0xff]
        %v4445 = vld [vmem:[%s4 + $0x1c8] sm:$0xff]
        %v4446 = vld [vmem:[%s4 + $0x1d0] sm:$0xff]
        %v4447 = vld [vmem:[%s4 + $0x1d8] sm:$0xff]
        %v4448 = vld [vmem:[%s4 + $0x1e0] sm:$0xff]
        %v4449 = vld [vmem:[%s4 + $0x1e8] sm:$0xff]
        %v4450 = vld [vmem:[%s4 + $0x1f0] sm:$0xff]
        %v4451 = vld [vmem:[%s4 + $0x1f8] sm:$0xff]
        %v4452 = vld [vmem:[%s5] sm:$0x3]
        %v4454 = vlaneseq
        %v4455 = vshrl.u32 %v4454, 7
        %v4456 = vsub.s32 0, %v4455
        %v4457 = vrot.slane %v4452, %v4456
        %v4458 = vlaneseq
        %v4459 = vshrl.u32 %v4458, 7
        %v4460 = vsub.s32 1, %v4459
        %v4461 = vrot.slane %v4452, %v4460
        %v4528 = vunpack.c.l.b16 %v4388
        %v4529 = vunpack.c.h.b16 %v4388
        %v4530 = vunpack.c.l.b16 %v4389
        %v4531 = vunpack.c.h.b16 %v4389
        %v4532 = vunpack.c.l.b16 %v4390
        %v4533 = vunpack.c.h.b16 %v4390
        %v4534 = vunpack.c.l.b16 %v4391
        %v4535 = vunpack.c.h.b16 %v4391
        %v4536 = vunpack.c.l.b16 %v4392
        %v4537 = vunpack.c.h.b16 %v4392
        %v4538 = vunpack.c.l.b16 %v4393
        %v4539 = vunpack.c.h.b16 %v4393
        %v4540 = vunpack.c.l.b16 %v4394
        %v4541 = vunpack.c.h.b16 %v4394
        %v4542 = vunpack.c.l.b16 %v4395
        %v4543 = vunpack.c.h.b16 %v4395
        %v4544 = vunpack.c.l.b16 %v4396
        %v4545 = vunpack.c.h.b16 %v4396
        %v4546 = vunpack.c.l.b16 %v4397
        %v4547 = vunpack.c.h.b16 %v4397
        %v4548 = vunpack.c.l.b16 %v4398
        %v4549 = vunpack.c.h.b16 %v4398
        %v4550 = vunpack.c.l.b16 %v4399
        %v4551 = vunpack.c.h.b16 %v4399
        %v4552 = vunpack.c.l.b16 %v4400
        %v4553 = vunpack.c.h.b16 %v4400
        %v4554 = vunpack.c.l.b16 %v4401
        %v4555 = vunpack.c.h.b16 %v4401
        %v4556 = vunpack.c.l.b16 %v4402
        %v4557 = vunpack.c.h.b16 %v4402
        %v4558 = vunpack.c.l.b16 %v4403
        %v4559 = vunpack.c.h.b16 %v4403
        %v4560 = vunpack.c.l.b16 %v4404
        %v4561 = vunpack.c.h.b16 %v4404
        %v4562 = vunpack.c.l.b16 %v4405
        %v4563 = vunpack.c.h.b16 %v4405
        %v4564 = vunpack.c.l.b16 %v4406
        %v4565 = vunpack.c.h.b16 %v4406
        %v4566 = vunpack.c.l.b16 %v4407
        %v4567 = vunpack.c.h.b16 %v4407
        %v4568 = vunpack.c.l.b16 %v4408
        %v4569 = vunpack.c.h.b16 %v4408
        %v4570 = vunpack.c.l.b16 %v4409
        %v4571 = vunpack.c.h.b16 %v4409
        %v4572 = vunpack.c.l.b16 %v4410
        %v4573 = vunpack.c.h.b16 %v4410
        %v4574 = vunpack.c.l.b16 %v4411
        %v4575 = vunpack.c.h.b16 %v4411
        %v4576 = vunpack.c.l.b16 %v4412
        %v4577 = vunpack.c.h.b16 %v4412
        %v4578 = vunpack.c.l.b16 %v4413
        %v4579 = vunpack.c.h.b16 %v4413
        %v4580 = vunpack.c.l.b16 %v4414
        %v4581 = vunpack.c.h.b16 %v4414
        %v4582 = vunpack.c.l.b16 %v4415
        %v4583 = vunpack.c.h.b16 %v4415
        %v4584 = vunpack.c.l.b16 %v4416
        %v4585 = vunpack.c.h.b16 %v4416
        %v4586 = vunpack.c.l.b16 %v4417
        %v4587 = vunpack.c.h.b16 %v4417
        %v4588 = vunpack.c.l.b16 %v4418
        %v4589 = vunpack.c.h.b16 %v4418
        %v4590 = vunpack.c.l.b16 %v4419
        %v4591 = vunpack.c.h.b16 %v4419
        %v4592 = vunpack.c.l.b16 %v4420
        %v4593 = vunpack.c.h.b16 %v4420
        %v4594 = vunpack.c.l.b16 %v4421
        %v4595 = vunpack.c.h.b16 %v4421
        %v4596 = vunpack.c.l.b16 %v4422
        %v4597 = vunpack.c.h.b16 %v4422
        %v4598 = vunpack.c.l.b16 %v4423
        %v4599 = vunpack.c.h.b16 %v4423
        %v4600 = vunpack.c.l.b16 %v4424
        %v4601 = vunpack.c.h.b16 %v4424
        %v4602 = vunpack.c.l.b16 %v4425
        %v4603 = vunpack.c.h.b16 %v4425
        %v4604 = vunpack.c.l.b16 %v4426
        %v4605 = vunpack.c.h.b16 %v4426
        %v4606 = vunpack.c.l.b16 %v4427
        %v4607 = vunpack.c.h.b16 %v4427
        %v4608 = vunpack.c.l.b16 %v4428
        %v4609 = vunpack.c.h.b16 %v4428
        %v4610 = vunpack.c.l.b16 %v4429
        %v4611 = vunpack.c.h.b16 %v4429
        %v4612 = vunpack.c.l.b16 %v4430
        %v4613 = vunpack.c.h.b16 %v4430
        %v4614 = vunpack.c.l.b16 %v4431
        %v4615 = vunpack.c.h.b16 %v4431
        %v4616 = vunpack.c.l.b16 %v4432
        %v4617 = vunpack.c.h.b16 %v4432
        %v4618 = vunpack.c.l.b16 %v4433
        %v4619 = vunpack.c.h.b16 %v4433
        %v4620 = vunpack.c.l.b16 %v4434
        %v4621 = vunpack.c.h.b16 %v4434
        %v4622 = vunpack.c.l.b16 %v4435
        %v4623 = vunpack.c.h.b16 %v4435
        %v4624 = vunpack.c.l.b16 %v4436
        %v4625 = vunpack.c.h.b16 %v4436
        %v4626 = vunpack.c.l.b16 %v4437
        %v4627 = vunpack.c.h.b16 %v4437
        %v4628 = vunpack.c.l.b16 %v4438
        %v4629 = vunpack.c.h.b16 %v4438
        %v4630 = vunpack.c.l.b16 %v4439
        %v4631 = vunpack.c.h.b16 %v4439
        %v4632 = vunpack.c.l.b16 %v4440
        %v4633 = vunpack.c.h.b16 %v4440
        %v4634 = vunpack.c.l.b16 %v4441
        %v4635 = vunpack.c.h.b16 %v4441
        %v4636 = vunpack.c.l.b16 %v4442
        %v4637 = vunpack.c.h.b16 %v4442
        %v4638 = vunpack.c.l.b16 %v4443
        %v4639 = vunpack.c.h.b16 %v4443
        %v4640 = vunpack.c.l.b16 %v4444
        %v4641 = vunpack.c.h.b16 %v4444
        %v4642 = vunpack.c.l.b16 %v4445
        %v4643 = vunpack.c.h.b16 %v4445
        %v4644 = vunpack.c.l.b16 %v4446
        %v4645 = vunpack.c.h.b16 %v4446
        %v4646 = vunpack.c.l.b16 %v4447
        %v4647 = vunpack.c.h.b16 %v4447
        %v4648 = vunpack.c.l.b16 %v4448
        %v4649 = vunpack.c.h.b16 %v4448
        %v4650 = vunpack.c.l.b16 %v4449
        %v4651 = vunpack.c.h.b16 %v4449
        %v4652 = vunpack.c.l.b16 %v4450
        %v4653 = vunpack.c.h.b16 %v4450
        %v4654 = vunpack.c.l.b16 %v4451
        %v4655 = vunpack.c.h.b16 %v4451
        %v4656 = vpack.c.b16 %v4530, %v4528
        %v4657 = vpack.c.b16 %v4531, %v4529
        %v4658 = vpack.c.b16 %v4534, %v4532
        %v4659 = vpack.c.b16 %v4535, %v4533
        %v4660 = vpack.c.b16 %v4538, %v4536
        %v4661 = vpack.c.b16 %v4539, %v4537
        %v4662 = vpack.c.b16 %v4542, %v4540
        %v4663 = vpack.c.b16 %v4543, %v4541
        %v4664 = vpack.c.b16 %v4546, %v4544
        %v4665 = vpack.c.b16 %v4547, %v4545
        %v4666 = vpack.c.b16 %v4550, %v4548
        %v4667 = vpack.c.b16 %v4551, %v4549
        %v4668 = vpack.c.b16 %v4554, %v4552
        %v4669 = vpack.c.b16 %v4555, %v4553
        %v4670 = vpack.c.b16 %v4558, %v4556
        %v4671 = vpack.c.b16 %v4559, %v4557
        %v4672 = vpack.c.b16 %v4562, %v4560
        %v4673 = vpack.c.b16 %v4563, %v4561
        %v4674 = vpack.c.b16 %v4566, %v4564
        %v4675 = vpack.c.b16 %v4567, %v4565
        %v4676 = vpack.c.b16 %v4570, %v4568
        %v4677 = vpack.c.b16 %v4571, %v4569
        %v4678 = vpack.c.b16 %v4574, %v4572
        %v4679 = vpack.c.b16 %v4575, %v4573
        %v4680 = vpack.c.b16 %v4578, %v4576
        %v4681 = vpack.c.b16 %v4579, %v4577
        %v4682 = vpack.c.b16 %v4582, %v4580
        %v4683 = vpack.c.b16 %v4583, %v4581
        %v4684 = vpack.c.b16 %v4586, %v4584
        %v4685 = vpack.c.b16 %v4587, %v4585
        %v4686 = vpack.c.b16 %v4590, %v4588
        %v4687 = vpack.c.b16 %v4591, %v4589
        %v4688 = vpack.c.b16 %v4594, %v4592
        %v4689 = vpack.c.b16 %v4595, %v4593
        %v4690 = vpack.c.b16 %v4598, %v4596
        %v4691 = vpack.c.b16 %v4599, %v4597
        %v4692 = vpack.c.b16 %v4602, %v4600
        %v4693 = vpack.c.b16 %v4603, %v4601
        %v4694 = vpack.c.b16 %v4606, %v4604
        %v4695 = vpack.c.b16 %v4607, %v4605
        %v4696 = vpack.c.b16 %v4610, %v4608
        %v4697 = vpack.c.b16 %v4611, %v4609
        %v4698 = vpack.c.b16 %v4614, %v4612
        %v4699 = vpack.c.b16 %v4615, %v4613
        %v4700 = vpack.c.b16 %v4618, %v4616
        %v4701 = vpack.c.b16 %v4619, %v4617
        %v4702 = vpack.c.b16 %v4622, %v4620
        %v4703 = vpack.c.b16 %v4623, %v4621
        %v4704 = vpack.c.b16 %v4626, %v4624
        %v4705 = vpack.c.b16 %v4627, %v4625
        %v4706 = vpack.c.b16 %v4630, %v4628
        %v4707 = vpack.c.b16 %v4631, %v4629
        %v4708 = vpack.c.b16 %v4634, %v4632
        %v4709 = vpack.c.b16 %v4635, %v4633
        %v4710 = vpack.c.b16 %v4638, %v4636
        %v4711 = vpack.c.b16 %v4639, %v4637
        %v4712 = vpack.c.b16 %v4642, %v4640
        %v4713 = vpack.c.b16 %v4643, %v4641
        %v4714 = vpack.c.b16 %v4646, %v4644
        %v4715 = vpack.c.b16 %v4647, %v4645
        %v4716 = vpack.c.b16 %v4650, %v4648
        %v4717 = vpack.c.b16 %v4651, %v4649
        %v4718 = vpack.c.b16 %v4654, %v4652
        %v4719 = vpack.c.b16 %v4655, %v4653
        %4784 = vmatprep.subr.bf16.mxu0 %v4657
        %4785 = vmatpush1.bf16.msra.mxu0 %v4656
        %4786 = vmatprep.subr.bf16.mxu0 %v4659
        %4787 = vmatpush1.bf16.msra.mxu0 %v4658
        %4788 = vmatprep.subr.bf16.mxu0 %v4661
        %4789 = vmatpush1.bf16.msra.mxu0 %v4660
        %4790 = vmatprep.subr.bf16.mxu0 %v4663
        %4791 = vmatpush1.bf16.msra.mxu0 %v4662
        %4792 = vmatprep.subr.bf16.mxu0 %v4665
        %4793 = vmatpush1.bf16.msra.mxu0 %v4664
        %4794 = vmatprep.subr.bf16.mxu0 %v4667
        %4795 = vmatpush1.bf16.msra.mxu0 %v4666
        %4796 = vmatprep.subr.bf16.mxu0 %v4669
        %4797 = vmatpush1.bf16.msra.mxu0 %v4668
        %4798 = vmatprep.subr.bf16.mxu0 %v4671
        %4799 = vmatpush1.bf16.msra.mxu0 %v4670
        %4800 = vmatprep.subr.bf16.mxu0 %v4673
        %4801 = vmatpush1.bf16.msra.mxu0 %v4672
        %4802 = vmatprep.subr.bf16.mxu0 %v4675
        %4803 = vmatpush1.bf16.msra.mxu0 %v4674
        %4804 = vmatprep.subr.bf16.mxu0 %v4677
        %4805 = vmatpush1.bf16.msra.mxu0 %v4676
        %4806 = vmatprep.subr.bf16.mxu0 %v4679
        %4807 = vmatpush1.bf16.msra.mxu0 %v4678
        %4808 = vmatprep.subr.bf16.mxu0 %v4681
        %4809 = vmatpush1.bf16.msra.mxu0 %v4680
        %4810 = vmatprep.subr.bf16.mxu0 %v4683
        %4811 = vmatpush1.bf16.msra.mxu0 %v4682
        %4812 = vmatprep.subr.bf16.mxu0 %v4685
        %4813 = vmatpush1.bf16.msra.mxu0 %v4684
        %4814 = vmatprep.subr.bf16.mxu0 %v4687
        %4815 = vmatpush1.bf16.msra.mxu0 %v4686
        %4816 = vmatprep.mubr.bf16.mxu0 %v4381
        %4817 = vmatmul.mubr.bf16.gmra.mrb[0].mxu0 %v4380
        %v4818 = vpop.f32.mrb[0].mxu0
        %v4819 = vadd.f32 %v4457, %v4818
        %v4820 = vpop.f32.mrb[0].mxu0
        %v4821 = vadd.f32 %v4461, %v4820
        %v4822 = vpop.f32.mrb[0].mxu0
        %v4823 = vpop.f32.mrb[0].mxu0
        %4824 = vdwg.mxu0
        %4825 = vmatprep.subr.bf16.mxu0 %v4689
        %4826 = vmatpush1.bf16.msra.mxu0 %v4688
        %4827 = vmatprep.subr.bf16.mxu0 %v4691
        %4828 = vmatpush1.bf16.msra.mxu0 %v4690
        %4829 = vmatprep.subr.bf16.mxu0 %v4693
        %4830 = vmatpush1.bf16.msra.mxu0 %v4692
        %4831 = vmatprep.subr.bf16.mxu0 %v4695
        %4832 = vmatpush1.bf16.msra.mxu0 %v4694
        %4833 = vmatprep.subr.bf16.mxu0 %v4697
        %4834 = vmatpush1.bf16.msra.mxu0 %v4696
        %4835 = vmatprep.subr.bf16.mxu0 %v4699
        %4836 = vmatpush1.bf16.msra.mxu0 %v4698
        %4837 = vmatprep.subr.bf16.mxu0 %v4701
        %4838 = vmatpush1.bf16.msra.mxu0 %v4700
        %4839 = vmatprep.subr.bf16.mxu0 %v4703
        %4840 = vmatpush1.bf16.msra.mxu0 %v4702
        %4841 = vmatprep.subr.bf16.mxu0 %v4705
        %4842 = vmatpush1.bf16.msra.mxu0 %v4704
        %4843 = vmatprep.subr.bf16.mxu0 %v4707
        %4844 = vmatpush1.bf16.msra.mxu0 %v4706
        %4845 = vmatprep.subr.bf16.mxu0 %v4709
        %4846 = vmatpush1.bf16.msra.mxu0 %v4708
        %4847 = vmatprep.subr.bf16.mxu0 %v4711
        %4848 = vmatpush1.bf16.msra.mxu0 %v4710
        %4849 = vmatprep.subr.bf16.mxu0 %v4713
        %4850 = vmatpush1.bf16.msra.mxu0 %v4712
        %4851 = vmatprep.subr.bf16.mxu0 %v4715
        %4852 = vmatpush1.bf16.msra.mxu0 %v4714
        %4853 = vmatprep.subr.bf16.mxu0 %v4717
        %4854 = vmatpush1.bf16.msra.mxu0 %v4716
        %4855 = vmatprep.subr.bf16.mxu0 %v4719
        %4856 = vmatpush1.bf16.msra.mxu0 %v4718
        %4857 = vmatprep.mubr.bf16.mxu0 %v4383
        %4858 = vmatmul.mubr.bf16.gmra.mrb[0].mxu0 %v4382
        %v4859 = vpop.f32.mrb[0].mxu0
        %v4860 = vadd.f32 %v4819, %v4859
        %v4861 = vpop.f32.mrb[0].mxu0
        %v4862 = vadd.f32 %v4821, %v4861
        %v4863 = vpop.f32.mrb[0].mxu0
        %v4864 = vpop.f32.mrb[0].mxu0
        %4865 = vdwg.mxu0
        %v4866 = vld [vmem:[%s6] sm:$0xff]
        %v4867 = vld [vmem:[%s6 + $0x8] sm:$0xff]
        %v4868 = vld [vmem:[%s6 + $0x10] sm:$0xff]
        %v4869 = vld [vmem:[%s6 + $0x18] sm:$0xff]
        %v4870 = vld [vmem:[%s6 + $0x20] sm:$0xff]
        %v4871 = vld [vmem:[%s6 + $0x28] sm:$0xff]
        %v4872 = vld [vmem:[%s6 + $0x30] sm:$0xff]
        %v4873 = vld [vmem:[%s6 + $0x38] sm:$0xff]
        %v4874 = vld [vmem:[%s6 + $0x40] sm:$0xff]
        %v4875 = vld [vmem:[%s6 + $0x48] sm:$0xff]
        %v4876 = vld [vmem:[%s6 + $0x50] sm:$0xff]
        %v4877 = vld [vmem:[%s6 + $0x58] sm:$0xff]
        %v4878 = vld [vmem:[%s6 + $0x60] sm:$0xff]
        %v4879 = vld [vmem:[%s6 + $0x68] sm:$0xff]
        %v4880 = vld [vmem:[%s6 + $0x70] sm:$0xff]
        %v4881 = vld [vmem:[%s6 + $0x78] sm:$0xff]
        %v4882 = vld [vmem:[%s6 + $0x80] sm:$0xff]
        %v4883 = vld [vmem:[%s6 + $0x88] sm:$0xff]
        %v4884 = vld [vmem:[%s6 + $0x90] sm:$0xff]
        %v4885 = vld [vmem:[%s6 + $0x98] sm:$0xff]
        %v4886 = vld [vmem:[%s6 + $0xa0] sm:$0xff]
        %v4887 = vld [vmem:[%s6 + $0xa8] sm:$0xff]
        %v4888 = vld [vmem:[%s6 + $0xb0] sm:$0xff]
        %v4889 = vld [vmem:[%s6 + $0xb8] sm:$0xff]
        %v4890 = vld [vmem:[%s6 + $0xc0] sm:$0xff]
        %v4891 = vld [vmem:[%s6 + $0xc8] sm:$0xff]
        %v4892 = vld [vmem:[%s6 + $0xd0] sm:$0xff]
        %v4893 = vld [vmem:[%s6 + $0xd8] sm:$0xff]
        %v4894 = vld [vmem:[%s6 + $0xe0] sm:$0xff]
        %v4895 = vld [vmem:[%s6 + $0xe8] sm:$0xff]
        %v4896 = vld [vmem:[%s6 + $0xf0] sm:$0xff]
        %v4897 = vld [vmem:[%s6 + $0xf8] sm:$0xff]
        %v4898 = vld [vmem:[%s6 + $0x100] sm:$0xff]
        %v4899 = vld [vmem:[%s6 + $0x108] sm:$0xff]
        %v4900 = vld [vmem:[%s6 + $0x110] sm:$0xff]
        %v4901 = vld [vmem:[%s6 + $0x118] sm:$0xff]
        %v4902 = vld [vmem:[%s6 + $0x120] sm:$0xff]
        %v4903 = vld [vmem:[%s6 + $0x128] sm:$0xff]
        %v4904 = vld [vmem:[%s6 + $0x130] sm:$0xff]
        %v4905 = vld [vmem:[%s6 + $0x138] sm:$0xff]
        %v4906 = vld [vmem:[%s6 + $0x140] sm:$0xff]
        %v4907 = vld [vmem:[%s6 + $0x148] sm:$0xff]
        %v4908 = vld [vmem:[%s6 + $0x150] sm:$0xff]
        %v4909 = vld [vmem:[%s6 + $0x158] sm:$0xff]
        %v4910 = vld [vmem:[%s6 + $0x160] sm:$0xff]
        %v4911 = vld [vmem:[%s6 + $0x168] sm:$0xff]
        %v4912 = vld [vmem:[%s6 + $0x170] sm:$0xff]
        %v4913 = vld [vmem:[%s6 + $0x178] sm:$0xff]
        %v4914 = vld [vmem:[%s6 + $0x180] sm:$0xff]
        %v4915 = vld [vmem:[%s6 + $0x188] sm:$0xff]
        %v4916 = vld [vmem:[%s6 + $0x190] sm:$0xff]
        %v4917 = vld [vmem:[%s6 + $0x198] sm:$0xff]
        %v4918 = vld [vmem:[%s6 + $0x1a0] sm:$0xff]
        %v4919 = vld [vmem:[%s6 + $0x1a8] sm:$0xff]
        %v4920 = vld [vmem:[%s6 + $0x1b0] sm:$0xff]
        %v4921 = vld [vmem:[%s6 + $0x1b8] sm:$0xff]
        %v4922 = vld [vmem:[%s6 + $0x1c0] sm:$0xff]
        %v4923 = vld [vmem:[%s6 + $0x1c8] sm:$0xff]
        %v4924 = vld [vmem:[%s6 + $0x1d0] sm:$0xff]
        %v4925 = vld [vmem:[%s6 + $0x1d8] sm:$0xff]
        %v4926 = vld [vmem:[%s6 + $0x1e0] sm:$0xff]
        %v4927 = vld [vmem:[%s6 + $0x1e8] sm:$0xff]
        %v4928 = vld [vmem:[%s6 + $0x1f0] sm:$0xff]
        %v4929 = vld [vmem:[%s6 + $0x1f8] sm:$0xff]
        %v4930 = vld [vmem:[%s6 + $0x200] sm:$0xff]
        %v4931 = vld [vmem:[%s6 + $0x208] sm:$0xff]
        %v4932 = vld [vmem:[%s6 + $0x210] sm:$0xff]
        %v4933 = vld [vmem:[%s6 + $0x218] sm:$0xff]
        %v4934 = vld [vmem:[%s6 + $0x220] sm:$0xff]
        %v4935 = vld [vmem:[%s6 + $0x228] sm:$0xff]
        %v4936 = vld [vmem:[%s6 + $0x230] sm:$0xff]
        %v4937 = vld [vmem:[%s6 + $0x238] sm:$0xff]
        %v4938 = vld [vmem:[%s6 + $0x240] sm:$0xff]
        %v4939 = vld [vmem:[%s6 + $0x248] sm:$0xff]
        %v4940 = vld [vmem:[%s6 + $0x250] sm:$0xff]
        %v4941 = vld [vmem:[%s6 + $0x258] sm:$0xff]
        %v4942 = vld [vmem:[%s6 + $0x260] sm:$0xff]
        %v4943 = vld [vmem:[%s6 + $0x268] sm:$0xff]
        %v4944 = vld [vmem:[%s6 + $0x270] sm:$0xff]
        %v4945 = vld [vmem:[%s6 + $0x278] sm:$0xff]
        %v4946 = vld [vmem:[%s6 + $0x280] sm:$0xff]
        %v4947 = vld [vmem:[%s6 + $0x288] sm:$0xff]
        %v4948 = vld [vmem:[%s6 + $0x290] sm:$0xff]
        %v4949 = vld [vmem:[%s6 + $0x298] sm:$0xff]
        %v4950 = vld [vmem:[%s6 + $0x2a0] sm:$0xff]
        %v4951 = vld [vmem:[%s6 + $0x2a8] sm:$0xff]
        %v4952 = vld [vmem:[%s6 + $0x2b0] sm:$0xff]
        %v4953 = vld [vmem:[%s6 + $0x2b8] sm:$0xff]
        %v4954 = vld [vmem:[%s6 + $0x2c0] sm:$0xff]
        %v4955 = vld [vmem:[%s6 + $0x2c8] sm:$0xff]
        %v4956 = vld [vmem:[%s6 + $0x2d0] sm:$0xff]
        %v4957 = vld [vmem:[%s6 + $0x2d8] sm:$0xff]
        %v4958 = vld [vmem:[%s6 + $0x2e0] sm:$0xff]
        %v4959 = vld [vmem:[%s6 + $0x2e8] sm:$0xff]
        %v4960 = vld [vmem:[%s6 + $0x2f0] sm:$0xff]
        %v4961 = vld [vmem:[%s6 + $0x2f8] sm:$0xff]
        %v4962 = vld [vmem:[%s6 + $0x300] sm:$0xff]
        %v4963 = vld [vmem:[%s6 + $0x308] sm:$0xff]
        %v4964 = vld [vmem:[%s6 + $0x310] sm:$0xff]
        %v4965 = vld [vmem:[%s6 + $0x318] sm:$0xff]
        %v4966 = vld [vmem:[%s6 + $0x320] sm:$0xff]
        %v4967 = vld [vmem:[%s6 + $0x328] sm:$0xff]
        %v4968 = vld [vmem:[%s6 + $0x330] sm:$0xff]
        %v4969 = vld [vmem:[%s6 + $0x338] sm:$0xff]
        %v4970 = vld [vmem:[%s6 + $0x340] sm:$0xff]
        %v4971 = vld [vmem:[%s6 + $0x348] sm:$0xff]
        %v4972 = vld [vmem:[%s6 + $0x350] sm:$0xff]
        %v4973 = vld [vmem:[%s6 + $0x358] sm:$0xff]
        %v4974 = vld [vmem:[%s6 + $0x360] sm:$0xff]
        %v4975 = vld [vmem:[%s6 + $0x368] sm:$0xff]
        %v4976 = vld [vmem:[%s6 + $0x370] sm:$0xff]
        %v4977 = vld [vmem:[%s6 + $0x378] sm:$0xff]
        %v4978 = vld [vmem:[%s6 + $0x380] sm:$0xff]
        %v4979 = vld [vmem:[%s6 + $0x388] sm:$0xff]
        %v4980 = vld [vmem:[%s6 + $0x390] sm:$0xff]
        %v4981 = vld [vmem:[%s6 + $0x398] sm:$0xff]
        %v4982 = vld [vmem:[%s6 + $0x3a0] sm:$0xff]
        %v4983 = vld [vmem:[%s6 + $0x3a8] sm:$0xff]
        %v4984 = vld [vmem:[%s6 + $0x3b0] sm:$0xff]
        %v4985 = vld [vmem:[%s6 + $0x3b8] sm:$0xff]
        %v4986 = vld [vmem:[%s6 + $0x3c0] sm:$0xff]
        %v4987 = vld [vmem:[%s6 + $0x3c8] sm:$0xff]
        %v4988 = vld [vmem:[%s6 + $0x3d0] sm:$0xff]
        %v4989 = vld [vmem:[%s6 + $0x3d8] sm:$0xff]
        %v4990 = vld [vmem:[%s6 + $0x3e0] sm:$0xff]
        %v4991 = vld [vmem:[%s6 + $0x3e8] sm:$0xff]
        %v4992 = vld [vmem:[%s6 + $0x3f0] sm:$0xff]
        %v4993 = vld [vmem:[%s6 + $0x3f8] sm:$0xff]
        %v4994 = vld [vmem:[%s6 + $0x400] sm:$0xff]
        %v4995 = vld [vmem:[%s6 + $0x408] sm:$0xff]
        %v4996 = vld [vmem:[%s6 + $0x410] sm:$0xff]
        %v4997 = vld [vmem:[%s6 + $0x418] sm:$0xff]
        %v4998 = vld [vmem:[%s6 + $0x420] sm:$0xff]
        %v4999 = vld [vmem:[%s6 + $0x428] sm:$0xff]
        %v5000 = vld [vmem:[%s6 + $0x430] sm:$0xff]
        %v5001 = vld [vmem:[%s6 + $0x438] sm:$0xff]
        %v5002 = vld [vmem:[%s6 + $0x440] sm:$0xff]
        %v5003 = vld [vmem:[%s6 + $0x448] sm:$0xff]
        %v5004 = vld [vmem:[%s6 + $0x450] sm:$0xff]
        %v5005 = vld [vmem:[%s6 + $0x458] sm:$0xff]
        %v5006 = vld [vmem:[%s6 + $0x460] sm:$0xff]
        %v5007 = vld [vmem:[%s6 + $0x468] sm:$0xff]
        %v5008 = vld [vmem:[%s6 + $0x470] sm:$0xff]
        %v5009 = vld [vmem:[%s6 + $0x478] sm:$0xff]
        %v5010 = vld [vmem:[%s6 + $0x480] sm:$0xff]
        %v5011 = vld [vmem:[%s6 + $0x488] sm:$0xff]
        %v5012 = vld [vmem:[%s6 + $0x490] sm:$0xff]
        %v5013 = vld [vmem:[%s6 + $0x498] sm:$0xff]
        %v5014 = vld [vmem:[%s6 + $0x4a0] sm:$0xff]
        %v5015 = vld [vmem:[%s6 + $0x4a8] sm:$0xff]
        %v5016 = vld [vmem:[%s6 + $0x4b0] sm:$0xff]
        %v5017 = vld [vmem:[%s6 + $0x4b8] sm:$0xff]
        %v5018 = vld [vmem:[%s6 + $0x4c0] sm:$0xff]
        %v5019 = vld [vmem:[%s6 + $0x4c8] sm:$0xff]
        %v5020 = vld [vmem:[%s6 + $0x4d0] sm:$0xff]
        %v5021 = vld [vmem:[%s6 + $0x4d8] sm:$0xff]
        %v5022 = vld [vmem:[%s6 + $0x4e0] sm:$0xff]
        %v5023 = vld [vmem:[%s6 + $0x4e8] sm:$0xff]
        %v5024 = vld [vmem:[%s6 + $0x4f0] sm:$0xff]
        %v5025 = vld [vmem:[%s6 + $0x4f8] sm:$0xff]
        %v5026 = vld [vmem:[%s6 + $0x500] sm:$0xff]
        %v5027 = vld [vmem:[%s6 + $0x508] sm:$0xff]
        %v5028 = vld [vmem:[%s6 + $0x510] sm:$0xff]
        %v5029 = vld [vmem:[%s6 + $0x518] sm:$0xff]
        %v5030 = vld [vmem:[%s6 + $0x520] sm:$0xff]
        %v5031 = vld [vmem:[%s6 + $0x528] sm:$0xff]
        %v5032 = vld [vmem:[%s6 + $0x530] sm:$0xff]
        %v5033 = vld [vmem:[%s6 + $0x538] sm:$0xff]
        %v5034 = vld [vmem:[%s6 + $0x540] sm:$0xff]
        %v5035 = vld [vmem:[%s6 + $0x548] sm:$0xff]
        %v5036 = vld [vmem:[%s6 + $0x550] sm:$0xff]
        %v5037 = vld [vmem:[%s6 + $0x558] sm:$0xff]
        %v5038 = vld [vmem:[%s6 + $0x560] sm:$0xff]
        %v5039 = vld [vmem:[%s6 + $0x568] sm:$0xff]
        %v5040 = vld [vmem:[%s6 + $0x570] sm:$0xff]
        %v5041 = vld [vmem:[%s6 + $0x578] sm:$0xff]
        %v5042 = vld [vmem:[%s6 + $0x580] sm:$0xff]
        %v5043 = vld [vmem:[%s6 + $0x588] sm:$0xff]
        %v5044 = vld [vmem:[%s6 + $0x590] sm:$0xff]
        %v5045 = vld [vmem:[%s6 + $0x598] sm:$0xff]
        %v5046 = vld [vmem:[%s6 + $0x5a0] sm:$0xff]
        %v5047 = vld [vmem:[%s6 + $0x5a8] sm:$0xff]
        %v5048 = vld [vmem:[%s6 + $0x5b0] sm:$0xff]
        %v5049 = vld [vmem:[%s6 + $0x5b8] sm:$0xff]
        %v5050 = vld [vmem:[%s6 + $0x5c0] sm:$0xff]
        %v5051 = vld [vmem:[%s6 + $0x5c8] sm:$0xff]
        %v5052 = vld [vmem:[%s6 + $0x5d0] sm:$0xff]
        %v5053 = vld [vmem:[%s6 + $0x5d8] sm:$0xff]
        %v5054 = vld [vmem:[%s6 + $0x5e0] sm:$0xff]
        %v5055 = vld [vmem:[%s6 + $0x5e8] sm:$0xff]
        %v5056 = vld [vmem:[%s6 + $0x5f0] sm:$0xff]
        %v5057 = vld [vmem:[%s6 + $0x5f8] sm:$0xff]
        %v5058 = vld [vmem:[%s6 + $0x600] sm:$0xff]
        %v5059 = vld [vmem:[%s6 + $0x608] sm:$0xff]
        %v5060 = vld [vmem:[%s6 + $0x610] sm:$0xff]
        %v5061 = vld [vmem:[%s6 + $0x618] sm:$0xff]
        %v5062 = vld [vmem:[%s6 + $0x620] sm:$0xff]
        %v5063 = vld [vmem:[%s6 + $0x628] sm:$0xff]
        %v5064 = vld [vmem:[%s6 + $0x630] sm:$0xff]
        %v5065 = vld [vmem:[%s6 + $0x638] sm:$0xff]
        %v5066 = vld [vmem:[%s6 + $0x640] sm:$0xff]
        %v5067 = vld [vmem:[%s6 + $0x648] sm:$0xff]
        %v5068 = vld [vmem:[%s6 + $0x650] sm:$0xff]
        %v5069 = vld [vmem:[%s6 + $0x658] sm:$0xff]
        %v5070 = vld [vmem:[%s6 + $0x660] sm:$0xff]
        %v5071 = vld [vmem:[%s6 + $0x668] sm:$0xff]
        %v5072 = vld [vmem:[%s6 + $0x670] sm:$0xff]
        %v5073 = vld [vmem:[%s6 + $0x678] sm:$0xff]
        %v5074 = vld [vmem:[%s6 + $0x680] sm:$0xff]
        %v5075 = vld [vmem:[%s6 + $0x688] sm:$0xff]
        %v5076 = vld [vmem:[%s6 + $0x690] sm:$0xff]
        %v5077 = vld [vmem:[%s6 + $0x698] sm:$0xff]
        %v5078 = vld [vmem:[%s6 + $0x6a0] sm:$0xff]
        %v5079 = vld [vmem:[%s6 + $0x6a8] sm:$0xff]
        %v5080 = vld [vmem:[%s6 + $0x6b0] sm:$0xff]
        %v5081 = vld [vmem:[%s6 + $0x6b8] sm:$0xff]
        %v5082 = vld [vmem:[%s6 + $0x6c0] sm:$0xff]
        %v5083 = vld [vmem:[%s6 + $0x6c8] sm:$0xff]
        %v5084 = vld [vmem:[%s6 + $0x6d0] sm:$0xff]
        %v5085 = vld [vmem:[%s6 + $0x6d8] sm:$0xff]
        %v5086 = vld [vmem:[%s6 + $0x6e0] sm:$0xff]
        %v5087 = vld [vmem:[%s6 + $0x6e8] sm:$0xff]
        %v5088 = vld [vmem:[%s6 + $0x6f0] sm:$0xff]
        %v5089 = vld [vmem:[%s6 + $0x6f8] sm:$0xff]
        %v5090 = vld [vmem:[%s6 + $0x700] sm:$0xff]
        %v5091 = vld [vmem:[%s6 + $0x708] sm:$0xff]
        %v5092 = vld [vmem:[%s6 + $0x710] sm:$0xff]
        %v5093 = vld [vmem:[%s6 + $0x718] sm:$0xff]
        %v5094 = vld [vmem:[%s6 + $0x720] sm:$0xff]
        %v5095 = vld [vmem:[%s6 + $0x728] sm:$0xff]
        %v5096 = vld [vmem:[%s6 + $0x730] sm:$0xff]
        %v5097 = vld [vmem:[%s6 + $0x738] sm:$0xff]
        %v5098 = vld [vmem:[%s6 + $0x740] sm:$0xff]
        %v5099 = vld [vmem:[%s6 + $0x748] sm:$0xff]
        %v5100 = vld [vmem:[%s6 + $0x750] sm:$0xff]
        %v5101 = vld [vmem:[%s6 + $0x758] sm:$0xff]
        %v5102 = vld [vmem:[%s6 + $0x760] sm:$0xff]
        %v5103 = vld [vmem:[%s6 + $0x768] sm:$0xff]
        %v5104 = vld [vmem:[%s6 + $0x770] sm:$0xff]
        %v5105 = vld [vmem:[%s6 + $0x778] sm:$0xff]
        %v5106 = vld [vmem:[%s6 + $0x780] sm:$0xff]
        %v5107 = vld [vmem:[%s6 + $0x788] sm:$0xff]
        %v5108 = vld [vmem:[%s6 + $0x790] sm:$0xff]
        %v5109 = vld [vmem:[%s6 + $0x798] sm:$0xff]
        %v5110 = vld [vmem:[%s6 + $0x7a0] sm:$0xff]
        %v5111 = vld [vmem:[%s6 + $0x7a8] sm:$0xff]
        %v5112 = vld [vmem:[%s6 + $0x7b0] sm:$0xff]
        %v5113 = vld [vmem:[%s6 + $0x7b8] sm:$0xff]
        %v5114 = vld [vmem:[%s6 + $0x7c0] sm:$0xff]
        %v5115 = vld [vmem:[%s6 + $0x7c8] sm:$0xff]
        %v5116 = vld [vmem:[%s6 + $0x7d0] sm:$0xff]
        %v5117 = vld [vmem:[%s6 + $0x7d8] sm:$0xff]
        %v5118 = vld [vmem:[%s6 + $0x7e0] sm:$0xff]
        %v5119 = vld [vmem:[%s6 + $0x7e8] sm:$0xff]
        %v5120 = vld [vmem:[%s6 + $0x7f0] sm:$0xff]
        %v5121 = vld [vmem:[%s6 + $0x7f8] sm:$0xff]
        %v5122 = vld [vmem:[%s7] sm:$0xff]
        %v5124 = vlaneseq
        %v5125 = vshrl.u32 %v5124, 7
        %v5126 = vsub.s32 0, %v5125
        %v5127 = vrot.slane %v5122, %v5126
        %v5128 = vlaneseq
        %v5129 = vshrl.u32 %v5128, 7
        %v5130 = vsub.s32 1, %v5129
        %v5131 = vrot.slane %v5122, %v5130
        %v5132 = vlaneseq
        %v5133 = vshrl.u32 %v5132, 7
        %v5134 = vsub.s32 2, %v5133
        %v5135 = vrot.slane %v5122, %v5134
        %v5136 = vlaneseq
        %v5137 = vshrl.u32 %v5136, 7
        %v5138 = vsub.s32 3, %v5137
        %v5139 = vrot.slane %v5122, %v5138
        %v5140 = vlaneseq
        %v5141 = vshrl.u32 %v5140, 7
        %v5142 = vsub.s32 4, %v5141
        %v5143 = vrot.slane %v5122, %v5142
        %v5144 = vlaneseq
        %v5145 = vshrl.u32 %v5144, 7
        %v5146 = vsub.s32 5, %v5145
        %v5147 = vrot.slane %v5122, %v5146
        %v5148 = vlaneseq
        %v5149 = vshrl.u32 %v5148, 7
        %v5150 = vsub.s32 6, %v5149
        %v5151 = vrot.slane %v5122, %v5150
        %v5152 = vlaneseq
        %v5153 = vshrl.u32 %v5152, 7
        %v5154 = vsub.s32 7, %v5153
        %v5155 = vrot.slane %v5122, %v5154
        %v5420 = vunpack.c.l.b16 %v4866
        %v5421 = vunpack.c.h.b16 %v4866
        %v5422 = vunpack.c.l.b16 %v4867
        %v5423 = vunpack.c.h.b16 %v4867
        %v5424 = vunpack.c.l.b16 %v4868
        %v5425 = vunpack.c.h.b16 %v4868
        %v5426 = vunpack.c.l.b16 %v4869
        %v5427 = vunpack.c.h.b16 %v4869
        %v5428 = vunpack.c.l.b16 %v4870
        %v5429 = vunpack.c.h.b16 %v4870
        %v5430 = vunpack.c.l.b16 %v4871
        %v5431 = vunpack.c.h.b16 %v4871
        %v5432 = vunpack.c.l.b16 %v4872
        %v5433 = vunpack.c.h.b16 %v4872
        %v5434 = vunpack.c.l.b16 %v4873
        %v5435 = vunpack.c.h.b16 %v4873
        %v5436 = vunpack.c.l.b16 %v4874
        %v5437 = vunpack.c.h.b16 %v4874
        %v5438 = vunpack.c.l.b16 %v4875
        %v5439 = vunpack.c.h.b16 %v4875
        %v5440 = vunpack.c.l.b16 %v4876
        %v5441 = vunpack.c.h.b16 %v4876
        %v5442 = vunpack.c.l.b16 %v4877
        %v5443 = vunpack.c.h.b16 %v4877
        %v5444 = vunpack.c.l.b16 %v4878
        %v5445 = vunpack.c.h.b16 %v4878
        %v5446 = vunpack.c.l.b16 %v4879
        %v5447 = vunpack.c.h.b16 %v4879
        %v5448 = vunpack.c.l.b16 %v4880
        %v5449 = vunpack.c.h.b16 %v4880
        %v5450 = vunpack.c.l.b16 %v4881
        %v5451 = vunpack.c.h.b16 %v4881
        %v5452 = vunpack.c.l.b16 %v4882
        %v5453 = vunpack.c.h.b16 %v4882
        %v5454 = vunpack.c.l.b16 %v4883
        %v5455 = vunpack.c.h.b16 %v4883
        %v5456 = vunpack.c.l.b16 %v4884
        %v5457 = vunpack.c.h.b16 %v4884
        %v5458 = vunpack.c.l.b16 %v4885
        %v5459 = vunpack.c.h.b16 %v4885
        %v5460 = vunpack.c.l.b16 %v4886
        %v5461 = vunpack.c.h.b16 %v4886
        %v5462 = vunpack.c.l.b16 %v4887
        %v5463 = vunpack.c.h.b16 %v4887
        %v5464 = vunpack.c.l.b16 %v4888
        %v5465 = vunpack.c.h.b16 %v4888
        %v5466 = vunpack.c.l.b16 %v4889
        %v5467 = vunpack.c.h.b16 %v4889
        %v5468 = vunpack.c.l.b16 %v4890
        %v5469 = vunpack.c.h.b16 %v4890
        %v5470 = vunpack.c.l.b16 %v4891
        %v5471 = vunpack.c.h.b16 %v4891
        %v5472 = vunpack.c.l.b16 %v4892
        %v5473 = vunpack.c.h.b16 %v4892
        %v5474 = vunpack.c.l.b16 %v4893
        %v5475 = vunpack.c.h.b16 %v4893
        %v5476 = vunpack.c.l.b16 %v4894
        %v5477 = vunpack.c.h.b16 %v4894
        %v5478 = vunpack.c.l.b16 %v4895
        %v5479 = vunpack.c.h.b16 %v4895
        %v5480 = vunpack.c.l.b16 %v4896
        %v5481 = vunpack.c.h.b16 %v4896
        %v5482 = vunpack.c.l.b16 %v4897
        %v5483 = vunpack.c.h.b16 %v4897
        %v5484 = vunpack.c.l.b16 %v4898
        %v5485 = vunpack.c.h.b16 %v4898
        %v5486 = vunpack.c.l.b16 %v4899
        %v5487 = vunpack.c.h.b16 %v4899
        %v5488 = vunpack.c.l.b16 %v4900
        %v5489 = vunpack.c.h.b16 %v4900
        %v5490 = vunpack.c.l.b16 %v4901
        %v5491 = vunpack.c.h.b16 %v4901
        %v5492 = vunpack.c.l.b16 %v4902
        %v5493 = vunpack.c.h.b16 %v4902
        %v5494 = vunpack.c.l.b16 %v4903
        %v5495 = vunpack.c.h.b16 %v4903
        %v5496 = vunpack.c.l.b16 %v4904
        %v5497 = vunpack.c.h.b16 %v4904
        %v5498 = vunpack.c.l.b16 %v4905
        %v5499 = vunpack.c.h.b16 %v4905
        %v5500 = vunpack.c.l.b16 %v4906
        %v5501 = vunpack.c.h.b16 %v4906
        %v5502 = vunpack.c.l.b16 %v4907
        %v5503 = vunpack.c.h.b16 %v4907
        %v5504 = vunpack.c.l.b16 %v4908
        %v5505 = vunpack.c.h.b16 %v4908
        %v5506 = vunpack.c.l.b16 %v4909
        %v5507 = vunpack.c.h.b16 %v4909
        %v5508 = vunpack.c.l.b16 %v4910
        %v5509 = vunpack.c.h.b16 %v4910
        %v5510 = vunpack.c.l.b16 %v4911
        %v5511 = vunpack.c.h.b16 %v4911
        %v5512 = vunpack.c.l.b16 %v4912
        %v5513 = vunpack.c.h.b16 %v4912
        %v5514 = vunpack.c.l.b16 %v4913
        %v5515 = vunpack.c.h.b16 %v4913
        %v5516 = vunpack.c.l.b16 %v4914
        %v5517 = vunpack.c.h.b16 %v4914
        %v5518 = vunpack.c.l.b16 %v4915
        %v5519 = vunpack.c.h.b16 %v4915
        %v5520 = vunpack.c.l.b16 %v4916
        %v5521 = vunpack.c.h.b16 %v4916
        %v5522 = vunpack.c.l.b16 %v4917
        %v5523 = vunpack.c.h.b16 %v4917
        %v5524 = vunpack.c.l.b16 %v4918
        %v5525 = vunpack.c.h.b16 %v4918
        %v5526 = vunpack.c.l.b16 %v4919
        %v5527 = vunpack.c.h.b16 %v4919
        %v5528 = vunpack.c.l.b16 %v4920
        %v5529 = vunpack.c.h.b16 %v4920
        %v5530 = vunpack.c.l.b16 %v4921
        %v5531 = vunpack.c.h.b16 %v4921
        %v5532 = vunpack.c.l.b16 %v4922
        %v5533 = vunpack.c.h.b16 %v4922
        %v5534 = vunpack.c.l.b16 %v4923
        %v5535 = vunpack.c.h.b16 %v4923
        %v5536 = vunpack.c.l.b16 %v4924
        %v5537 = vunpack.c.h.b16 %v4924
        %v5538 = vunpack.c.l.b16 %v4925
        %v5539 = vunpack.c.h.b16 %v4925
        %v5540 = vunpack.c.l.b16 %v4926
        %v5541 = vunpack.c.h.b16 %v4926
        %v5542 = vunpack.c.l.b16 %v4927
        %v5543 = vunpack.c.h.b16 %v4927
        %v5544 = vunpack.c.l.b16 %v4928
        %v5545 = vunpack.c.h.b16 %v4928
        %v5546 = vunpack.c.l.b16 %v4929
        %v5547 = vunpack.c.h.b16 %v4929
        %v5548 = vunpack.c.l.b16 %v4930
        %v5549 = vunpack.c.h.b16 %v4930
        %v5550 = vunpack.c.l.b16 %v4931
        %v5551 = vunpack.c.h.b16 %v4931
        %v5552 = vunpack.c.l.b16 %v4932
        %v5553 = vunpack.c.h.b16 %v4932
        %v5554 = vunpack.c.l.b16 %v4933
        %v5555 = vunpack.c.h.b16 %v4933
        %v5556 = vunpack.c.l.b16 %v4934
        %v5557 = vunpack.c.h.b16 %v4934
        %v5558 = vunpack.c.l.b16 %v4935
        %v5559 = vunpack.c.h.b16 %v4935
        %v5560 = vunpack.c.l.b16 %v4936
        %v5561 = vunpack.c.h.b16 %v4936
        %v5562 = vunpack.c.l.b16 %v4937
        %v5563 = vunpack.c.h.b16 %v4937
        %v5564 = vunpack.c.l.b16 %v4938
        %v5565 = vunpack.c.h.b16 %v4938
        %v5566 = vunpack.c.l.b16 %v4939
        %v5567 = vunpack.c.h.b16 %v4939
        %v5568 = vunpack.c.l.b16 %v4940
        %v5569 = vunpack.c.h.b16 %v4940
        %v5570 = vunpack.c.l.b16 %v4941
        %v5571 = vunpack.c.h.b16 %v4941
        %v5572 = vunpack.c.l.b16 %v4942
        %v5573 = vunpack.c.h.b16 %v4942
        %v5574 = vunpack.c.l.b16 %v4943
        %v5575 = vunpack.c.h.b16 %v4943
        %v5576 = vunpack.c.l.b16 %v4944
        %v5577 = vunpack.c.h.b16 %v4944
        %v5578 = vunpack.c.l.b16 %v4945
        %v5579 = vunpack.c.h.b16 %v4945
        %v5580 = vunpack.c.l.b16 %v4946
        %v5581 = vunpack.c.h.b16 %v4946
        %v5582 = vunpack.c.l.b16 %v4947
        %v5583 = vunpack.c.h.b16 %v4947
        %v5584 = vunpack.c.l.b16 %v4948
        %v5585 = vunpack.c.h.b16 %v4948
        %v5586 = vunpack.c.l.b16 %v4949
        %v5587 = vunpack.c.h.b16 %v4949
        %v5588 = vunpack.c.l.b16 %v4950
        %v5589 = vunpack.c.h.b16 %v4950
        %v5590 = vunpack.c.l.b16 %v4951
        %v5591 = vunpack.c.h.b16 %v4951
        %v5592 = vunpack.c.l.b16 %v4952
        %v5593 = vunpack.c.h.b16 %v4952
        %v5594 = vunpack.c.l.b16 %v4953
        %v5595 = vunpack.c.h.b16 %v4953
        %v5596 = vunpack.c.l.b16 %v4954
        %v5597 = vunpack.c.h.b16 %v4954
        %v5598 = vunpack.c.l.b16 %v4955
        %v5599 = vunpack.c.h.b16 %v4955
        %v5600 = vunpack.c.l.b16 %v4956
        %v5601 = vunpack.c.h.b16 %v4956
        %v5602 = vunpack.c.l.b16 %v4957
        %v5603 = vunpack.c.h.b16 %v4957
        %v5604 = vunpack.c.l.b16 %v4958
        %v5605 = vunpack.c.h.b16 %v4958
        %v5606 = vunpack.c.l.b16 %v4959
        %v5607 = vunpack.c.h.b16 %v4959
        %v5608 = vunpack.c.l.b16 %v4960
        %v5609 = vunpack.c.h.b16 %v4960
        %v5610 = vunpack.c.l.b16 %v4961
        %v5611 = vunpack.c.h.b16 %v4961
        %v5612 = vunpack.c.l.b16 %v4962
        %v5613 = vunpack.c.h.b16 %v4962
        %v5614 = vunpack.c.l.b16 %v4963
        %v5615 = vunpack.c.h.b16 %v4963
        %v5616 = vunpack.c.l.b16 %v4964
        %v5617 = vunpack.c.h.b16 %v4964
        %v5618 = vunpack.c.l.b16 %v4965
        %v5619 = vunpack.c.h.b16 %v4965
        %v5620 = vunpack.c.l.b16 %v4966
        %v5621 = vunpack.c.h.b16 %v4966
        %v5622 = vunpack.c.l.b16 %v4967
        %v5623 = vunpack.c.h.b16 %v4967
        %v5624 = vunpack.c.l.b16 %v4968
        %v5625 = vunpack.c.h.b16 %v4968
        %v5626 = vunpack.c.l.b16 %v4969
        %v5627 = vunpack.c.h.b16 %v4969
        %v5628 = vunpack.c.l.b16 %v4970
        %v5629 = vunpack.c.h.b16 %v4970
        %v5630 = vunpack.c.l.b16 %v4971
        %v5631 = vunpack.c.h.b16 %v4971
        %v5632 = vunpack.c.l.b16 %v4972
        %v5633 = vunpack.c.h.b16 %v4972
        %v5634 = vunpack.c.l.b16 %v4973
        %v5635 = vunpack.c.h.b16 %v4973
        %v5636 = vunpack.c.l.b16 %v4974
        %v5637 = vunpack.c.h.b16 %v4974
        %v5638 = vunpack.c.l.b16 %v4975
        %v5639 = vunpack.c.h.b16 %v4975
        %v5640 = vunpack.c.l.b16 %v4976
        %v5641 = vunpack.c.h.b16 %v4976
        %v5642 = vunpack.c.l.b16 %v4977
        %v5643 = vunpack.c.h.b16 %v4977
        %v5644 = vunpack.c.l.b16 %v4978
        %v5645 = vunpack.c.h.b16 %v4978
        %v5646 = vunpack.c.l.b16 %v4979
        %v5647 = vunpack.c.h.b16 %v4979
        %v5648 = vunpack.c.l.b16 %v4980
        %v5649 = vunpack.c.h.b16 %v4980
        %v5650 = vunpack.c.l.b16 %v4981
        %v5651 = vunpack.c.h.b16 %v4981
        %v5652 = vunpack.c.l.b16 %v4982
        %v5653 = vunpack.c.h.b16 %v4982
        %v5654 = vunpack.c.l.b16 %v4983
        %v5655 = vunpack.c.h.b16 %v4983
        %v5656 = vunpack.c.l.b16 %v4984
        %v5657 = vunpack.c.h.b16 %v4984
        %v5658 = vunpack.c.l.b16 %v4985
        %v5659 = vunpack.c.h.b16 %v4985
        %v5660 = vunpack.c.l.b16 %v4986
        %v5661 = vunpack.c.h.b16 %v4986
        %v5662 = vunpack.c.l.b16 %v4987
        %v5663 = vunpack.c.h.b16 %v4987
        %v5664 = vunpack.c.l.b16 %v4988
        %v5665 = vunpack.c.h.b16 %v4988
        %v5666 = vunpack.c.l.b16 %v4989
        %v5667 = vunpack.c.h.b16 %v4989
        %v5668 = vunpack.c.l.b16 %v4990
        %v5669 = vunpack.c.h.b16 %v4990
        %v5670 = vunpack.c.l.b16 %v4991
        %v5671 = vunpack.c.h.b16 %v4991
        %v5672 = vunpack.c.l.b16 %v4992
        %v5673 = vunpack.c.h.b16 %v4992
        %v5674 = vunpack.c.l.b16 %v4993
        %v5675 = vunpack.c.h.b16 %v4993
        %v5676 = vunpack.c.l.b16 %v4994
        %v5677 = vunpack.c.h.b16 %v4994
        %v5678 = vunpack.c.l.b16 %v4995
        %v5679 = vunpack.c.h.b16 %v4995
        %v5680 = vunpack.c.l.b16 %v4996
        %v5681 = vunpack.c.h.b16 %v4996
        %v5682 = vunpack.c.l.b16 %v4997
        %v5683 = vunpack.c.h.b16 %v4997
        %v5684 = vunpack.c.l.b16 %v4998
        %v5685 = vunpack.c.h.b16 %v4998
        %v5686 = vunpack.c.l.b16 %v4999
        %v5687 = vunpack.c.h.b16 %v4999
        %v5688 = vunpack.c.l.b16 %v5000
        %v5689 = vunpack.c.h.b16 %v5000
        %v5690 = vunpack.c.l.b16 %v5001
        %v5691 = vunpack.c.h.b16 %v5001
        %v5692 = vunpack.c.l.b16 %v5002
        %v5693 = vunpack.c.h.b16 %v5002
        %v5694 = vunpack.c.l.b16 %v5003
        %v5695 = vunpack.c.h.b16 %v5003
        %v5696 = vunpack.c.l.b16 %v5004
        %v5697 = vunpack.c.h.b16 %v5004
        %v5698 = vunpack.c.l.b16 %v5005
        %v5699 = vunpack.c.h.b16 %v5005
        %v5700 = vunpack.c.l.b16 %v5006
        %v5701 = vunpack.c.h.b16 %v5006
        %v5702 = vunpack.c.l.b16 %v5007
        %v5703 = vunpack.c.h.b16 %v5007
        %v5704 = vunpack.c.l.b16 %v5008
        %v5705 = vunpack.c.h.b16 %v5008
        %v5706 = vunpack.c.l.b16 %v5009
        %v5707 = vunpack.c.h.b16 %v5009
        %v5708 = vunpack.c.l.b16 %v5010
        %v5709 = vunpack.c.h.b16 %v5010
        %v5710 = vunpack.c.l.b16 %v5011
        %v5711 = vunpack.c.h.b16 %v5011
        %v5712 = vunpack.c.l.b16 %v5012
        %v5713 = vunpack.c.h.b16 %v5012
        %v5714 = vunpack.c.l.b16 %v5013
        %v5715 = vunpack.c.h.b16 %v5013
        %v5716 = vunpack.c.l.b16 %v5014
        %v5717 = vunpack.c.h.b16 %v5014
        %v5718 = vunpack.c.l.b16 %v5015
        %v5719 = vunpack.c.h.b16 %v5015
        %v5720 = vunpack.c.l.b16 %v5016
        %v5721 = vunpack.c.h.b16 %v5016
        %v5722 = vunpack.c.l.b16 %v5017
        %v5723 = vunpack.c.h.b16 %v5017
        %v5724 = vunpack.c.l.b16 %v5018
        %v5725 = vunpack.c.h.b16 %v5018
        %v5726 = vunpack.c.l.b16 %v5019
        %v5727 = vunpack.c.h.b16 %v5019
        %v5728 = vunpack.c.l.b16 %v5020
        %v5729 = vunpack.c.h.b16 %v5020
        %v5730 = vunpack.c.l.b16 %v5021
        %v5731 = vunpack.c.h.b16 %v5021
        %v5732 = vunpack.c.l.b16 %v5022
        %v5733 = vunpack.c.h.b16 %v5022
        %v5734 = vunpack.c.l.b16 %v5023
        %v5735 = vunpack.c.h.b16 %v5023
        %v5736 = vunpack.c.l.b16 %v5024
        %v5737 = vunpack.c.h.b16 %v5024
        %v5738 = vunpack.c.l.b16 %v5025
        %v5739 = vunpack.c.h.b16 %v5025
        %v5740 = vunpack.c.l.b16 %v5026
        %v5741 = vunpack.c.h.b16 %v5026
        %v5742 = vunpack.c.l.b16 %v5027
        %v5743 = vunpack.c.h.b16 %v5027
        %v5744 = vunpack.c.l.b16 %v5028
        %v5745 = vunpack.c.h.b16 %v5028
        %v5746 = vunpack.c.l.b16 %v5029
        %v5747 = vunpack.c.h.b16 %v5029
        %v5748 = vunpack.c.l.b16 %v5030
        %v5749 = vunpack.c.h.b16 %v5030
        %v5750 = vunpack.c.l.b16 %v5031
        %v5751 = vunpack.c.h.b16 %v5031
        %v5752 = vunpack.c.l.b16 %v5032
        %v5753 = vunpack.c.h.b16 %v5032
        %v5754 = vunpack.c.l.b16 %v5033
        %v5755 = vunpack.c.h.b16 %v5033
        %v5756 = vunpack.c.l.b16 %v5034
        %v5757 = vunpack.c.h.b16 %v5034
        %v5758 = vunpack.c.l.b16 %v5035
        %v5759 = vunpack.c.h.b16 %v5035
        %v5760 = vunpack.c.l.b16 %v5036
        %v5761 = vunpack.c.h.b16 %v5036
        %v5762 = vunpack.c.l.b16 %v5037
        %v5763 = vunpack.c.h.b16 %v5037
        %v5764 = vunpack.c.l.b16 %v5038
        %v5765 = vunpack.c.h.b16 %v5038
        %v5766 = vunpack.c.l.b16 %v5039
        %v5767 = vunpack.c.h.b16 %v5039
        %v5768 = vunpack.c.l.b16 %v5040
        %v5769 = vunpack.c.h.b16 %v5040
        %v5770 = vunpack.c.l.b16 %v5041
        %v5771 = vunpack.c.h.b16 %v5041
        %v5772 = vunpack.c.l.b16 %v5042
        %v5773 = vunpack.c.h.b16 %v5042
        %v5774 = vunpack.c.l.b16 %v5043
        %v5775 = vunpack.c.h.b16 %v5043
        %v5776 = vunpack.c.l.b16 %v5044
        %v5777 = vunpack.c.h.b16 %v5044
        %v5778 = vunpack.c.l.b16 %v5045
        %v5779 = vunpack.c.h.b16 %v5045
        %v5780 = vunpack.c.l.b16 %v5046
        %v5781 = vunpack.c.h.b16 %v5046
        %v5782 = vunpack.c.l.b16 %v5047
        %v5783 = vunpack.c.h.b16 %v5047
        %v5784 = vunpack.c.l.b16 %v5048
        %v5785 = vunpack.c.h.b16 %v5048
        %v5786 = vunpack.c.l.b16 %v5049
        %v5787 = vunpack.c.h.b16 %v5049
        %v5788 = vunpack.c.l.b16 %v5050
        %v5789 = vunpack.c.h.b16 %v5050
        %v5790 = vunpack.c.l.b16 %v5051
        %v5791 = vunpack.c.h.b16 %v5051
        %v5792 = vunpack.c.l.b16 %v5052
        %v5793 = vunpack.c.h.b16 %v5052
        %v5794 = vunpack.c.l.b16 %v5053
        %v5795 = vunpack.c.h.b16 %v5053
        %v5796 = vunpack.c.l.b16 %v5054
        %v5797 = vunpack.c.h.b16 %v5054
        %v5798 = vunpack.c.l.b16 %v5055
        %v5799 = vunpack.c.h.b16 %v5055
        %v5800 = vunpack.c.l.b16 %v5056
        %v5801 = vunpack.c.h.b16 %v5056
        %v5802 = vunpack.c.l.b16 %v5057
        %v5803 = vunpack.c.h.b16 %v5057
        %v5804 = vunpack.c.l.b16 %v5058
        %v5805 = vunpack.c.h.b16 %v5058
        %v5806 = vunpack.c.l.b16 %v5059
        %v5807 = vunpack.c.h.b16 %v5059
        %v5808 = vunpack.c.l.b16 %v5060
        %v5809 = vunpack.c.h.b16 %v5060
        %v5810 = vunpack.c.l.b16 %v5061
        %v5811 = vunpack.c.h.b16 %v5061
        %v5812 = vunpack.c.l.b16 %v5062
        %v5813 = vunpack.c.h.b16 %v5062
        %v5814 = vunpack.c.l.b16 %v5063
        %v5815 = vunpack.c.h.b16 %v5063
        %v5816 = vunpack.c.l.b16 %v5064
        %v5817 = vunpack.c.h.b16 %v5064
        %v5818 = vunpack.c.l.b16 %v5065
        %v5819 = vunpack.c.h.b16 %v5065
        %v5820 = vunpack.c.l.b16 %v5066
        %v5821 = vunpack.c.h.b16 %v5066
        %v5822 = vunpack.c.l.b16 %v5067
        %v5823 = vunpack.c.h.b16 %v5067
        %v5824 = vunpack.c.l.b16 %v5068
        %v5825 = vunpack.c.h.b16 %v5068
        %v5826 = vunpack.c.l.b16 %v5069
        %v5827 = vunpack.c.h.b16 %v5069
        %v5828 = vunpack.c.l.b16 %v5070
        %v5829 = vunpack.c.h.b16 %v5070
        %v5830 = vunpack.c.l.b16 %v5071
        %v5831 = vunpack.c.h.b16 %v5071
        %v5832 = vunpack.c.l.b16 %v5072
        %v5833 = vunpack.c.h.b16 %v5072
        %v5834 = vunpack.c.l.b16 %v5073
        %v5835 = vunpack.c.h.b16 %v5073
        %v5836 = vunpack.c.l.b16 %v5074
        %v5837 = vunpack.c.h.b16 %v5074
        %v5838 = vunpack.c.l.b16 %v5075
        %v5839 = vunpack.c.h.b16 %v5075
        %v5840 = vunpack.c.l.b16 %v5076
        %v5841 = vunpack.c.h.b16 %v5076
        %v5842 = vunpack.c.l.b16 %v5077
        %v5843 = vunpack.c.h.b16 %v5077
        %v5844 = vunpack.c.l.b16 %v5078
        %v5845 = vunpack.c.h.b16 %v5078
        %v5846 = vunpack.c.l.b16 %v5079
        %v5847 = vunpack.c.h.b16 %v5079
        %v5848 = vunpack.c.l.b16 %v5080
        %v5849 = vunpack.c.h.b16 %v5080
        %v5850 = vunpack.c.l.b16 %v5081
        %v5851 = vunpack.c.h.b16 %v5081
        %v5852 = vunpack.c.l.b16 %v5082
        %v5853 = vunpack.c.h.b16 %v5082
        %v5854 = vunpack.c.l.b16 %v5083
        %v5855 = vunpack.c.h.b16 %v5083
        %v5856 = vunpack.c.l.b16 %v5084
        %v5857 = vunpack.c.h.b16 %v5084
        %v5858 = vunpack.c.l.b16 %v5085
        %v5859 = vunpack.c.h.b16 %v5085
        %v5860 = vunpack.c.l.b16 %v5086
        %v5861 = vunpack.c.h.b16 %v5086
        %v5862 = vunpack.c.l.b16 %v5087
        %v5863 = vunpack.c.h.b16 %v5087
        %v5864 = vunpack.c.l.b16 %v5088
        %v5865 = vunpack.c.h.b16 %v5088
        %v5866 = vunpack.c.l.b16 %v5089
        %v5867 = vunpack.c.h.b16 %v5089
        %v5868 = vunpack.c.l.b16 %v5090
        %v5869 = vunpack.c.h.b16 %v5090
        %v5870 = vunpack.c.l.b16 %v5091
        %v5871 = vunpack.c.h.b16 %v5091
        %v5872 = vunpack.c.l.b16 %v5092
        %v5873 = vunpack.c.h.b16 %v5092
        %v5874 = vunpack.c.l.b16 %v5093
        %v5875 = vunpack.c.h.b16 %v5093
        %v5876 = vunpack.c.l.b16 %v5094
        %v5877 = vunpack.c.h.b16 %v5094
        %v5878 = vunpack.c.l.b16 %v5095
        %v5879 = vunpack.c.h.b16 %v5095
        %v5880 = vunpack.c.l.b16 %v5096
        %v5881 = vunpack.c.h.b16 %v5096
        %v5882 = vunpack.c.l.b16 %v5097
        %v5883 = vunpack.c.h.b16 %v5097
        %v5884 = vunpack.c.l.b16 %v5098
        %v5885 = vunpack.c.h.b16 %v5098
        %v5886 = vunpack.c.l.b16 %v5099
        %v5887 = vunpack.c.h.b16 %v5099
        %v5888 = vunpack.c.l.b16 %v5100
        %v5889 = vunpack.c.h.b16 %v5100
        %v5890 = vunpack.c.l.b16 %v5101
        %v5891 = vunpack.c.h.b16 %v5101
        %v5892 = vunpack.c.l.b16 %v5102
        %v5893 = vunpack.c.h.b16 %v5102
        %v5894 = vunpack.c.l.b16 %v5103
        %v5895 = vunpack.c.h.b16 %v5103
        %v5896 = vunpack.c.l.b16 %v5104
        %v5897 = vunpack.c.h.b16 %v5104
        %v5898 = vunpack.c.l.b16 %v5105
        %v5899 = vunpack.c.h.b16 %v5105
        %v5900 = vunpack.c.l.b16 %v5106
        %v5901 = vunpack.c.h.b16 %v5106
        %v5902 = vunpack.c.l.b16 %v5107
        %v5903 = vunpack.c.h.b16 %v5107
        %v5904 = vunpack.c.l.b16 %v5108
        %v5905 = vunpack.c.h.b16 %v5108
        %v5906 = vunpack.c.l.b16 %v5109
        %v5907 = vunpack.c.h.b16 %v5109
        %v5908 = vunpack.c.l.b16 %v5110
        %v5909 = vunpack.c.h.b16 %v5110
        %v5910 = vunpack.c.l.b16 %v5111
        %v5911 = vunpack.c.h.b16 %v5111
        %v5912 = vunpack.c.l.b16 %v5112
        %v5913 = vunpack.c.h.b16 %v5112
        %v5914 = vunpack.c.l.b16 %v5113
        %v5915 = vunpack.c.h.b16 %v5113
        %v5916 = vunpack.c.l.b16 %v5114
        %v5917 = vunpack.c.h.b16 %v5114
        %v5918 = vunpack.c.l.b16 %v5115
        %v5919 = vunpack.c.h.b16 %v5115
        %v5920 = vunpack.c.l.b16 %v5116
        %v5921 = vunpack.c.h.b16 %v5116
        %v5922 = vunpack.c.l.b16 %v5117
        %v5923 = vunpack.c.h.b16 %v5117
        %v5924 = vunpack.c.l.b16 %v5118
        %v5925 = vunpack.c.h.b16 %v5118
        %v5926 = vunpack.c.l.b16 %v5119
        %v5927 = vunpack.c.h.b16 %v5119
        %v5928 = vunpack.c.l.b16 %v5120
        %v5929 = vunpack.c.h.b16 %v5120
        %v5930 = vunpack.c.l.b16 %v5121
        %v5931 = vunpack.c.h.b16 %v5121
        %v5932 = vpack.c.b16 %v5428, %v5420
        %v5933 = vpack.c.b16 %v5429, %v5421
        %v5934 = vpack.c.b16 %v5430, %v5422
        %v5935 = vpack.c.b16 %v5431, %v5423
        %v5936 = vpack.c.b16 %v5432, %v5424
        %v5937 = vpack.c.b16 %v5433, %v5425
        %v5938 = vpack.c.b16 %v5434, %v5426
        %v5939 = vpack.c.b16 %v5435, %v5427
        %v5940 = vpack.c.b16 %v5444, %v5436
        %v5941 = vpack.c.b16 %v5445, %v5437
        %v5942 = vpack.c.b16 %v5446, %v5438
        %v5943 = vpack.c.b16 %v5447, %v5439
        %v5944 = vpack.c.b16 %v5448, %v5440
        %v5945 = vpack.c.b16 %v5449, %v5441
        %v5946 = vpack.c.b16 %v5450, %v5442
        %v5947 = vpack.c.b16 %v5451, %v5443
        %v5948 = vpack.c.b16 %v5460, %v5452
        %v5949 = vpack.c.b16 %v5461, %v5453
        %v5950 = vpack.c.b16 %v5462, %v5454
        %v5951 = vpack.c.b16 %v5463, %v5455
        %v5952 = vpack.c.b16 %v5464, %v5456
        %v5953 = vpack.c.b16 %v5465, %v5457
        %v5954 = vpack.c.b16 %v5466, %v5458
        %v5955 = vpack.c.b16 %v5467, %v5459
        %v5956 = vpack.c.b16 %v5476, %v5468
        %v5957 = vpack.c.b16 %v5477, %v5469
        %v5958 = vpack.c.b16 %v5478, %v5470
        %v5959 = vpack.c.b16 %v5479, %v5471
        %v5960 = vpack.c.b16 %v5480, %v5472
        %v5961 = vpack.c.b16 %v5481, %v5473
        %v5962 = vpack.c.b16 %v5482, %v5474
        %v5963 = vpack.c.b16 %v5483, %v5475
        %v5964 = vpack.c.b16 %v5492, %v5484
        %v5965 = vpack.c.b16 %v5493, %v5485
        %v5966 = vpack.c.b16 %v5494, %v5486
        %v5967 = vpack.c.b16 %v5495, %v5487
        %v5968 = vpack.c.b16 %v5496, %v5488
        %v5969 = vpack.c.b16 %v5497, %v5489
        %v5970 = vpack.c.b16 %v5498, %v5490
        %v5971 = vpack.c.b16 %v5499, %v5491
        %v5972 = vpack.c.b16 %v5508, %v5500
        %v5973 = vpack.c.b16 %v5509, %v5501
        %v5974 = vpack.c.b16 %v5510, %v5502
        %v5975 = vpack.c.b16 %v5511, %v5503
        %v5976 = vpack.c.b16 %v5512, %v5504
        %v5977 = vpack.c.b16 %v5513, %v5505
        %v5978 = vpack.c.b16 %v5514, %v5506
        %v5979 = vpack.c.b16 %v5515, %v5507
        %v5980 = vpack.c.b16 %v5524, %v5516
        %v5981 = vpack.c.b16 %v5525, %v5517
        %v5982 = vpack.c.b16 %v5526, %v5518
        %v5983 = vpack.c.b16 %v5527, %v5519
        %v5984 = vpack.c.b16 %v5528, %v5520
        %v5985 = vpack.c.b16 %v5529, %v5521
        %v5986 = vpack.c.b16 %v5530, %v5522
        %v5987 = vpack.c.b16 %v5531, %v5523
        %v5988 = vpack.c.b16 %v5540, %v5532
        %v5989 = vpack.c.b16 %v5541, %v5533
        %v5990 = vpack.c.b16 %v5542, %v5534
        %v5991 = vpack.c.b16 %v5543, %v5535
        %v5992 = vpack.c.b16 %v5544, %v5536
        %v5993 = vpack.c.b16 %v5545, %v5537
        %v5994 = vpack.c.b16 %v5546, %v5538
        %v5995 = vpack.c.b16 %v5547, %v5539
        %v5996 = vpack.c.b16 %v5556, %v5548
        %v5997 = vpack.c.b16 %v5557, %v5549
        %v5998 = vpack.c.b16 %v5558, %v5550
        %v5999 = vpack.c.b16 %v5559, %v5551
        %v6000 = vpack.c.b16 %v5560, %v5552
        %v6001 = vpack.c.b16 %v5561, %v5553
        %v6002 = vpack.c.b16 %v5562, %v5554
        %v6003 = vpack.c.b16 %v5563, %v5555
        %v6004 = vpack.c.b16 %v5572, %v5564
        %v6005 = vpack.c.b16 %v5573, %v5565
        %v6006 = vpack.c.b16 %v5574, %v5566
        %v6007 = vpack.c.b16 %v5575, %v5567
        %v6008 = vpack.c.b16 %v5576, %v5568
        %v6009 = vpack.c.b16 %v5577, %v5569
        %v6010 = vpack.c.b16 %v5578, %v5570
        %v6011 = vpack.c.b16 %v5579, %v5571
        %v6012 = vpack.c.b16 %v5588, %v5580
        %v6013 = vpack.c.b16 %v5589, %v5581
        %v6014 = vpack.c.b16 %v5590, %v5582
        %v6015 = vpack.c.b16 %v5591, %v5583
        %v6016 = vpack.c.b16 %v5592, %v5584
        %v6017 = vpack.c.b16 %v5593, %v5585
        %v6018 = vpack.c.b16 %v5594, %v5586
        %v6019 = vpack.c.b16 %v5595, %v5587
        %v6020 = vpack.c.b16 %v5604, %v5596
        %v6021 = vpack.c.b16 %v5605, %v5597
        %v6022 = vpack.c.b16 %v5606, %v5598
        %v6023 = vpack.c.b16 %v5607, %v5599
        %v6024 = vpack.c.b16 %v5608, %v5600
        %v6025 = vpack.c.b16 %v5609, %v5601
        %v6026 = vpack.c.b16 %v5610, %v5602
        %v6027 = vpack.c.b16 %v5611, %v5603
        %v6028 = vpack.c.b16 %v5620, %v5612
        %v6029 = vpack.c.b16 %v5621, %v5613
        %v6030 = vpack.c.b16 %v5622, %v5614
        %v6031 = vpack.c.b16 %v5623, %v5615
        %v6032 = vpack.c.b16 %v5624, %v5616
        %v6033 = vpack.c.b16 %v5625, %v5617
        %v6034 = vpack.c.b16 %v5626, %v5618
        %v6035 = vpack.c.b16 %v5627, %v5619
        %v6036 = vpack.c.b16 %v5636, %v5628
        %v6037 = vpack.c.b16 %v5637, %v5629
        %v6038 = vpack.c.b16 %v5638, %v5630
        %v6039 = vpack.c.b16 %v5639, %v5631
        %v6040 = vpack.c.b16 %v5640, %v5632
        %v6041 = vpack.c.b16 %v5641, %v5633
        %v6042 = vpack.c.b16 %v5642, %v5634
        %v6043 = vpack.c.b16 %v5643, %v5635
        %v6044 = vpack.c.b16 %v5652, %v5644
        %v6045 = vpack.c.b16 %v5653, %v5645
        %v6046 = vpack.c.b16 %v5654, %v5646
        %v6047 = vpack.c.b16 %v5655, %v5647
        %v6048 = vpack.c.b16 %v5656, %v5648
        %v6049 = vpack.c.b16 %v5657, %v5649
        %v6050 = vpack.c.b16 %v5658, %v5650
        %v6051 = vpack.c.b16 %v5659, %v5651
        %v6052 = vpack.c.b16 %v5668, %v5660
        %v6053 = vpack.c.b16 %v5669, %v5661
        %v6054 = vpack.c.b16 %v5670, %v5662
        %v6055 = vpack.c.b16 %v5671, %v5663
        %v6056 = vpack.c.b16 %v5672, %v5664
        %v6057 = vpack.c.b16 %v5673, %v5665
        %v6058 = vpack.c.b16 %v5674, %v5666
        %v6059 = vpack.c.b16 %v5675, %v5667
        %v6060 = vpack.c.b16 %v5684, %v5676
        %v6061 = vpack.c.b16 %v5685, %v5677
        %v6062 = vpack.c.b16 %v5686, %v5678
        %v6063 = vpack.c.b16 %v5687, %v5679
        %v6064 = vpack.c.b16 %v5688, %v5680
        %v6065 = vpack.c.b16 %v5689, %v5681
        %v6066 = vpack.c.b16 %v5690, %v5682
        %v6067 = vpack.c.b16 %v5691, %v5683
        %v6068 = vpack.c.b16 %v5700, %v5692
        %v6069 = vpack.c.b16 %v5701, %v5693
        %v6070 = vpack.c.b16 %v5702, %v5694
        %v6071 = vpack.c.b16 %v5703, %v5695
        %v6072 = vpack.c.b16 %v5704, %v5696
        %v6073 = vpack.c.b16 %v5705, %v5697
        %v6074 = vpack.c.b16 %v5706, %v5698
        %v6075 = vpack.c.b16 %v5707, %v5699
        %v6076 = vpack.c.b16 %v5716, %v5708
        %v6077 = vpack.c.b16 %v5717, %v5709
        %v6078 = vpack.c.b16 %v5718, %v5710
        %v6079 = vpack.c.b16 %v5719, %v5711
        %v6080 = vpack.c.b16 %v5720, %v5712
        %v6081 = vpack.c.b16 %v5721, %v5713
        %v6082 = vpack.c.b16 %v5722, %v5714
        %v6083 = vpack.c.b16 %v5723, %v5715
        %v6084 = vpack.c.b16 %v5732, %v5724
        %v6085 = vpack.c.b16 %v5733, %v5725
        %v6086 = vpack.c.b16 %v5734, %v5726
        %v6087 = vpack.c.b16 %v5735, %v5727
        %v6088 = vpack.c.b16 %v5736, %v5728
        %v6089 = vpack.c.b16 %v5737, %v5729
        %v6090 = vpack.c.b16 %v5738, %v5730
        %v6091 = vpack.c.b16 %v5739, %v5731
        %v6092 = vpack.c.b16 %v5748, %v5740
        %v6093 = vpack.c.b16 %v5749, %v5741
        %v6094 = vpack.c.b16 %v5750, %v5742
        %v6095 = vpack.c.b16 %v5751, %v5743
        %v6096 = vpack.c.b16 %v5752, %v5744
        %v6097 = vpack.c.b16 %v5753, %v5745
        %v6098 = vpack.c.b16 %v5754, %v5746
        %v6099 = vpack.c.b16 %v5755, %v5747
        %v6100 = vpack.c.b16 %v5764, %v5756
        %v6101 = vpack.c.b16 %v5765, %v5757
        %v6102 = vpack.c.b16 %v5766, %v5758
        %v6103 = vpack.c.b16 %v5767, %v5759
        %v6104 = vpack.c.b16 %v5768, %v5760
        %v6105 = vpack.c.b16 %v5769, %v5761
        %v6106 = vpack.c.b16 %v5770, %v5762
        %v6107 = vpack.c.b16 %v5771, %v5763
        %v6108 = vpack.c.b16 %v5780, %v5772
        %v6109 = vpack.c.b16 %v5781, %v5773
        %v6110 = vpack.c.b16 %v5782, %v5774
        %v6111 = vpack.c.b16 %v5783, %v5775
        %v6112 = vpack.c.b16 %v5784, %v5776
        %v6113 = vpack.c.b16 %v5785, %v5777
        %v6114 = vpack.c.b16 %v5786, %v5778
        %v6115 = vpack.c.b16 %v5787, %v5779
        %v6116 = vpack.c.b16 %v5796, %v5788
        %v6117 = vpack.c.b16 %v5797, %v5789
        %v6118 = vpack.c.b16 %v5798, %v5790
        %v6119 = vpack.c.b16 %v5799, %v5791
        %v6120 = vpack.c.b16 %v5800, %v5792
        %v6121 = vpack.c.b16 %v5801, %v5793
        %v6122 = vpack.c.b16 %v5802, %v5794
        %v6123 = vpack.c.b16 %v5803, %v5795
        %v6124 = vpack.c.b16 %v5812, %v5804
        %v6125 = vpack.c.b16 %v5813, %v5805
        %v6126 = vpack.c.b16 %v5814, %v5806
        %v6127 = vpack.c.b16 %v5815, %v5807
        %v6128 = vpack.c.b16 %v5816, %v5808
        %v6129 = vpack.c.b16 %v5817, %v5809
        %v6130 = vpack.c.b16 %v5818, %v5810
        %v6131 = vpack.c.b16 %v5819, %v5811
        %v6132 = vpack.c.b16 %v5828, %v5820
        %v6133 = vpack.c.b16 %v5829, %v5821
        %v6134 = vpack.c.b16 %v5830, %v5822
        %v6135 = vpack.c.b16 %v5831, %v5823
        %v6136 = vpack.c.b16 %v5832, %v5824
        %v6137 = vpack.c.b16 %v5833, %v5825
        %v6138 = vpack.c.b16 %v5834, %v5826
        %v6139 = vpack.c.b16 %v5835, %v5827
        %v6140 = vpack.c.b16 %v5844, %v5836
        %v6141 = vpack.c.b16 %v5845, %v5837
        %v6142 = vpack.c.b16 %v5846, %v5838
        %v6143 = vpack.c.b16 %v5847, %v5839
        %v6144 = vpack.c.b16 %v5848, %v5840
        %v6145 = vpack.c.b16 %v5849, %v5841
        %v6146 = vpack.c.b16 %v5850, %v5842
        %v6147 = vpack.c.b16 %v5851, %v5843
        %v6148 = vpack.c.b16 %v5860, %v5852
        %v6149 = vpack.c.b16 %v5861, %v5853
        %v6150 = vpack.c.b16 %v5862, %v5854
        %v6151 = vpack.c.b16 %v5863, %v5855
        %v6152 = vpack.c.b16 %v5864, %v5856
        %v6153 = vpack.c.b16 %v5865, %v5857
        %v6154 = vpack.c.b16 %v5866, %v5858
        %v6155 = vpack.c.b16 %v5867, %v5859
        %v6156 = vpack.c.b16 %v5876, %v5868
        %v6157 = vpack.c.b16 %v5877, %v5869
        %v6158 = vpack.c.b16 %v5878, %v5870
        %v6159 = vpack.c.b16 %v5879, %v5871
        %v6160 = vpack.c.b16 %v5880, %v5872
        %v6161 = vpack.c.b16 %v5881, %v5873
        %v6162 = vpack.c.b16 %v5882, %v5874
        %v6163 = vpack.c.b16 %v5883, %v5875
        %v6164 = vpack.c.b16 %v5892, %v5884
        %v6165 = vpack.c.b16 %v5893, %v5885
        %v6166 = vpack.c.b16 %v5894, %v5886
        %v6167 = vpack.c.b16 %v5895, %v5887
        %v6168 = vpack.c.b16 %v5896, %v5888
        %v6169 = vpack.c.b16 %v5897, %v5889
        %v6170 = vpack.c.b16 %v5898, %v5890
        %v6171 = vpack.c.b16 %v5899, %v5891
        %v6172 = vpack.c.b16 %v5908, %v5900
        %v6173 = vpack.c.b16 %v5909, %v5901
        %v6174 = vpack.c.b16 %v5910, %v5902
        %v6175 = vpack.c.b16 %v5911, %v5903
        %v6176 = vpack.c.b16 %v5912, %v5904
        %v6177 = vpack.c.b16 %v5913, %v5905
        %v6178 = vpack.c.b16 %v5914, %v5906
        %v6179 = vpack.c.b16 %v5915, %v5907
        %v6180 = vpack.c.b16 %v5924, %v5916
        %v6181 = vpack.c.b16 %v5925, %v5917
        %v6182 = vpack.c.b16 %v5926, %v5918
        %v6183 = vpack.c.b16 %v5927, %v5919
        %v6184 = vpack.c.b16 %v5928, %v5920
        %v6185 = vpack.c.b16 %v5929, %v5921
        %v6186 = vpack.c.b16 %v5930, %v5922
        %v6187 = vpack.c.b16 %v5931, %v5923
        %6444 = vmatprep.subr.bf16.mxu0 %v5933
        %6445 = vmatpush1.bf16.msra.mxu0 %v5932
        %6446 = vmatprep.subr.bf16.mxu0 %v5941
        %6447 = vmatpush1.bf16.msra.mxu0 %v5940
        %6448 = vmatprep.subr.bf16.mxu0 %v5949
        %6449 = vmatpush1.bf16.msra.mxu0 %v5948
        %6450 = vmatprep.subr.bf16.mxu0 %v5957
        %6451 = vmatpush1.bf16.msra.mxu0 %v5956
        %6452 = vmatprep.subr.bf16.mxu0 %v5965
        %6453 = vmatpush1.bf16.msra.mxu0 %v5964
        %6454 = vmatprep.subr.bf16.mxu0 %v5973
        %6455 = vmatpush1.bf16.msra.mxu0 %v5972
        %6456 = vmatprep.subr.bf16.mxu0 %v5981
        %6457 = vmatpush1.bf16.msra.mxu0 %v5980
        %6458 = vmatprep.subr.bf16.mxu0 %v5989
        %6459 = vmatpush1.bf16.msra.mxu0 %v5988
        %6460 = vmatprep.subr.bf16.mxu0 %v5997
        %6461 = vmatpush1.bf16.msra.mxu0 %v5996
        %6462 = vmatprep.subr.bf16.mxu0 %v6005
        %6463 = vmatpush1.bf16.msra.mxu0 %v6004
        %6464 = vmatprep.subr.bf16.mxu0 %v6013
        %6465 = vmatpush1.bf16.msra.mxu0 %v6012
        %6466 = vmatprep.subr.bf16.mxu0 %v6021
        %6467 = vmatpush1.bf16.msra.mxu0 %v6020
        %6468 = vmatprep.subr.bf16.mxu0 %v6029
        %6469 = vmatpush1.bf16.msra.mxu0 %v6028
        %6470 = vmatprep.subr.bf16.mxu0 %v6037
        %6471 = vmatpush1.bf16.msra.mxu0 %v6036
        %6472 = vmatprep.subr.bf16.mxu0 %v6045
        %6473 = vmatpush1.bf16.msra.mxu0 %v6044
        %6474 = vmatprep.subr.bf16.mxu0 %v6053
        %6475 = vmatpush1.bf16.msra.mxu0 %v6052
        %6476 = vmatprep.mubr.bf16.mxu0 %v4385
        %6477 = vmatmul.mubr.bf16.gmra.mrb[0].mxu0 %v4384
        %v6478 = vpop.f32.mrb[0].mxu0
        %v6479 = vadd.f32 %v5127, %v6478
        %v6480 = vpop.f32.mrb[0].mxu0
        %v6481 = vadd.f32 %v5131, %v6480
        %v6482 = vpop.f32.mrb[0].mxu0
        %v6483 = vpop.f32.mrb[0].mxu0
        %6484 = vdwg.mxu0
        %6485 = vmatprep.subr.bf16.mxu0 %v6061
        %6486 = vmatpush1.bf16.msra.mxu0 %v6060
        %6487 = vmatprep.subr.bf16.mxu0 %v6069
        %6488 = vmatpush1.bf16.msra.mxu0 %v6068
        %6489 = vmatprep.subr.bf16.mxu0 %v6077
        %6490 = vmatpush1.bf16.msra.mxu0 %v6076
        %6491 = vmatprep.subr.bf16.mxu0 %v6085
        %6492 = vmatpush1.bf16.msra.mxu0 %v6084
        %6493 = vmatprep.subr.bf16.mxu0 %v6093
        %6494 = vmatpush1.bf16.msra.mxu0 %v6092
        %6495 = vmatprep.subr.bf16.mxu0 %v6101
        %6496 = vmatpush1.bf16.msra.mxu0 %v6100
        %6497 = vmatprep.subr.bf16.mxu0 %v6109
        %6498 = vmatpush1.bf16.msra.mxu0 %v6108
        %6499 = vmatprep.subr.bf16.mxu0 %v6117
        %6500 = vmatpush1.bf16.msra.mxu0 %v6116
        %6501 = vmatprep.subr.bf16.mxu0 %v6125
        %6502 = vmatpush1.bf16.msra.mxu0 %v6124
        %6503 = vmatprep.subr.bf16.mxu0 %v6133
        %6504 = vmatpush1.bf16.msra.mxu0 %v6132
        %6505 = vmatprep.subr.bf16.mxu0 %v6141
        %6506 = vmatpush1.bf16.msra.mxu0 %v6140
        %6507 = vmatprep.subr.bf16.mxu0 %v6149
        %6508 = vmatpush1.bf16.msra.mxu0 %v6148
        %6509 = vmatprep.subr.bf16.mxu0 %v6157
        %6510 = vmatpush1.bf16.msra.mxu0 %v6156
        %6511 = vmatprep.subr.bf16.mxu0 %v6165
        %6512 = vmatpush1.bf16.msra.mxu0 %v6164
        %6513 = vmatprep.subr.bf16.mxu0 %v6173
        %6514 = vmatpush1.bf16.msra.mxu0 %v6172
        %6515 = vmatprep.subr.bf16.mxu0 %v6181
        %6516 = vmatpush1.bf16.msra.mxu0 %v6180
        %6517 = vmatprep.mubr.bf16.mxu0 %v4387
        %6518 = vmatmul.mubr.bf16.gmra.mrb[0].mxu0 %v4386
        %v6519 = vpop.f32.mrb[0].mxu0
        %v6520 = vadd.f32 %v6479, %v6519
        %v6521 = vpop.f32.mrb[0].mxu0
        %v6522 = vadd.f32 %v6481, %v6521
        %v6523 = vpop.f32.mrb[0].mxu0
        %v6524 = vpop.f32.mrb[0].mxu0
        %6525 = vdwg.mxu0
        %6526 = vmatprep.subr.bf16.mxu0 %v5935
        %6527 = vmatpush1.bf16.msra.mxu0 %v5934
        %6528 = vmatprep.subr.bf16.mxu0 %v5943
        %6529 = vmatpush1.bf16.msra.mxu0 %v5942
        %6530 = vmatprep.subr.bf16.mxu0 %v5951
        %6531 = vmatpush1.bf16.msra.mxu0 %v5950
        %6532 = vmatprep.subr.bf16.mxu0 %v5959
        %6533 = vmatpush1.bf16.msra.mxu0 %v5958
        %6534 = vmatprep.subr.bf16.mxu0 %v5967
        %6535 = vmatpush1.bf16.msra.mxu0 %v5966
        %6536 = vmatprep.subr.bf16.mxu0 %v5975
        %6537 = vmatpush1.bf16.msra.mxu0 %v5974
        %6538 = vmatprep.subr.bf16.mxu0 %v5983
        %6539 = vmatpush1.bf16.msra.mxu0 %v5982
        %6540 = vmatprep.subr.bf16.mxu0 %v5991
        %6541 = vmatpush1.bf16.msra.mxu0 %v5990
        %6542 = vmatprep.subr.bf16.mxu0 %v5999
        %6543 = vmatpush1.bf16.msra.mxu0 %v5998
        %6544 = vmatprep.subr.bf16.mxu0 %v6007
        %6545 = vmatpush1.bf16.msra.mxu0 %v6006
        %6546 = vmatprep.subr.bf16.mxu0 %v6015
        %6547 = vmatpush1.bf16.msra.mxu0 %v6014
        %6548 = vmatprep.subr.bf16.mxu0 %v6023
        %6549 = vmatpush1.bf16.msra.mxu0 %v6022
        %6550 = vmatprep.subr.bf16.mxu0 %v6031
        %6551 = vmatpush1.bf16.msra.mxu0 %v6030
        %6552 = vmatprep.subr.bf16.mxu0 %v6039
        %6553 = vmatpush1.bf16.msra.mxu0 %v6038
        %6554 = vmatprep.subr.bf16.mxu0 %v6047
        %6555 = vmatpush1.bf16.msra.mxu0 %v6046
        %6556 = vmatprep.subr.bf16.mxu0 %v6055
        %6557 = vmatpush1.bf16.msra.mxu0 %v6054
        %6558 = vmatprep.mubr.bf16.mxu0 %v4385
        %6559 = vmatmul.mubr.bf16.gmra.mrb[0].mxu0 %v4384
        %v6560 = vpop.f32.mrb[0].mxu0
        %v6561 = vadd.f32 %v5135, %v6560
        %v6562 = vpop.f32.mrb[0].mxu0
        %v6563 = vadd.f32 %v5139, %v6562
        %v6564 = vpop.f32.mrb[0].mxu0
        %v6565 = vpop.f32.mrb[0].mxu0
        %6566 = vdwg.mxu0
        %6567 = vmatprep.subr.bf16.mxu0 %v6063
        %6568 = vmatpush1.bf16.msra.mxu0 %v6062
        %6569 = vmatprep.subr.bf16.mxu0 %v6071
        %6570 = vmatpush1.bf16.msra.mxu0 %v6070
        %6571 = vmatprep.subr.bf16.mxu0 %v6079
        %6572 = vmatpush1.bf16.msra.mxu0 %v6078
        %6573 = vmatprep.subr.bf16.mxu0 %v6087
        %6574 = vmatpush1.bf16.msra.mxu0 %v6086
        %6575 = vmatprep.subr.bf16.mxu0 %v6095
        %6576 = vmatpush1.bf16.msra.mxu0 %v6094
        %6577 = vmatprep.subr.bf16.mxu0 %v6103
        %6578 = vmatpush1.bf16.msra.mxu0 %v6102
        %6579 = vmatprep.subr.bf16.mxu0 %v6111
        %6580 = vmatpush1.bf16.msra.mxu0 %v6110
        %6581 = vmatprep.subr.bf16.mxu0 %v6119
        %6582 = vmatpush1.bf16.msra.mxu0 %v6118
        %6583 = vmatprep.subr.bf16.mxu0 %v6127
        %6584 = vmatpush1.bf16.msra.mxu0 %v6126
        %6585 = vmatprep.subr.bf16.mxu0 %v6135
        %6586 = vmatpush1.bf16.msra.mxu0 %v6134
        %6587 = vmatprep.subr.bf16.mxu0 %v6143
        %6588 = vmatpush1.bf16.msra.mxu0 %v6142
        %6589 = vmatprep.subr.bf16.mxu0 %v6151
        %6590 = vmatpush1.bf16.msra.mxu0 %v6150
        %6591 = vmatprep.subr.bf16.mxu0 %v6159
        %6592 = vmatpush1.bf16.msra.mxu0 %v6158
        %6593 = vmatprep.subr.bf16.mxu0 %v6167
        %6594 = vmatpush1.bf16.msra.mxu0 %v6166
        %6595 = vmatprep.subr.bf16.mxu0 %v6175
        %6596 = vmatpush1.bf16.msra.mxu0 %v6174
        %6597 = vmatprep.subr.bf16.mxu0 %v6183
        %6598 = vmatpush1.bf16.msra.mxu0 %v6182
        %6599 = vmatprep.mubr.bf16.mxu0 %v4387
        %6600 = vmatmul.mubr.bf16.gmra.mrb[0].mxu0 %v4386
        %v6601 = vpop.f32.mrb[0].mxu0
        %v6602 = vadd.f32 %v6561, %v6601
        %v6603 = vpop.f32.mrb[0].mxu0
        %v6604 = vadd.f32 %v6563, %v6603
        %v6605 = vpop.f32.mrb[0].mxu0
        %v6606 = vpop.f32.mrb[0].mxu0
        %6607 = vdwg.mxu0
        %6608 = vmatprep.subr.bf16.mxu0 %v5937
        %6609 = vmatpush1.bf16.msra.mxu0 %v5936
        %6610 = vmatprep.subr.bf16.mxu0 %v5945
        %6611 = vmatpush1.bf16.msra.mxu0 %v5944
        %6612 = vmatprep.subr.bf16.mxu0 %v5953
        %6613 = vmatpush1.bf16.msra.mxu0 %v5952
        %6614 = vmatprep.subr.bf16.mxu0 %v5961
        %6615 = vmatpush1.bf16.msra.mxu0 %v5960
        %6616 = vmatprep.subr.bf16.mxu0 %v5969
        %6617 = vmatpush1.bf16.msra.mxu0 %v5968
        %6618 = vmatprep.subr.bf16.mxu0 %v5977
        %6619 = vmatpush1.bf16.msra.mxu0 %v5976
        %6620 = vmatprep.subr.bf16.mxu0 %v5985
        %6621 = vmatpush1.bf16.msra.mxu0 %v5984
        %6622 = vmatprep.subr.bf16.mxu0 %v5993
        %6623 = vmatpush1.bf16.msra.mxu0 %v5992
        %6624 = vmatprep.subr.bf16.mxu0 %v6001
        %6625 = vmatpush1.bf16.msra.mxu0 %v6000
        %6626 = vmatprep.subr.bf16.mxu0 %v6009
        %6627 = vmatpush1.bf16.msra.mxu0 %v6008
        %6628 = vmatprep.subr.bf16.mxu0 %v6017
        %6629 = vmatpush1.bf16.msra.mxu0 %v6016
        %6630 = vmatprep.subr.bf16.mxu0 %v6025
        %6631 = vmatpush1.bf16.msra.mxu0 %v6024
        %6632 = vmatprep.subr.bf16.mxu0 %v6033
        %6633 = vmatpush1.bf16.msra.mxu0 %v6032
        %6634 = vmatprep.subr.bf16.mxu0 %v6041
        %6635 = vmatpush1.bf16.msra.mxu0 %v6040
        %6636 = vmatprep.subr.bf16.mxu0 %v6049
        %6637 = vmatpush1.bf16.msra.mxu0 %v6048
        %6638 = vmatprep.subr.bf16.mxu0 %v6057
        %6639 = vmatpush1.bf16.msra.mxu0 %v6056
        %6640 = vmatprep.mubr.bf16.mxu0 %v4385
        %6641 = vmatmul.mubr.bf16.gmra.mrb[0].mxu0 %v4384
        %v6642 = vpop.f32.mrb[0].mxu0
        %v6643 = vadd.f32 %v5143, %v6642
        %v6644 = vpop.f32.mrb[0].mxu0
        %v6645 = vadd.f32 %v5147, %v6644
        %v6646 = vpop.f32.mrb[0].mxu0
        %v6647 = vpop.f32.mrb[0].mxu0
        %6648 = vdwg.mxu0
        %6649 = vmatprep.subr.bf16.mxu0 %v6065
        %6650 = vmatpush1.bf16.msra.mxu0 %v6064
        %6651 = vmatprep.subr.bf16.mxu0 %v6073
        %6652 = vmatpush1.bf16.msra.mxu0 %v6072
        %6653 = vmatprep.subr.bf16.mxu0 %v6081
        %6654 = vmatpush1.bf16.msra.mxu0 %v6080
        %6655 = vmatprep.subr.bf16.mxu0 %v6089
        %6656 = vmatpush1.bf16.msra.mxu0 %v6088
        %6657 = vmatprep.subr.bf16.mxu0 %v6097
        %6658 = vmatpush1.bf16.msra.mxu0 %v6096
        %6659 = vmatprep.subr.bf16.mxu0 %v6105
        %6660 = vmatpush1.bf16.msra.mxu0 %v6104
        %6661 = vmatprep.subr.bf16.mxu0 %v6113
        %6662 = vmatpush1.bf16.msra.mxu0 %v6112
        %6663 = vmatprep.subr.bf16.mxu0 %v6121
        %6664 = vmatpush1.bf16.msra.mxu0 %v6120
        %6665 = vmatprep.subr.bf16.mxu0 %v6129
        %6666 = vmatpush1.bf16.msra.mxu0 %v6128
        %6667 = vmatprep.subr.bf16.mxu0 %v6137
        %6668 = vmatpush1.bf16.msra.mxu0 %v6136
        %6669 = vmatprep.subr.bf16.mxu0 %v6145
        %6670 = vmatpush1.bf16.msra.mxu0 %v6144
        %6671 = vmatprep.subr.bf16.mxu0 %v6153
        %6672 = vmatpush1.bf16.msra.mxu0 %v6152
        %6673 = vmatprep.subr.bf16.mxu0 %v6161
        %6674 = vmatpush1.bf16.msra.mxu0 %v6160
        %6675 = vmatprep.subr.bf16.mxu0 %v6169
        %6676 = vmatpush1.bf16.msra.mxu0 %v6168
        %6677 = vmatprep.subr.bf16.mxu0 %v6177
        %6678 = vmatpush1.bf16.msra.mxu0 %v6176
        %6679 = vmatprep.subr.bf16.mxu0 %v6185
        %6680 = vmatpush1.bf16.msra.mxu0 %v6184
        %6681 = vmatprep.mubr.bf16.mxu0 %v4387
        %6682 = vmatmul.mubr.bf16.gmra.mrb[0].mxu0 %v4386
        %v6683 = vpop.f32.mrb[0].mxu0
        %v6684 = vadd.f32 %v6643, %v6683
        %v6685 = vpop.f32.mrb[0].mxu0
        %v6686 = vadd.f32 %v6645, %v6685
        %v6687 = vpop.f32.mrb[0].mxu0
        %v6688 = vpop.f32.mrb[0].mxu0
        %6689 = vdwg.mxu0
        %6690 = vmatprep.subr.bf16.mxu0 %v5939
        %6691 = vmatpush1.bf16.msra.mxu0 %v5938
        %6692 = vmatprep.subr.bf16.mxu0 %v5947
        %6693 = vmatpush1.bf16.msra.mxu0 %v5946
        %6694 = vmatprep.subr.bf16.mxu0 %v5955
        %6695 = vmatpush1.bf16.msra.mxu0 %v5954
        %6696 = vmatprep.subr.bf16.mxu0 %v5963
        %6697 = vmatpush1.bf16.msra.mxu0 %v5962
        %6698 = vmatprep.subr.bf16.mxu0 %v5971
        %6699 = vmatpush1.bf16.msra.mxu0 %v5970
        %6700 = vmatprep.subr.bf16.mxu0 %v5979
        %6701 = vmatpush1.bf16.msra.mxu0 %v5978
        %6702 = vmatprep.subr.bf16.mxu0 %v5987
        %6703 = vmatpush1.bf16.msra.mxu0 %v5986
        %6704 = vmatprep.subr.bf16.mxu0 %v5995
        %6705 = vmatpush1.bf16.msra.mxu0 %v5994
        %6706 = vmatprep.subr.bf16.mxu0 %v6003
        %6707 = vmatpush1.bf16.msra.mxu0 %v6002
        %6708 = vmatprep.subr.bf16.mxu0 %v6011
        %6709 = vmatpush1.bf16.msra.mxu0 %v6010
        %6710 = vmatprep.subr.bf16.mxu0 %v6019
        %6711 = vmatpush1.bf16.msra.mxu0 %v6018
        %6712 = vmatprep.subr.bf16.mxu0 %v6027
        %6713 = vmatpush1.bf16.msra.mxu0 %v6026
        %6714 = vmatprep.subr.bf16.mxu0 %v6035
        %6715 = vmatpush1.bf16.msra.mxu0 %v6034
        %6716 = vmatprep.subr.bf16.mxu0 %v6043
        %6717 = vmatpush1.bf16.msra.mxu0 %v6042
        %6718 = vmatprep.subr.bf16.mxu0 %v6051
        %6719 = vmatpush1.bf16.msra.mxu0 %v6050
        %6720 = vmatprep.subr.bf16.mxu0 %v6059
        %6721 = vmatpush1.bf16.msra.mxu0 %v6058
        %6722 = vmatprep.mubr.bf16.mxu0 %v4385
        %6723 = vmatmul.mubr.bf16.gmra.mrb[0].mxu0 %v4384
        %v6724 = vpop.f32.mrb[0].mxu0
        %v6725 = vadd.f32 %v5151, %v6724
        %v6726 = vpop.f32.mrb[0].mxu0
        %v6727 = vadd.f32 %v5155, %v6726
        %v6728 = vpop.f32.mrb[0].mxu0
        %v6729 = vpop.f32.mrb[0].mxu0
        %6730 = vdwg.mxu0
        %6731 = vmatprep.subr.bf16.mxu0 %v6067
        %6732 = vmatpush1.bf16.msra.mxu0 %v6066
        %6733 = vmatprep.subr.bf16.mxu0 %v6075
        %6734 = vmatpush1.bf16.msra.mxu0 %v6074
        %6735 = vmatprep.subr.bf16.mxu0 %v6083
        %6736 = vmatpush1.bf16.msra.mxu0 %v6082
        %6737 = vmatprep.subr.bf16.mxu0 %v6091
        %6738 = vmatpush1.bf16.msra.mxu0 %v6090
        %6739 = vmatprep.subr.bf16.mxu0 %v6099
        %6740 = vmatpush1.bf16.msra.mxu0 %v6098
        %6741 = vmatprep.subr.bf16.mxu0 %v6107
        %6742 = vmatpush1.bf16.msra.mxu0 %v6106
        %6743 = vmatprep.subr.bf16.mxu0 %v6115
        %6744 = vmatpush1.bf16.msra.mxu0 %v6114
        %6745 = vmatprep.subr.bf16.mxu0 %v6123
        %6746 = vmatpush1.bf16.msra.mxu0 %v6122
        %6747 = vmatprep.subr.bf16.mxu0 %v6131
        %6748 = vmatpush1.bf16.msra.mxu0 %v6130
        %6749 = vmatprep.subr.bf16.mxu0 %v6139
        %6750 = vmatpush1.bf16.msra.mxu0 %v6138
        %6751 = vmatprep.subr.bf16.mxu0 %v6147
        %6752 = vmatpush1.bf16.msra.mxu0 %v6146
        %6753 = vmatprep.subr.bf16.mxu0 %v6155
        %6754 = vmatpush1.bf16.msra.mxu0 %v6154
        %6755 = vmatprep.subr.bf16.mxu0 %v6163
        %6756 = vmatpush1.bf16.msra.mxu0 %v6162
        %6757 = vmatprep.subr.bf16.mxu0 %v6171
        %6758 = vmatpush1.bf16.msra.mxu0 %v6170
        %6759 = vmatprep.subr.bf16.mxu0 %v6179
        %6760 = vmatpush1.bf16.msra.mxu0 %v6178
        %6761 = vmatprep.subr.bf16.mxu0 %v6187
        %6762 = vmatpush1.bf16.msra.mxu0 %v6186
        %6763 = vmatprep.mubr.bf16.mxu0 %v4387
        %6764 = vmatmul.mubr.bf16.gmra.mrb[0].mxu0 %v4386
        %v6765 = vpop.f32.mrb[0].mxu0
        %v6766 = vadd.f32 %v6725, %v6765
        %v6767 = vpop.f32.mrb[0].mxu0
        %v6768 = vadd.f32 %v6727, %v6767
        %v6769 = vpop.f32.mrb[0].mxu0
        %v6770 = vpop.f32.mrb[0].mxu0
        %6771 = vdwg.mxu0
        %v6772 = vadd.f32 %v6520, %v6602
        %v6773 = vadd.f32 %v6522, %v6604
        %v6774 = vadd.f32 %v6772, %v6684
        %v6775 = vadd.f32 %v6773, %v6686
        %v6776 = vadd.f32 %v6774, %v6766
        %v6777 = vadd.f32 %v6775, %v6768
        %v6778 = vmul.f32 %v6776, 0.25
        %v6779 = vmul.f32 %v6777, 0.25
        %v6780 = vadd.f32 %v4860, %v6520
        %v6781 = vadd.f32 %v4862, %v6522
        %v6782 = vsub.f32 %v6780, %v6778
        %v6783 = vsub.f32 %v6781, %v6779
        %v6784 = vadd.f32 %v4860, %v6602
        %v6785 = vadd.f32 %v4862, %v6604
        %v6786 = vsub.f32 %v6784, %v6778
        %v6787 = vsub.f32 %v6785, %v6779
        %v6788 = vadd.f32 %v4860, %v6684
        %v6789 = vadd.f32 %v4862, %v6686
        %v6790 = vsub.f32 %v6788, %v6778
        %v6791 = vsub.f32 %v6789, %v6779
        %v6792 = vadd.f32 %v4860, %v6766
        %v6793 = vadd.f32 %v4862, %v6768
        %v6794 = vsub.f32 %v6792, %v6778
        %v6795 = vsub.f32 %v6793, %v6779
        %6796 = vst [vmem:[%s8] sm:$0xff] %v6782
        %6797 = vst [vmem:[%s8 + $0x8] sm:$0xff] %v6783
        %6798 = vst [vmem:[%s8 + $0x10] sm:$0xff] %v6786
        %6799 = vst [vmem:[%s8 + $0x18] sm:$0xff] %v6787
        %6800 = vst [vmem:[%s8 + $0x20] sm:$0xff] %v6790
        %6801 = vst [vmem:[%s8 + $0x28] sm:$0xff] %v6791
        %6802 = vst [vmem:[%s8 + $0x30] sm:$0xff] %v6794
        %6803 = vst [vmem:[%s8 + $0x38] sm:$0xff] %v6795
      $region60: #{dqn_forward.7} parent=51 // pred_fallthru
        _
      // Predicated region
      $region61: #{dqn_forward.7} parent=51 // pred_check
        %p6804 = pneg %p210
      $region62: #{dqn_forward.7} parent=51 // pred_check_branch
        %6806 = sbr.rel (%p6804) target = $region64
      $region63: #{dqn_forward.7} parent=51 // pred_region
        _
      $region64: #{dqn_forward.7} parent=51 // pred_fallthru
        _
      // Predicated region
      $region65: #{dqn_forward.7} parent=51 // pred_check
        %p6807 = pneg %p210
      $region66: #{dqn_forward.7} parent=51 // pred_check_branch
        %6809 = sbr.rel (%p6807) target = $region68
      $region67: #{dqn_forward.7} parent=51 // pred_region
        _
      $region68: #{dqn_forward.7} parent=51 // pred_fallthru
        _
    $region52: #{dqn_forward.7} parent=5 // pred_fallthru
      _
    %p6810 = scmp.le.s32.totalorder 2, %s14
    // Predicated region
    $region69: #{dqn_forward.7} parent=5 // pred_check
      %p6811 = pneg %p6810
    $region70: #{dqn_forward.7} parent=5 // pred_check_branch
      %6813 = sbr.rel (%p6811) target = $region72
    $region71: #{dqn_forward.7} parent=5 // pred_region
      %s6814 = ssub.s32 %s14, 2
    $region72: #{dqn_forward.7} parent=5 // pred_fallthru
      _
  $region6: #{dqn_forward.7} parent=0 // loop_footer
    %s18 = sadd.s32 1, %s14
  $region7: #{dqn_forward.7} parent=0 // loop_footer_branch
    %13 = sbr.rel target = $region3
  $region8: #{dqn_forward.7} parent=0 // loop_exit
    _

</llo_original>
